<compile_context>
chip_gen: v5e
topology: v5e:2x2
jax: 0.10.0
libtpu: 0.0.40
codegen_flags: <defaults>
</compile_context>

<pallas_src>
import functools
import math

import jax
import jax.numpy as jnp
from jax.experimental import pallas as pl
from jax.experimental.pallas import tpu as pltpu


# ----------------------------------------------------------------------------
# Generation-aware VMEM budget / tiling helpers
# ----------------------------------------------------------------------------

def _vmem_limit_bytes():
    try:
        cap = int(pltpu.get_tpu_info().vmem_capacity_bytes)
    except Exception:
        cap = 64 * 1024 * 1024
    # 3/4 of physical VMEM, capped at 100 MiB: ~96 MiB on v5e/v6e, 48 on v7x.
    return min(cap * 3 // 4, 100 * 1024 * 1024)


_VMEM_LIMIT = _vmem_limit_bytes()
_HALO = 8   # sublane-aligned conv halo (supports kernel sizes up to 17)


def _cparams(ndim):
    # All grid axes below are embarrassingly parallel -> megacore sharding.
    return pltpu.CompilerParams(dimension_semantics=("parallel",) * ndim,
                                vmem_limit_bytes=_VMEM_LIMIT)


def _pick_row_tile(M, K, N, in_bytes=4, out_bytes=4):
    """Largest row tile that divides M and keeps double-buffered blocks in VMEM."""
    budget = max(_VMEM_LIMIT // 2, 8 * 1024 * 1024)
    fixed = 2 * (K * N * 2 + N * 4)                 # weight + bias (double-buffered)
    for t in (1024, 512, 256, 128, 64, 32, 16, 8):
        if M % t == 0 and fixed + 2 * t * (K * in_bytes + N * out_bytes) <= budget:
            return t
    return M


def _pick_seq_tile(S, candidates=(256, 128, 64, 32, 16, 8)):
    for t in candidates:
        if S % t == 0:
            return t
    return S


# ----------------------------------------------------------------------------
# Pallas kernels
# ----------------------------------------------------------------------------

def _linear_kernel(x_ref, w_ref, b_ref, o_ref, *, act):
    y = jnp.dot(x_ref[...].astype(jnp.bfloat16), w_ref[...],
                preferred_element_type=jnp.float32) + b_ref[...]
    if act == "relu":
        y = jnp.maximum(y, 0.0)
    o_ref[...] = y.astype(o_ref.dtype)


def pallas_linear(x2d, w, b, act=None, out_dtype=jnp.float32):
    """y = x @ w + b; bf16 operands (cast in-kernel), f32 accumulate."""
    M, K = x2d.shape
    N = w.shape[1]
    tm = _pick_row_tile(M, K, N, in_bytes=x2d.dtype.itemsize,
                        out_bytes=jnp.dtype(out_dtype).itemsize)
    return pl.pallas_call(
        functools.partial(_linear_kernel, act=act),
        grid=(M // tm,),
        in_specs=[pl.BlockSpec((tm, K), lambda i: (i, 0)),
                  pl.BlockSpec((K, N), lambda i: (0, 0)),
                  pl.BlockSpec((1, N), lambda i: (0, 0))],
        out_specs=pl.BlockSpec((tm, N), lambda i: (i, 0)),
        out_shape=jax.ShapeDtypeStruct((M, N), out_dtype),
        compiler_params=_cparams(1),
    )(x2d, w.astype(jnp.bfloat16), b.reshape(1, N).astype(jnp.float32))


def _qkv_kernel(x_ref, w_ref, b_ref, q_ref, k_ref, v_ref):
    y = jnp.dot(x_ref[...].astype(jnp.bfloat16), w_ref[...],
                preferred_element_type=jnp.float32) + b_ref[...]
    yb = y.astype(jnp.bfloat16)
    D = q_ref.shape[-1]
    q_ref[...] = yb[:, :D]
    k_ref[...] = yb[:, D:2 * D]
    v_ref[...] = yb[:, 2 * D:]


def pallas_qkv(x2d, w_qkv, b_qkv):
    """Fused QKV projection: one (D, 3D) matmul, three bf16 outputs (no split)."""
    M, K = x2d.shape
    N3 = w_qkv.shape[1]
    D = N3 // 3
    tm = _pick_row_tile(M, K, N3, in_bytes=x2d.dtype.itemsize, out_bytes=2)
    out_sd = jax.ShapeDtypeStruct((M, D), jnp.bfloat16)
    return pl.pallas_call(
        _qkv_kernel,
        grid=(M // tm,),
        in_specs=[pl.BlockSpec((tm, K), lambda i: (i, 0)),
                  pl.BlockSpec((K, N3), lambda i: (0, 0)),
                  pl.BlockSpec((1, N3), lambda i: (0, 0))],
        out_specs=[pl.BlockSpec((tm, D), lambda i: (i, 0)),
                   pl.BlockSpec((tm, D), lambda i: (i, 0)),
                   pl.BlockSpec((tm, D), lambda i: (i, 0))],
        out_shape=(out_sd, out_sd, out_sd),
        compiler_params=_cparams(1),
    )(x2d, w_qkv.astype(jnp.bfloat16), b_qkv.reshape(1, N3).astype(jnp.float32))


def _mha_kernel(q_ref, k_ref, v_ref, bias_ref, wo_ref, bo_ref, o_ref, *,
                n_head, scale):
    """All heads for one (batch, query-tile); Wo fused; one lane-dense store."""
    bias = bias_ref[0]                                   # (1, S): 0 valid / -1e9 pad
    Tq, D = q_ref.shape[1], q_ref.shape[2]
    Dh = D // n_head
    acc = jnp.zeros((Tq, D), jnp.float32)
    for h in range(n_head):                              # static unroll over heads
        sl = slice(h * Dh, (h + 1) * Dh)
        q = q_ref[0, :, sl]                              # (Tq, Dh) bf16
        k = k_ref[0, :, sl]                              # (S,  Dh) bf16
        v = v_ref[0, :, sl]
        s = jax.lax.dot_general(q, k, (((1,), (1,)), ((), ())),
                                preferred_element_type=jnp.float32) * scale + bias
        s = s - jnp.max(s, axis=-1, keepdims=True)
        p = jnp.exp(s)
        p = p * pl.reciprocal(jnp.sum(p, axis=-1, keepdims=True), approx=True)
        o_h = jnp.dot(p.astype(jnp.bfloat16), v, preferred_element_type=jnp.float32)
        acc = acc + jnp.dot(o_h.astype(jnp.bfloat16), wo_ref[sl, :],
                            preferred_element_type=jnp.float32)
    o_ref[0] = acc + bo_ref[...]


def pallas_mha(q, k, v, attn_bias, wo, bo, n_head, scale):
    """q,k,v: (B,S,D) bf16; attn_bias: (B,1,S) f32 additive. Output (B,S,D) f32
    already projected by Wo (+bo)."""
    B, S, D = q.shape
    tq = _pick_seq_tile(S)
    return pl.pallas_call(
        functools.partial(_mha_kernel, n_head=n_head, scale=scale),
        grid=(B, S // tq),
        in_specs=[pl.BlockSpec((1, tq, D), lambda b, i: (b, i, 0)),
                  pl.BlockSpec((1, S, D), lambda b, i: (b, 0, 0)),
                  pl.BlockSpec((1, S, D), lambda b, i: (b, 0, 0)),
                  pl.BlockSpec((1, 1, S), lambda b, i: (b, 0, 0)),
                  pl.BlockSpec((D, D), lambda b, i: (0, 0)),
                  pl.BlockSpec((1, D), lambda b, i: (0, 0))],
        out_specs=pl.BlockSpec((1, tq, D), lambda b, i: (b, i, 0)),
        out_shape=jax.ShapeDtypeStruct((B, S, D), jnp.float32),
        compiler_params=_cparams(2),
    )(q, k, v, attn_bias, wo.astype(jnp.bfloat16),
      bo.reshape(1, D).astype(jnp.float32))


def _ffn_tail_kernel(attn_ref, res_ref, m_ref, g1_ref, bg1_ref,
                     w1_ref, cb1_ref, w2_ref, cb2_ref, g2_ref, bg2_ref,
                     o_ref, tpad_ref, hpad_ref, *, ksize, eps):
    """residual + LN1 + mask + conv1/ReLU + conv2 + residual + LN2 + mask,
    with the (S, filter) intermediate kept in VMEM scratch (never in HBM)."""
    S = attn_ref.shape[1]
    pad = (ksize - 1) // 2
    m = m_ref[0]                                           # (S, 1)
    # residual + LN1 + non-pad mask
    x = attn_ref[0] + res_ref[0]
    mu = jnp.mean(x, axis=-1, keepdims=True)
    var = jnp.mean(jnp.square(x - mu), axis=-1, keepdims=True)
    t = ((x - mu) * jax.lax.rsqrt(var + eps) * g1_ref[...] + bg1_ref[...]) * m
    # conv1 (K shifted matmuls over a zero-halo'd VMEM scratch) + ReLU
    D = tpad_ref.shape[1]
    F = hpad_ref.shape[1]
    tpad_ref[pl.ds(0, _HALO), :] = jnp.zeros((_HALO, D), tpad_ref.dtype)
    tpad_ref[pl.ds(_HALO + S, _HALO), :] = jnp.zeros((_HALO, D), tpad_ref.dtype)
    tpad_ref[pl.ds(_HALO, S), :] = t.astype(tpad_ref.dtype)
    acc = jnp.zeros((S, F), jnp.float32)
    for j in range(ksize):                                 # static unroll over taps
        acc = acc + jnp.dot(tpad_ref[pl.ds(_HALO - pad + j, S), :], w1_ref[j],
                            preferred_element_type=jnp.float32)
    h = jnp.maximum(acc + cb1_ref[...], 0.0)
    # conv2
    hpad_ref[pl.ds(0, _HALO), :] = jnp.zeros((_HALO, F), hpad_ref.dtype)
    hpad_ref[pl.ds(_HALO + S, _HALO), :] = jnp.zeros((_HALO, F), hpad_ref.dtype)
    hpad_ref[pl.ds(_HALO, S), :] = h.astype(hpad_ref.dtype)
    acc2 = jnp.zeros((S, o_ref.shape[2]), jnp.float32)
    for j in range(ksize):
        acc2 = acc2 + jnp.dot(hpad_ref[pl.ds(_HALO - pad + j, S), :], w2_ref[j],
                              preferred_element_type=jnp.float32)
    # residual (LN1 output) + LN2 + mask, single lane-dense store
    y = acc2 + cb2_ref[...] + t
    mu2 = jnp.mean(y, axis=-1, keepdims=True)
    var2 = jnp.mean(jnp.square(y - mu2), axis=-1, keepdims=True)
    o_ref[0] = ((y - mu2) * jax.lax.rsqrt(var2 + eps) * g2_ref[...] + bg2_ref[...]) * m


def pallas_ffn_tail(attn, res, non_pad, p, eps=1e-5):
    B, S, D = attn.shape
    K = p["conv1_w"].shape[2]
    F = p["conv1_w"].shape[0]
    assert K % 2 == 1 and (K - 1) // 2 <= _HALO
    w1 = jnp.transpose(p["conv1_w"], (2, 1, 0)).astype(jnp.bfloat16)   # (K, D, F)
    w2 = jnp.transpose(p["conv2_w"], (2, 1, 0)).astype(jnp.bfloat16)   # (K, F, D)
    return pl.pallas_call(
        functools.partial(_ffn_tail_kernel, ksize=K, eps=eps),
        grid=(B,),
        in_specs=[pl.BlockSpec((1, S, D), lambda b: (b, 0, 0)),
                  pl.BlockSpec((1, S, D), lambda b: (b, 0, 0)),
                  pl.BlockSpec((1, S, 1), lambda b: (b, 0, 0)),
                  pl.BlockSpec((1, D), lambda b: (0, 0)),
                  pl.BlockSpec((1, D), lambda b: (0, 0)),
                  pl.BlockSpec((K, D, F), lambda b: (0, 0, 0)),
                  pl.BlockSpec((1, F), lambda b: (0, 0)),
                  pl.BlockSpec((K, F, D), lambda b: (0, 0, 0)),
                  pl.BlockSpec((1, D), lambda b: (0, 0)),
                  pl.BlockSpec((1, D), lambda b: (0, 0)),
                  pl.BlockSpec((1, D), lambda b: (0, 0))],
        out_specs=pl.BlockSpec((1, S, D), lambda b: (b, 0, 0)),
        out_shape=jax.ShapeDtypeStruct((B, S, D), jnp.float32),
        scratch_shapes=[pltpu.VMEM((S + 2 * _HALO, D), jnp.bfloat16),
                        pltpu.VMEM((S + 2 * _HALO, F), jnp.bfloat16)],
        compiler_params=_cparams(1),
    )(attn, res.astype(jnp.float32), non_pad,
      p["ln1_g"].reshape(1, D).astype(jnp.float32),
      p["ln1_b"].reshape(1, D).astype(jnp.float32),
      w1, p["conv1_b"].reshape(1, F).astype(jnp.float32),
      w2, p["conv2_b"].reshape(1, D).astype(jnp.float32),
      p["ln2_g"].reshape(1, D).astype(jnp.float32),
      p["ln2_b"].reshape(1, D).astype(jnp.float32))


def _var_predictor_kernel(x_ref, w1_ref, cb1_ref, g1_ref, bg1_ref,
                          w2_ref, cb2_ref, g2_ref, bg2_ref, wp_ref, bp_ref,
                          o_ref, xpad_ref, hpad_ref, *, ksize, eps):
    """conv1/ReLU + LN + conv2/ReLU + LN + scalar head, fully fused.
    The scalar head is a VPU reduction (no degenerate N=1 MXU matmul)."""
    S = x_ref.shape[1]
    pad = (ksize - 1) // 2
    D = xpad_ref.shape[1]
    F = hpad_ref.shape[1]
    xpad_ref[pl.ds(0, _HALO), :] = jnp.zeros((_HALO, D), xpad_ref.dtype)
    xpad_ref[pl.ds(_HALO + S, _HALO), :] = jnp.zeros((_HALO, D), xpad_ref.dtype)
    xpad_ref[pl.ds(_HALO, S), :] = x_ref[0].astype(xpad_ref.dtype)
    acc = jnp.zeros((S, F), jnp.float32)
    for j in range(ksize):
        acc = acc + jnp.dot(xpad_ref[pl.ds(_HALO - pad + j, S), :], w1_ref[j],
                            preferred_element_type=jnp.float32)
    h = jnp.maximum(acc + cb1_ref[...], 0.0)
    mu = jnp.mean(h, axis=-1, keepdims=True)
    var = jnp.mean(jnp.square(h - mu), axis=-1, keepdims=True)
    h = (h - mu) * jax.lax.rsqrt(var + eps) * g1_ref[...] + bg1_ref[...]
    hpad_ref[pl.ds(0, _HALO), :] = jnp.zeros((_HALO, F), hpad_ref.dtype)
    hpad_ref[pl.ds(_HALO + S, _HALO), :] = jnp.zeros((_HALO, F), hpad_ref.dtype)
    hpad_ref[pl.ds(_HALO, S), :] = h.astype(hpad_ref.dtype)
    acc2 = jnp.zeros((S, F), jnp.float32)
    for j in range(ksize):
        acc2 = acc2 + jnp.dot(hpad_ref[pl.ds(_HALO - pad + j, S), :], w2_ref[j],
                              preferred_element_type=jnp.float32)
    h2 = jnp.maximum(acc2 + cb2_ref[...], 0.0)
    mu2 = jnp.mean(h2, axis=-1, keepdims=True)
    var2 = jnp.mean(jnp.square(h2 - mu2), axis=-1, keepdims=True)
    h2 = (h2 - mu2) * jax.lax.rsqrt(var2 + eps) * g2_ref[...] + bg2_ref[...]
    o_ref[0] = jnp.sum(h2 * wp_ref[...], axis=-1, keepdims=True) + bp_ref[...]


def pallas_variance_predictor(x, p, eps=1e-5):
    B, S, D = x.shape
    K = p["c1_w"].shape[2]
    F = p["c1_w"].shape[0]
    assert K % 2 == 1 and (K - 1) // 2 <= _HALO
    w1 = jnp.transpose(p["c1_w"], (2, 1, 0)).astype(jnp.bfloat16)      # (K, D, F)
    w2 = jnp.transpose(p["c2_w"], (2, 1, 0)).astype(jnp.bfloat16)      # (K, F, F)
    out = pl.pallas_call(
        functools.partial(_var_predictor_kernel, ksize=K, eps=eps),
        grid=(B,),
        in_specs=[pl.BlockSpec((1, S, D), lambda b: (b, 0, 0)),
                  pl.BlockSpec((K, D, F), lambda b: (0, 0, 0)),
                  pl.BlockSpec((1, F), lambda b: (0, 0)),
                  pl.BlockSpec((1, F), lambda b: (0, 0)),
                  pl.BlockSpec((1, F), lambda b: (0, 0)),
                  pl.BlockSpec((K, F, F), lambda b: (0, 0, 0)),
                  pl.BlockSpec((1, F), lambda b: (0, 0)),
                  pl.BlockSpec((1, F), lambda b: (0, 0)),
                  pl.BlockSpec((1, F), lambda b: (0, 0)),
                  pl.BlockSpec((1, F), lambda b: (0, 0)),
                  pl.BlockSpec((1, 1), lambda b: (0, 0))],
        out_specs=pl.BlockSpec((1, S, 1), lambda b: (b, 0, 0)),
        out_shape=jax.ShapeDtypeStruct((B, S, 1), jnp.float32),
        scratch_shapes=[pltpu.VMEM((S + 2 * _HALO, D), jnp.bfloat16),
                        pltpu.VMEM((S + 2 * _HALO, F), jnp.bfloat16)],
        compiler_params=_cparams(1),
    )(x, w1, p["c1_b"].reshape(1, F).astype(jnp.float32),
      p["ln1_g"].reshape(1, F).astype(jnp.float32),
      p["ln1_b"].reshape(1, F).astype(jnp.float32),
      w2, p["c2_b"].reshape(1, F).astype(jnp.float32),
      p["ln2_g"].reshape(1, F).astype(jnp.float32),
      p["ln2_b"].reshape(1, F).astype(jnp.float32),
      p["lin_w"].reshape(1, F).astype(jnp.float32),
      p["lin_b"].reshape(1, 1).astype(jnp.float32))
    return out[..., 0]                                     # (B, S)


# ----------------------------------------------------------------------------
# Model building blocks (glue around the Pallas kernels)
# ----------------------------------------------------------------------------

def fft_block(x, attn_bias, non_pad, p, n_head):
    B, S, D = x.shape
    a = p["attn"]
    w_qkv = jnp.concatenate([a["wq"], a["wk"], a["wv"]], axis=1)
    b_qkv = jnp.concatenate([a["bq"], a["bk"], a["bv"]], axis=0)
    q2, k2, v2 = pallas_qkv(x.reshape(B * S, D), w_qkv, b_qkv)
    q = q2.reshape(B, S, D)
    k = k2.reshape(B, S, D)
    v = v2.reshape(B, S, D)
    Dh = D // n_head
    attn = pallas_mha(q, k, v, attn_bias, a["wo"], a["bo"], n_head,
                      float(1.0 / math.sqrt(Dh)))
    return pallas_ffn_tail(attn, x, non_pad, p)


def length_regulate(x, dur, mel_max):
    """Expand x:(B,S,D) by integer durations dur:(B,S) to fixed mel_max length."""
    B, S, D = x.shape
    ends = jnp.cumsum(dur, axis=1)                                  # (B, S)
    total = jnp.minimum(ends[:, -1], mel_max)                       # (B,)
    t = jnp.arange(mel_max)
    idx = jnp.sum(t[None, :, None] >= ends[:, None, :], axis=-1)    # (B, T)
    idx = jnp.clip(idx, 0, S - 1)
    out = jnp.take_along_axis(x, idx[..., None], axis=1)            # (B, T, D)
    valid = t[None, :] < total[:, None]
    out = out * valid[..., None].astype(x.dtype)
    mel_pos = jnp.where(valid, t[None, :] + 1, 0).astype(jnp.int32)
    return out, mel_pos


def encoder_fwd(text, src_pos, p, n_head):
    key_mask = (src_pos != 0).astype(jnp.float32)                   # (B, S)
    attn_bias = ((key_mask - 1.0) * 1e9)[:, None, :]                # (B, 1, S)
    non_pad = key_mask[..., None]                                   # (B, S, 1)
    x = jnp.take(p["word_emb"], text, axis=0) + jnp.take(p["pos_table"], src_pos, axis=0)
    for lp in p["layers"]:
        x = fft_block(x, attn_bias, non_pad, lp, n_head)
    return x, key_mask


def decoder_fwd(x, mel_pos, p, n_head):
    key_mask = (mel_pos != 0).astype(jnp.float32)
    attn_bias = ((key_mask - 1.0) * 1e9)[:, None, :]
    non_pad = key_mask[..., None]
    x = x + jnp.take(p["pos_table"], mel_pos, axis=0)
    for lp in p["layers"]:
        x = fft_block(x, attn_bias, non_pad, lp, n_head)
    return x


def variance_adapter_fwd(x, src_mask, p, cfg,
                         length_coeff=1.0, energy_coeff=1.0, pitch_coeff=1.0):
    n_bins = cfg["n_bins"]
    # duration
    log_dur = pallas_variance_predictor(x, p["duration"])           # (B, S)
    dur = jnp.maximum(jnp.round((jnp.exp(log_dur) - 1.0) * length_coeff), 1.0)
    dur = (dur * src_mask).astype(jnp.int32)
    out, mel_pos = length_regulate(x, dur, cfg["mel_max_len"])
    # energy
    energy_pred = pallas_variance_predictor(out, p["energy"]) * energy_coeff
    e_idx = jnp.clip(jnp.searchsorted(p["energy_bins"], energy_pred), 0, n_bins - 1)
    out = out + jnp.take(p["energy_emb"], e_idx, axis=0)
    # pitch
    pitch_pred = pallas_variance_predictor(out, p["pitch"]) * pitch_coeff
    p_idx = jnp.clip(jnp.searchsorted(p["pitch_bins"], pitch_pred), 0, n_bins - 1)
    out = out + jnp.take(p["pitch_emb"], p_idx, axis=0)
    return out, mel_pos, energy_pred, pitch_pred


def mel_linear_apply(x, w, b):
    """Pad output channels to a multiple of 128 so kernel stores are lane-dense."""
    B, S, D = x.shape
    N = w.shape[1]
    n_pad = (-N) % 128
    w_p = jnp.pad(w, ((0, 0), (0, n_pad)))
    b_p = jnp.pad(b, ((0, n_pad),))
    y = pallas_linear(x.reshape(B * S, D), w_p, b_p).reshape(B, S, N + n_pad)
    return y[..., :N]


def fastspeech_forward(params, cfg, text, src_pos,
                       length_coeff=1.0, energy_coeff=1.0, pitch_coeff=1.0):
    """Inference (eval-mode) FastSpeech forward."""
    x, src_mask = encoder_fwd(text, src_pos, params["encoder"], cfg["encoder_head"])
    out, mel_pos, e_pred, p_pred = variance_adapter_fwd(
        x, src_mask, params["variance_adapter"], cfg,
        length_coeff=length_coeff, energy_coeff=energy_coeff, pitch_coeff=pitch_coeff)
    out = decoder_fwd(out, mel_pos, params["decoder"], cfg["decoder_head"])
    mel = mel_linear_apply(out, params["mel_linear_w"], params["mel_linear_b"])
    return {"mel_output": mel, "mel_pos": mel_pos,
            "energy_predicted": e_pred, "pitch_predicted": p_pred}


# ----------------------------------------------------------------------------
# Deterministic parameter construction
# ----------------------------------------------------------------------------

class KeyGen:
    def __init__(self, key):
        self.key = key

    def __call__(self):
        self.key, sub = jax.random.split(self.key)
        return sub


def nrm(kg, shape, scale=0.02):
    return jax.random.normal(kg(), shape, dtype=jnp.float32) * scale


def sinusoid_table(n_pos, d):
    pos = jnp.arange(n_pos, dtype=jnp.float32)[:, None]
    i = jnp.arange(d, dtype=jnp.float32)[None, :]
    angle = pos / jnp.power(10000.0, 2.0 * jnp.floor(i / 2.0) / d)
    table = jnp.where((jnp.arange(d) % 2) == 0, jnp.sin(angle), jnp.cos(angle))
    return table.at[0].set(0.0)  # padding idx = 0


def init_fft_layer(kg, dim, filt, k):
    return {
        "attn": {
            "wq": nrm(kg, (dim, dim)), "bq": jnp.zeros((dim,)),
            "wk": nrm(kg, (dim, dim)), "bk": jnp.zeros((dim,)),
            "wv": nrm(kg, (dim, dim)), "bv": jnp.zeros((dim,)),
            "wo": nrm(kg, (dim, dim)), "bo": jnp.zeros((dim,)),
        },
        "ln1_g": jnp.ones((dim,)), "ln1_b": jnp.zeros((dim,)),
        "conv1_w": nrm(kg, (filt, dim, k)), "conv1_b": jnp.zeros((filt,)),
        "conv2_w": nrm(kg, (dim, filt, k)), "conv2_b": jnp.zeros((dim,)),
        "ln2_g": jnp.ones((dim,)), "ln2_b": jnp.zeros((dim,)),
    }


def init_predictor(kg, dim, filt, k):
    return {
        "c1_w": nrm(kg, (filt, dim, k)), "c1_b": jnp.zeros((filt,)),
        "ln1_g": jnp.ones((filt,)), "ln1_b": jnp.zeros((filt,)),
        "c2_w": nrm(kg, (filt, filt, k)), "c2_b": jnp.zeros((filt,)),
        "ln2_g": jnp.ones((filt,)), "ln2_b": jnp.zeros((filt,)),
        "lin_w": nrm(kg, (filt, 1)), "lin_b": jnp.zeros((1,)),
    }


def init_params(key, cfg):
    kg = KeyGen(key)
    n_pos = cfg["mel_max_len"] + 1
    enc_dim, dec_dim = cfg["encoder_dim"], cfg["decoder_dim"]
    params = {
        "encoder": {
            "word_emb": nrm(kg, (cfg["vocab_size"], enc_dim), scale=0.1),
            "pos_table": sinusoid_table(n_pos, enc_dim),
            "layers": [init_fft_layer(kg, enc_dim, cfg["encoder_conv1d_filter_size"],
                                      cfg["fft_kernel"])
                       for _ in range(cfg["encoder_n_layer"])],
        },
        "variance_adapter": {
            "duration": init_predictor(kg, enc_dim, cfg["predictor_filter_size"],
                                       cfg["predictor_kernel_size"]),
            "energy": init_predictor(kg, enc_dim, cfg["predictor_filter_size"],
                                     cfg["predictor_kernel_size"]),
            "pitch": init_predictor(kg, enc_dim, cfg["predictor_filter_size"],
                                    cfg["predictor_kernel_size"]),
            "energy_bins": jnp.linspace(-1.0, 1.0, cfg["n_bins"] - 1),
            "energy_emb": nrm(kg, (cfg["n_bins"], enc_dim), scale=0.1),
            "pitch_bins": jnp.linspace(-1.0, 1.0, cfg["n_bins"] - 1),
            "pitch_emb": nrm(kg, (cfg["n_bins"], enc_dim), scale=0.1),
        },
        "decoder": {
            "pos_table": sinusoid_table(n_pos, dec_dim),
            "layers": [init_fft_layer(kg, dec_dim, cfg["decoder_conv1d_filter_size"],
                                      cfg["fft_kernel"])
                       for _ in range(cfg["decoder_n_layer"])],
        },
        "mel_linear_w": nrm(kg, (dec_dim, cfg["num_mels"])),
        "mel_linear_b": jnp.zeros((cfg["num_mels"],)),
    }
    return params


# ----------------------------------------------------------------------------
# Main
# ----------------------------------------------------------------------------

if __name__ == "__main__":
    cfg = dict(
        vocab_size=32, encoder_dim=32, decoder_dim=32,
        encoder_head=2, decoder_head=2,
        encoder_conv1d_filter_size=64, decoder_conv1d_filter_size=64,
        fft_kernel=3, encoder_n_layer=2, decoder_n_layer=2,
        predictor_filter_size=32, predictor_kernel_size=3,
        num_mels=16, n_bins=16, mel_max_len=32,
    )

    key = jax.random.PRNGKey(0)
    k_param, k_text = jax.random.split(key)
    params = init_params(k_param, cfg)

    B, S = 2, 8
    lengths = jnp.array([8, 6], dtype=jnp.int32)
    pos_ids = jnp.arange(1, S + 1, dtype=jnp.int32)[None, :]
    src_pos = jnp.where(pos_ids <= lengths[:, None], pos_ids, 0)          # (B, S)
    text = jax.random.randint(k_text, (B, S), 1, cfg["vocab_size"], dtype=jnp.int32)
    text = text * (src_pos != 0).astype(jnp.int32)

    fwd = jax.jit(lambda p, t, sp: fastspeech_forward(p, cfg, t, sp,
                                                      length_coeff=1.0,
                                                      energy_coeff=1.0,
                                                      pitch_coeff=1.0))
    out = fwd(params, text, src_pos)
    mel = jax.block_until_ready(out["mel_output"])
    assert mel.shape == (B, cfg["mel_max_len"], cfg["num_mels"])
    assert jnp.all(jnp.isfinite(mel))
    print("KERNEL_OK")
</pallas_src>

<mosaic_0001>
module attributes {stable_mosaic.version = 11 : i64} {
  func.func @_qkv_kernel(%arg0: i32, %arg1: memref<16x32xf32, #tpu.memory_space<vmem>>, %arg2: memref<32x96xbf16, #tpu.memory_space<vmem>>, %arg3: memref<1x96xf32, #tpu.memory_space<vmem>>, %arg4: memref<16x32xbf16, #tpu.memory_space<vmem>>, %arg5: memref<16x32xbf16, #tpu.memory_space<vmem>>, %arg6: memref<16x32xbf16, #tpu.memory_space<vmem>>) attributes {dimension_semantics = [#tpu.dimension_semantics<parallel>], iteration_bounds = array<i64: 1>, scalar_prefetch = 0 : i64, scratch_operands = 0 : i64, tpu.core_type = #tpu.core_type<tc>, window_params = [{transform_indices = @transform_0, window_bounds = array<i64: 16, 32>}, {pipeline_mode = #tpu.pipeline_mode<synchronous>, transform_indices = @transform_1, window_bounds = array<i64: 32, 96>}, {pipeline_mode = #tpu.pipeline_mode<synchronous>, transform_indices = @transform_2, window_bounds = array<i64: 1, 96>}, {transform_indices = @transform_3, window_bounds = array<i64: 16, 32>}, {transform_indices = @transform_4, window_bounds = array<i64: 16, 32>}, {transform_indices = @transform_5, window_bounds = array<i64: 16, 32>}]} {
    %c0 = arith.constant 0 : index
    %c0_0 = arith.constant 0 : index
    %0 = vector.load %arg1[%c0, %c0_0] : memref<16x32xf32, #tpu.memory_space<vmem>>, vector<16x32xf32>
    %1 = arith.truncf %0 : vector<16x32xf32> to vector<16x32xbf16>
    %c0_1 = arith.constant 0 : index
    %c0_2 = arith.constant 0 : index
    %2 = vector.load %arg2[%c0_1, %c0_2] : memref<32x96xbf16, #tpu.memory_space<vmem>>, vector<32x96xbf16>
    %cst = arith.constant dense<0.000000e+00> : vector<16x96xf32>
    %3 = tpu.matmul %1, %2, %cst {dimension_numbers = #tpu.dot_dimension_numbers<[1], [0], [0], [1], [0, 0, 1, 1], [], []>} : vector<16x32xbf16>, vector<32x96xbf16>, vector<16x96xf32> -> vector<16x96xf32>
    %c0_3 = arith.constant 0 : index
    %c0_4 = arith.constant 0 : index
    %4 = vector.load %arg3[%c0_3, %c0_4] : memref<1x96xf32, #tpu.memory_space<vmem>>, vector<1x96xf32>
    %5 = vector.broadcast %4 : vector<1x96xf32> to vector<16x96xf32>
    %6 = arith.addf %3, %5 : vector<16x96xf32>
    %7 = arith.truncf %6 : vector<16x96xf32> to vector<16x96xbf16>
    %8 = vector.extract_strided_slice %7 {offsets = [0, 0], sizes = [16, 32], strides = [1, 1]} : vector<16x96xbf16> to vector<16x32xbf16>
    %c0_5 = arith.constant 0 : index
    %c0_6 = arith.constant 0 : index
    %9 = vector.load %arg4[%c0_5, %c0_6] : memref<16x32xbf16, #tpu.memory_space<vmem>>, vector<16x32xbf16>
    tpu.vector_store %arg4[%c0_5, %c0_6], %8 {strides = array<i32>} : memref<16x32xbf16, #tpu.memory_space<vmem>>, vector<16x32xbf16>,
    %10 = vector.extract_strided_slice %7 {offsets = [0, 32], sizes = [16, 32], strides = [1, 1]} : vector<16x96xbf16> to vector<16x32xbf16>
    %c0_7 = arith.constant 0 : index
    %c0_8 = arith.constant 0 : index
    %11 = vector.load %arg5[%c0_7, %c0_8] : memref<16x32xbf16, #tpu.memory_space<vmem>>, vector<16x32xbf16>
    tpu.vector_store %arg5[%c0_7, %c0_8], %10 {strides = array<i32>} : memref<16x32xbf16, #tpu.memory_space<vmem>>, vector<16x32xbf16>,
    %12 = vector.extract_strided_slice %7 {offsets = [0, 64], sizes = [16, 32], strides = [1, 1]} : vector<16x96xbf16> to vector<16x32xbf16>
    %c0_9 = arith.constant 0 : index
    %c0_10 = arith.constant 0 : index
    %13 = vector.load %arg6[%c0_9, %c0_10] : memref<16x32xbf16, #tpu.memory_space<vmem>>, vector<16x32xbf16>
    tpu.vector_store %arg6[%c0_9, %c0_10], %12 {strides = array<i32>} : memref<16x32xbf16, #tpu.memory_space<vmem>>, vector<16x32xbf16>,
    return
  }
  func.func @transform_0(%arg0: i32) -> (i32, i32) {
    %c0_i32 = arith.constant 0 : i32
    %c0_i32_0 = arith.constant 0 : i32
    return %arg0, %c0_i32 : i32, i32
  }
  func.func @transform_1(%arg0: i32) -> (i32, i32) {
    %c0_i32 = arith.constant 0 : i32
    %c0_i32_0 = arith.constant 0 : i32
    %c0_i32_1 = arith.constant 0 : i32
    return %c0_i32, %c0_i32_0 : i32, i32
  }
  func.func @transform_2(%arg0: i32) -> (i32, i32) {
    %c0_i32 = arith.constant 0 : i32
    %c0_i32_0 = arith.constant 0 : i32
    %c0_i32_1 = arith.constant 0 : i32
    return %c0_i32, %c0_i32_0 : i32, i32
  }
  func.func @transform_3(%arg0: i32) -> (i32, i32) {
    %c0_i32 = arith.constant 0 : i32
    %c0_i32_0 = arith.constant 0 : i32
    return %arg0, %c0_i32 : i32, i32
  }
  func.func @transform_4(%arg0: i32) -> (i32, i32) {
    %c0_i32 = arith.constant 0 : i32
    %c0_i32_0 = arith.constant 0 : i32
    return %arg0, %c0_i32 : i32, i32
  }
  func.func @transform_5(%arg0: i32) -> (i32, i32) {
    %c0_i32 = arith.constant 0 : i32
    %c0_i32_0 = arith.constant 0 : i32
    return %arg0, %c0_i32 : i32, i32
  }
}

module attributes {stable_mosaic.version = 11 : i64} {
  func.func @_mha_kernel(%arg0: i32, %arg1: i32, %arg2: memref<1x8x32xbf16, #tpu.memory_space<vmem>>, %arg3: memref<1x8x32xbf16, #tpu.memory_space<vmem>>, %arg4: memref<1x8x32xbf16, #tpu.memory_space<vmem>>, %arg5: memref<1x1x8xf32, #tpu.memory_space<vmem>>, %arg6: memref<32x32xbf16, #tpu.memory_space<vmem>>, %arg7: memref<1x32xf32, #tpu.memory_space<vmem>>, %arg8: memref<1x8x32xf32, #tpu.memory_space<vmem>>) attributes {dimension_semantics = [#tpu.dimension_semantics<parallel>, #tpu.dimension_semantics<parallel>], iteration_bounds = array<i64: 2, 1>, scalar_prefetch = 0 : i64, scratch_operands = 0 : i64, tpu.core_type = #tpu.core_type<tc>, window_params = [{transform_indices = @transform_0, window_bounds = array<i64: 1, 8, 32>}, {transform_indices = @transform_1, window_bounds = array<i64: 1, 8, 32>}, {transform_indices = @transform_2, window_bounds = array<i64: 1, 8, 32>}, {transform_indices = @transform_3, window_bounds = array<i64: 1, 1, 8>}, {pipeline_mode = #tpu.pipeline_mode<synchronous>, transform_indices = @transform_4, window_bounds = array<i64: 32, 32>}, {pipeline_mode = #tpu.pipeline_mode<synchronous>, transform_indices = @transform_5, window_bounds = array<i64: 1, 32>}, {transform_indices = @transform_6, window_bounds = array<i64: 1, 8, 32>}]} {
    %c0 = arith.constant 0 : index
    %c0_0 = arith.constant 0 : index
    %c0_1 = arith.constant 0 : index
    %0 = vector.load %arg5[%c0, %c0_0, %c0_1] : memref<1x1x8xf32, #tpu.memory_space<vmem>>, vector<1x1x8xf32>
    %1 = vector.shape_cast %0 : vector<1x1x8xf32> to vector<1x8xf32>
    %cst = arith.constant 0.000000e+00 : f32
    %2 = vector.broadcast %cst : f32 to vector<8x32xf32>
    %c0_2 = arith.constant 0 : index
    %c0_3 = arith.constant 0 : index
    %c0_4 = arith.constant 0 : index
    %3 = vector.load %arg2[%c0_2, %c0_3, %c0_4] : memref<1x8x32xbf16, #tpu.memory_space<vmem>>, vector<1x8x16xbf16>
    %4 = vector.shape_cast %3 : vector<1x8x16xbf16> to vector<8x16xbf16>
    %c0_5 = arith.constant 0 : index
    %c0_6 = arith.constant 0 : index
    %c0_7 = arith.constant 0 : index
    %5 = vector.load %arg3[%c0_5, %c0_6, %c0_7] : memref<1x8x32xbf16, #tpu.memory_space<vmem>>, vector<1x8x16xbf16>
    %6 = vector.shape_cast %5 : vector<1x8x16xbf16> to vector<8x16xbf16>
    %c0_8 = arith.constant 0 : index
    %c0_9 = arith.constant 0 : index
    %c0_10 = arith.constant 0 : index
    %7 = vector.load %arg4[%c0_8, %c0_9, %c0_10] : memref<1x8x32xbf16, #tpu.memory_space<vmem>>, vector<1x8x16xbf16>
    %8 = vector.shape_cast %7 : vector<1x8x16xbf16> to vector<8x16xbf16>
    %cst_11 = arith.constant dense<0.000000e+00> : vector<8x8xf32>
    %9 = tpu.matmul %4, %6, %cst_11 {dimension_numbers = #tpu.dot_dimension_numbers<[1], [1], [0], [0], [0, 0, 1, 0], [], []>} : vector<8x16xbf16>, vector<8x16xbf16>, vector<8x8xf32> -> vector<8x8xf32>
    %cst_12 = arith.constant 2.500000e-01 : f32
    %10 = vector.broadcast %cst_12 : f32 to vector<8x8xf32>
    %11 = arith.mulf %9, %10 : vector<8x8xf32>
    %12 = vector.broadcast %1 : vector<1x8xf32> to vector<8x8xf32>
    %13 = arith.addf %11, %12 : vector<8x8xf32>
    %cst_13 = arith.constant dense<0xFF800000> : vector<8xf32>
    %14 = vector.multi_reduction <maximumf>, %13, %cst_13 [1] : vector<8x8xf32> to vector<8xf32>
    %15 = vector.shape_cast %14 : vector<8xf32> to vector<8x1xf32>
    %16 = vector.broadcast %15 : vector<8x1xf32> to vector<8x8xf32>
    %17 = arith.subf %13, %16 : vector<8x8xf32>
    %18 = math.exp %17 : vector<8x8xf32>
    %cst_14 = arith.constant dense<0.000000e+00> : vector<8xf32>
    %19 = vector.multi_reduction <add>, %18, %cst_14 [1] : vector<8x8xf32> to vector<8xf32>
    %20 = vector.shape_cast %19 : vector<8xf32> to vector<8x1xf32>
    %21 = tpu.reciprocal %20 {approx = true} : vector<8x1xf32> -> vector<8x1xf32>
    %22 = vector.broadcast %21 : vector<8x1xf32> to vector<8x8xf32>
    %23 = arith.mulf %18, %22 : vector<8x8xf32>
    %24 = arith.truncf %23 : vector<8x8xf32> to vector<8x8xbf16>
    %cst_15 = arith.constant dense<0.000000e+00> : vector<8x16xf32>
    %25 = tpu.matmul %24, %8, %cst_15 {dimension_numbers = #tpu.dot_dimension_numbers<[1], [0], [0], [1], [0, 0, 1, 1], [], []>} : vector<8x8xbf16>, vector<8x16xbf16>, vector<8x16xf32> -> vector<8x16xf32>
    %26 = arith.truncf %25 : vector<8x16xf32> to vector<8x16xbf16>
    %c0_16 = arith.constant 0 : index
    %c0_17 = arith.constant 0 : index
    %27 = vector.load %arg6[%c0_16, %c0_17] : memref<32x32xbf16, #tpu.memory_space<vmem>>, vector<16x32xbf16>
    %cst_18 = arith.constant dense<0.000000e+00> : vector<8x32xf32>
    %28 = tpu.matmul %26, %27, %cst_18 {dimension_numbers = #tpu.dot_dimension_numbers<[1], [0], [0], [1], [0, 0, 1, 1], [], []>} : vector<8x16xbf16>, vector<16x32xbf16>, vector<8x32xf32> -> vector<8x32xf32>
    %29 = arith.addf %2, %28 : vector<8x32xf32>
    %c0_19 = arith.constant 0 : index
    %c0_20 = arith.constant 0 : index
    %c16 = arith.constant 16 : index
    %30 = vector.load %arg2[%c0_19, %c0_20, %c16] : memref<1x8x32xbf16, #tpu.memory_space<vmem>>, vector<1x8x16xbf16>
    %31 = vector.shape_cast %30 : vector<1x8x16xbf16> to vector<8x16xbf16>
    %c0_21 = arith.constant 0 : index
    %c0_22 = arith.constant 0 : index
    %c16_23 = arith.constant 16 : index
    %32 = vector.load %arg3[%c0_21, %c0_22, %c16_23] : memref<1x8x32xbf16, #tpu.memory_space<vmem>>, vector<1x8x16xbf16>
    %33 = vector.shape_cast %32 : vector<1x8x16xbf16> to vector<8x16xbf16>
    %c0_24 = arith.constant 0 : index
    %c0_25 = arith.constant 0 : index
    %c16_26 = arith.constant 16 : index
    %34 = vector.load %arg4[%c0_24, %c0_25, %c16_26] : memref<1x8x32xbf16, #tpu.memory_space<vmem>>, vector<1x8x16xbf16>
    %35 = vector.shape_cast %34 : vector<1x8x16xbf16> to vector<8x16xbf16>
    %cst_27 = arith.constant dense<0.000000e+00> : vector<8x8xf32>
    %36 = tpu.matmul %31, %33, %cst_27 {dimension_numbers = #tpu.dot_dimension_numbers<[1], [1], [0], [0], [0, 0, 1, 0], [], []>} : vector<8x16xbf16>, vector<8x16xbf16>, vector<8x8xf32> -> vector<8x8xf32>
    %cst_28 = arith.constant 2.500000e-01 : f32
    %37 = vector.broadcast %cst_28 : f32 to vector<8x8xf32>
    %38 = arith.mulf %36, %37 : vector<8x8xf32>
    %39 = vector.broadcast %1 : vector<1x8xf32> to vector<8x8xf32>
    %40 = arith.addf %38, %39 : vector<8x8xf32>
    %cst_29 = arith.constant dense<0xFF800000> : vector<8xf32>
    %41 = vector.multi_reduction <maximumf>, %40, %cst_29 [1] : vector<8x8xf32> to vector<8xf32>
    %42 = vector.shape_cast %41 : vector<8xf32> to vector<8x1xf32>
    %43 = vector.broadcast %42 : vector<8x1xf32> to vector<8x8xf32>
    %44 = arith.subf %40, %43 : vector<8x8xf32>
    %45 = math.exp %44 : vector<8x8xf32>
    %cst_30 = arith.constant dense<0.000000e+00> : vector<8xf32>
    %46 = vector.multi_reduction <add>, %45, %cst_30 [1] : vector<8x8xf32> to vector<8xf32>
    %47 = vector.shape_cast %46 : vector<8xf32> to vector<8x1xf32>
    %48 = tpu.reciprocal %47 {approx = true} : vector<8x1xf32> -> vector<8x1xf32>
    %49 = vector.broadcast %48 : vector<8x1xf32> to vector<8x8xf32>
    %50 = arith.mulf %45, %49 : vector<8x8xf32>
    %51 = arith.truncf %50 : vector<8x8xf32> to vector<8x8xbf16>
    %cst_31 = arith.constant dense<0.000000e+00> : vector<8x16xf32>
    %52 = tpu.matmul %51, %35, %cst_31 {dimension_numbers = #tpu.dot_dimension_numbers<[1], [0], [0], [1], [0, 0, 1, 1], [], []>} : vector<8x8xbf16>, vector<8x16xbf16>, vector<8x16xf32> -> vector<8x16xf32>
    %53 = arith.truncf %52 : vector<8x16xf32> to vector<8x16xbf16>
    %c16_32 = arith.constant 16 : index
    %c0_33 = arith.constant 0 : index
    %54 = vector.load %arg6[%c16_32, %c0_33] : memref<32x32xbf16, #tpu.memory_space<vmem>>, vector<16x32xbf16>
    %cst_34 = arith.constant dense<0.000000e+00> : vector<8x32xf32>
    %55 = tpu.matmul %53, %54, %cst_34 {dimension_numbers = #tpu.dot_dimension_numbers<[1], [0], [0], [1], [0, 0, 1, 1], [], []>} : vector<8x16xbf16>, vector<16x32xbf16>, vector<8x32xf32> -> vector<8x32xf32>
    %56 = arith.addf %29, %55 : vector<8x32xf32>
    %c0_35 = arith.constant 0 : index
    %c0_36 = arith.constant 0 : index
    %57 = vector.load %arg7[%c0_35, %c0_36] : memref<1x32xf32, #tpu.memory_space<vmem>>, vector<1x32xf32>
    %58 = vector.broadcast %57 : vector<1x32xf32> to vector<8x32xf32>
    %59 = arith.addf %56, %58 : vector<8x32xf32>
    %c0_37 = arith.constant 0 : index
    %c0_38 = arith.constant 0 : index
    %c0_39 = arith.constant 0 : index
    %60 = vector.load %arg8[%c0_37, %c0_38, %c0_39] : memref<1x8x32xf32, #tpu.memory_space<vmem>>, vector<1x8x32xf32>
    %61 = vector.shape_cast %60 : vector<1x8x32xf32> to vector<8x32xf32>
    %62 = vector.shape_cast %59 : vector<8x32xf32> to vector<1x8x32xf32>
    tpu.vector_store %arg8[%c0_37, %c0_38, %c0_39], %62 {strides = array<i32>} : memref<1x8x32xf32, #tpu.memory_space<vmem>>, vector<1x8x32xf32>,
    return
  }
  func.func @transform_0(%arg0: i32, %arg1: i32) -> (i32, i32, i32) {
    %c0_i32 = arith.constant 0 : i32
    %c0_i32_0 = arith.constant 0 : i32
    return %arg0, %arg1, %c0_i32 : i32, i32, i32
  }
  func.func @transform_1(%arg0: i32, %arg1: i32) -> (i32, i32, i32) {
    %c0_i32 = arith.constant 0 : i32
    %c0_i32_0 = arith.constant 0 : i32
    %c0_i32_1 = arith.constant 0 : i32
    return %arg0, %c0_i32, %c0_i32_0 : i32, i32, i32
  }
  func.func @transform_2(%arg0: i32, %arg1: i32) -> (i32, i32, i32) {
    %c0_i32 = arith.constant 0 : i32
    %c0_i32_0 = arith.constant 0 : i32
    %c0_i32_1 = arith.constant 0 : i32
    return %arg0, %c0_i32, %c0_i32_0 : i32, i32, i32
  }
  func.func @transform_3(%arg0: i32, %arg1: i32) -> (i32, i32, i32) {
    %c0_i32 = arith.constant 0 : i32
    %c0_i32_0 = arith.constant 0 : i32
    %c0_i32_1 = arith.constant 0 : i32
    return %arg0, %c0_i32, %c0_i32_0 : i32, i32, i32
  }
  func.func @transform_4(%arg0: i32, %arg1: i32) -> (i32, i32) {
    %c0_i32 = arith.constant 0 : i32
    %c0_i32_0 = arith.constant 0 : i32
    %c0_i32_1 = arith.constant 0 : i32
    return %c0_i32, %c0_i32_0 : i32, i32
  }
  func.func @transform_5(%arg0: i32, %arg1: i32) -> (i32, i32) {
    %c0_i32 = arith.constant 0 : i32
    %c0_i32_0 = arith.constant 0 : i32
    %c0_i32_1 = arith.constant 0 : i32
    return %c0_i32, %c0_i32_0 : i32, i32
  }
  func.func @transform_6(%arg0: i32, %arg1: i32) -> (i32, i32, i32) {
    %c0_i32 = arith.constant 0 : i32
    %c0_i32_0 = arith.constant 0 : i32
    return %arg0, %arg1, %c0_i32 : i32, i32, i32
  }
}

module attributes {stable_mosaic.version = 11 : i64} {
  func.func @_ffn_tail_kernel(%arg0: i32, %arg1: memref<1x8x32xf32, #tpu.memory_space<vmem>>, %arg2: memref<1x8x32xf32, #tpu.memory_space<vmem>>, %arg3: memref<1x8x1xf32, #tpu.memory_space<vmem>>, %arg4: memref<1x32xf32, #tpu.memory_space<vmem>>, %arg5: memref<1x32xf32, #tpu.memory_space<vmem>>, %arg6: memref<3x32x64xbf16, #tpu.memory_space<vmem>>, %arg7: memref<1x64xf32, #tpu.memory_space<vmem>>, %arg8: memref<3x64x32xbf16, #tpu.memory_space<vmem>>, %arg9: memref<1x32xf32, #tpu.memory_space<vmem>>, %arg10: memref<1x32xf32, #tpu.memory_space<vmem>>, %arg11: memref<1x32xf32, #tpu.memory_space<vmem>>, %arg12: memref<1x8x32xf32, #tpu.memory_space<vmem>>, %arg13: memref<24x32xbf16, #tpu.memory_space<vmem>>, %arg14: memref<24x64xbf16, #tpu.memory_space<vmem>>) attributes {dimension_semantics = [#tpu.dimension_semantics<parallel>], iteration_bounds = array<i64: 2>, scalar_prefetch = 0 : i64, scratch_operands = 2 : i64, tpu.core_type = #tpu.core_type<tc>, window_params = [{transform_indices = @transform_0, window_bounds = array<i64: 1, 8, 32>}, {transform_indices = @transform_1, window_bounds = array<i64: 1, 8, 32>}, {transform_indices = @transform_2, window_bounds = array<i64: 1, 8, 1>}, {pipeline_mode = #tpu.pipeline_mode<synchronous>, transform_indices = @transform_3, window_bounds = array<i64: 1, 32>}, {pipeline_mode = #tpu.pipeline_mode<synchronous>, transform_indices = @transform_4, window_bounds = array<i64: 1, 32>}, {pipeline_mode = #tpu.pipeline_mode<synchronous>, transform_indices = @transform_5, window_bounds = array<i64: 3, 32, 64>}, {pipeline_mode = #tpu.pipeline_mode<synchronous>, transform_indices = @transform_6, window_bounds = array<i64: 1, 64>}, {pipeline_mode = #tpu.pipeline_mode<synchronous>, transform_indices = @transform_7, window_bounds = array<i64: 3, 64, 32>}, {pipeline_mode = #tpu.pipeline_mode<synchronous>, transform_indices = @transform_8, window_bounds = array<i64: 1, 32>}, {pipeline_mode = #tpu.pipeline_mode<synchronous>, transform_indices = @transform_9, window_bounds = array<i64: 1, 32>}, {pipeline_mode = #tpu.pipeline_mode<synchronous>, transform_indices = @transform_10, window_bounds = array<i64: 1, 32>}, {transform_indices = @transform_11, window_bounds = array<i64: 1, 8, 32>}]} {
    %c0 = arith.constant 0 : index
    %c0_0 = arith.constant 0 : index
    %c0_1 = arith.constant 0 : index
    %0 = vector.load %arg3[%c0, %c0_0, %c0_1] : memref<1x8x1xf32, #tpu.memory_space<vmem>>, vector<1x8x1xf32>
    %1 = vector.shape_cast %0 : vector<1x8x1xf32> to vector<8x1xf32>
    %c0_2 = arith.constant 0 : index
    %c0_3 = arith.constant 0 : index
    %c0_4 = arith.constant 0 : index
    %2 = vector.load %arg1[%c0_2, %c0_3, %c0_4] : memref<1x8x32xf32, #tpu.memory_space<vmem>>, vector<1x8x32xf32>
    %3 = vector.shape_cast %2 : vector<1x8x32xf32> to vector<8x32xf32>
    %c0_5 = arith.constant 0 : index
    %c0_6 = arith.constant 0 : index
    %c0_7 = arith.constant 0 : index
    %4 = vector.load %arg2[%c0_5, %c0_6, %c0_7] : memref<1x8x32xf32, #tpu.memory_space<vmem>>, vector<1x8x32xf32>
    %5 = vector.shape_cast %4 : vector<1x8x32xf32> to vector<8x32xf32>
    %6 = arith.addf %3, %5 : vector<8x32xf32>
    %cst = arith.constant dense<0.000000e+00> : vector<8xf32>
    %7 = vector.multi_reduction <add>, %6, %cst [1] : vector<8x32xf32> to vector<8xf32>
    %8 = vector.shape_cast %7 : vector<8xf32> to vector<8x1xf32>
    %cst_8 = arith.constant 3.200000e+01 : f32
    %9 = vector.broadcast %cst_8 : f32 to vector<8x1xf32>
    %10 = arith.divf %8, %9 : vector<8x1xf32>
    %11 = vector.broadcast %10 : vector<8x1xf32> to vector<8x32xf32>
    %12 = arith.subf %6, %11 : vector<8x32xf32>
    %13 = arith.mulf %12, %12 : vector<8x32xf32>
    %cst_9 = arith.constant dense<0.000000e+00> : vector<8xf32>
    %14 = vector.multi_reduction <add>, %13, %cst_9 [1] : vector<8x32xf32> to vector<8xf32>
    %15 = vector.shape_cast %14 : vector<8xf32> to vector<8x1xf32>
    %cst_10 = arith.constant 3.200000e+01 : f32
    %16 = vector.broadcast %cst_10 : f32 to vector<8x1xf32>
    %17 = arith.divf %15, %16 : vector<8x1xf32>
    %18 = vector.broadcast %10 : vector<8x1xf32> to vector<8x32xf32>
    %19 = arith.subf %6, %18 : vector<8x32xf32>
    %cst_11 = arith.constant 9.99999974E-6 : f32
    %20 = vector.broadcast %cst_11 : f32 to vector<8x1xf32>
    %21 = arith.addf %17, %20 : vector<8x1xf32>
    %22 = math.rsqrt %21 : vector<8x1xf32>
    %23 = vector.broadcast %22 : vector<8x1xf32> to vector<8x32xf32>
    %24 = arith.mulf %19, %23 : vector<8x32xf32>
    %c0_12 = arith.constant 0 : index
    %c0_13 = arith.constant 0 : index
    %25 = vector.load %arg4[%c0_12, %c0_13] : memref<1x32xf32, #tpu.memory_space<vmem>>, vector<1x32xf32>
    %26 = vector.broadcast %25 : vector<1x32xf32> to vector<8x32xf32>
    %27 = arith.mulf %24, %26 : vector<8x32xf32>
    %c0_14 = arith.constant 0 : index
    %c0_15 = arith.constant 0 : index
    %28 = vector.load %arg5[%c0_14, %c0_15] : memref<1x32xf32, #tpu.memory_space<vmem>>, vector<1x32xf32>
    %29 = vector.broadcast %28 : vector<1x32xf32> to vector<8x32xf32>
    %30 = arith.addf %27, %29 : vector<8x32xf32>
    %31 = vector.broadcast %1 : vector<8x1xf32> to vector<8x32xf32>
    %32 = arith.mulf %30, %31 : vector<8x32xf32>
    %cst_16 = arith.constant 0.000000e+00 : bf16
    %33 = vector.broadcast %cst_16 : bf16 to vector<8x32xbf16>
    %c0_17 = arith.constant 0 : index
    %c0_18 = arith.constant 0 : index
    %34 = vector.load %arg13[%c0_17, %c0_18] : memref<24x32xbf16, #tpu.memory_space<vmem>>, vector<8x32xbf16>
    tpu.vector_store %arg13[%c0_17, %c0_18], %33 {strides = array<i32>} : memref<24x32xbf16, #tpu.memory_space<vmem>>, vector<8x32xbf16>,
    %cst_19 = arith.constant 0.000000e+00 : bf16
    %35 = vector.broadcast %cst_19 : bf16 to vector<8x32xbf16>
    %c16 = arith.constant 16 : index
    %c0_20 = arith.constant 0 : index
    %36 = vector.load %arg13[%c16, %c0_20] : memref<24x32xbf16, #tpu.memory_space<vmem>>, vector<8x32xbf16>
    tpu.vector_store %arg13[%c16, %c0_20], %35 {strides = array<i32>} : memref<24x32xbf16, #tpu.memory_space<vmem>>, vector<8x32xbf16>,
    %37 = arith.truncf %32 : vector<8x32xf32> to vector<8x32xbf16>
    %c8 = arith.constant 8 : index
    %c0_21 = arith.constant 0 : index
    %38 = vector.load %arg13[%c8, %c0_21] : memref<24x32xbf16, #tpu.memory_space<vmem>>, vector<8x32xbf16>
    tpu.vector_store %arg13[%c8, %c0_21], %37 {strides = array<i32>} : memref<24x32xbf16, #tpu.memory_space<vmem>>, vector<8x32xbf16>,
    %cst_22 = arith.constant 0.000000e+00 : f32
    %39 = vector.broadcast %cst_22 : f32 to vector<8x64xf32>
    %c7 = arith.constant 7 : index
    %c0_23 = arith.constant 0 : index
    %40 = vector.load %arg13[%c7, %c0_23] : memref<24x32xbf16, #tpu.memory_space<vmem>>, vector<8x32xbf16>
    %c0_24 = arith.constant 0 : index
    %c0_25 = arith.constant 0 : index
    %c0_26 = arith.constant 0 : index
    %41 = vector.load %arg6[%c0_24, %c0_25, %c0_26] : memref<3x32x64xbf16, #tpu.memory_space<vmem>>, vector<1x32x64xbf16>
    %42 = vector.shape_cast %41 : vector<1x32x64xbf16> to vector<32x64xbf16>
    %cst_27 = arith.constant dense<0.000000e+00> : vector<8x64xf32>
    %43 = tpu.matmul %40, %42, %cst_27 {dimension_numbers = #tpu.dot_dimension_numbers<[1], [0], [0], [1], [0, 0, 1, 1], [], []>} : vector<8x32xbf16>, vector<32x64xbf16>, vector<8x64xf32> -> vector<8x64xf32>
    %44 = arith.addf %39, %43 : vector<8x64xf32>
    %c8_28 = arith.constant 8 : index
    %c0_29 = arith.constant 0 : index
    %45 = vector.load %arg13[%c8_28, %c0_29] : memref<24x32xbf16, #tpu.memory_space<vmem>>, vector<8x32xbf16>
    %c1 = arith.constant 1 : index
    %c0_30 = arith.constant 0 : index
    %c0_31 = arith.constant 0 : index
    %46 = vector.load %arg6[%c1, %c0_30, %c0_31] : memref<3x32x64xbf16, #tpu.memory_space<vmem>>, vector<1x32x64xbf16>
    %47 = vector.shape_cast %46 : vector<1x32x64xbf16> to vector<32x64xbf16>
    %cst_32 = arith.constant dense<0.000000e+00> : vector<8x64xf32>
    %48 = tpu.matmul %45, %47, %cst_32 {dimension_numbers = #tpu.dot_dimension_numbers<[1], [0], [0], [1], [0, 0, 1, 1], [], []>} : vector<8x32xbf16>, vector<32x64xbf16>, vector<8x64xf32> -> vector<8x64xf32>
    %49 = arith.addf %44, %48 : vector<8x64xf32>
    %c9 = arith.constant 9 : index
    %c0_33 = arith.constant 0 : index
    %50 = vector.load %arg13[%c9, %c0_33] : memref<24x32xbf16, #tpu.memory_space<vmem>>, vector<8x32xbf16>
    %c2 = arith.constant 2 : index
    %c0_34 = arith.constant 0 : index
    %c0_35 = arith.constant 0 : index
    %51 = vector.load %arg6[%c2, %c0_34, %c0_35] : memref<3x32x64xbf16, #tpu.memory_space<vmem>>, vector<1x32x64xbf16>
    %52 = vector.shape_cast %51 : vector<1x32x64xbf16> to vector<32x64xbf16>
    %cst_36 = arith.constant dense<0.000000e+00> : vector<8x64xf32>
    %53 = tpu.matmul %50, %52, %cst_36 {dimension_numbers = #tpu.dot_dimension_numbers<[1], [0], [0], [1], [0, 0, 1, 1], [], []>} : vector<8x32xbf16>, vector<32x64xbf16>, vector<8x64xf32> -> vector<8x64xf32>
    %54 = arith.addf %49, %53 : vector<8x64xf32>
    %c0_37 = arith.constant 0 : index
    %c0_38 = arith.constant 0 : index
    %55 = vector.load %arg7[%c0_37, %c0_38] : memref<1x64xf32, #tpu.memory_space<vmem>>, vector<1x64xf32>
    %56 = vector.broadcast %55 : vector<1x64xf32> to vector<8x64xf32>
    %57 = arith.addf %54, %56 : vector<8x64xf32>
    %cst_39 = arith.constant 0.000000e+00 : f32
    %58 = vector.broadcast %cst_39 : f32 to vector<8x64xf32>
    %59 = arith.maximumf %57, %58 : vector<8x64xf32>
    %cst_40 = arith.constant 0.000000e+00 : bf16
    %60 = vector.broadcast %cst_40 : bf16 to vector<8x64xbf16>
    %c0_41 = arith.constant 0 : index
    %c0_42 = arith.constant 0 : index
    %61 = vector.load %arg14[%c0_41, %c0_42] : memref<24x64xbf16, #tpu.memory_space<vmem>>, vector<8x64xbf16>
    tpu.vector_store %arg14[%c0_41, %c0_42], %60 {strides = array<i32>} : memref<24x64xbf16, #tpu.memory_space<vmem>>, vector<8x64xbf16>,
    %cst_43 = arith.constant 0.000000e+00 : bf16
    %62 = vector.broadcast %cst_43 : bf16 to vector<8x64xbf16>
    %c16_44 = arith.constant 16 : index
    %c0_45 = arith.constant 0 : index
    %63 = vector.load %arg14[%c16_44, %c0_45] : memref<24x64xbf16, #tpu.memory_space<vmem>>, vector<8x64xbf16>
    tpu.vector_store %arg14[%c16_44, %c0_45], %62 {strides = array<i32>} : memref<24x64xbf16, #tpu.memory_space<vmem>>, vector<8x64xbf16>,
    %64 = arith.truncf %59 : vector<8x64xf32> to vector<8x64xbf16>
    %c8_46 = arith.constant 8 : index
    %c0_47 = arith.constant 0 : index
    %65 = vector.load %arg14[%c8_46, %c0_47] : memref<24x64xbf16, #tpu.memory_space<vmem>>, vector<8x64xbf16>
    tpu.vector_store %arg14[%c8_46, %c0_47], %64 {strides = array<i32>} : memref<24x64xbf16, #tpu.memory_space<vmem>>, vector<8x64xbf16>,
    %cst_48 = arith.constant 0.000000e+00 : f32
    %66 = vector.broadcast %cst_48 : f32 to vector<8x32xf32>
    %c7_49 = arith.constant 7 : index
    %c0_50 = arith.constant 0 : index
    %67 = vector.load %arg14[%c7_49, %c0_50] : memref<24x64xbf16, #tpu.memory_space<vmem>>, vector<8x64xbf16>
    %c0_51 = arith.constant 0 : index
    %c0_52 = arith.constant 0 : index
    %c0_53 = arith.constant 0 : index
    %68 = vector.load %arg8[%c0_51, %c0_52, %c0_53] : memref<3x64x32xbf16, #tpu.memory_space<vmem>>, vector<1x64x32xbf16>
    %69 = vector.shape_cast %68 : vector<1x64x32xbf16> to vector<64x32xbf16>
    %cst_54 = arith.constant dense<0.000000e+00> : vector<8x32xf32>
    %70 = tpu.matmul %67, %69, %cst_54 {dimension_numbers = #tpu.dot_dimension_numbers<[1], [0], [0], [1], [0, 0, 1, 1], [], []>} : vector<8x64xbf16>, vector<64x32xbf16>, vector<8x32xf32> -> vector<8x32xf32>
    %71 = arith.addf %66, %70 : vector<8x32xf32>
    %c8_55 = arith.constant 8 : index
    %c0_56 = arith.constant 0 : index
    %72 = vector.load %arg14[%c8_55, %c0_56] : memref<24x64xbf16, #tpu.memory_space<vmem>>, vector<8x64xbf16>
    %c1_57 = arith.constant 1 : index
    %c0_58 = arith.constant 0 : index
    %c0_59 = arith.constant 0 : index
    %73 = vector.load %arg8[%c1_57, %c0_58, %c0_59] : memref<3x64x32xbf16, #tpu.memory_space<vmem>>, vector<1x64x32xbf16>
    %74 = vector.shape_cast %73 : vector<1x64x32xbf16> to vector<64x32xbf16>
    %cst_60 = arith.constant dense<0.000000e+00> : vector<8x32xf32>
    %75 = tpu.matmul %72, %74, %cst_60 {dimension_numbers = #tpu.dot_dimension_numbers<[1], [0], [0], [1], [0, 0, 1, 1], [], []>} : vector<8x64xbf16>, vector<64x32xbf16>, vector<8x32xf32> -> vector<8x32xf32>
    %76 = arith.addf %71, %75 : vector<8x32xf32>
    %c9_61 = arith.constant 9 : index
    %c0_62 = arith.constant 0 : index
    %77 = vector.load %arg14[%c9_61, %c0_62] : memref<24x64xbf16, #tpu.memory_space<vmem>>, vector<8x64xbf16>
    %c2_63 = arith.constant 2 : index
    %c0_64 = arith.constant 0 : index
    %c0_65 = arith.constant 0 : index
    %78 = vector.load %arg8[%c2_63, %c0_64, %c0_65] : memref<3x64x32xbf16, #tpu.memory_space<vmem>>, vector<1x64x32xbf16>
    %79 = vector.shape_cast %78 : vector<1x64x32xbf16> to vector<64x32xbf16>
    %cst_66 = arith.constant dense<0.000000e+00> : vector<8x32xf32>
    %80 = tpu.matmul %77, %79, %cst_66 {dimension_numbers = #tpu.dot_dimension_numbers<[1], [0], [0], [1], [0, 0, 1, 1], [], []>} : vector<8x64xbf16>, vector<64x32xbf16>, vector<8x32xf32> -> vector<8x32xf32>
    %81 = arith.addf %76, %80 : vector<8x32xf32>
    %c0_67 = arith.constant 0 : index
    %c0_68 = arith.constant 0 : index
    %82 = vector.load %arg9[%c0_67, %c0_68] : memref<1x32xf32, #tpu.memory_space<vmem>>, vector<1x32xf32>
    %83 = vector.broadcast %82 : vector<1x32xf32> to vector<8x32xf32>
    %84 = arith.addf %81, %83 : vector<8x32xf32>
    %85 = arith.addf %84, %32 : vector<8x32xf32>
    %cst_69 = arith.constant dense<0.000000e+00> : vector<8xf32>
    %86 = vector.multi_reduction <add>, %85, %cst_69 [1] : vector<8x32xf32> to vector<8xf32>
    %87 = vector.shape_cast %86 : vector<8xf32> to vector<8x1xf32>
    %cst_70 = arith.constant 3.200000e+01 : f32
    %88 = vector.broadcast %cst_70 : f32 to vector<8x1xf32>
    %89 = arith.divf %87, %88 : vector<8x1xf32>
    %90 = vector.broadcast %89 : vector<8x1xf32> to vector<8x32xf32>
    %91 = arith.subf %85, %90 : vector<8x32xf32>
    %92 = arith.mulf %91, %91 : vector<8x32xf32>
    %cst_71 = arith.constant dense<0.000000e+00> : vector<8xf32>
    %93 = vector.multi_reduction <add>, %92, %cst_71 [1] : vector<8x32xf32> to vector<8xf32>
    %94 = vector.shape_cast %93 : vector<8xf32> to vector<8x1xf32>
    %cst_72 = arith.constant 3.200000e+01 : f32
    %95 = vector.broadcast %cst_72 : f32 to vector<8x1xf32>
    %96 = arith.divf %94, %95 : vector<8x1xf32>
    %97 = vector.broadcast %89 : vector<8x1xf32> to vector<8x32xf32>
    %98 = arith.subf %85, %97 : vector<8x32xf32>
    %cst_73 = arith.constant 9.99999974E-6 : f32
    %99 = vector.broadcast %cst_73 : f32 to vector<8x1xf32>
    %100 = arith.addf %96, %99 : vector<8x1xf32>
    %101 = math.rsqrt %100 : vector<8x1xf32>
    %102 = vector.broadcast %101 : vector<8x1xf32> to vector<8x32xf32>
    %103 = arith.mulf %98, %102 : vector<8x32xf32>
    %c0_74 = arith.constant 0 : index
    %c0_75 = arith.constant 0 : index
    %104 = vector.load %arg10[%c0_74, %c0_75] : memref<1x32xf32, #tpu.memory_space<vmem>>, vector<1x32xf32>
    %105 = vector.broadcast %104 : vector<1x32xf32> to vector<8x32xf32>
    %106 = arith.mulf %103, %105 : vector<8x32xf32>
    %c0_76 = arith.constant 0 : index
    %c0_77 = arith.constant 0 : index
    %107 = vector.load %arg11[%c0_76, %c0_77] : memref<1x32xf32, #tpu.memory_space<vmem>>, vector<1x32xf32>
    %108 = vector.broadcast %107 : vector<1x32xf32> to vector<8x32xf32>
    %109 = arith.addf %106, %108 : vector<8x32xf32>
    %110 = vector.broadcast %1 : vector<8x1xf32> to vector<8x32xf32>
    %111 = arith.mulf %109, %110 : vector<8x32xf32>
    %c0_78 = arith.constant 0 : index
    %c0_79 = arith.constant 0 : index
    %c0_80 = arith.constant 0 : index
    %112 = vector.load %arg12[%c0_78, %c0_79, %c0_80] : memref<1x8x32xf32, #tpu.memory_space<vmem>>, vector<1x8x32xf32>
    %113 = vector.shape_cast %112 : vector<1x8x32xf32> to vector<8x32xf32>
    %114 = vector.shape_cast %111 : vector<8x32xf32> to vector<1x8x32xf32>
    tpu.vector_store %arg12[%c0_78, %c0_79, %c0_80], %114 {strides = array<i32>} : memref<1x8x32xf32, #tpu.memory_space<vmem>>, vector<1x8x32xf32>,
    return
  }
  func.func @transform_0(%arg0: i32) -> (i32, i32, i32) {
    %c0_i32 = arith.constant 0 : i32
    %c0_i32_0 = arith.constant 0 : i32
    %c0_i32_1 = arith.constant 0 : i32
    return %arg0, %c0_i32, %c0_i32_0 : i32, i32, i32
  }
  func.func @transform_1(%arg0: i32) -> (i32, i32, i32) {
    %c0_i32 = arith.constant 0 : i32
    %c0_i32_0 = arith.constant 0 : i32
    %c0_i32_1 = arith.constant 0 : i32
    return %arg0, %c0_i32, %c0_i32_0 : i32, i32, i32
  }
  func.func @transform_2(%arg0: i32) -> (i32, i32, i32) {
    %c0_i32 = arith.constant 0 : i32
    %c0_i32_0 = arith.constant 0 : i32
    %c0_i32_1 = arith.constant 0 : i32
    return %arg0, %c0_i32, %c0_i32_0 : i32, i32, i32
  }
  func.func @transform_3(%arg0: i32) -> (i32, i32) {
    %c0_i32 = arith.constant 0 : i32
    %c0_i32_0 = arith.constant 0 : i32
    %c0_i32_1 = arith.constant 0 : i32
    return %c0_i32, %c0_i32_0 : i32, i32
  }
  func.func @transform_4(%arg0: i32) -> (i32, i32) {
    %c0_i32 = arith.constant 0 : i32
    %c0_i32_0 = arith.constant 0 : i32
    %c0_i32_1 = arith.constant 0 : i32
    return %c0_i32, %c0_i32_0 : i32, i32
  }
  func.func @transform_5(%arg0: i32) -> (i32, i32, i32) {
    %c0_i32 = arith.constant 0 : i32
    %c0_i32_0 = arith.constant 0 : i32
    %c0_i32_1 = arith.constant 0 : i32
    %c0_i32_2 = arith.constant 0 : i32
    return %c0_i32, %c0_i32_0, %c0_i32_1 : i32, i32, i32
  }
  func.func @transform_6(%arg0: i32) -> (i32, i32) {
    %c0_i32 = arith.constant 0 : i32
    %c0_i32_0 = arith.constant 0 : i32
    %c0_i32_1 = arith.constant 0 : i32
    return %c0_i32, %c0_i32_0 : i32, i32
  }
  func.func @transform_7(%arg0: i32) -> (i32, i32, i32) {
    %c0_i32 = arith.constant 0 : i32
    %c0_i32_0 = arith.constant 0 : i32
    %c0_i32_1 = arith.constant 0 : i32
    %c0_i32_2 = arith.constant 0 : i32
    return %c0_i32, %c0_i32_0, %c0_i32_1 : i32, i32, i32
  }
  func.func @transform_8(%arg0: i32) -> (i32, i32) {
    %c0_i32 = arith.constant 0 : i32
    %c0_i32_0 = arith.constant 0 : i32
    %c0_i32_1 = arith.constant 0 : i32
    return %c0_i32, %c0_i32_0 : i32, i32
  }
  func.func @transform_9(%arg0: i32) -> (i32, i32) {
    %c0_i32 = arith.constant 0 : i32
    %c0_i32_0 = arith.constant 0 : i32
    %c0_i32_1 = arith.constant 0 : i32
    return %c0_i32, %c0_i32_0 : i32, i32
  }
  func.func @transform_10(%arg0: i32) -> (i32, i32) {
    %c0_i32 = arith.constant 0 : i32
    %c0_i32_0 = arith.constant 0 : i32
    %c0_i32_1 = arith.constant 0 : i32
    return %c0_i32, %c0_i32_0 : i32, i32
  }
  func.func @transform_11(%arg0: i32) -> (i32, i32, i32) {
    %c0_i32 = arith.constant 0 : i32
    %c0_i32_0 = arith.constant 0 : i32
    %c0_i32_1 = arith.constant 0 : i32
    return %arg0, %c0_i32, %c0_i32_0 : i32, i32, i32
  }
}

module attributes {stable_mosaic.version = 11 : i64} {
  func.func @_var_predictor_kernel(%arg0: i32, %arg1: memref<1x8x32xf32, #tpu.memory_space<vmem>>, %arg2: memref<3x32x32xbf16, #tpu.memory_space<vmem>>, %arg3: memref<1x32xf32, #tpu.memory_space<vmem>>, %arg4: memref<1x32xf32, #tpu.memory_space<vmem>>, %arg5: memref<1x32xf32, #tpu.memory_space<vmem>>, %arg6: memref<3x32x32xbf16, #tpu.memory_space<vmem>>, %arg7: memref<1x32xf32, #tpu.memory_space<vmem>>, %arg8: memref<1x32xf32, #tpu.memory_space<vmem>>, %arg9: memref<1x32xf32, #tpu.memory_space<vmem>>, %arg10: memref<1x32xf32, #tpu.memory_space<vmem>>, %arg11: memref<1x1xf32, #tpu.memory_space<vmem>>, %arg12: memref<1x8x1xf32, #tpu.memory_space<vmem>>, %arg13: memref<24x32xbf16, #tpu.memory_space<vmem>>, %arg14: memref<24x32xbf16, #tpu.memory_space<vmem>>) attributes {dimension_semantics = [#tpu.dimension_semantics<parallel>], iteration_bounds = array<i64: 2>, scalar_prefetch = 0 : i64, scratch_operands = 2 : i64, tpu.core_type = #tpu.core_type<tc>, window_params = [{transform_indices = @transform_0, window_bounds = array<i64: 1, 8, 32>}, {pipeline_mode = #tpu.pipeline_mode<synchronous>, transform_indices = @transform_1, window_bounds = array<i64: 3, 32, 32>}, {pipeline_mode = #tpu.pipeline_mode<synchronous>, transform_indices = @transform_2, window_bounds = array<i64: 1, 32>}, {pipeline_mode = #tpu.pipeline_mode<synchronous>, transform_indices = @transform_3, window_bounds = array<i64: 1, 32>}, {pipeline_mode = #tpu.pipeline_mode<synchronous>, transform_indices = @transform_4, window_bounds = array<i64: 1, 32>}, {pipeline_mode = #tpu.pipeline_mode<synchronous>, transform_indices = @transform_5, window_bounds = array<i64: 3, 32, 32>}, {pipeline_mode = #tpu.pipeline_mode<synchronous>, transform_indices = @transform_6, window_bounds = array<i64: 1, 32>}, {pipeline_mode = #tpu.pipeline_mode<synchronous>, transform_indices = @transform_7, window_bounds = array<i64: 1, 32>}, {pipeline_mode = #tpu.pipeline_mode<synchronous>, transform_indices = @transform_8, window_bounds = array<i64: 1, 32>}, {pipeline_mode = #tpu.pipeline_mode<synchronous>, transform_indices = @transform_9, window_bounds = array<i64: 1, 32>}, {pipeline_mode = #tpu.pipeline_mode<synchronous>, transform_indices = @transform_10, window_bounds = array<i64: 1, 1>}, {transform_indices = @transform_11, window_bounds = array<i64: 1, 8, 1>}]} {
    %cst = arith.constant 0.000000e+00 : bf16
    %0 = vector.broadcast %cst : bf16 to vector<8x32xbf16>
    %c0 = arith.constant 0 : index
    %c0_0 = arith.constant 0 : index
    %1 = vector.load %arg13[%c0, %c0_0] : memref<24x32xbf16, #tpu.memory_space<vmem>>, vector<8x32xbf16>
    tpu.vector_store %arg13[%c0, %c0_0], %0 {strides = array<i32>} : memref<24x32xbf16, #tpu.memory_space<vmem>>, vector<8x32xbf16>,
    %cst_1 = arith.constant 0.000000e+00 : bf16
    %2 = vector.broadcast %cst_1 : bf16 to vector<8x32xbf16>
    %c16 = arith.constant 16 : index
    %c0_2 = arith.constant 0 : index
    %3 = vector.load %arg13[%c16, %c0_2] : memref<24x32xbf16, #tpu.memory_space<vmem>>, vector<8x32xbf16>
    tpu.vector_store %arg13[%c16, %c0_2], %2 {strides = array<i32>} : memref<24x32xbf16, #tpu.memory_space<vmem>>, vector<8x32xbf16>,
    %c0_3 = arith.constant 0 : index
    %c0_4 = arith.constant 0 : index
    %c0_5 = arith.constant 0 : index
    %4 = vector.load %arg1[%c0_3, %c0_4, %c0_5] : memref<1x8x32xf32, #tpu.memory_space<vmem>>, vector<1x8x32xf32>
    %5 = vector.shape_cast %4 : vector<1x8x32xf32> to vector<8x32xf32>
    %6 = arith.truncf %5 : vector<8x32xf32> to vector<8x32xbf16>
    %c8 = arith.constant 8 : index
    %c0_6 = arith.constant 0 : index
    %7 = vector.load %arg13[%c8, %c0_6] : memref<24x32xbf16, #tpu.memory_space<vmem>>, vector<8x32xbf16>
    tpu.vector_store %arg13[%c8, %c0_6], %6 {strides = array<i32>} : memref<24x32xbf16, #tpu.memory_space<vmem>>, vector<8x32xbf16>,
    %cst_7 = arith.constant 0.000000e+00 : f32
    %8 = vector.broadcast %cst_7 : f32 to vector<8x32xf32>
    %c7 = arith.constant 7 : index
    %c0_8 = arith.constant 0 : index
    %9 = vector.load %arg13[%c7, %c0_8] : memref<24x32xbf16, #tpu.memory_space<vmem>>, vector<8x32xbf16>
    %c0_9 = arith.constant 0 : index
    %c0_10 = arith.constant 0 : index
    %c0_11 = arith.constant 0 : index
    %10 = vector.load %arg2[%c0_9, %c0_10, %c0_11] : memref<3x32x32xbf16, #tpu.memory_space<vmem>>, vector<1x32x32xbf16>
    %11 = vector.shape_cast %10 : vector<1x32x32xbf16> to vector<32x32xbf16>
    %cst_12 = arith.constant dense<0.000000e+00> : vector<8x32xf32>
    %12 = tpu.matmul %9, %11, %cst_12 {dimension_numbers = #tpu.dot_dimension_numbers<[1], [0], [0], [1], [0, 0, 1, 1], [], []>} : vector<8x32xbf16>, vector<32x32xbf16>, vector<8x32xf32> -> vector<8x32xf32>
    %13 = arith.addf %8, %12 : vector<8x32xf32>
    %c8_13 = arith.constant 8 : index
    %c0_14 = arith.constant 0 : index
    %14 = vector.load %arg13[%c8_13, %c0_14] : memref<24x32xbf16, #tpu.memory_space<vmem>>, vector<8x32xbf16>
    %c1 = arith.constant 1 : index
    %c0_15 = arith.constant 0 : index
    %c0_16 = arith.constant 0 : index
    %15 = vector.load %arg2[%c1, %c0_15, %c0_16] : memref<3x32x32xbf16, #tpu.memory_space<vmem>>, vector<1x32x32xbf16>
    %16 = vector.shape_cast %15 : vector<1x32x32xbf16> to vector<32x32xbf16>
    %cst_17 = arith.constant dense<0.000000e+00> : vector<8x32xf32>
    %17 = tpu.matmul %14, %16, %cst_17 {dimension_numbers = #tpu.dot_dimension_numbers<[1], [0], [0], [1], [0, 0, 1, 1], [], []>} : vector<8x32xbf16>, vector<32x32xbf16>, vector<8x32xf32> -> vector<8x32xf32>
    %18 = arith.addf %13, %17 : vector<8x32xf32>
    %c9 = arith.constant 9 : index
    %c0_18 = arith.constant 0 : index
    %19 = vector.load %arg13[%c9, %c0_18] : memref<24x32xbf16, #tpu.memory_space<vmem>>, vector<8x32xbf16>
    %c2 = arith.constant 2 : index
    %c0_19 = arith.constant 0 : index
    %c0_20 = arith.constant 0 : index
    %20 = vector.load %arg2[%c2, %c0_19, %c0_20] : memref<3x32x32xbf16, #tpu.memory_space<vmem>>, vector<1x32x32xbf16>
    %21 = vector.shape_cast %20 : vector<1x32x32xbf16> to vector<32x32xbf16>
    %cst_21 = arith.constant dense<0.000000e+00> : vector<8x32xf32>
    %22 = tpu.matmul %19, %21, %cst_21 {dimension_numbers = #tpu.dot_dimension_numbers<[1], [0], [0], [1], [0, 0, 1, 1], [], []>} : vector<8x32xbf16>, vector<32x32xbf16>, vector<8x32xf32> -> vector<8x32xf32>
    %23 = arith.addf %18, %22 : vector<8x32xf32>
    %c0_22 = arith.constant 0 : index
    %c0_23 = arith.constant 0 : index
    %24 = vector.load %arg3[%c0_22, %c0_23] : memref<1x32xf32, #tpu.memory_space<vmem>>, vector<1x32xf32>
    %25 = vector.broadcast %24 : vector<1x32xf32> to vector<8x32xf32>
    %26 = arith.addf %23, %25 : vector<8x32xf32>
    %cst_24 = arith.constant 0.000000e+00 : f32
    %27 = vector.broadcast %cst_24 : f32 to vector<8x32xf32>
    %28 = arith.maximumf %26, %27 : vector<8x32xf32>
    %cst_25 = arith.constant dense<0.000000e+00> : vector<8xf32>
    %29 = vector.multi_reduction <add>, %28, %cst_25 [1] : vector<8x32xf32> to vector<8xf32>
    %30 = vector.shape_cast %29 : vector<8xf32> to vector<8x1xf32>
    %cst_26 = arith.constant 3.200000e+01 : f32
    %31 = vector.broadcast %cst_26 : f32 to vector<8x1xf32>
    %32 = arith.divf %30, %31 : vector<8x1xf32>
    %33 = vector.broadcast %32 : vector<8x1xf32> to vector<8x32xf32>
    %34 = arith.subf %28, %33 : vector<8x32xf32>
    %35 = arith.mulf %34, %34 : vector<8x32xf32>
    %cst_27 = arith.constant dense<0.000000e+00> : vector<8xf32>
    %36 = vector.multi_reduction <add>, %35, %cst_27 [1] : vector<8x32xf32> to vector<8xf32>
    %37 = vector.shape_cast %36 : vector<8xf32> to vector<8x1xf32>
    %cst_28 = arith.constant 3.200000e+01 : f32
    %38 = vector.broadcast %cst_28 : f32 to vector<8x1xf32>
    %39 = arith.divf %37, %38 : vector<8x1xf32>
    %40 = vector.broadcast %32 : vector<8x1xf32> to vector<8x32xf32>
    %41 = arith.subf %28, %40 : vector<8x32xf32>
    %cst_29 = arith.constant 9.99999974E-6 : f32
    %42 = vector.broadcast %cst_29 : f32 to vector<8x1xf32>
    %43 = arith.addf %39, %42 : vector<8x1xf32>
    %44 = math.rsqrt %43 : vector<8x1xf32>
    %45 = vector.broadcast %44 : vector<8x1xf32> to vector<8x32xf32>
    %46 = arith.mulf %41, %45 : vector<8x32xf32>
    %c0_30 = arith.constant 0 : index
    %c0_31 = arith.constant 0 : index
    %47 = vector.load %arg4[%c0_30, %c0_31] : memref<1x32xf32, #tpu.memory_space<vmem>>, vector<1x32xf32>
    %48 = vector.broadcast %47 : vector<1x32xf32> to vector<8x32xf32>
    %49 = arith.mulf %46, %48 : vector<8x32xf32>
    %c0_32 = arith.constant 0 : index
    %c0_33 = arith.constant 0 : index
    %50 = vector.load %arg5[%c0_32, %c0_33] : memref<1x32xf32, #tpu.memory_space<vmem>>, vector<1x32xf32>
    %51 = vector.broadcast %50 : vector<1x32xf32> to vector<8x32xf32>
    %52 = arith.addf %49, %51 : vector<8x32xf32>
    %cst_34 = arith.constant 0.000000e+00 : bf16
    %53 = vector.broadcast %cst_34 : bf16 to vector<8x32xbf16>
    %c0_35 = arith.constant 0 : index
    %c0_36 = arith.constant 0 : index
    %54 = vector.load %arg14[%c0_35, %c0_36] : memref<24x32xbf16, #tpu.memory_space<vmem>>, vector<8x32xbf16>
    tpu.vector_store %arg14[%c0_35, %c0_36], %53 {strides = array<i32>} : memref<24x32xbf16, #tpu.memory_space<vmem>>, vector<8x32xbf16>,
    %cst_37 = arith.constant 0.000000e+00 : bf16
    %55 = vector.broadcast %cst_37 : bf16 to vector<8x32xbf16>
    %c16_38 = arith.constant 16 : index
    %c0_39 = arith.constant 0 : index
    %56 = vector.load %arg14[%c16_38, %c0_39] : memref<24x32xbf16, #tpu.memory_space<vmem>>, vector<8x32xbf16>
    tpu.vector_store %arg14[%c16_38, %c0_39], %55 {strides = array<i32>} : memref<24x32xbf16, #tpu.memory_space<vmem>>, vector<8x32xbf16>,
    %57 = arith.truncf %52 : vector<8x32xf32> to vector<8x32xbf16>
    %c8_40 = arith.constant 8 : index
    %c0_41 = arith.constant 0 : index
    %58 = vector.load %arg14[%c8_40, %c0_41] : memref<24x32xbf16, #tpu.memory_space<vmem>>, vector<8x32xbf16>
    tpu.vector_store %arg14[%c8_40, %c0_41], %57 {strides = array<i32>} : memref<24x32xbf16, #tpu.memory_space<vmem>>, vector<8x32xbf16>,
    %cst_42 = arith.constant 0.000000e+00 : f32
    %59 = vector.broadcast %cst_42 : f32 to vector<8x32xf32>
    %c7_43 = arith.constant 7 : index
    %c0_44 = arith.constant 0 : index
    %60 = vector.load %arg14[%c7_43, %c0_44] : memref<24x32xbf16, #tpu.memory_space<vmem>>, vector<8x32xbf16>
    %c0_45 = arith.constant 0 : index
    %c0_46 = arith.constant 0 : index
    %c0_47 = arith.constant 0 : index
    %61 = vector.load %arg6[%c0_45, %c0_46, %c0_47] : memref<3x32x32xbf16, #tpu.memory_space<vmem>>, vector<1x32x32xbf16>
    %62 = vector.shape_cast %61 : vector<1x32x32xbf16> to vector<32x32xbf16>
    %cst_48 = arith.constant dense<0.000000e+00> : vector<8x32xf32>
    %63 = tpu.matmul %60, %62, %cst_48 {dimension_numbers = #tpu.dot_dimension_numbers<[1], [0], [0], [1], [0, 0, 1, 1], [], []>} : vector<8x32xbf16>, vector<32x32xbf16>, vector<8x32xf32> -> vector<8x32xf32>
    %64 = arith.addf %59, %63 : vector<8x32xf32>
    %c8_49 = arith.constant 8 : index
    %c0_50 = arith.constant 0 : index
    %65 = vector.load %arg14[%c8_49, %c0_50] : memref<24x32xbf16, #tpu.memory_space<vmem>>, vector<8x32xbf16>
    %c1_51 = arith.constant 1 : index
    %c0_52 = arith.constant 0 : index
    %c0_53 = arith.constant 0 : index
    %66 = vector.load %arg6[%c1_51, %c0_52, %c0_53] : memref<3x32x32xbf16, #tpu.memory_space<vmem>>, vector<1x32x32xbf16>
    %67 = vector.shape_cast %66 : vector<1x32x32xbf16> to vector<32x32xbf16>
    %cst_54 = arith.constant dense<0.000000e+00> : vector<8x32xf32>
    %68 = tpu.matmul %65, %67, %cst_54 {dimension_numbers = #tpu.dot_dimension_numbers<[1], [0], [0], [1], [0, 0, 1, 1], [], []>} : vector<8x32xbf16>, vector<32x32xbf16>, vector<8x32xf32> -> vector<8x32xf32>
    %69 = arith.addf %64, %68 : vector<8x32xf32>
    %c9_55 = arith.constant 9 : index
    %c0_56 = arith.constant 0 : index
    %70 = vector.load %arg14[%c9_55, %c0_56] : memref<24x32xbf16, #tpu.memory_space<vmem>>, vector<8x32xbf16>
    %c2_57 = arith.constant 2 : index
    %c0_58 = arith.constant 0 : index
    %c0_59 = arith.constant 0 : index
    %71 = vector.load %arg6[%c2_57, %c0_58, %c0_59] : memref<3x32x32xbf16, #tpu.memory_space<vmem>>, vector<1x32x32xbf16>
    %72 = vector.shape_cast %71 : vector<1x32x32xbf16> to vector<32x32xbf16>
    %cst_60 = arith.constant dense<0.000000e+00> : vector<8x32xf32>
    %73 = tpu.matmul %70, %72, %cst_60 {dimension_numbers = #tpu.dot_dimension_numbers<[1], [0], [0], [1], [0, 0, 1, 1], [], []>} : vector<8x32xbf16>, vector<32x32xbf16>, vector<8x32xf32> -> vector<8x32xf32>
    %74 = arith.addf %69, %73 : vector<8x32xf32>
    %c0_61 = arith.constant 0 : index
    %c0_62 = arith.constant 0 : index
    %75 = vector.load %arg7[%c0_61, %c0_62] : memref<1x32xf32, #tpu.memory_space<vmem>>, vector<1x32xf32>
    %76 = vector.broadcast %75 : vector<1x32xf32> to vector<8x32xf32>
    %77 = arith.addf %74, %76 : vector<8x32xf32>
    %cst_63 = arith.constant 0.000000e+00 : f32
    %78 = vector.broadcast %cst_63 : f32 to vector<8x32xf32>
    %79 = arith.maximumf %77, %78 : vector<8x32xf32>
    %cst_64 = arith.constant dense<0.000000e+00> : vector<8xf32>
    %80 = vector.multi_reduction <add>, %79, %cst_64 [1] : vector<8x32xf32> to vector<8xf32>
    %81 = vector.shape_cast %80 : vector<8xf32> to vector<8x1xf32>
    %cst_65 = arith.constant 3.200000e+01 : f32
    %82 = vector.broadcast %cst_65 : f32 to vector<8x1xf32>
    %83 = arith.divf %81, %82 : vector<8x1xf32>
    %84 = vector.broadcast %83 : vector<8x1xf32> to vector<8x32xf32>
    %85 = arith.subf %79, %84 : vector<8x32xf32>
    %86 = arith.mulf %85, %85 : vector<8x32xf32>
    %cst_66 = arith.constant dense<0.000000e+00> : vector<8xf32>
    %87 = vector.multi_reduction <add>, %86, %cst_66 [1] : vector<8x32xf32> to vector<8xf32>
    %88 = vector.shape_cast %87 : vector<8xf32> to vector<8x1xf32>
    %cst_67 = arith.constant 3.200000e+01 : f32
    %89 = vector.broadcast %cst_67 : f32 to vector<8x1xf32>
    %90 = arith.divf %88, %89 : vector<8x1xf32>
    %91 = vector.broadcast %83 : vector<8x1xf32> to vector<8x32xf32>
    %92 = arith.subf %79, %91 : vector<8x32xf32>
    %cst_68 = arith.constant 9.99999974E-6 : f32
    %93 = vector.broadcast %cst_68 : f32 to vector<8x1xf32>
    %94 = arith.addf %90, %93 : vector<8x1xf32>
    %95 = math.rsqrt %94 : vector<8x1xf32>
    %96 = vector.broadcast %95 : vector<8x1xf32> to vector<8x32xf32>
    %97 = arith.mulf %92, %96 : vector<8x32xf32>
    %c0_69 = arith.constant 0 : index
    %c0_70 = arith.constant 0 : index
    %98 = vector.load %arg8[%c0_69, %c0_70] : memref<1x32xf32, #tpu.memory_space<vmem>>, vector<1x32xf32>
    %99 = vector.broadcast %98 : vector<1x32xf32> to vector<8x32xf32>
    %100 = arith.mulf %97, %99 : vector<8x32xf32>
    %c0_71 = arith.constant 0 : index
    %c0_72 = arith.constant 0 : index
    %101 = vector.load %arg9[%c0_71, %c0_72] : memref<1x32xf32, #tpu.memory_space<vmem>>, vector<1x32xf32>
    %102 = vector.broadcast %101 : vector<1x32xf32> to vector<8x32xf32>
    %103 = arith.addf %100, %102 : vector<8x32xf32>
    %c0_73 = arith.constant 0 : index
    %c0_74 = arith.constant 0 : index
    %104 = vector.load %arg10[%c0_73, %c0_74] : memref<1x32xf32, #tpu.memory_space<vmem>>, vector<1x32xf32>
    %105 = vector.broadcast %104 : vector<1x32xf32> to vector<8x32xf32>
    %106 = arith.mulf %103, %105 : vector<8x32xf32>
    %cst_75 = arith.constant dense<0.000000e+00> : vector<8xf32>
    %107 = vector.multi_reduction <add>, %106, %cst_75 [1] : vector<8x32xf32> to vector<8xf32>
    %108 = vector.shape_cast %107 : vector<8xf32> to vector<8x1xf32>
    %c0_76 = arith.constant 0 : index
    %c0_77 = arith.constant 0 : index
    %109 = vector.load %arg11[%c0_76, %c0_77] : memref<1x1xf32, #tpu.memory_space<vmem>>, vector<1x1xf32>
    %110 = vector.broadcast %109 : vector<1x1xf32> to vector<8x1xf32>
    %111 = arith.addf %108, %110 : vector<8x1xf32>
    %c0_78 = arith.constant 0 : index
    %c0_79 = arith.constant 0 : index
    %c0_80 = arith.constant 0 : index
    %112 = vector.load %arg12[%c0_78, %c0_79, %c0_80] : memref<1x8x1xf32, #tpu.memory_space<vmem>>, vector<1x8x1xf32>
    %113 = vector.shape_cast %112 : vector<1x8x1xf32> to vector<8x1xf32>
    %114 = vector.shape_cast %111 : vector<8x1xf32> to vector<1x8x1xf32>
    tpu.vector_store %arg12[%c0_78, %c0_79, %c0_80], %114 {strides = array<i32>} : memref<1x8x1xf32, #tpu.memory_space<vmem>>, vector<1x8x1xf32>,
    return
  }
  func.func @transform_0(%arg0: i32) -> (i32, i32, i32) {
    %c0_i32 = arith.constant 0 : i32
    %c0_i32_0 = arith.constant 0 : i32
    %c0_i32_1 = arith.constant 0 : i32
    return %arg0, %c0_i32, %c0_i32_0 : i32, i32, i32
  }
  func.func @transform_1(%arg0: i32) -> (i32, i32, i32) {
    %c0_i32 = arith.constant 0 : i32
    %c0_i32_0 = arith.constant 0 : i32
    %c0_i32_1 = arith.constant 0 : i32
    %c0_i32_2 = arith.constant 0 : i32
    return %c0_i32, %c0_i32_0, %c0_i32_1 : i32, i32, i32
  }
  func.func @transform_2(%arg0: i32) -> (i32, i32) {
    %c0_i32 = arith.constant 0 : i32
    %c0_i32_0 = arith.constant 0 : i32
    %c0_i32_1 = arith.constant 0 : i32
    return %c0_i32, %c0_i32_0 : i32, i32
  }
  func.func @transform_3(%arg0: i32) -> (i32, i32) {
    %c0_i32 = arith.constant 0 : i32
    %c0_i32_0 = arith.constant 0 : i32
    %c0_i32_1 = arith.constant 0 : i32
    return %c0_i32, %c0_i32_0 : i32, i32
  }
  func.func @transform_4(%arg0: i32) -> (i32, i32) {
    %c0_i32 = arith.constant 0 : i32
    %c0_i32_0 = arith.constant 0 : i32
    %c0_i32_1 = arith.constant 0 : i32
    return %c0_i32, %c0_i32_0 : i32, i32
  }
  func.func @transform_5(%arg0: i32) -> (i32, i32, i32) {
    %c0_i32 = arith.constant 0 : i32
    %c0_i32_0 = arith.constant 0 : i32
    %c0_i32_1 = arith.constant 0 : i32
    %c0_i32_2 = arith.constant 0 : i32
    return %c0_i32, %c0_i32_0, %c0_i32_1 : i32, i32, i32
  }
  func.func @transform_6(%arg0: i32) -> (i32, i32) {
    %c0_i32 = arith.constant 0 : i32
    %c0_i32_0 = arith.constant 0 : i32
    %c0_i32_1 = arith.constant 0 : i32
    return %c0_i32, %c0_i32_0 : i32, i32
  }
  func.func @transform_7(%arg0: i32) -> (i32, i32) {
    %c0_i32 = arith.constant 0 : i32
    %c0_i32_0 = arith.constant 0 : i32
    %c0_i32_1 = arith.constant 0 : i32
    return %c0_i32, %c0_i32_0 : i32, i32
  }
  func.func @transform_8(%arg0: i32) -> (i32, i32) {
    %c0_i32 = arith.constant 0 : i32
    %c0_i32_0 = arith.constant 0 : i32
    %c0_i32_1 = arith.constant 0 : i32
    return %c0_i32, %c0_i32_0 : i32, i32
  }
  func.func @transform_9(%arg0: i32) -> (i32, i32) {
    %c0_i32 = arith.constant 0 : i32
    %c0_i32_0 = arith.constant 0 : i32
    %c0_i32_1 = arith.constant 0 : i32
    return %c0_i32, %c0_i32_0 : i32, i32
  }
  func.func @transform_10(%arg0: i32) -> (i32, i32) {
    %c0_i32 = arith.constant 0 : i32
    %c0_i32_0 = arith.constant 0 : i32
    %c0_i32_1 = arith.constant 0 : i32
    return %c0_i32, %c0_i32_0 : i32, i32
  }
  func.func @transform_11(%arg0: i32) -> (i32, i32, i32) {
    %c0_i32 = arith.constant 0 : i32
    %c0_i32_0 = arith.constant 0 : i32
    %c0_i32_1 = arith.constant 0 : i32
    return %arg0, %c0_i32, %c0_i32_0 : i32, i32, i32
  }
}

module attributes {stable_mosaic.version = 11 : i64} {
  func.func @_var_predictor_kernel(%arg0: i32, %arg1: memref<1x32x32xf32, #tpu.memory_space<vmem>>, %arg2: memref<3x32x32xbf16, #tpu.memory_space<vmem>>, %arg3: memref<1x32xf32, #tpu.memory_space<vmem>>, %arg4: memref<1x32xf32, #tpu.memory_space<vmem>>, %arg5: memref<1x32xf32, #tpu.memory_space<vmem>>, %arg6: memref<3x32x32xbf16, #tpu.memory_space<vmem>>, %arg7: memref<1x32xf32, #tpu.memory_space<vmem>>, %arg8: memref<1x32xf32, #tpu.memory_space<vmem>>, %arg9: memref<1x32xf32, #tpu.memory_space<vmem>>, %arg10: memref<1x32xf32, #tpu.memory_space<vmem>>, %arg11: memref<1x1xf32, #tpu.memory_space<vmem>>, %arg12: memref<1x32x1xf32, #tpu.memory_space<vmem>>, %arg13: memref<48x32xbf16, #tpu.memory_space<vmem>>, %arg14: memref<48x32xbf16, #tpu.memory_space<vmem>>) attributes {dimension_semantics = [#tpu.dimension_semantics<parallel>], iteration_bounds = array<i64: 2>, scalar_prefetch = 0 : i64, scratch_operands = 2 : i64, tpu.core_type = #tpu.core_type<tc>, window_params = [{transform_indices = @transform_0, window_bounds = array<i64: 1, 32, 32>}, {pipeline_mode = #tpu.pipeline_mode<synchronous>, transform_indices = @transform_1, window_bounds = array<i64: 3, 32, 32>}, {pipeline_mode = #tpu.pipeline_mode<synchronous>, transform_indices = @transform_2, window_bounds = array<i64: 1, 32>}, {pipeline_mode = #tpu.pipeline_mode<synchronous>, transform_indices = @transform_3, window_bounds = array<i64: 1, 32>}, {pipeline_mode = #tpu.pipeline_mode<synchronous>, transform_indices = @transform_4, window_bounds = array<i64: 1, 32>}, {pipeline_mode = #tpu.pipeline_mode<synchronous>, transform_indices = @transform_5, window_bounds = array<i64: 3, 32, 32>}, {pipeline_mode = #tpu.pipeline_mode<synchronous>, transform_indices = @transform_6, window_bounds = array<i64: 1, 32>}, {pipeline_mode = #tpu.pipeline_mode<synchronous>, transform_indices = @transform_7, window_bounds = array<i64: 1, 32>}, {pipeline_mode = #tpu.pipeline_mode<synchronous>, transform_indices = @transform_8, window_bounds = array<i64: 1, 32>}, {pipeline_mode = #tpu.pipeline_mode<synchronous>, transform_indices = @transform_9, window_bounds = array<i64: 1, 32>}, {pipeline_mode = #tpu.pipeline_mode<synchronous>, transform_indices = @transform_10, window_bounds = array<i64: 1, 1>}, {transform_indices = @transform_11, window_bounds = array<i64: 1, 32, 1>}]} {
    %cst = arith.constant 0.000000e+00 : bf16
    %0 = vector.broadcast %cst : bf16 to vector<8x32xbf16>
    %c0 = arith.constant 0 : index
    %c0_0 = arith.constant 0 : index
    %1 = vector.load %arg13[%c0, %c0_0] : memref<48x32xbf16, #tpu.memory_space<vmem>>, vector<8x32xbf16>
    tpu.vector_store %arg13[%c0, %c0_0], %0 {strides = array<i32>} : memref<48x32xbf16, #tpu.memory_space<vmem>>, vector<8x32xbf16>,
    %cst_1 = arith.constant 0.000000e+00 : bf16
    %2 = vector.broadcast %cst_1 : bf16 to vector<8x32xbf16>
    %c40 = arith.constant 40 : index
    %c0_2 = arith.constant 0 : index
    %3 = vector.load %arg13[%c40, %c0_2] : memref<48x32xbf16, #tpu.memory_space<vmem>>, vector<8x32xbf16>
    tpu.vector_store %arg13[%c40, %c0_2], %2 {strides = array<i32>} : memref<48x32xbf16, #tpu.memory_space<vmem>>, vector<8x32xbf16>,
    %c0_3 = arith.constant 0 : index
    %c0_4 = arith.constant 0 : index
    %c0_5 = arith.constant 0 : index
    %4 = vector.load %arg1[%c0_3, %c0_4, %c0_5] : memref<1x32x32xf32, #tpu.memory_space<vmem>>, vector<1x32x32xf32>
    %5 = vector.shape_cast %4 : vector<1x32x32xf32> to vector<32x32xf32>
    %6 = arith.truncf %5 : vector<32x32xf32> to vector<32x32xbf16>
    %c8 = arith.constant 8 : index
    %c0_6 = arith.constant 0 : index
    %7 = vector.load %arg13[%c8, %c0_6] : memref<48x32xbf16, #tpu.memory_space<vmem>>, vector<32x32xbf16>
    tpu.vector_store %arg13[%c8, %c0_6], %6 {strides = array<i32>} : memref<48x32xbf16, #tpu.memory_space<vmem>>, vector<32x32xbf16>,
    %cst_7 = arith.constant 0.000000e+00 : f32
    %8 = vector.broadcast %cst_7 : f32 to vector<32x32xf32>
    %c7 = arith.constant 7 : index
    %c0_8 = arith.constant 0 : index
    %9 = vector.load %arg13[%c7, %c0_8] : memref<48x32xbf16, #tpu.memory_space<vmem>>, vector<32x32xbf16>
    %c0_9 = arith.constant 0 : index
    %c0_10 = arith.constant 0 : index
    %c0_11 = arith.constant 0 : index
    %10 = vector.load %arg2[%c0_9, %c0_10, %c0_11] : memref<3x32x32xbf16, #tpu.memory_space<vmem>>, vector<1x32x32xbf16>
    %11 = vector.shape_cast %10 : vector<1x32x32xbf16> to vector<32x32xbf16>
    %cst_12 = arith.constant dense<0.000000e+00> : vector<32x32xf32>
    %12 = tpu.matmul %9, %11, %cst_12 {dimension_numbers = #tpu.dot_dimension_numbers<[1], [0], [0], [1], [0, 0, 1, 1], [], []>} : vector<32x32xbf16>, vector<32x32xbf16>, vector<32x32xf32> -> vector<32x32xf32>
    %13 = arith.addf %8, %12 : vector<32x32xf32>
    %c8_13 = arith.constant 8 : index
    %c0_14 = arith.constant 0 : index
    %14 = vector.load %arg13[%c8_13, %c0_14] : memref<48x32xbf16, #tpu.memory_space<vmem>>, vector<32x32xbf16>
    %c1 = arith.constant 1 : index
    %c0_15 = arith.constant 0 : index
    %c0_16 = arith.constant 0 : index
    %15 = vector.load %arg2[%c1, %c0_15, %c0_16] : memref<3x32x32xbf16, #tpu.memory_space<vmem>>, vector<1x32x32xbf16>
    %16 = vector.shape_cast %15 : vector<1x32x32xbf16> to vector<32x32xbf16>
    %cst_17 = arith.constant dense<0.000000e+00> : vector<32x32xf32>
    %17 = tpu.matmul %14, %16, %cst_17 {dimension_numbers = #tpu.dot_dimension_numbers<[1], [0], [0], [1], [0, 0, 1, 1], [], []>} : vector<32x32xbf16>, vector<32x32xbf16>, vector<32x32xf32> -> vector<32x32xf32>
    %18 = arith.addf %13, %17 : vector<32x32xf32>
    %c9 = arith.constant 9 : index
    %c0_18 = arith.constant 0 : index
    %19 = vector.load %arg13[%c9, %c0_18] : memref<48x32xbf16, #tpu.memory_space<vmem>>, vector<32x32xbf16>
    %c2 = arith.constant 2 : index
    %c0_19 = arith.constant 0 : index
    %c0_20 = arith.constant 0 : index
    %20 = vector.load %arg2[%c2, %c0_19, %c0_20] : memref<3x32x32xbf16, #tpu.memory_space<vmem>>, vector<1x32x32xbf16>
    %21 = vector.shape_cast %20 : vector<1x32x32xbf16> to vector<32x32xbf16>
    %cst_21 = arith.constant dense<0.000000e+00> : vector<32x32xf32>
    %22 = tpu.matmul %19, %21, %cst_21 {dimension_numbers = #tpu.dot_dimension_numbers<[1], [0], [0], [1], [0, 0, 1, 1], [], []>} : vector<32x32xbf16>, vector<32x32xbf16>, vector<32x32xf32> -> vector<32x32xf32>
    %23 = arith.addf %18, %22 : vector<32x32xf32>
    %c0_22 = arith.constant 0 : index
    %c0_23 = arith.constant 0 : index
    %24 = vector.load %arg3[%c0_22, %c0_23] : memref<1x32xf32, #tpu.memory_space<vmem>>, vector<1x32xf32>
    %25 = vector.broadcast %24 : vector<1x32xf32> to vector<32x32xf32>
    %26 = arith.addf %23, %25 : vector<32x32xf32>
    %cst_24 = arith.constant 0.000000e+00 : f32
    %27 = vector.broadcast %cst_24 : f32 to vector<32x32xf32>
    %28 = arith.maximumf %26, %27 : vector<32x32xf32>
    %cst_25 = arith.constant dense<0.000000e+00> : vector<32xf32>
    %29 = vector.multi_reduction <add>, %28, %cst_25 [1] : vector<32x32xf32> to vector<32xf32>
    %30 = vector.shape_cast %29 : vector<32xf32> to vector<32x1xf32>
    %cst_26 = arith.constant 3.200000e+01 : f32
    %31 = vector.broadcast %cst_26 : f32 to vector<32x1xf32>
    %32 = arith.divf %30, %31 : vector<32x1xf32>
    %33 = vector.broadcast %32 : vector<32x1xf32> to vector<32x32xf32>
    %34 = arith.subf %28, %33 : vector<32x32xf32>
    %35 = arith.mulf %34, %34 : vector<32x32xf32>
    %cst_27 = arith.constant dense<0.000000e+00> : vector<32xf32>
    %36 = vector.multi_reduction <add>, %35, %cst_27 [1] : vector<32x32xf32> to vector<32xf32>
    %37 = vector.shape_cast %36 : vector<32xf32> to vector<32x1xf32>
    %cst_28 = arith.constant 3.200000e+01 : f32
    %38 = vector.broadcast %cst_28 : f32 to vector<32x1xf32>
    %39 = arith.divf %37, %38 : vector<32x1xf32>
    %40 = vector.broadcast %32 : vector<32x1xf32> to vector<32x32xf32>
    %41 = arith.subf %28, %40 : vector<32x32xf32>
    %cst_29 = arith.constant 9.99999974E-6 : f32
    %42 = vector.broadcast %cst_29 : f32 to vector<32x1xf32>
    %43 = arith.addf %39, %42 : vector<32x1xf32>
    %44 = math.rsqrt %43 : vector<32x1xf32>
    %45 = vector.broadcast %44 : vector<32x1xf32> to vector<32x32xf32>
    %46 = arith.mulf %41, %45 : vector<32x32xf32>
    %c0_30 = arith.constant 0 : index
    %c0_31 = arith.constant 0 : index
    %47 = vector.load %arg4[%c0_30, %c0_31] : memref<1x32xf32, #tpu.memory_space<vmem>>, vector<1x32xf32>
    %48 = vector.broadcast %47 : vector<1x32xf32> to vector<32x32xf32>
    %49 = arith.mulf %46, %48 : vector<32x32xf32>
    %c0_32 = arith.constant 0 : index
    %c0_33 = arith.constant 0 : index
    %50 = vector.load %arg5[%c0_32, %c0_33] : memref<1x32xf32, #tpu.memory_space<vmem>>, vector<1x32xf32>
    %51 = vector.broadcast %50 : vector<1x32xf32> to vector<32x32xf32>
    %52 = arith.addf %49, %51 : vector<32x32xf32>
    %cst_34 = arith.constant 0.000000e+00 : bf16
    %53 = vector.broadcast %cst_34 : bf16 to vector<8x32xbf16>
    %c0_35 = arith.constant 0 : index
    %c0_36 = arith.constant 0 : index
    %54 = vector.load %arg14[%c0_35, %c0_36] : memref<48x32xbf16, #tpu.memory_space<vmem>>, vector<8x32xbf16>
    tpu.vector_store %arg14[%c0_35, %c0_36], %53 {strides = array<i32>} : memref<48x32xbf16, #tpu.memory_space<vmem>>, vector<8x32xbf16>,
    %cst_37 = arith.constant 0.000000e+00 : bf16
    %55 = vector.broadcast %cst_37 : bf16 to vector<8x32xbf16>
    %c40_38 = arith.constant 40 : index
    %c0_39 = arith.constant 0 : index
    %56 = vector.load %arg14[%c40_38, %c0_39] : memref<48x32xbf16, #tpu.memory_space<vmem>>, vector<8x32xbf16>
    tpu.vector_store %arg14[%c40_38, %c0_39], %55 {strides = array<i32>} : memref<48x32xbf16, #tpu.memory_space<vmem>>, vector<8x32xbf16>,
    %57 = arith.truncf %52 : vector<32x32xf32> to vector<32x32xbf16>
    %c8_40 = arith.constant 8 : index
    %c0_41 = arith.constant 0 : index
    %58 = vector.load %arg14[%c8_40, %c0_41] : memref<48x32xbf16, #tpu.memory_space<vmem>>, vector<32x32xbf16>
    tpu.vector_store %arg14[%c8_40, %c0_41], %57 {strides = array<i32>} : memref<48x32xbf16, #tpu.memory_space<vmem>>, vector<32x32xbf16>,
    %cst_42 = arith.constant 0.000000e+00 : f32
    %59 = vector.broadcast %cst_42 : f32 to vector<32x32xf32>
    %c7_43 = arith.constant 7 : index
    %c0_44 = arith.constant 0 : index
    %60 = vector.load %arg14[%c7_43, %c0_44] : memref<48x32xbf16, #tpu.memory_space<vmem>>, vector<32x32xbf16>
    %c0_45 = arith.constant 0 : index
    %c0_46 = arith.constant 0 : index
    %c0_47 = arith.constant 0 : index
    %61 = vector.load %arg6[%c0_45, %c0_46, %c0_47] : memref<3x32x32xbf16, #tpu.memory_space<vmem>>, vector<1x32x32xbf16>
    %62 = vector.shape_cast %61 : vector<1x32x32xbf16> to vector<32x32xbf16>
    %cst_48 = arith.constant dense<0.000000e+00> : vector<32x32xf32>
    %63 = tpu.matmul %60, %62, %cst_48 {dimension_numbers = #tpu.dot_dimension_numbers<[1], [0], [0], [1], [0, 0, 1, 1], [], []>} : vector<32x32xbf16>, vector<32x32xbf16>, vector<32x32xf32> -> vector<32x32xf32>
    %64 = arith.addf %59, %63 : vector<32x32xf32>
    %c8_49 = arith.constant 8 : index
    %c0_50 = arith.constant 0 : index
    %65 = vector.load %arg14[%c8_49, %c0_50] : memref<48x32xbf16, #tpu.memory_space<vmem>>, vector<32x32xbf16>
    %c1_51 = arith.constant 1 : index
    %c0_52 = arith.constant 0 : index
    %c0_53 = arith.constant 0 : index
    %66 = vector.load %arg6[%c1_51, %c0_52, %c0_53] : memref<3x32x32xbf16, #tpu.memory_space<vmem>>, vector<1x32x32xbf16>
    %67 = vector.shape_cast %66 : vector<1x32x32xbf16> to vector<32x32xbf16>
    %cst_54 = arith.constant dense<0.000000e+00> : vector<32x32xf32>
    %68 = tpu.matmul %65, %67, %cst_54 {dimension_numbers = #tpu.dot_dimension_numbers<[1], [0], [0], [1], [0, 0, 1, 1], [], []>} : vector<32x32xbf16>, vector<32x32xbf16>, vector<32x32xf32> -> vector<32x32xf32>
    %69 = arith.addf %64, %68 : vector<32x32xf32>
    %c9_55 = arith.constant 9 : index
    %c0_56 = arith.constant 0 : index
    %70 = vector.load %arg14[%c9_55, %c0_56] : memref<48x32xbf16, #tpu.memory_space<vmem>>, vector<32x32xbf16>
    %c2_57 = arith.constant 2 : index
    %c0_58 = arith.constant 0 : index
    %c0_59 = arith.constant 0 : index
    %71 = vector.load %arg6[%c2_57, %c0_58, %c0_59] : memref<3x32x32xbf16, #tpu.memory_space<vmem>>, vector<1x32x32xbf16>
    %72 = vector.shape_cast %71 : vector<1x32x32xbf16> to vector<32x32xbf16>
    %cst_60 = arith.constant dense<0.000000e+00> : vector<32x32xf32>
    %73 = tpu.matmul %70, %72, %cst_60 {dimension_numbers = #tpu.dot_dimension_numbers<[1], [0], [0], [1], [0, 0, 1, 1], [], []>} : vector<32x32xbf16>, vector<32x32xbf16>, vector<32x32xf32> -> vector<32x32xf32>
    %74 = arith.addf %69, %73 : vector<32x32xf32>
    %c0_61 = arith.constant 0 : index
    %c0_62 = arith.constant 0 : index
    %75 = vector.load %arg7[%c0_61, %c0_62] : memref<1x32xf32, #tpu.memory_space<vmem>>, vector<1x32xf32>
    %76 = vector.broadcast %75 : vector<1x32xf32> to vector<32x32xf32>
    %77 = arith.addf %74, %76 : vector<32x32xf32>
    %cst_63 = arith.constant 0.000000e+00 : f32
    %78 = vector.broadcast %cst_63 : f32 to vector<32x32xf32>
    %79 = arith.maximumf %77, %78 : vector<32x32xf32>
    %cst_64 = arith.constant dense<0.000000e+00> : vector<32xf32>
    %80 = vector.multi_reduction <add>, %79, %cst_64 [1] : vector<32x32xf32> to vector<32xf32>
    %81 = vector.shape_cast %80 : vector<32xf32> to vector<32x1xf32>
    %cst_65 = arith.constant 3.200000e+01 : f32
    %82 = vector.broadcast %cst_65 : f32 to vector<32x1xf32>
    %83 = arith.divf %81, %82 : vector<32x1xf32>
    %84 = vector.broadcast %83 : vector<32x1xf32> to vector<32x32xf32>
    %85 = arith.subf %79, %84 : vector<32x32xf32>
    %86 = arith.mulf %85, %85 : vector<32x32xf32>
    %cst_66 = arith.constant dense<0.000000e+00> : vector<32xf32>
    %87 = vector.multi_reduction <add>, %86, %cst_66 [1] : vector<32x32xf32> to vector<32xf32>
    %88 = vector.shape_cast %87 : vector<32xf32> to vector<32x1xf32>
    %cst_67 = arith.constant 3.200000e+01 : f32
    %89 = vector.broadcast %cst_67 : f32 to vector<32x1xf32>
    %90 = arith.divf %88, %89 : vector<32x1xf32>
    %91 = vector.broadcast %83 : vector<32x1xf32> to vector<32x32xf32>
    %92 = arith.subf %79, %91 : vector<32x32xf32>
    %cst_68 = arith.constant 9.99999974E-6 : f32
    %93 = vector.broadcast %cst_68 : f32 to vector<32x1xf32>
    %94 = arith.addf %90, %93 : vector<32x1xf32>
    %95 = math.rsqrt %94 : vector<32x1xf32>
    %96 = vector.broadcast %95 : vector<32x1xf32> to vector<32x32xf32>
    %97 = arith.mulf %92, %96 : vector<32x32xf32>
    %c0_69 = arith.constant 0 : index
    %c0_70 = arith.constant 0 : index
    %98 = vector.load %arg8[%c0_69, %c0_70] : memref<1x32xf32, #tpu.memory_space<vmem>>, vector<1x32xf32>
    %99 = vector.broadcast %98 : vector<1x32xf32> to vector<32x32xf32>
    %100 = arith.mulf %97, %99 : vector<32x32xf32>
    %c0_71 = arith.constant 0 : index
    %c0_72 = arith.constant 0 : index
    %101 = vector.load %arg9[%c0_71, %c0_72] : memref<1x32xf32, #tpu.memory_space<vmem>>, vector<1x32xf32>
    %102 = vector.broadcast %101 : vector<1x32xf32> to vector<32x32xf32>
    %103 = arith.addf %100, %102 : vector<32x32xf32>
    %c0_73 = arith.constant 0 : index
    %c0_74 = arith.constant 0 : index
    %104 = vector.load %arg10[%c0_73, %c0_74] : memref<1x32xf32, #tpu.memory_space<vmem>>, vector<1x32xf32>
    %105 = vector.broadcast %104 : vector<1x32xf32> to vector<32x32xf32>
    %106 = arith.mulf %103, %105 : vector<32x32xf32>
    %cst_75 = arith.constant dense<0.000000e+00> : vector<32xf32>
    %107 = vector.multi_reduction <add>, %106, %cst_75 [1] : vector<32x32xf32> to vector<32xf32>
    %108 = vector.shape_cast %107 : vector<32xf32> to vector<32x1xf32>
    %c0_76 = arith.constant 0 : index
    %c0_77 = arith.constant 0 : index
    %109 = vector.load %arg11[%c0_76, %c0_77] : memref<1x1xf32, #tpu.memory_space<vmem>>, vector<1x1xf32>
    %110 = vector.broadcast %109 : vector<1x1xf32> to vector<32x1xf32>
    %111 = arith.addf %108, %110 : vector<32x1xf32>
    %c0_78 = arith.constant 0 : index
    %c0_79 = arith.constant 0 : index
    %c0_80 = arith.constant 0 : index
    %112 = vector.load %arg12[%c0_78, %c0_79, %c0_80] : memref<1x32x1xf32, #tpu.memory_space<vmem>>, vector<1x32x1xf32>
    %113 = vector.shape_cast %112 : vector<1x32x1xf32> to vector<32x1xf32>
    %114 = vector.shape_cast %111 : vector<32x1xf32> to vector<1x32x1xf32>
    tpu.vector_store %arg12[%c0_78, %c0_79, %c0_80], %114 {strides = array<i32>} : memref<1x32x1xf32, #tpu.memory_space<vmem>>, vector<1x32x1xf32>,
    return
  }
  func.func @transform_0(%arg0: i32) -> (i32, i32, i32) {
    %c0_i32 = arith.constant 0 : i32
    %c0_i32_0 = arith.constant 0 : i32
    %c0_i32_1 = arith.constant 0 : i32
    return %arg0, %c0_i32, %c0_i32_0 : i32, i32, i32
  }
  func.func @transform_1(%arg0: i32) -> (i32, i32, i32) {
    %c0_i32 = arith.constant 0 : i32
    %c0_i32_0 = arith.constant 0 : i32
    %c0_i32_1 = arith.constant 0 : i32
    %c0_i32_2 = arith.constant 0 : i32
    return %c0_i32, %c0_i32_0, %c0_i32_1 : i32, i32, i32
  }
  func.func @transform_2(%arg0: i32) -> (i32, i32) {
    %c0_i32 = arith.constant 0 : i32
    %c0_i32_0 = arith.constant 0 : i32
    %c0_i32_1 = arith.constant 0 : i32
    return %c0_i32, %c0_i32_0 : i32, i32
  }
  func.func @transform_3(%arg0: i32) -> (i32, i32) {
    %c0_i32 = arith.constant 0 : i32
    %c0_i32_0 = arith.constant 0 : i32
    %c0_i32_1 = arith.constant 0 : i32
    return %c0_i32, %c0_i32_0 : i32, i32
  }
  func.func @transform_4(%arg0: i32) -> (i32, i32) {
    %c0_i32 = arith.constant 0 : i32
    %c0_i32_0 = arith.constant 0 : i32
    %c0_i32_1 = arith.constant 0 : i32
    return %c0_i32, %c0_i32_0 : i32, i32
  }
  func.func @transform_5(%arg0: i32) -> (i32, i32, i32) {
    %c0_i32 = arith.constant 0 : i32
    %c0_i32_0 = arith.constant 0 : i32
    %c0_i32_1 = arith.constant 0 : i32
    %c0_i32_2 = arith.constant 0 : i32
    return %c0_i32, %c0_i32_0, %c0_i32_1 : i32, i32, i32
  }
  func.func @transform_6(%arg0: i32) -> (i32, i32) {
    %c0_i32 = arith.constant 0 : i32
    %c0_i32_0 = arith.constant 0 : i32
    %c0_i32_1 = arith.constant 0 : i32
    return %c0_i32, %c0_i32_0 : i32, i32
  }
  func.func @transform_7(%arg0: i32) -> (i32, i32) {
    %c0_i32 = arith.constant 0 : i32
    %c0_i32_0 = arith.constant 0 : i32
    %c0_i32_1 = arith.constant 0 : i32
    return %c0_i32, %c0_i32_0 : i32, i32
  }
  func.func @transform_8(%arg0: i32) -> (i32, i32) {
    %c0_i32 = arith.constant 0 : i32
    %c0_i32_0 = arith.constant 0 : i32
    %c0_i32_1 = arith.constant 0 : i32
    return %c0_i32, %c0_i32_0 : i32, i32
  }
  func.func @transform_9(%arg0: i32) -> (i32, i32) {
    %c0_i32 = arith.constant 0 : i32
    %c0_i32_0 = arith.constant 0 : i32
    %c0_i32_1 = arith.constant 0 : i32
    return %c0_i32, %c0_i32_0 : i32, i32
  }
  func.func @transform_10(%arg0: i32) -> (i32, i32) {
    %c0_i32 = arith.constant 0 : i32
    %c0_i32_0 = arith.constant 0 : i32
    %c0_i32_1 = arith.constant 0 : i32
    return %c0_i32, %c0_i32_0 : i32, i32
  }
  func.func @transform_11(%arg0: i32) -> (i32, i32, i32) {
    %c0_i32 = arith.constant 0 : i32
    %c0_i32_0 = arith.constant 0 : i32
    %c0_i32_1 = arith.constant 0 : i32
    return %arg0, %c0_i32, %c0_i32_0 : i32, i32, i32
  }
}

module attributes {stable_mosaic.version = 11 : i64} {
  func.func @_qkv_kernel(%arg0: i32, %arg1: memref<64x32xf32, #tpu.memory_space<vmem>>, %arg2: memref<32x96xbf16, #tpu.memory_space<vmem>>, %arg3: memref<1x96xf32, #tpu.memory_space<vmem>>, %arg4: memref<64x32xbf16, #tpu.memory_space<vmem>>, %arg5: memref<64x32xbf16, #tpu.memory_space<vmem>>, %arg6: memref<64x32xbf16, #tpu.memory_space<vmem>>) attributes {dimension_semantics = [#tpu.dimension_semantics<parallel>], iteration_bounds = array<i64: 1>, scalar_prefetch = 0 : i64, scratch_operands = 0 : i64, tpu.core_type = #tpu.core_type<tc>, window_params = [{transform_indices = @transform_0, window_bounds = array<i64: 64, 32>}, {pipeline_mode = #tpu.pipeline_mode<synchronous>, transform_indices = @transform_1, window_bounds = array<i64: 32, 96>}, {pipeline_mode = #tpu.pipeline_mode<synchronous>, transform_indices = @transform_2, window_bounds = array<i64: 1, 96>}, {transform_indices = @transform_3, window_bounds = array<i64: 64, 32>}, {transform_indices = @transform_4, window_bounds = array<i64: 64, 32>}, {transform_indices = @transform_5, window_bounds = array<i64: 64, 32>}]} {
    %c0 = arith.constant 0 : index
    %c0_0 = arith.constant 0 : index
    %0 = vector.load %arg1[%c0, %c0_0] : memref<64x32xf32, #tpu.memory_space<vmem>>, vector<64x32xf32>
    %1 = arith.truncf %0 : vector<64x32xf32> to vector<64x32xbf16>
    %c0_1 = arith.constant 0 : index
    %c0_2 = arith.constant 0 : index
    %2 = vector.load %arg2[%c0_1, %c0_2] : memref<32x96xbf16, #tpu.memory_space<vmem>>, vector<32x96xbf16>
    %cst = arith.constant dense<0.000000e+00> : vector<64x96xf32>
    %3 = tpu.matmul %1, %2, %cst {dimension_numbers = #tpu.dot_dimension_numbers<[1], [0], [0], [1], [0, 0, 1, 1], [], []>} : vector<64x32xbf16>, vector<32x96xbf16>, vector<64x96xf32> -> vector<64x96xf32>
    %c0_3 = arith.constant 0 : index
    %c0_4 = arith.constant 0 : index
    %4 = vector.load %arg3[%c0_3, %c0_4] : memref<1x96xf32, #tpu.memory_space<vmem>>, vector<1x96xf32>
    %5 = vector.broadcast %4 : vector<1x96xf32> to vector<64x96xf32>
    %6 = arith.addf %3, %5 : vector<64x96xf32>
    %7 = arith.truncf %6 : vector<64x96xf32> to vector<64x96xbf16>
    %8 = vector.extract_strided_slice %7 {offsets = [0, 0], sizes = [64, 32], strides = [1, 1]} : vector<64x96xbf16> to vector<64x32xbf16>
    %c0_5 = arith.constant 0 : index
    %c0_6 = arith.constant 0 : index
    %9 = vector.load %arg4[%c0_5, %c0_6] : memref<64x32xbf16, #tpu.memory_space<vmem>>, vector<64x32xbf16>
    tpu.vector_store %arg4[%c0_5, %c0_6], %8 {strides = array<i32>} : memref<64x32xbf16, #tpu.memory_space<vmem>>, vector<64x32xbf16>,
    %10 = vector.extract_strided_slice %7 {offsets = [0, 32], sizes = [64, 32], strides = [1, 1]} : vector<64x96xbf16> to vector<64x32xbf16>
    %c0_7 = arith.constant 0 : index
    %c0_8 = arith.constant 0 : index
    %11 = vector.load %arg5[%c0_7, %c0_8] : memref<64x32xbf16, #tpu.memory_space<vmem>>, vector<64x32xbf16>
    tpu.vector_store %arg5[%c0_7, %c0_8], %10 {strides = array<i32>} : memref<64x32xbf16, #tpu.memory_space<vmem>>, vector<64x32xbf16>,
    %12 = vector.extract_strided_slice %7 {offsets = [0, 64], sizes = [64, 32], strides = [1, 1]} : vector<64x96xbf16> to vector<64x32xbf16>
    %c0_9 = arith.constant 0 : index
    %c0_10 = arith.constant 0 : index
    %13 = vector.load %arg6[%c0_9, %c0_10] : memref<64x32xbf16, #tpu.memory_space<vmem>>, vector<64x32xbf16>
    tpu.vector_store %arg6[%c0_9, %c0_10], %12 {strides = array<i32>} : memref<64x32xbf16, #tpu.memory_space<vmem>>, vector<64x32xbf16>,
    return
  }
  func.func @transform_0(%arg0: i32) -> (i32, i32) {
    %c0_i32 = arith.constant 0 : i32
    %c0_i32_0 = arith.constant 0 : i32
    return %arg0, %c0_i32 : i32, i32
  }
  func.func @transform_1(%arg0: i32) -> (i32, i32) {
    %c0_i32 = arith.constant 0 : i32
    %c0_i32_0 = arith.constant 0 : i32
    %c0_i32_1 = arith.constant 0 : i32
    return %c0_i32, %c0_i32_0 : i32, i32
  }
  func.func @transform_2(%arg0: i32) -> (i32, i32) {
    %c0_i32 = arith.constant 0 : i32
    %c0_i32_0 = arith.constant 0 : i32
    %c0_i32_1 = arith.constant 0 : i32
    return %c0_i32, %c0_i32_0 : i32, i32
  }
  func.func @transform_3(%arg0: i32) -> (i32, i32) {
    %c0_i32 = arith.constant 0 : i32
    %c0_i32_0 = arith.constant 0 : i32
    return %arg0, %c0_i32 : i32, i32
  }
  func.func @transform_4(%arg0: i32) -> (i32, i32) {
    %c0_i32 = arith.constant 0 : i32
    %c0_i32_0 = arith.constant 0 : i32
    return %arg0, %c0_i32 : i32, i32
  }
  func.func @transform_5(%arg0: i32) -> (i32, i32) {
    %c0_i32 = arith.constant 0 : i32
    %c0_i32_0 = arith.constant 0 : i32
    return %arg0, %c0_i32 : i32, i32
  }
}

module attributes {stable_mosaic.version = 11 : i64} {
  func.func @_mha_kernel(%arg0: i32, %arg1: i32, %arg2: memref<1x32x32xbf16, #tpu.memory_space<vmem>>, %arg3: memref<1x32x32xbf16, #tpu.memory_space<vmem>>, %arg4: memref<1x32x32xbf16, #tpu.memory_space<vmem>>, %arg5: memref<1x1x32xf32, #tpu.memory_space<vmem>>, %arg6: memref<32x32xbf16, #tpu.memory_space<vmem>>, %arg7: memref<1x32xf32, #tpu.memory_space<vmem>>, %arg8: memref<1x32x32xf32, #tpu.memory_space<vmem>>) attributes {dimension_semantics = [#tpu.dimension_semantics<parallel>, #tpu.dimension_semantics<parallel>], iteration_bounds = array<i64: 2, 1>, scalar_prefetch = 0 : i64, scratch_operands = 0 : i64, tpu.core_type = #tpu.core_type<tc>, window_params = [{transform_indices = @transform_0, window_bounds = array<i64: 1, 32, 32>}, {transform_indices = @transform_1, window_bounds = array<i64: 1, 32, 32>}, {transform_indices = @transform_2, window_bounds = array<i64: 1, 32, 32>}, {transform_indices = @transform_3, window_bounds = array<i64: 1, 1, 32>}, {pipeline_mode = #tpu.pipeline_mode<synchronous>, transform_indices = @transform_4, window_bounds = array<i64: 32, 32>}, {pipeline_mode = #tpu.pipeline_mode<synchronous>, transform_indices = @transform_5, window_bounds = array<i64: 1, 32>}, {transform_indices = @transform_6, window_bounds = array<i64: 1, 32, 32>}]} {
    %c0 = arith.constant 0 : index
    %c0_0 = arith.constant 0 : index
    %c0_1 = arith.constant 0 : index
    %0 = vector.load %arg5[%c0, %c0_0, %c0_1] : memref<1x1x32xf32, #tpu.memory_space<vmem>>, vector<1x1x32xf32>
    %1 = vector.shape_cast %0 : vector<1x1x32xf32> to vector<1x32xf32>
    %cst = arith.constant 0.000000e+00 : f32
    %2 = vector.broadcast %cst : f32 to vector<32x32xf32>
    %c0_2 = arith.constant 0 : index
    %c0_3 = arith.constant 0 : index
    %c0_4 = arith.constant 0 : index
    %3 = vector.load %arg2[%c0_2, %c0_3, %c0_4] : memref<1x32x32xbf16, #tpu.memory_space<vmem>>, vector<1x32x16xbf16>
    %4 = vector.shape_cast %3 : vector<1x32x16xbf16> to vector<32x16xbf16>
    %c0_5 = arith.constant 0 : index
    %c0_6 = arith.constant 0 : index
    %c0_7 = arith.constant 0 : index
    %5 = vector.load %arg3[%c0_5, %c0_6, %c0_7] : memref<1x32x32xbf16, #tpu.memory_space<vmem>>, vector<1x32x16xbf16>
    %6 = vector.shape_cast %5 : vector<1x32x16xbf16> to vector<32x16xbf16>
    %c0_8 = arith.constant 0 : index
    %c0_9 = arith.constant 0 : index
    %c0_10 = arith.constant 0 : index
    %7 = vector.load %arg4[%c0_8, %c0_9, %c0_10] : memref<1x32x32xbf16, #tpu.memory_space<vmem>>, vector<1x32x16xbf16>
    %8 = vector.shape_cast %7 : vector<1x32x16xbf16> to vector<32x16xbf16>
    %cst_11 = arith.constant dense<0.000000e+00> : vector<32x32xf32>
    %9 = tpu.matmul %4, %6, %cst_11 {dimension_numbers = #tpu.dot_dimension_numbers<[1], [1], [0], [0], [0, 0, 1, 0], [], []>} : vector<32x16xbf16>, vector<32x16xbf16>, vector<32x32xf32> -> vector<32x32xf32>
    %cst_12 = arith.constant 2.500000e-01 : f32
    %10 = vector.broadcast %cst_12 : f32 to vector<32x32xf32>
    %11 = arith.mulf %9, %10 : vector<32x32xf32>
    %12 = vector.broadcast %1 : vector<1x32xf32> to vector<32x32xf32>
    %13 = arith.addf %11, %12 : vector<32x32xf32>
    %cst_13 = arith.constant dense<0xFF800000> : vector<32xf32>
    %14 = vector.multi_reduction <maximumf>, %13, %cst_13 [1] : vector<32x32xf32> to vector<32xf32>
    %15 = vector.shape_cast %14 : vector<32xf32> to vector<32x1xf32>
    %16 = vector.broadcast %15 : vector<32x1xf32> to vector<32x32xf32>
    %17 = arith.subf %13, %16 : vector<32x32xf32>
    %18 = math.exp %17 : vector<32x32xf32>
    %cst_14 = arith.constant dense<0.000000e+00> : vector<32xf32>
    %19 = vector.multi_reduction <add>, %18, %cst_14 [1] : vector<32x32xf32> to vector<32xf32>
    %20 = vector.shape_cast %19 : vector<32xf32> to vector<32x1xf32>
    %21 = tpu.reciprocal %20 {approx = true} : vector<32x1xf32> -> vector<32x1xf32>
    %22 = vector.broadcast %21 : vector<32x1xf32> to vector<32x32xf32>
    %23 = arith.mulf %18, %22 : vector<32x32xf32>
    %24 = arith.truncf %23 : vector<32x32xf32> to vector<32x32xbf16>
    %cst_15 = arith.constant dense<0.000000e+00> : vector<32x16xf32>
    %25 = tpu.matmul %24, %8, %cst_15 {dimension_numbers = #tpu.dot_dimension_numbers<[1], [0], [0], [1], [0, 0, 1, 1], [], []>} : vector<32x32xbf16>, vector<32x16xbf16>, vector<32x16xf32> -> vector<32x16xf32>
    %26 = arith.truncf %25 : vector<32x16xf32> to vector<32x16xbf16>
    %c0_16 = arith.constant 0 : index
    %c0_17 = arith.constant 0 : index
    %27 = vector.load %arg6[%c0_16, %c0_17] : memref<32x32xbf16, #tpu.memory_space<vmem>>, vector<16x32xbf16>
    %cst_18 = arith.constant dense<0.000000e+00> : vector<32x32xf32>
    %28 = tpu.matmul %26, %27, %cst_18 {dimension_numbers = #tpu.dot_dimension_numbers<[1], [0], [0], [1], [0, 0, 1, 1], [], []>} : vector<32x16xbf16>, vector<16x32xbf16>, vector<32x32xf32> -> vector<32x32xf32>
    %29 = arith.addf %2, %28 : vector<32x32xf32>
    %c0_19 = arith.constant 0 : index
    %c0_20 = arith.constant 0 : index
    %c16 = arith.constant 16 : index
    %30 = vector.load %arg2[%c0_19, %c0_20, %c16] : memref<1x32x32xbf16, #tpu.memory_space<vmem>>, vector<1x32x16xbf16>
    %31 = vector.shape_cast %30 : vector<1x32x16xbf16> to vector<32x16xbf16>
    %c0_21 = arith.constant 0 : index
    %c0_22 = arith.constant 0 : index
    %c16_23 = arith.constant 16 : index
    %32 = vector.load %arg3[%c0_21, %c0_22, %c16_23] : memref<1x32x32xbf16, #tpu.memory_space<vmem>>, vector<1x32x16xbf16>
    %33 = vector.shape_cast %32 : vector<1x32x16xbf16> to vector<32x16xbf16>
    %c0_24 = arith.constant 0 : index
    %c0_25 = arith.constant 0 : index
    %c16_26 = arith.constant 16 : index
    %34 = vector.load %arg4[%c0_24, %c0_25, %c16_26] : memref<1x32x32xbf16, #tpu.memory_space<vmem>>, vector<1x32x16xbf16>
    %35 = vector.shape_cast %34 : vector<1x32x16xbf16> to vector<32x16xbf16>
    %cst_27 = arith.constant dense<0.000000e+00> : vector<32x32xf32>
    %36 = tpu.matmul %31, %33, %cst_27 {dimension_numbers = #tpu.dot_dimension_numbers<[1], [1], [0], [0], [0, 0, 1, 0], [], []>} : vector<32x16xbf16>, vector<32x16xbf16>, vector<32x32xf32> -> vector<32x32xf32>
    %cst_28 = arith.constant 2.500000e-01 : f32
    %37 = vector.broadcast %cst_28 : f32 to vector<32x32xf32>
    %38 = arith.mulf %36, %37 : vector<32x32xf32>
    %39 = vector.broadcast %1 : vector<1x32xf32> to vector<32x32xf32>
    %40 = arith.addf %38, %39 : vector<32x32xf32>
    %cst_29 = arith.constant dense<0xFF800000> : vector<32xf32>
    %41 = vector.multi_reduction <maximumf>, %40, %cst_29 [1] : vector<32x32xf32> to vector<32xf32>
    %42 = vector.shape_cast %41 : vector<32xf32> to vector<32x1xf32>
    %43 = vector.broadcast %42 : vector<32x1xf32> to vector<32x32xf32>
    %44 = arith.subf %40, %43 : vector<32x32xf32>
    %45 = math.exp %44 : vector<32x32xf32>
    %cst_30 = arith.constant dense<0.000000e+00> : vector<32xf32>
    %46 = vector.multi_reduction <add>, %45, %cst_30 [1] : vector<32x32xf32> to vector<32xf32>
    %47 = vector.shape_cast %46 : vector<32xf32> to vector<32x1xf32>
    %48 = tpu.reciprocal %47 {approx = true} : vector<32x1xf32> -> vector<32x1xf32>
    %49 = vector.broadcast %48 : vector<32x1xf32> to vector<32x32xf32>
    %50 = arith.mulf %45, %49 : vector<32x32xf32>
    %51 = arith.truncf %50 : vector<32x32xf32> to vector<32x32xbf16>
    %cst_31 = arith.constant dense<0.000000e+00> : vector<32x16xf32>
    %52 = tpu.matmul %51, %35, %cst_31 {dimension_numbers = #tpu.dot_dimension_numbers<[1], [0], [0], [1], [0, 0, 1, 1], [], []>} : vector<32x32xbf16>, vector<32x16xbf16>, vector<32x16xf32> -> vector<32x16xf32>
    %53 = arith.truncf %52 : vector<32x16xf32> to vector<32x16xbf16>
    %c16_32 = arith.constant 16 : index
    %c0_33 = arith.constant 0 : index
    %54 = vector.load %arg6[%c16_32, %c0_33] : memref<32x32xbf16, #tpu.memory_space<vmem>>, vector<16x32xbf16>
    %cst_34 = arith.constant dense<0.000000e+00> : vector<32x32xf32>
    %55 = tpu.matmul %53, %54, %cst_34 {dimension_numbers = #tpu.dot_dimension_numbers<[1], [0], [0], [1], [0, 0, 1, 1], [], []>} : vector<32x16xbf16>, vector<16x32xbf16>, vector<32x32xf32> -> vector<32x32xf32>
    %56 = arith.addf %29, %55 : vector<32x32xf32>
    %c0_35 = arith.constant 0 : index
    %c0_36 = arith.constant 0 : index
    %57 = vector.load %arg7[%c0_35, %c0_36] : memref<1x32xf32, #tpu.memory_space<vmem>>, vector<1x32xf32>
    %58 = vector.broadcast %57 : vector<1x32xf32> to vector<32x32xf32>
    %59 = arith.addf %56, %58 : vector<32x32xf32>
    %c0_37 = arith.constant 0 : index
    %c0_38 = arith.constant 0 : index
    %c0_39 = arith.constant 0 : index
    %60 = vector.load %arg8[%c0_37, %c0_38, %c0_39] : memref<1x32x32xf32, #tpu.memory_space<vmem>>, vector<1x32x32xf32>
    %61 = vector.shape_cast %60 : vector<1x32x32xf32> to vector<32x32xf32>
    %62 = vector.shape_cast %59 : vector<32x32xf32> to vector<1x32x32xf32>
    tpu.vector_store %arg8[%c0_37, %c0_38, %c0_39], %62 {strides = array<i32>} : memref<1x32x32xf32, #tpu.memory_space<vmem>>, vector<1x32x32xf32>,
    return
  }
  func.func @transform_0(%arg0: i32, %arg1: i32) -> (i32, i32, i32) {
    %c0_i32 = arith.constant 0 : i32
    %c0_i32_0 = arith.constant 0 : i32
    return %arg0, %arg1, %c0_i32 : i32, i32, i32
  }
  func.func @transform_1(%arg0: i32, %arg1: i32) -> (i32, i32, i32) {
    %c0_i32 = arith.constant 0 : i32
    %c0_i32_0 = arith.constant 0 : i32
    %c0_i32_1 = arith.constant 0 : i32
    return %arg0, %c0_i32, %c0_i32_0 : i32, i32, i32
  }
  func.func @transform_2(%arg0: i32, %arg1: i32) -> (i32, i32, i32) {
    %c0_i32 = arith.constant 0 : i32
    %c0_i32_0 = arith.constant 0 : i32
    %c0_i32_1 = arith.constant 0 : i32
    return %arg0, %c0_i32, %c0_i32_0 : i32, i32, i32
  }
  func.func @transform_3(%arg0: i32, %arg1: i32) -> (i32, i32, i32) {
    %c0_i32 = arith.constant 0 : i32
    %c0_i32_0 = arith.constant 0 : i32
    %c0_i32_1 = arith.constant 0 : i32
    return %arg0, %c0_i32, %c0_i32_0 : i32, i32, i32
  }
  func.func @transform_4(%arg0: i32, %arg1: i32) -> (i32, i32) {
    %c0_i32 = arith.constant 0 : i32
    %c0_i32_0 = arith.constant 0 : i32
    %c0_i32_1 = arith.constant 0 : i32
    return %c0_i32, %c0_i32_0 : i32, i32
  }
  func.func @transform_5(%arg0: i32, %arg1: i32) -> (i32, i32) {
    %c0_i32 = arith.constant 0 : i32
    %c0_i32_0 = arith.constant 0 : i32
    %c0_i32_1 = arith.constant 0 : i32
    return %c0_i32, %c0_i32_0 : i32, i32
  }
  func.func @transform_6(%arg0: i32, %arg1: i32) -> (i32, i32, i32) {
    %c0_i32 = arith.constant 0 : i32
    %c0_i32_0 = arith.constant 0 : i32
    return %arg0, %arg1, %c0_i32 : i32, i32, i32
  }
}

module attributes {stable_mosaic.version = 11 : i64} {
  func.func @_ffn_tail_kernel(%arg0: i32, %arg1: memref<1x32x32xf32, #tpu.memory_space<vmem>>, %arg2: memref<1x32x32xf32, #tpu.memory_space<vmem>>, %arg3: memref<1x32x1xf32, #tpu.memory_space<vmem>>, %arg4: memref<1x32xf32, #tpu.memory_space<vmem>>, %arg5: memref<1x32xf32, #tpu.memory_space<vmem>>, %arg6: memref<3x32x64xbf16, #tpu.memory_space<vmem>>, %arg7: memref<1x64xf32, #tpu.memory_space<vmem>>, %arg8: memref<3x64x32xbf16, #tpu.memory_space<vmem>>, %arg9: memref<1x32xf32, #tpu.memory_space<vmem>>, %arg10: memref<1x32xf32, #tpu.memory_space<vmem>>, %arg11: memref<1x32xf32, #tpu.memory_space<vmem>>, %arg12: memref<1x32x32xf32, #tpu.memory_space<vmem>>, %arg13: memref<48x32xbf16, #tpu.memory_space<vmem>>, %arg14: memref<48x64xbf16, #tpu.memory_space<vmem>>) attributes {dimension_semantics = [#tpu.dimension_semantics<parallel>], iteration_bounds = array<i64: 2>, scalar_prefetch = 0 : i64, scratch_operands = 2 : i64, tpu.core_type = #tpu.core_type<tc>, window_params = [{transform_indices = @transform_0, window_bounds = array<i64: 1, 32, 32>}, {transform_indices = @transform_1, window_bounds = array<i64: 1, 32, 32>}, {transform_indices = @transform_2, window_bounds = array<i64: 1, 32, 1>}, {pipeline_mode = #tpu.pipeline_mode<synchronous>, transform_indices = @transform_3, window_bounds = array<i64: 1, 32>}, {pipeline_mode = #tpu.pipeline_mode<synchronous>, transform_indices = @transform_4, window_bounds = array<i64: 1, 32>}, {pipeline_mode = #tpu.pipeline_mode<synchronous>, transform_indices = @transform_5, window_bounds = array<i64: 3, 32, 64>}, {pipeline_mode = #tpu.pipeline_mode<synchronous>, transform_indices = @transform_6, window_bounds = array<i64: 1, 64>}, {pipeline_mode = #tpu.pipeline_mode<synchronous>, transform_indices = @transform_7, window_bounds = array<i64: 3, 64, 32>}, {pipeline_mode = #tpu.pipeline_mode<synchronous>, transform_indices = @transform_8, window_bounds = array<i64: 1, 32>}, {pipeline_mode = #tpu.pipeline_mode<synchronous>, transform_indices = @transform_9, window_bounds = array<i64: 1, 32>}, {pipeline_mode = #tpu.pipeline_mode<synchronous>, transform_indices = @transform_10, window_bounds = array<i64: 1, 32>}, {transform_indices = @transform_11, window_bounds = array<i64: 1, 32, 32>}]} {
    %c0 = arith.constant 0 : index
    %c0_0 = arith.constant 0 : index
    %c0_1 = arith.constant 0 : index
    %0 = vector.load %arg3[%c0, %c0_0, %c0_1] : memref<1x32x1xf32, #tpu.memory_space<vmem>>, vector<1x32x1xf32>
    %1 = vector.shape_cast %0 : vector<1x32x1xf32> to vector<32x1xf32>
    %c0_2 = arith.constant 0 : index
    %c0_3 = arith.constant 0 : index
    %c0_4 = arith.constant 0 : index
    %2 = vector.load %arg1[%c0_2, %c0_3, %c0_4] : memref<1x32x32xf32, #tpu.memory_space<vmem>>, vector<1x32x32xf32>
    %3 = vector.shape_cast %2 : vector<1x32x32xf32> to vector<32x32xf32>
    %c0_5 = arith.constant 0 : index
    %c0_6 = arith.constant 0 : index
    %c0_7 = arith.constant 0 : index
    %4 = vector.load %arg2[%c0_5, %c0_6, %c0_7] : memref<1x32x32xf32, #tpu.memory_space<vmem>>, vector<1x32x32xf32>
    %5 = vector.shape_cast %4 : vector<1x32x32xf32> to vector<32x32xf32>
    %6 = arith.addf %3, %5 : vector<32x32xf32>
    %cst = arith.constant dense<0.000000e+00> : vector<32xf32>
    %7 = vector.multi_reduction <add>, %6, %cst [1] : vector<32x32xf32> to vector<32xf32>
    %8 = vector.shape_cast %7 : vector<32xf32> to vector<32x1xf32>
    %cst_8 = arith.constant 3.200000e+01 : f32
    %9 = vector.broadcast %cst_8 : f32 to vector<32x1xf32>
    %10 = arith.divf %8, %9 : vector<32x1xf32>
    %11 = vector.broadcast %10 : vector<32x1xf32> to vector<32x32xf32>
    %12 = arith.subf %6, %11 : vector<32x32xf32>
    %13 = arith.mulf %12, %12 : vector<32x32xf32>
    %cst_9 = arith.constant dense<0.000000e+00> : vector<32xf32>
    %14 = vector.multi_reduction <add>, %13, %cst_9 [1] : vector<32x32xf32> to vector<32xf32>
    %15 = vector.shape_cast %14 : vector<32xf32> to vector<32x1xf32>
    %cst_10 = arith.constant 3.200000e+01 : f32
    %16 = vector.broadcast %cst_10 : f32 to vector<32x1xf32>
    %17 = arith.divf %15, %16 : vector<32x1xf32>
    %18 = vector.broadcast %10 : vector<32x1xf32> to vector<32x32xf32>
    %19 = arith.subf %6, %18 : vector<32x32xf32>
    %cst_11 = arith.constant 9.99999974E-6 : f32
    %20 = vector.broadcast %cst_11 : f32 to vector<32x1xf32>
    %21 = arith.addf %17, %20 : vector<32x1xf32>
    %22 = math.rsqrt %21 : vector<32x1xf32>
    %23 = vector.broadcast %22 : vector<32x1xf32> to vector<32x32xf32>
    %24 = arith.mulf %19, %23 : vector<32x32xf32>
    %c0_12 = arith.constant 0 : index
    %c0_13 = arith.constant 0 : index
    %25 = vector.load %arg4[%c0_12, %c0_13] : memref<1x32xf32, #tpu.memory_space<vmem>>, vector<1x32xf32>
    %26 = vector.broadcast %25 : vector<1x32xf32> to vector<32x32xf32>
    %27 = arith.mulf %24, %26 : vector<32x32xf32>
    %c0_14 = arith.constant 0 : index
    %c0_15 = arith.constant 0 : index
    %28 = vector.load %arg5[%c0_14, %c0_15] : memref<1x32xf32, #tpu.memory_space<vmem>>, vector<1x32xf32>
    %29 = vector.broadcast %28 : vector<1x32xf32> to vector<32x32xf32>
    %30 = arith.addf %27, %29 : vector<32x32xf32>
    %31 = vector.broadcast %1 : vector<32x1xf32> to vector<32x32xf32>
    %32 = arith.mulf %30, %31 : vector<32x32xf32>
    %cst_16 = arith.constant 0.000000e+00 : bf16
    %33 = vector.broadcast %cst_16 : bf16 to vector<8x32xbf16>
    %c0_17 = arith.constant 0 : index
    %c0_18 = arith.constant 0 : index
    %34 = vector.load %arg13[%c0_17, %c0_18] : memref<48x32xbf16, #tpu.memory_space<vmem>>, vector<8x32xbf16>
    tpu.vector_store %arg13[%c0_17, %c0_18], %33 {strides = array<i32>} : memref<48x32xbf16, #tpu.memory_space<vmem>>, vector<8x32xbf16>,
    %cst_19 = arith.constant 0.000000e+00 : bf16
    %35 = vector.broadcast %cst_19 : bf16 to vector<8x32xbf16>
    %c40 = arith.constant 40 : index
    %c0_20 = arith.constant 0 : index
    %36 = vector.load %arg13[%c40, %c0_20] : memref<48x32xbf16, #tpu.memory_space<vmem>>, vector<8x32xbf16>
    tpu.vector_store %arg13[%c40, %c0_20], %35 {strides = array<i32>} : memref<48x32xbf16, #tpu.memory_space<vmem>>, vector<8x32xbf16>,
    %37 = arith.truncf %32 : vector<32x32xf32> to vector<32x32xbf16>
    %c8 = arith.constant 8 : index
    %c0_21 = arith.constant 0 : index
    %38 = vector.load %arg13[%c8, %c0_21] : memref<48x32xbf16, #tpu.memory_space<vmem>>, vector<32x32xbf16>
    tpu.vector_store %arg13[%c8, %c0_21], %37 {strides = array<i32>} : memref<48x32xbf16, #tpu.memory_space<vmem>>, vector<32x32xbf16>,
    %cst_22 = arith.constant 0.000000e+00 : f32
    %39 = vector.broadcast %cst_22 : f32 to vector<32x64xf32>
    %c7 = arith.constant 7 : index
    %c0_23 = arith.constant 0 : index
    %40 = vector.load %arg13[%c7, %c0_23] : memref<48x32xbf16, #tpu.memory_space<vmem>>, vector<32x32xbf16>
    %c0_24 = arith.constant 0 : index
    %c0_25 = arith.constant 0 : index
    %c0_26 = arith.constant 0 : index
    %41 = vector.load %arg6[%c0_24, %c0_25, %c0_26] : memref<3x32x64xbf16, #tpu.memory_space<vmem>>, vector<1x32x64xbf16>
    %42 = vector.shape_cast %41 : vector<1x32x64xbf16> to vector<32x64xbf16>
    %cst_27 = arith.constant dense<0.000000e+00> : vector<32x64xf32>
    %43 = tpu.matmul %40, %42, %cst_27 {dimension_numbers = #tpu.dot_dimension_numbers<[1], [0], [0], [1], [0, 0, 1, 1], [], []>} : vector<32x32xbf16>, vector<32x64xbf16>, vector<32x64xf32> -> vector<32x64xf32>
    %44 = arith.addf %39, %43 : vector<32x64xf32>
    %c8_28 = arith.constant 8 : index
    %c0_29 = arith.constant 0 : index
    %45 = vector.load %arg13[%c8_28, %c0_29] : memref<48x32xbf16, #tpu.memory_space<vmem>>, vector<32x32xbf16>
    %c1 = arith.constant 1 : index
    %c0_30 = arith.constant 0 : index
    %c0_31 = arith.constant 0 : index
    %46 = vector.load %arg6[%c1, %c0_30, %c0_31] : memref<3x32x64xbf16, #tpu.memory_space<vmem>>, vector<1x32x64xbf16>
    %47 = vector.shape_cast %46 : vector<1x32x64xbf16> to vector<32x64xbf16>
    %cst_32 = arith.constant dense<0.000000e+00> : vector<32x64xf32>
    %48 = tpu.matmul %45, %47, %cst_32 {dimension_numbers = #tpu.dot_dimension_numbers<[1], [0], [0], [1], [0, 0, 1, 1], [], []>} : vector<32x32xbf16>, vector<32x64xbf16>, vector<32x64xf32> -> vector<32x64xf32>
    %49 = arith.addf %44, %48 : vector<32x64xf32>
    %c9 = arith.constant 9 : index
    %c0_33 = arith.constant 0 : index
    %50 = vector.load %arg13[%c9, %c0_33] : memref<48x32xbf16, #tpu.memory_space<vmem>>, vector<32x32xbf16>
    %c2 = arith.constant 2 : index
    %c0_34 = arith.constant 0 : index
    %c0_35 = arith.constant 0 : index
    %51 = vector.load %arg6[%c2, %c0_34, %c0_35] : memref<3x32x64xbf16, #tpu.memory_space<vmem>>, vector<1x32x64xbf16>
    %52 = vector.shape_cast %51 : vector<1x32x64xbf16> to vector<32x64xbf16>
    %cst_36 = arith.constant dense<0.000000e+00> : vector<32x64xf32>
    %53 = tpu.matmul %50, %52, %cst_36 {dimension_numbers = #tpu.dot_dimension_numbers<[1], [0], [0], [1], [0, 0, 1, 1], [], []>} : vector<32x32xbf16>, vector<32x64xbf16>, vector<32x64xf32> -> vector<32x64xf32>
    %54 = arith.addf %49, %53 : vector<32x64xf32>
    %c0_37 = arith.constant 0 : index
    %c0_38 = arith.constant 0 : index
    %55 = vector.load %arg7[%c0_37, %c0_38] : memref<1x64xf32, #tpu.memory_space<vmem>>, vector<1x64xf32>
    %56 = vector.broadcast %55 : vector<1x64xf32> to vector<32x64xf32>
    %57 = arith.addf %54, %56 : vector<32x64xf32>
    %cst_39 = arith.constant 0.000000e+00 : f32
    %58 = vector.broadcast %cst_39 : f32 to vector<32x64xf32>
    %59 = arith.maximumf %57, %58 : vector<32x64xf32>
    %cst_40 = arith.constant 0.000000e+00 : bf16
    %60 = vector.broadcast %cst_40 : bf16 to vector<8x64xbf16>
    %c0_41 = arith.constant 0 : index
    %c0_42 = arith.constant 0 : index
    %61 = vector.load %arg14[%c0_41, %c0_42] : memref<48x64xbf16, #tpu.memory_space<vmem>>, vector<8x64xbf16>
    tpu.vector_store %arg14[%c0_41, %c0_42], %60 {strides = array<i32>} : memref<48x64xbf16, #tpu.memory_space<vmem>>, vector<8x64xbf16>,
    %cst_43 = arith.constant 0.000000e+00 : bf16
    %62 = vector.broadcast %cst_43 : bf16 to vector<8x64xbf16>
    %c40_44 = arith.constant 40 : index
    %c0_45 = arith.constant 0 : index
    %63 = vector.load %arg14[%c40_44, %c0_45] : memref<48x64xbf16, #tpu.memory_space<vmem>>, vector<8x64xbf16>
    tpu.vector_store %arg14[%c40_44, %c0_45], %62 {strides = array<i32>} : memref<48x64xbf16, #tpu.memory_space<vmem>>, vector<8x64xbf16>,
    %64 = arith.truncf %59 : vector<32x64xf32> to vector<32x64xbf16>
    %c8_46 = arith.constant 8 : index
    %c0_47 = arith.constant 0 : index
    %65 = vector.load %arg14[%c8_46, %c0_47] : memref<48x64xbf16, #tpu.memory_space<vmem>>, vector<32x64xbf16>
    tpu.vector_store %arg14[%c8_46, %c0_47], %64 {strides = array<i32>} : memref<48x64xbf16, #tpu.memory_space<vmem>>, vector<32x64xbf16>,
    %cst_48 = arith.constant 0.000000e+00 : f32
    %66 = vector.broadcast %cst_48 : f32 to vector<32x32xf32>
    %c7_49 = arith.constant 7 : index
    %c0_50 = arith.constant 0 : index
    %67 = vector.load %arg14[%c7_49, %c0_50] : memref<48x64xbf16, #tpu.memory_space<vmem>>, vector<32x64xbf16>
    %c0_51 = arith.constant 0 : index
    %c0_52 = arith.constant 0 : index
    %c0_53 = arith.constant 0 : index
    %68 = vector.load %arg8[%c0_51, %c0_52, %c0_53] : memref<3x64x32xbf16, #tpu.memory_space<vmem>>, vector<1x64x32xbf16>
    %69 = vector.shape_cast %68 : vector<1x64x32xbf16> to vector<64x32xbf16>
    %cst_54 = arith.constant dense<0.000000e+00> : vector<32x32xf32>
    %70 = tpu.matmul %67, %69, %cst_54 {dimension_numbers = #tpu.dot_dimension_numbers<[1], [0], [0], [1], [0, 0, 1, 1], [], []>} : vector<32x64xbf16>, vector<64x32xbf16>, vector<32x32xf32> -> vector<32x32xf32>
    %71 = arith.addf %66, %70 : vector<32x32xf32>
    %c8_55 = arith.constant 8 : index
    %c0_56 = arith.constant 0 : index
    %72 = vector.load %arg14[%c8_55, %c0_56] : memref<48x64xbf16, #tpu.memory_space<vmem>>, vector<32x64xbf16>
    %c1_57 = arith.constant 1 : index
    %c0_58 = arith.constant 0 : index
    %c0_59 = arith.constant 0 : index
    %73 = vector.load %arg8[%c1_57, %c0_58, %c0_59] : memref<3x64x32xbf16, #tpu.memory_space<vmem>>, vector<1x64x32xbf16>
    %74 = vector.shape_cast %73 : vector<1x64x32xbf16> to vector<64x32xbf16>
    %cst_60 = arith.constant dense<0.000000e+00> : vector<32x32xf32>
    %75 = tpu.matmul %72, %74, %cst_60 {dimension_numbers = #tpu.dot_dimension_numbers<[1], [0], [0], [1], [0, 0, 1, 1], [], []>} : vector<32x64xbf16>, vector<64x32xbf16>, vector<32x32xf32> -> vector<32x32xf32>
    %76 = arith.addf %71, %75 : vector<32x32xf32>
    %c9_61 = arith.constant 9 : index
    %c0_62 = arith.constant 0 : index
    %77 = vector.load %arg14[%c9_61, %c0_62] : memref<48x64xbf16, #tpu.memory_space<vmem>>, vector<32x64xbf16>
    %c2_63 = arith.constant 2 : index
    %c0_64 = arith.constant 0 : index
    %c0_65 = arith.constant 0 : index
    %78 = vector.load %arg8[%c2_63, %c0_64, %c0_65] : memref<3x64x32xbf16, #tpu.memory_space<vmem>>, vector<1x64x32xbf16>
    %79 = vector.shape_cast %78 : vector<1x64x32xbf16> to vector<64x32xbf16>
    %cst_66 = arith.constant dense<0.000000e+00> : vector<32x32xf32>
    %80 = tpu.matmul %77, %79, %cst_66 {dimension_numbers = #tpu.dot_dimension_numbers<[1], [0], [0], [1], [0, 0, 1, 1], [], []>} : vector<32x64xbf16>, vector<64x32xbf16>, vector<32x32xf32> -> vector<32x32xf32>
    %81 = arith.addf %76, %80 : vector<32x32xf32>
    %c0_67 = arith.constant 0 : index
    %c0_68 = arith.constant 0 : index
    %82 = vector.load %arg9[%c0_67, %c0_68] : memref<1x32xf32, #tpu.memory_space<vmem>>, vector<1x32xf32>
    %83 = vector.broadcast %82 : vector<1x32xf32> to vector<32x32xf32>
    %84 = arith.addf %81, %83 : vector<32x32xf32>
    %85 = arith.addf %84, %32 : vector<32x32xf32>
    %cst_69 = arith.constant dense<0.000000e+00> : vector<32xf32>
    %86 = vector.multi_reduction <add>, %85, %cst_69 [1] : vector<32x32xf32> to vector<32xf32>
    %87 = vector.shape_cast %86 : vector<32xf32> to vector<32x1xf32>
    %cst_70 = arith.constant 3.200000e+01 : f32
    %88 = vector.broadcast %cst_70 : f32 to vector<32x1xf32>
    %89 = arith.divf %87, %88 : vector<32x1xf32>
    %90 = vector.broadcast %89 : vector<32x1xf32> to vector<32x32xf32>
    %91 = arith.subf %85, %90 : vector<32x32xf32>
    %92 = arith.mulf %91, %91 : vector<32x32xf32>
    %cst_71 = arith.constant dense<0.000000e+00> : vector<32xf32>
    %93 = vector.multi_reduction <add>, %92, %cst_71 [1] : vector<32x32xf32> to vector<32xf32>
    %94 = vector.shape_cast %93 : vector<32xf32> to vector<32x1xf32>
    %cst_72 = arith.constant 3.200000e+01 : f32
    %95 = vector.broadcast %cst_72 : f32 to vector<32x1xf32>
    %96 = arith.divf %94, %95 : vector<32x1xf32>
    %97 = vector.broadcast %89 : vector<32x1xf32> to vector<32x32xf32>
    %98 = arith.subf %85, %97 : vector<32x32xf32>
    %cst_73 = arith.constant 9.99999974E-6 : f32
    %99 = vector.broadcast %cst_73 : f32 to vector<32x1xf32>
    %100 = arith.addf %96, %99 : vector<32x1xf32>
    %101 = math.rsqrt %100 : vector<32x1xf32>
    %102 = vector.broadcast %101 : vector<32x1xf32> to vector<32x32xf32>
    %103 = arith.mulf %98, %102 : vector<32x32xf32>
    %c0_74 = arith.constant 0 : index
    %c0_75 = arith.constant 0 : index
    %104 = vector.load %arg10[%c0_74, %c0_75] : memref<1x32xf32, #tpu.memory_space<vmem>>, vector<1x32xf32>
    %105 = vector.broadcast %104 : vector<1x32xf32> to vector<32x32xf32>
    %106 = arith.mulf %103, %105 : vector<32x32xf32>
    %c0_76 = arith.constant 0 : index
    %c0_77 = arith.constant 0 : index
    %107 = vector.load %arg11[%c0_76, %c0_77] : memref<1x32xf32, #tpu.memory_space<vmem>>, vector<1x32xf32>
    %108 = vector.broadcast %107 : vector<1x32xf32> to vector<32x32xf32>
    %109 = arith.addf %106, %108 : vector<32x32xf32>
    %110 = vector.broadcast %1 : vector<32x1xf32> to vector<32x32xf32>
    %111 = arith.mulf %109, %110 : vector<32x32xf32>
    %c0_78 = arith.constant 0 : index
    %c0_79 = arith.constant 0 : index
    %c0_80 = arith.constant 0 : index
    %112 = vector.load %arg12[%c0_78, %c0_79, %c0_80] : memref<1x32x32xf32, #tpu.memory_space<vmem>>, vector<1x32x32xf32>
    %113 = vector.shape_cast %112 : vector<1x32x32xf32> to vector<32x32xf32>
    %114 = vector.shape_cast %111 : vector<32x32xf32> to vector<1x32x32xf32>
    tpu.vector_store %arg12[%c0_78, %c0_79, %c0_80], %114 {strides = array<i32>} : memref<1x32x32xf32, #tpu.memory_space<vmem>>, vector<1x32x32xf32>,
    return
  }
  func.func @transform_0(%arg0: i32) -> (i32, i32, i32) {
    %c0_i32 = arith.constant 0 : i32
    %c0_i32_0 = arith.constant 0 : i32
    %c0_i32_1 = arith.constant 0 : i32
    return %arg0, %c0_i32, %c0_i32_0 : i32, i32, i32
  }
  func.func @transform_1(%arg0: i32) -> (i32, i32, i32) {
    %c0_i32 = arith.constant 0 : i32
    %c0_i32_0 = arith.constant 0 : i32
    %c0_i32_1 = arith.constant 0 : i32
    return %arg0, %c0_i32, %c0_i32_0 : i32, i32, i32
  }
  func.func @transform_2(%arg0: i32) -> (i32, i32, i32) {
    %c0_i32 = arith.constant 0 : i32
    %c0_i32_0 = arith.constant 0 : i32
    %c0_i32_1 = arith.constant 0 : i32
    return %arg0, %c0_i32, %c0_i32_0 : i32, i32, i32
  }
  func.func @transform_3(%arg0: i32) -> (i32, i32) {
    %c0_i32 = arith.constant 0 : i32
    %c0_i32_0 = arith.constant 0 : i32
    %c0_i32_1 = arith.constant 0 : i32
    return %c0_i32, %c0_i32_0 : i32, i32
  }
  func.func @transform_4(%arg0: i32) -> (i32, i32) {
    %c0_i32 = arith.constant 0 : i32
    %c0_i32_0 = arith.constant 0 : i32
    %c0_i32_1 = arith.constant 0 : i32
    return %c0_i32, %c0_i32_0 : i32, i32
  }
  func.func @transform_5(%arg0: i32) -> (i32, i32, i32) {
    %c0_i32 = arith.constant 0 : i32
    %c0_i32_0 = arith.constant 0 : i32
    %c0_i32_1 = arith.constant 0 : i32
    %c0_i32_2 = arith.constant 0 : i32
    return %c0_i32, %c0_i32_0, %c0_i32_1 : i32, i32, i32
  }
  func.func @transform_6(%arg0: i32) -> (i32, i32) {
    %c0_i32 = arith.constant 0 : i32
    %c0_i32_0 = arith.constant 0 : i32
    %c0_i32_1 = arith.constant 0 : i32
    return %c0_i32, %c0_i32_0 : i32, i32
  }
  func.func @transform_7(%arg0: i32) -> (i32, i32, i32) {
    %c0_i32 = arith.constant 0 : i32
    %c0_i32_0 = arith.constant 0 : i32
    %c0_i32_1 = arith.constant 0 : i32
    %c0_i32_2 = arith.constant 0 : i32
    return %c0_i32, %c0_i32_0, %c0_i32_1 : i32, i32, i32
  }
  func.func @transform_8(%arg0: i32) -> (i32, i32) {
    %c0_i32 = arith.constant 0 : i32
    %c0_i32_0 = arith.constant 0 : i32
    %c0_i32_1 = arith.constant 0 : i32
    return %c0_i32, %c0_i32_0 : i32, i32
  }
  func.func @transform_9(%arg0: i32) -> (i32, i32) {
    %c0_i32 = arith.constant 0 : i32
    %c0_i32_0 = arith.constant 0 : i32
    %c0_i32_1 = arith.constant 0 : i32
    return %c0_i32, %c0_i32_0 : i32, i32
  }
  func.func @transform_10(%arg0: i32) -> (i32, i32) {
    %c0_i32 = arith.constant 0 : i32
    %c0_i32_0 = arith.constant 0 : i32
    %c0_i32_1 = arith.constant 0 : i32
    return %c0_i32, %c0_i32_0 : i32, i32
  }
  func.func @transform_11(%arg0: i32) -> (i32, i32, i32) {
    %c0_i32 = arith.constant 0 : i32
    %c0_i32_0 = arith.constant 0 : i32
    %c0_i32_1 = arith.constant 0 : i32
    return %arg0, %c0_i32, %c0_i32_0 : i32, i32, i32
  }
}

module attributes {stable_mosaic.version = 11 : i64} {
  func.func @_linear_kernel(%arg0: i32, %arg1: memref<64x32xf32, #tpu.memory_space<vmem>>, %arg2: memref<32x128xbf16, #tpu.memory_space<vmem>>, %arg3: memref<1x128xf32, #tpu.memory_space<vmem>>, %arg4: memref<64x128xf32, #tpu.memory_space<vmem>>) attributes {dimension_semantics = [#tpu.dimension_semantics<parallel>], iteration_bounds = array<i64: 1>, scalar_prefetch = 0 : i64, scratch_operands = 0 : i64, tpu.core_type = #tpu.core_type<tc>, window_params = [{transform_indices = @transform_0, window_bounds = array<i64: 64, 32>}, {pipeline_mode = #tpu.pipeline_mode<synchronous>, transform_indices = @transform_1, window_bounds = array<i64: 32, 128>}, {pipeline_mode = #tpu.pipeline_mode<synchronous>, transform_indices = @transform_2, window_bounds = array<i64: 1, 128>}, {transform_indices = @transform_3, window_bounds = array<i64: 64, 128>}]} {
    %c0 = arith.constant 0 : index
    %c0_0 = arith.constant 0 : index
    %0 = vector.load %arg1[%c0, %c0_0] : memref<64x32xf32, #tpu.memory_space<vmem>>, vector<64x32xf32>
    %1 = arith.truncf %0 : vector<64x32xf32> to vector<64x32xbf16>
    %c0_1 = arith.constant 0 : index
    %c0_2 = arith.constant 0 : index
    %2 = vector.load %arg2[%c0_1, %c0_2] : memref<32x128xbf16, #tpu.memory_space<vmem>>, vector<32x128xbf16>
    %cst = arith.constant dense<0.000000e+00> : vector<64x128xf32>
    %3 = tpu.matmul %1, %2, %cst {dimension_numbers = #tpu.dot_dimension_numbers<[1], [0], [0], [1], [0, 0, 1, 1], [], []>} : vector<64x32xbf16>, vector<32x128xbf16>, vector<64x128xf32> -> vector<64x128xf32>
    %c0_3 = arith.constant 0 : index
    %c0_4 = arith.constant 0 : index
    %4 = vector.load %arg3[%c0_3, %c0_4] : memref<1x128xf32, #tpu.memory_space<vmem>>, vector<1x128xf32>
    %5 = vector.broadcast %4 : vector<1x128xf32> to vector<64x128xf32>
    %6 = arith.addf %3, %5 : vector<64x128xf32>
    %c0_5 = arith.constant 0 : index
    %c0_6 = arith.constant 0 : index
    %7 = vector.load %arg4[%c0_5, %c0_6] : memref<64x128xf32, #tpu.memory_space<vmem>>, vector<64x128xf32>
    tpu.vector_store %arg4[%c0_5, %c0_6], %6 {strides = array<i32>} : memref<64x128xf32, #tpu.memory_space<vmem>>, vector<64x128xf32>,
    return
  }
  func.func @transform_0(%arg0: i32) -> (i32, i32) {
    %c0_i32 = arith.constant 0 : i32
    %c0_i32_0 = arith.constant 0 : i32
    return %arg0, %c0_i32 : i32, i32
  }
  func.func @transform_1(%arg0: i32) -> (i32, i32) {
    %c0_i32 = arith.constant 0 : i32
    %c0_i32_0 = arith.constant 0 : i32
    %c0_i32_1 = arith.constant 0 : i32
    return %c0_i32, %c0_i32_0 : i32, i32
  }
  func.func @transform_2(%arg0: i32) -> (i32, i32) {
    %c0_i32 = arith.constant 0 : i32
    %c0_i32_0 = arith.constant 0 : i32
    %c0_i32_1 = arith.constant 0 : i32
    return %c0_i32, %c0_i32_0 : i32, i32
  }
  func.func @transform_3(%arg0: i32) -> (i32, i32) {
    %c0_i32 = arith.constant 0 : i32
    %c0_i32_0 = arith.constant 0 : i32
    return %arg0, %c0_i32 : i32, i32
  }
}

</mosaic_0001>

<llo_original>
// kernel: _lambda_.16
$region0: #{_lambda_.16}
  #allocation0 [shape = 'u32[]', space=smem, size = 0x4, offset = 0x4, fixed_abs, tag = 'smem constant byte address 0x4 - core index']
  #allocation1 [shape = 'u32[72,128]{1,0:T(1,128)}', space=vmem, size = 0x9000, scoped, tag = 'internal scratch']
  %s0 = inlined_call_operand.vmem [shape: f32[16,32], index: 0, kind: input, shape index: {}]
  %s1 = inlined_call_operand.vmem [shape: bf16[32,96], index: 1, kind: input, shape index: {}]
  %s2 = inlined_call_operand.vmem [shape: f32[1,96], index: 2, kind: input, shape index: {}]
  %s3 = inlined_call_operand.vmem [shape: bf16[16,32], index: 3, kind: output, shape index: {0}]
  %s4 = inlined_call_operand.vmem [shape: bf16[16,32], index: 4, kind: output, shape index: {1}]
  %s5 = inlined_call_operand.vmem [shape: bf16[16,32], index: 5, kind: output, shape index: {2}]
  %6 = xla_tuple %s3, %s4, %s5
  %s7 = sld [smem:[#allocation0]]
  $region38: #{_lambda_.16} parent=0
    _
  %s9 = ssub.s32 1, %s7
  %s10 = scalar_select 0, %s9, %s7
  // Predicated region
  $region2: #{_lambda_.16} parent=0 // pred_check
    _
  $region3: #{_lambda_.16} parent=0 // pred_check_branch
    %12 = sbr.rel (0) target = $region5
  $region4: #{_lambda_.16} parent=0 // pred_region
    _
  $region5: #{_lambda_.16} parent=0 // pred_fallthru
    _
  // Predicated region
  $region6: #{_lambda_.16} parent=0 // pred_check
    _
  $region7: #{_lambda_.16} parent=0 // pred_check_branch
    %14 = sbr.rel (0) target = $region9
  $region8: #{_lambda_.16} parent=0 // pred_region
    _
  $region9: #{_lambda_.16} parent=0 // pred_fallthru
    _
  // Predicated region
  $region10: #{_lambda_.16} parent=0 // pred_check
    _
  $region11: #{_lambda_.16} parent=0 // pred_check_branch
    %16 = sbr.rel (0) target = $region13
  $region12: #{_lambda_.16} parent=0 // pred_region
    _
  $region13: #{_lambda_.16} parent=0 // pred_fallthru
    _
  %v18 = vld [vmem:[%s0] sm:$0xff]
  %v19 = vld [vmem:[%s0 + $0x8] sm:$0xff]
  %v20 = vpack.c.bf16 %v19, %v18
  %v21 = vld [vmem:[%s1] sm:$0xf]
  %v22 = vld [vmem:[%s1 + $0x4] sm:$0xf]
  %v23 = vld [vmem:[%s1 + $0x8] sm:$0xf]
  %v24 = vld [vmem:[%s1 + $0xc] sm:$0xf]
  %v25 = vld [vmem:[%s2] sm:$0x1]
  %v27 = vperm.slane %v25, 0
  %v33 = vunpack.c.l.b16 %v21
  %v34 = vunpack.c.l.b16 %v22
  %v35 = vunpack.c.l.b16 %v23
  %v36 = vunpack.c.l.b16 %v24
  %v37 = vpack.c.b16 %v34, %v33
  %v38 = vpack.c.b16 %v36, %v35
  %vm41 = vcmask 261120
  %v43 = vsel %vm41, %v20, 0
  %45 = vmatpush.bf16.msra.mxu0 0
  %46 = vmatpush.bf16.msra.mxu0 0
  %47 = vmatpush.bf16.msra.mxu0 0
  %48 = vmatpush.bf16.msra.mxu0 0
  %49 = vmatpush.bf16.msra.mxu0 0
  %50 = vmatpush.bf16.msra.mxu0 0
  %51 = vmatpush.bf16.msra.mxu0 %v38
  %52 = vmatpush.bf16.msra.mxu0 %v37
  %53 = vmatmul.bf16.gmra.mxu0 %v43
  %v54 = vpop.f32.mrf.mxu0
  %v55 = vadd.f32 %v27, %v54
  %v56 = vpop.f32.mrf.mxu0
  %v57 = vadd.f32 %v27, %v56
  %58 = vdwg.mxu0
  %v59 = vpack.c.bf16 %v55, %v55
  %v60 = vpack.c.bf16 %v57, %v57
  %vm61 = vcmask 257024
  %62 = vst.msk [vmem:[%s3] sm:$0xf] %vm61, %v59
  %63 = vst.msk [vmem:[%s3 + $0x4] sm:$0xf] %vm61, %v60
  %66 = vrot.lane.b32.xlu0 %v59, 96
  %v67 = vpop.permute.xlu0 %66
  %68 = vrot.lane.b32.xlu0 %v60, 96
  %v69 = vpop.permute.xlu0 %68
  %72 = vst.msk [vmem:[%s4] sm:$0xf] %vm61, %v67
  %73 = vst.msk [vmem:[%s4 + $0x4] sm:$0xf] %vm61, %v69
  %74 = vrot.lane.b32.xlu0 %v59, 64
  %v75 = vpop.permute.xlu0 %74
  %76 = vrot.lane.b32.xlu0 %v60, 64
  %v77 = vpop.permute.xlu0 %76
  %80 = vst.msk [vmem:[%s5] sm:$0xf] %vm61, %v75
  %81 = vst.msk [vmem:[%s5 + $0x4] sm:$0xf] %vm61, %v77
  // Predicated region
  $region14: #{_lambda_.16} parent=0 // pred_check
    _
  $region15: #{_lambda_.16} parent=0 // pred_check_branch
    %83 = sbr.rel (0) target = $region17
  $region16: #{_lambda_.16} parent=0 // pred_region
    _
  $region17: #{_lambda_.16} parent=0 // pred_fallthru
    _
  // Predicated region
  $region18: #{_lambda_.16} parent=0 // pred_check
    _
  $region19: #{_lambda_.16} parent=0 // pred_check_branch
    %85 = sbr.rel (0) target = $region21
  $region20: #{_lambda_.16} parent=0 // pred_region
    _
  $region21: #{_lambda_.16} parent=0 // pred_fallthru
    _
  // Predicated region
  $region22: #{_lambda_.16} parent=0 // pred_check
    _
  $region23: #{_lambda_.16} parent=0 // pred_check_branch
    %87 = sbr.rel (0) target = $region25
  $region24: #{_lambda_.16} parent=0 // pred_region
    _
  $region25: #{_lambda_.16} parent=0 // pred_fallthru
    _
  // Predicated region
  $region26: #{_lambda_.16} parent=0 // pred_check
    _
  $region27: #{_lambda_.16} parent=0 // pred_check_branch
    %89 = sbr.rel (0) target = $region29
  $region28: #{_lambda_.16} parent=0 // pred_region
    _
  $region29: #{_lambda_.16} parent=0 // pred_fallthru
    _
  // Predicated region
  $region30: #{_lambda_.16} parent=0 // pred_check
    _
  $region31: #{_lambda_.16} parent=0 // pred_check_branch
    %91 = sbr.rel (0) target = $region33
  $region32: #{_lambda_.16} parent=0 // pred_region
    _
  $region33: #{_lambda_.16} parent=0 // pred_fallthru
    _
  // Predicated region
  $region34: #{_lambda_.16} parent=0 // pred_check
    _
  $region35: #{_lambda_.16} parent=0 // pred_check_branch
    %93 = sbr.rel (0) target = $region37
  $region36: #{_lambda_.16} parent=0 // pred_region
    _
  $region37: #{_lambda_.16} parent=0 // pred_fallthru
    _

// kernel: _lambda_.17
$region0: #{_lambda_.17}
  #allocation0 [shape = 'u32[]', space=smem, size = 0x4, offset = 0x4, fixed_abs, tag = 'smem constant byte address 0x4 - core index']
  #allocation1 [shape = 'u32[72,128]{1,0:T(1,128)}', space=vmem, size = 0x9000, scoped, tag = 'internal scratch']
  %s0 = inlined_call_operand.vmem [shape: bf16[2,8,32], index: 0, kind: input, shape index: {}]
  %s1 = inlined_call_operand.vmem [shape: bf16[2,8,32], index: 1, kind: input, shape index: {}]
  %s2 = inlined_call_operand.vmem [shape: bf16[2,8,32], index: 2, kind: input, shape index: {}]
  %s3 = inlined_call_operand.vmem [shape: f32[2,1,8], index: 3, kind: input, shape index: {}]
  %s4 = inlined_call_operand.vmem [shape: bf16[32,32], index: 4, kind: input, shape index: {}]
  %s5 = inlined_call_operand.vmem [shape: f32[1,32], index: 5, kind: input, shape index: {}]
  %s6 = inlined_call_operand.vmem [shape: f32[2,8,32], index: 6, kind: output, shape index: {}]
  %s7 = sld [smem:[#allocation0]]
  $region57: #{_lambda_.17} parent=0
    _
  %s9 = ssub.s32 1, %s7
  %s10 = scalar_select 0, %s9, %s7
  loop: start=0, step=1, limit=4
  $region2: #{_lambda_.17} parent=0 // loop_pre_header
    _
  $region3: #{_lambda_.17} parent=0 // loop_header
    %s12 = sphi 0, %s16
    %p13 = scmp.ge.s32.totalorder %s12, 4
    %s19 = sphi 0, %s31
    %s20 = sphi 0, %s27
    %s21 = sphi 0, %s19
    %s22 = sphi 0, %s20
    %s23 = sphi 0, %s21
    %s24 = sphi 0, %s22
    %s36 = sphi 0, %s38
    %s39 = sphi 0, %s36
    %s40 = sphi 0, %s39
    %s56 = sphi 0, %s40
    %s62 = sphi 0, %s64
    %s65 = sphi 0, %s62
    %s66 = sphi 0, %s65
    %s82 = sphi 0, %s66
    %s88 = sphi 0, %s90
    %s91 = sphi 0, %s88
    %s92 = sphi 0, %s91
    %s108 = sphi 0, %s92
    %s114 = sphi 0, %s116
    %s117 = sphi 0, %s114
    %s118 = sphi 0, %s117
    %s134 = sphi 0, %s118
    %s138 = sphi 0, %s138
    %s140 = sphi 0, %s138
    %s141 = sphi 0, %s140
    %s155 = sphi 0, %s141
    %s159 = sphi 0, %s159
    %s161 = sphi 0, %s159
    %s162 = sphi 0, %s161
    %s176 = sphi 0, %s162
    %s184 = sphi 0, %s186
    %s187 = sphi 0, %s184
    %s188 = sphi 0, %s187
    %s204 = sphi 0, %s188
  $region4: #{_lambda_.17} parent=0 // loop_header_branch
    %15 = sbr.rel (%p13) target = $region8
  $region5: #{_lambda_.17} parent=0 // loop_body
    %s17 = ssub.s32 %s12, 1
    %s18 = ssub.s32 %s12, 2
    %s25 = sadd.s32 1, %s20
    %p26 = scmp.ge.s32.totalorder %s25, 1
    %s27 = scalar_select %p26, 0, %s25
    %s28 = sadd.s32 1, %s19
    %s29 = scalar_select %p26, %s28, %s19
    %p30 = scmp.ge.s32.totalorder %s29, 2
    %s31 = scalar_select %p30, 0, %s29
    %s32 = ssub.s32 %s19, %s31
    %s33 = ssub.s32 %s20, %s27
    %s34 = sor.u32 %s32, %s33
    %p35 = scmp.eq.s32.totalorder %s34, 0
    %s37 = sadd.s32 %s36, 1
    %s38 = scalar_select %p35, %s36, %s37
    %p41 = pneg %p35
    %p42 = scmp.eq.s32.totalorder %s12, 1
    %p43 = por %p41, %p42
    %p44 = scmp.ne.s32.totalorder %s36, %s39
    %p45 = scmp.eq.s32.totalorder %s12, 0
    %p46 = por %p44, %p45
    %p47 = scmp.ne.s32.totalorder %s36, %s39
    %p48 = scmp.eq.s32.totalorder %s17, 1
    %p49 = por %p47, %p48
    %p50 = scmp.ne.s32.totalorder %s39, %s40
    %p51 = scmp.eq.s32.totalorder %s17, 0
    %p52 = por %p50, %p51
    %p53 = scmp.ne.s32.totalorder %s39, %s40
    %p54 = scmp.eq.s32.totalorder %s18, 1
    %p55 = por %p53, %p54
    %p57 = scmp.ne.s32.totalorder %s40, %s56
    %p58 = scmp.eq.s32.totalorder %s18, 0
    %p59 = por %p57, %p58
    %s60 = ssub.s32 %s19, %s31
    %p61 = scmp.eq.s32.totalorder %s60, 0
    %s63 = sadd.s32 %s62, 1
    %s64 = scalar_select %p61, %s62, %s63
    %p67 = pneg %p61
    %p68 = scmp.eq.s32.totalorder %s12, 1
    %p69 = por %p67, %p68
    %p70 = scmp.ne.s32.totalorder %s62, %s65
    %p71 = scmp.eq.s32.totalorder %s12, 0
    %p72 = por %p70, %p71
    %p73 = scmp.ne.s32.totalorder %s62, %s65
    %p74 = scmp.eq.s32.totalorder %s17, 1
    %p75 = por %p73, %p74
    %p76 = scmp.ne.s32.totalorder %s65, %s66
    %p77 = scmp.eq.s32.totalorder %s17, 0
    %p78 = por %p76, %p77
    %p79 = scmp.ne.s32.totalorder %s65, %s66
    %p80 = scmp.eq.s32.totalorder %s18, 1
    %p81 = por %p79, %p80
    %p83 = scmp.ne.s32.totalorder %s66, %s82
    %p84 = scmp.eq.s32.totalorder %s18, 0
    %p85 = por %p83, %p84
    %s86 = ssub.s32 %s19, %s31
    %p87 = scmp.eq.s32.totalorder %s86, 0
    %s89 = sadd.s32 %s88, 1
    %s90 = scalar_select %p87, %s88, %s89
    %p93 = pneg %p87
    %p94 = scmp.eq.s32.totalorder %s12, 1
    %p95 = por %p93, %p94
    %p96 = scmp.ne.s32.totalorder %s88, %s91
    %p97 = scmp.eq.s32.totalorder %s12, 0
    %p98 = por %p96, %p97
    %p99 = scmp.ne.s32.totalorder %s88, %s91
    %p100 = scmp.eq.s32.totalorder %s17, 1
    %p101 = por %p99, %p100
    %p102 = scmp.ne.s32.totalorder %s91, %s92
    %p103 = scmp.eq.s32.totalorder %s17, 0
    %p104 = por %p102, %p103
    %p105 = scmp.ne.s32.totalorder %s91, %s92
    %p106 = scmp.eq.s32.totalorder %s18, 1
    %p107 = por %p105, %p106
    %p109 = scmp.ne.s32.totalorder %s92, %s108
    %p110 = scmp.eq.s32.totalorder %s18, 0
    %p111 = por %p109, %p110
    %s112 = ssub.s32 %s19, %s31
    %p113 = scmp.eq.s32.totalorder %s112, 0
    %s115 = sadd.s32 %s114, 1
    %s116 = scalar_select %p113, %s114, %s115
    %p119 = pneg %p113
    %p120 = scmp.eq.s32.totalorder %s12, 1
    %p121 = por %p119, %p120
    %p122 = scmp.ne.s32.totalorder %s114, %s117
    %p123 = scmp.eq.s32.totalorder %s12, 0
    %p124 = por %p122, %p123
    %p125 = scmp.ne.s32.totalorder %s114, %s117
    %p126 = scmp.eq.s32.totalorder %s17, 1
    %p127 = por %p125, %p126
    %p128 = scmp.ne.s32.totalorder %s117, %s118
    %p129 = scmp.eq.s32.totalorder %s17, 0
    %p130 = por %p128, %p129
    %p131 = scmp.ne.s32.totalorder %s117, %s118
    %p132 = scmp.eq.s32.totalorder %s18, 1
    %p133 = por %p131, %p132
    %p135 = scmp.ne.s32.totalorder %s118, %s134
    %p136 = scmp.eq.s32.totalorder %s18, 0
    %p137 = por %p135, %p136
    %s139 = sadd.s32 %s138, 1
    %p142 = scmp.eq.s32.totalorder %s12, 1
    %p143 = scmp.ne.s32.totalorder %s138, %s140
    %p144 = scmp.eq.s32.totalorder %s12, 0
    %p145 = por %p143, %p144
    %p146 = scmp.ne.s32.totalorder %s138, %s140
    %p147 = scmp.eq.s32.totalorder %s17, 1
    %p148 = por %p146, %p147
    %p149 = scmp.ne.s32.totalorder %s140, %s141
    %p150 = scmp.eq.s32.totalorder %s17, 0
    %p151 = por %p149, %p150
    %p152 = scmp.ne.s32.totalorder %s140, %s141
    %p153 = scmp.eq.s32.totalorder %s18, 1
    %p154 = por %p152, %p153
    %p156 = scmp.ne.s32.totalorder %s141, %s155
    %p157 = scmp.eq.s32.totalorder %s18, 0
    %p158 = por %p156, %p157
    %s160 = sadd.s32 %s159, 1
    %p163 = scmp.eq.s32.totalorder %s12, 1
    %p164 = scmp.ne.s32.totalorder %s159, %s161
    %p165 = scmp.eq.s32.totalorder %s12, 0
    %p166 = por %p164, %p165
    %p167 = scmp.ne.s32.totalorder %s159, %s161
    %p168 = scmp.eq.s32.totalorder %s17, 1
    %p169 = por %p167, %p168
    %p170 = scmp.ne.s32.totalorder %s161, %s162
    %p171 = scmp.eq.s32.totalorder %s17, 0
    %p172 = por %p170, %p171
    %p173 = scmp.ne.s32.totalorder %s161, %s162
    %p174 = scmp.eq.s32.totalorder %s18, 1
    %p175 = por %p173, %p174
    %p177 = scmp.ne.s32.totalorder %s162, %s176
    %p178 = scmp.eq.s32.totalorder %s18, 0
    %p179 = por %p177, %p178
    %s180 = ssub.s32 %s19, %s31
    %s181 = ssub.s32 %s20, %s27
    %s182 = sor.u32 %s180, %s181
    %p183 = scmp.eq.s32.totalorder %s182, 0
    %s185 = sadd.s32 %s184, 1
    %s186 = scalar_select %p183, %s184, %s185
    %p189 = pneg %p183
    %p190 = scmp.eq.s32.totalorder %s12, 1
    %p191 = por %p189, %p190
    %p192 = scmp.ne.s32.totalorder %s184, %s187
    %p193 = scmp.eq.s32.totalorder %s12, 0
    %p194 = por %p192, %p193
    %p195 = scmp.ne.s32.totalorder %s184, %s187
    %p196 = scmp.eq.s32.totalorder %s17, 1
    %p197 = por %p195, %p196
    %p198 = scmp.ne.s32.totalorder %s187, %s188
    %p199 = scmp.eq.s32.totalorder %s17, 0
    %p200 = por %p198, %p199
    %p201 = scmp.ne.s32.totalorder %s187, %s188
    %p202 = scmp.eq.s32.totalorder %s18, 1
    %p203 = por %p201, %p202
    %p205 = scmp.ne.s32.totalorder %s188, %s204
    %p206 = scmp.eq.s32.totalorder %s18, 0
    %p207 = por %p205, %p206
    %p208 = scmp.le.s32.totalorder 1, %s12
    %p209 = scmp.lt.s32.totalorder %s12, 3
    %p210 = pnand %p208, %p209
    %p211 = pneg %p210
    // Predicated region
    $region9: #{_lambda_.17} parent=5 // pred_check
      _
    $region10: #{_lambda_.17} parent=5 // pred_check_branch
      %213 = sbr.rel (%p210) target = $region12
    $region11: #{_lambda_.17} parent=5 // pred_region
      %s214 = ssub.s32 %s12, 1
      // Predicated region
      $region13: #{_lambda_.17} parent=11 // pred_check
        %p215 = pneg %p151
      $region14: #{_lambda_.17} parent=11 // pred_check_branch
        %217 = sbr.rel (%p215) target = $region16
      $region15: #{_lambda_.17} parent=11 // pred_region
        _
      $region16: #{_lambda_.17} parent=11 // pred_fallthru
        _
      // Predicated region
      $region17: #{_lambda_.17} parent=11 // pred_check
        %p218 = pneg %p172
      $region18: #{_lambda_.17} parent=11 // pred_check_branch
        %220 = sbr.rel (%p218) target = $region20
      $region19: #{_lambda_.17} parent=11 // pred_region
        _
      $region20: #{_lambda_.17} parent=11 // pred_fallthru
        _
    $region12: #{_lambda_.17} parent=5 // pred_fallthru
      _
    %p221 = scmp.lt.s32.totalorder %s12, 2
    // Predicated region
    $region21: #{_lambda_.17} parent=5 // pred_check
      %p222 = pneg %p221
    $region22: #{_lambda_.17} parent=5 // pred_check_branch
      %224 = sbr.rel (%p222) target = $region24
    $region23: #{_lambda_.17} parent=5 // pred_region
      // Predicated region
      $region25: #{_lambda_.17} parent=23 // pred_check
        %p225 = pneg %p46
      $region26: #{_lambda_.17} parent=23 // pred_check_branch
        %227 = sbr.rel (%p225) target = $region28
      $region27: #{_lambda_.17} parent=23 // pred_region
        %p228 = scmp.lt.s32.totalorder %s19, 1
        %s229 = scalar_select %p228, %s19, 1
        %p230 = scmp.lt.s32.totalorder %s20, 0
        %s231 = scalar_select %p230, %s20, 0
        %s232 = sadd.s32 %s231, %s229
        %s233 = smul.addr %s232, 4
        %s234 = scalar_lea.vmem %s0, %s233
      $region28: #{_lambda_.17} parent=23 // pred_fallthru
        _
      // Predicated region
      $region29: #{_lambda_.17} parent=23 // pred_check
        %p235 = pneg %p72
      $region30: #{_lambda_.17} parent=23 // pred_check_branch
        %237 = sbr.rel (%p235) target = $region32
      $region31: #{_lambda_.17} parent=23 // pred_region
        %p238 = scmp.lt.s32.totalorder %s19, 1
        %s239 = scalar_select %p238, %s19, 1
        %s240 = smul.addr %s239, 4
        %s241 = scalar_lea.vmem %s1, %s240
      $region32: #{_lambda_.17} parent=23 // pred_fallthru
        _
      // Predicated region
      $region33: #{_lambda_.17} parent=23 // pred_check
        %p242 = pneg %p98
      $region34: #{_lambda_.17} parent=23 // pred_check_branch
        %244 = sbr.rel (%p242) target = $region36
      $region35: #{_lambda_.17} parent=23 // pred_region
        %p245 = scmp.lt.s32.totalorder %s19, 1
        %s246 = scalar_select %p245, %s19, 1
        %s247 = smul.addr %s246, 4
        %s248 = scalar_lea.vmem %s2, %s247
      $region36: #{_lambda_.17} parent=23 // pred_fallthru
        _
      // Predicated region
      $region37: #{_lambda_.17} parent=23 // pred_check
        %p249 = pneg %p124
      $region38: #{_lambda_.17} parent=23 // pred_check_branch
        %251 = sbr.rel (%p249) target = $region40
      $region39: #{_lambda_.17} parent=23 // pred_region
        %p252 = scmp.lt.s32.totalorder %s19, 1
        %s253 = scalar_select %p252, %s19, 1
        %s254 = scalar_lea.vmem %s3, %s253
      $region40: #{_lambda_.17} parent=23 // pred_fallthru
        _
    $region24: #{_lambda_.17} parent=5 // pred_fallthru
      _
    %p255 = scmp.le.s32.totalorder 1, %s12
    %p256 = scmp.lt.s32.totalorder %s12, 3
    %p257 = pnand %p255, %p256
    %p258 = pneg %p257
    // Predicated region
    $region41: #{_lambda_.17} parent=5 // pred_check
      _
    $region42: #{_lambda_.17} parent=5 // pred_check_branch
      %260 = sbr.rel (%p257) target = $region44
    $region43: #{_lambda_.17} parent=5 // pred_region
      %s261 = ssub.s32 %s12, 1
      %p262 = scmp.lt.s32.totalorder %s21, 1
      %s263 = scalar_select %p262, %s21, 1
      %p264 = scmp.lt.s32.totalorder %s22, 0
      %s265 = scalar_select %p264, %s22, 0
      %s266 = sadd.s32 %s265, %s263
      %s267 = smul.addr %s266, 4
      %s268 = scalar_lea.vmem %s0, %s267
      %p269 = pneg %p52
      %p270 = pneg %p49
      %p271 = scmp.lt.s32.totalorder %s21, 1
      %s272 = scalar_select %p271, %s21, 1
      %s273 = smul.addr %s272, 4
      %s274 = scalar_lea.vmem %s1, %s273
      %p275 = pneg %p78
      %p276 = pneg %p75
      %p277 = scmp.lt.s32.totalorder %s21, 1
      %s278 = scalar_select %p277, %s21, 1
      %s279 = smul.addr %s278, 4
      %s280 = scalar_lea.vmem %s2, %s279
      %p281 = pneg %p104
      %p282 = pneg %p101
      %p283 = scmp.lt.s32.totalorder %s21, 1
      %s284 = scalar_select %p283, %s21, 1
      %s285 = scalar_lea.vmem %s3, %s284
      %p286 = pneg %p130
      %p287 = pneg %p127
      %p288 = pneg %p151
      %p289 = pneg %p148
      %p290 = pneg %p172
      %p291 = pneg %p169
      %p292 = pneg %p200
      %p293 = pneg %p197
      %p294 = scmp.lt.s32.totalorder %s21, 1
      %s295 = scalar_select %p294, %s21, 1
      %p296 = scmp.lt.s32.totalorder %s22, 0
      %s297 = scalar_select %p296, %s22, 0
      %s298 = sadd.s32 %s297, %s295
      %s299 = smul.addr %s298, 8
      %s300 = scalar_lea.vmem %s6, %s299
      %p301 = scmp.lt.s32.totalorder %s21, 1
      %s302 = scalar_select %p301, %s21, 1
      %p303 = scmp.lt.s32.totalorder %s22, 0
      %s304 = scalar_select %p303, %s22, 0
      %s305 = sadd.s32 %s304, %s302
      %s306 = smul.addr %s305, 4
      %s307 = scalar_lea.vmem %s0, %s306
      %p308 = scmp.lt.s32.totalorder %s21, 1
      %s309 = scalar_select %p308, %s21, 1
      %s310 = smul.addr %s309, 4
      %s311 = scalar_lea.vmem %s1, %s310
      %p312 = scmp.lt.s32.totalorder %s21, 1
      %s313 = scalar_select %p312, %s21, 1
      %s314 = smul.addr %s313, 4
      %s315 = scalar_lea.vmem %s2, %s314
      %p316 = scmp.lt.s32.totalorder %s21, 1
      %s317 = scalar_select %p316, %s21, 1
      %s318 = scalar_lea.vmem %s3, %s317
      %p319 = scmp.lt.s32.totalorder %s21, 1
      %s320 = scalar_select %p319, %s21, 1
      %p321 = scmp.lt.s32.totalorder %s22, 0
      %s322 = scalar_select %p321, %s22, 0
      %s323 = sadd.s32 %s322, %s320
      %s324 = smul.addr %s323, 8
      %s325 = scalar_lea.vmem %s6, %s324
      %v327 = vld [vmem:[%s318] sm:$0x1]
      %v328 = vld [vmem:[%s307] sm:$0xf]
      %v329 = vld [vmem:[%s311] sm:$0xf]
      %v330 = vld [vmem:[%s315] sm:$0xf]
      %vm331 = vcmask 130048
      %v333 = vsel %vm331, %v328, 0
      %v336 = vsel %vm331, %v329, 0
      %338 = vmatpush.bf16.xpose.msra.mxu0 0
      %339 = vmatpush.bf16.xpose.msra.mxu0 0
      %340 = vmatpush.bf16.xpose.msra.mxu0 0
      %341 = vmatpush.bf16.xpose.msra.mxu0 0
      %342 = vmatpush.bf16.xpose.msra.mxu0 0
      %343 = vmatpush.bf16.xpose.msra.mxu0 0
      %344 = vmatpush.bf16.xpose.msra.mxu0 0
      %345 = vmatpush.bf16.xpose.msra.mxu0 %v336
      %346 = vmatmul.bf16.gmra.mxu0 %v333
      %v347 = vpop.f32.mrf.mxu0
      %v348 = vadd.f32 0.0, %v347
      %v349 = vpop.f32.mrf.mxu0
      %350 = vdwg.mxu0
      %v351 = vmul.f32 %v348, 0.25
      %v353 = vperm.slane %v327, 0
      %v355 = vadd.f32 %v351, %v353
      %vm356 = vcmask 64512
      %v357 = vsel %vm356, %v355, -inf
      %358 = vmax.xlane.f32.xlu0 %v357
      %v359 = vpop.xlane.xlu0 %358
      %v360 = vsub.f32 %v355, %v359
      %v361 = vmul.f32 %v360, 1.442695
      %v362 = vpow.pop %v361
      %v363 = vsel %vm356, %v362, 0.0
      %364 = vadd.xlane.f32.xlu0 %v363
      %v365 = vpop.xlane.xlu0 %364
      %v366 = vrcp.pop %v365
      %v367 = vmul.f32 %v362, %v366
      %v368 = vpack.c.bf16 %v367, %v367
      %v370 = vsel %vm356, %v368, 0
      %vm372 = vcmask 1043456
      %v374 = vsel %vm372, %v330, 0
      %376 = vmatpush.bf16.msra.mxu0 0
      %377 = vmatpush.bf16.msra.mxu0 0
      %378 = vmatpush.bf16.msra.mxu0 0
      %379 = vmatpush.bf16.msra.mxu0 0
      %380 = vmatpush.bf16.msra.mxu0 0
      %381 = vmatpush.bf16.msra.mxu0 0
      %382 = vmatpush.bf16.msra.mxu0 0
      %383 = vmatpush.bf16.msra.mxu0 %v374
      %384 = vmatmul.bf16.gmra.mxu0 %v370
      %v385 = vpop.f32.mrf.mxu0
      %v386 = vadd.f32 0.0, %v385
      %v387 = vpop.f32.mrf.mxu0
      %388 = vdwg.mxu0
      %v389 = vpack.c.bf16 %v386, %v386
      %v390 = vld [vmem:[%s4] sm:$0xf]
      %v391 = vld [vmem:[%s4 + $0x4] sm:$0xf]
      %v393 = vunpack.c.l.b16 %v328
      %v394 = vpack.c.b16 %v393, %v393
      %395 = vrot.lane.b32.xlu0 %v394, 112
      %v396 = vpop.permute.xlu0 %395
      %v398 = vunpack.c.l.b16 %v329
      %v399 = vpack.c.b16 %v398, %v398
      %400 = vrot.lane.b32.xlu0 %v399, 112
      %v401 = vpop.permute.xlu0 %400
      %v403 = vsel %vm331, %v396, 0
      %v406 = vsel %vm331, %v401, 0
      %408 = vmatpush.bf16.xpose.msra.mxu0 0
      %409 = vmatpush.bf16.xpose.msra.mxu0 0
      %410 = vmatpush.bf16.xpose.msra.mxu0 0
      %411 = vmatpush.bf16.xpose.msra.mxu0 0
      %412 = vmatpush.bf16.xpose.msra.mxu0 0
      %413 = vmatpush.bf16.xpose.msra.mxu0 0
      %414 = vmatpush.bf16.xpose.msra.mxu0 0
      %415 = vmatpush.bf16.xpose.msra.mxu0 %v406
      %416 = vmatmul.bf16.gmra.mxu0 %v403
      %v417 = vpop.f32.mrf.mxu0
      %v418 = vadd.f32 0.0, %v417
      %v419 = vpop.f32.mrf.mxu0
      %420 = vdwg.mxu0
      %v421 = vmul.f32 %v418, 0.25
      %v422 = vadd.f32 %v421, %v353
      %v423 = vsel %vm356, %v422, -inf
      %424 = vmax.xlane.f32.xlu0 %v423
      %v425 = vpop.xlane.xlu0 %424
      %v426 = vsub.f32 %v422, %v425
      %v427 = vmul.f32 %v426, 1.442695
      %v428 = vpow.pop %v427
      %v429 = vsel %vm356, %v428, 0.0
      %430 = vadd.xlane.f32.xlu0 %v429
      %v431 = vpop.xlane.xlu0 %430
      %v432 = vrcp.pop %v431
      %v433 = vmul.f32 %v428, %v432
      %v434 = vpack.c.bf16 %v433, %v433
      %v436 = vunpack.c.l.b16 %v330
      %v437 = vpack.c.b16 %v436, %v436
      %438 = vrot.lane.b32.xlu0 %v437, 112
      %v439 = vpop.permute.xlu0 %438
      %v441 = vsel %vm356, %v434, 0
      %v444 = vsel %vm372, %v439, 0
      %446 = vmatpush.bf16.msra.mxu0 0
      %447 = vmatpush.bf16.msra.mxu0 0
      %448 = vmatpush.bf16.msra.mxu0 0
      %449 = vmatpush.bf16.msra.mxu0 0
      %450 = vmatpush.bf16.msra.mxu0 0
      %451 = vmatpush.bf16.msra.mxu0 0
      %452 = vmatpush.bf16.msra.mxu0 0
      %453 = vmatpush.bf16.msra.mxu0 %v444
      %454 = vmatmul.bf16.gmra.mxu0 %v441
      %v455 = vpop.f32.mrf.mxu0
      %v456 = vadd.f32 0.0, %v455
      %v457 = vpop.f32.mrf.mxu0
      %458 = vdwg.mxu0
      %v459 = vpack.c.bf16 %v456, %v456
      %v460 = vld [vmem:[%s4 + $0x8] sm:$0xf]
      %v461 = vld [vmem:[%s4 + $0xc] sm:$0xf]
      %v464 = vunpack.c.l.b16 %v460
      %v465 = vunpack.c.l.b16 %v461
      %v466 = vpack.c.b16 %v465, %v464
      %v469 = vsel %vm331, %v459, 0
      %471 = vmatpush.bf16.msra.mxu0 0
      %472 = vmatpush.bf16.msra.mxu0 0
      %473 = vmatpush.bf16.msra.mxu0 0
      %474 = vmatpush.bf16.msra.mxu0 0
      %475 = vmatpush.bf16.msra.mxu0 0
      %476 = vmatpush.bf16.msra.mxu0 0
      %477 = vmatpush.bf16.msra.mxu0 0
      %478 = vmatpush.bf16.msra.mxu0 %v466
      %479 = vmatmul.bf16.gmra.mxu0 %v469
      %v480 = vpop.f32.mrf.mxu0
      %v481 = vadd.f32 0.0, %v480
      %v482 = vpop.f32.mrf.mxu0
      %483 = vdwg.mxu0
      %v486 = vunpack.c.l.b16 %v390
      %v487 = vunpack.c.l.b16 %v391
      %v488 = vpack.c.b16 %v487, %v486
      %v491 = vsel %vm331, %v389, 0
      %493 = vmatpush.bf16.msra.mxu0 0
      %494 = vmatpush.bf16.msra.mxu0 0
      %495 = vmatpush.bf16.msra.mxu0 0
      %496 = vmatpush.bf16.msra.mxu0 0
      %497 = vmatpush.bf16.msra.mxu0 0
      %498 = vmatpush.bf16.msra.mxu0 0
      %499 = vmatpush.bf16.msra.mxu0 0
      %500 = vmatpush.bf16.msra.mxu0 %v488
      %501 = vmatmul.bf16.gmra.mxu0 %v491
      %v502 = vpop.f32.mrf.mxu0
      %v503 = vadd.f32 %v481, %v502
      %v504 = vpop.f32.mrf.mxu0
      %505 = vdwg.mxu0
      %v506 = vld [vmem:[%s5] sm:$0x1]
      %v508 = vperm.slane %v506, 0
      %v510 = vadd.f32 %v503, %v508
      %vm511 = vcmask 261120
      %512 = vst.msk [vmem:[%s325] sm:$0xff] %vm511, %v510
      %p513 = scmp.lt.s32.totalorder %s21, 1
      %s514 = scalar_select %p513, %s21, 1
      %p515 = scmp.lt.s32.totalorder %s22, 0
      %s516 = scalar_select %p515, %s22, 0
      %s517 = sadd.s32 %s516, %s514
      %s518 = smul.addr %s517, 8
      %s519 = scalar_lea.vmem %s6, %s518
      // Predicated region
      $region45: #{_lambda_.17} parent=43 // pred_check
        %p520 = pneg %p197
      $region46: #{_lambda_.17} parent=43 // pred_check_branch
        %522 = sbr.rel (%p520) target = $region48
      $region47: #{_lambda_.17} parent=43 // pred_region
        _
      $region48: #{_lambda_.17} parent=43 // pred_fallthru
        _
    $region44: #{_lambda_.17} parent=5 // pred_fallthru
      _
    %p523 = scmp.le.s32.totalorder 2, %s12
    // Predicated region
    $region49: #{_lambda_.17} parent=5 // pred_check
      %p524 = pneg %p523
    $region50: #{_lambda_.17} parent=5 // pred_check_branch
      %526 = sbr.rel (%p524) target = $region52
    $region51: #{_lambda_.17} parent=5 // pred_region
      %s527 = ssub.s32 %s12, 2
      // Predicated region
      $region53: #{_lambda_.17} parent=51 // pred_check
        %p528 = pneg %p203
      $region54: #{_lambda_.17} parent=51 // pred_check_branch
        %530 = sbr.rel (%p528) target = $region56
      $region55: #{_lambda_.17} parent=51 // pred_region
        %p531 = scmp.lt.s32.totalorder %s23, 1
        %s532 = scalar_select %p531, %s23, 1
        %p533 = scmp.lt.s32.totalorder %s24, 0
        %s534 = scalar_select %p533, %s24, 0
        %s535 = sadd.s32 %s534, %s532
        %s536 = smul.addr %s535, 8
        %s537 = scalar_lea.vmem %s6, %s536
      $region56: #{_lambda_.17} parent=51 // pred_fallthru
        _
    $region52: #{_lambda_.17} parent=5 // pred_fallthru
      _
  $region6: #{_lambda_.17} parent=0 // loop_footer
    %s16 = sadd.s32 1, %s12
  $region7: #{_lambda_.17} parent=0 // loop_footer_branch
    %11 = sbr.rel target = $region3
  $region8: #{_lambda_.17} parent=0 // loop_exit
    _

// kernel: _lambda_.18
$region0: #{_lambda_.18}
  #allocation0 [shape = 'u32[]', space=smem, size = 0x4, offset = 0x4, fixed_abs, tag = 'smem constant byte address 0x4 - core index']
  #allocation1 [shape = 'u32[72,128]{1,0:T(1,128)}', space=vmem, size = 0x9000, scoped, tag = 'internal scratch']
  #allocation2 [shape = 'bf16[24,32]{1,0:T(8,128)(2,1)}', space=vmem, size = 0x1800, scoped, tag = 'scratch operand']
  #allocation3 [shape = 'bf16[24,64]{1,0:T(8,128)(2,1)}', space=vmem, size = 0x1800, scoped, tag = 'scratch operand']
  %s0 = inlined_call_operand.vmem [shape: f32[2,8,32], index: 0, kind: input, shape index: {}]
  %s1 = inlined_call_operand.vmem [shape: f32[2,8,32], index: 1, kind: input, shape index: {}]
  %s2 = inlined_call_operand.vmem [shape: f32[2,8,1], index: 2, kind: input, shape index: {}]
  %s3 = inlined_call_operand.vmem [shape: f32[1,32], index: 3, kind: input, shape index: {}]
  %s4 = inlined_call_operand.vmem [shape: f32[1,32], index: 4, kind: input, shape index: {}]
  %s5 = inlined_call_operand.vmem [shape: bf16[3,32,64], index: 5, kind: input, shape index: {}]
  %s6 = inlined_call_operand.vmem [shape: f32[1,64], index: 6, kind: input, shape index: {}]
  %s7 = inlined_call_operand.vmem [shape: bf16[3,64,32], index: 7, kind: input, shape index: {}]
  %s8 = inlined_call_operand.vmem [shape: f32[1,32], index: 8, kind: input, shape index: {}]
  %s9 = inlined_call_operand.vmem [shape: f32[1,32], index: 9, kind: input, shape index: {}]
  %s10 = inlined_call_operand.vmem [shape: f32[1,32], index: 10, kind: input, shape index: {}]
  %s11 = inlined_call_operand.vmem [shape: f32[2,8,32], index: 11, kind: output, shape index: {}]
  %s12 = sld [smem:[#allocation0]]
  $region77: #{_lambda_.18} parent=0
    _
  %s14 = ssub.s32 1, %s12
  %s15 = scalar_select 0, %s14, %s12
  loop: start=0, step=1, limit=4
  $region2: #{_lambda_.18} parent=0 // loop_pre_header
    _
  $region3: #{_lambda_.18} parent=0 // loop_header
    %s17 = sphi 0, %s21
    %p18 = scmp.ge.s32.totalorder %s17, 4
    %s27 = sphi 0, %s29
    %s30 = sphi 0, %s27
    %s31 = sphi 0, %s30
    %s47 = sphi 0, %s31
    %s53 = sphi 0, %s55
    %s56 = sphi 0, %s53
    %s57 = sphi 0, %s56
    %s73 = sphi 0, %s57
    %s79 = sphi 0, %s81
    %s82 = sphi 0, %s79
    %s83 = sphi 0, %s82
    %s99 = sphi 0, %s83
    %s103 = sphi 0, %s103
    %s105 = sphi 0, %s103
    %s106 = sphi 0, %s105
    %s120 = sphi 0, %s106
    %s124 = sphi 0, %s124
    %s126 = sphi 0, %s124
    %s127 = sphi 0, %s126
    %s141 = sphi 0, %s127
    %s145 = sphi 0, %s145
    %s147 = sphi 0, %s145
    %s148 = sphi 0, %s147
    %s162 = sphi 0, %s148
    %s166 = sphi 0, %s166
    %s168 = sphi 0, %s166
    %s169 = sphi 0, %s168
    %s183 = sphi 0, %s169
    %s187 = sphi 0, %s187
    %s189 = sphi 0, %s187
    %s190 = sphi 0, %s189
    %s204 = sphi 0, %s190
    %s208 = sphi 0, %s208
    %s210 = sphi 0, %s208
    %s211 = sphi 0, %s210
    %s225 = sphi 0, %s211
    %s229 = sphi 0, %s229
    %s231 = sphi 0, %s229
    %s232 = sphi 0, %s231
    %s246 = sphi 0, %s232
    %s250 = sphi 0, %s250
    %s252 = sphi 0, %s250
    %s253 = sphi 0, %s252
    %s267 = sphi 0, %s253
    %s273 = sphi 0, %s275
    %s276 = sphi 0, %s273
    %s277 = sphi 0, %s276
    %s293 = sphi 0, %s277
  $region4: #{_lambda_.18} parent=0 // loop_header_branch
    %20 = sbr.rel (%p18) target = $region8
  $region5: #{_lambda_.18} parent=0 // loop_body
    %s22 = ssub.s32 %s17, 1
    %s23 = ssub.s32 %s17, 2
    %s24 = sadd.s32 %s17, 1
    %s25 = ssub.s32 %s17, %s24
    %p26 = scmp.eq.s32.totalorder %s25, 0
    %s28 = sadd.s32 %s27, 1
    %s29 = scalar_select %p26, %s27, %s28
    %p32 = pneg %p26
    %p33 = scmp.eq.s32.totalorder %s17, 1
    %p34 = por %p32, %p33
    %p35 = scmp.ne.s32.totalorder %s27, %s30
    %p36 = scmp.eq.s32.totalorder %s17, 0
    %p37 = por %p35, %p36
    %p38 = scmp.ne.s32.totalorder %s27, %s30
    %p39 = scmp.eq.s32.totalorder %s22, 1
    %p40 = por %p38, %p39
    %p41 = scmp.ne.s32.totalorder %s30, %s31
    %p42 = scmp.eq.s32.totalorder %s22, 0
    %p43 = por %p41, %p42
    %p44 = scmp.ne.s32.totalorder %s30, %s31
    %p45 = scmp.eq.s32.totalorder %s23, 1
    %p46 = por %p44, %p45
    %p48 = scmp.ne.s32.totalorder %s31, %s47
    %p49 = scmp.eq.s32.totalorder %s23, 0
    %p50 = por %p48, %p49
    %s51 = ssub.s32 %s17, %s24
    %p52 = scmp.eq.s32.totalorder %s51, 0
    %s54 = sadd.s32 %s53, 1
    %s55 = scalar_select %p52, %s53, %s54
    %p58 = pneg %p52
    %p59 = scmp.eq.s32.totalorder %s17, 1
    %p60 = por %p58, %p59
    %p61 = scmp.ne.s32.totalorder %s53, %s56
    %p62 = scmp.eq.s32.totalorder %s17, 0
    %p63 = por %p61, %p62
    %p64 = scmp.ne.s32.totalorder %s53, %s56
    %p65 = scmp.eq.s32.totalorder %s22, 1
    %p66 = por %p64, %p65
    %p67 = scmp.ne.s32.totalorder %s56, %s57
    %p68 = scmp.eq.s32.totalorder %s22, 0
    %p69 = por %p67, %p68
    %p70 = scmp.ne.s32.totalorder %s56, %s57
    %p71 = scmp.eq.s32.totalorder %s23, 1
    %p72 = por %p70, %p71
    %p74 = scmp.ne.s32.totalorder %s57, %s73
    %p75 = scmp.eq.s32.totalorder %s23, 0
    %p76 = por %p74, %p75
    %s77 = ssub.s32 %s17, %s24
    %p78 = scmp.eq.s32.totalorder %s77, 0
    %s80 = sadd.s32 %s79, 1
    %s81 = scalar_select %p78, %s79, %s80
    %p84 = pneg %p78
    %p85 = scmp.eq.s32.totalorder %s17, 1
    %p86 = por %p84, %p85
    %p87 = scmp.ne.s32.totalorder %s79, %s82
    %p88 = scmp.eq.s32.totalorder %s17, 0
    %p89 = por %p87, %p88
    %p90 = scmp.ne.s32.totalorder %s79, %s82
    %p91 = scmp.eq.s32.totalorder %s22, 1
    %p92 = por %p90, %p91
    %p93 = scmp.ne.s32.totalorder %s82, %s83
    %p94 = scmp.eq.s32.totalorder %s22, 0
    %p95 = por %p93, %p94
    %p96 = scmp.ne.s32.totalorder %s82, %s83
    %p97 = scmp.eq.s32.totalorder %s23, 1
    %p98 = por %p96, %p97
    %p100 = scmp.ne.s32.totalorder %s83, %s99
    %p101 = scmp.eq.s32.totalorder %s23, 0
    %p102 = por %p100, %p101
    %s104 = sadd.s32 %s103, 1
    %p107 = scmp.eq.s32.totalorder %s17, 1
    %p108 = scmp.ne.s32.totalorder %s103, %s105
    %p109 = scmp.eq.s32.totalorder %s17, 0
    %p110 = por %p108, %p109
    %p111 = scmp.ne.s32.totalorder %s103, %s105
    %p112 = scmp.eq.s32.totalorder %s22, 1
    %p113 = por %p111, %p112
    %p114 = scmp.ne.s32.totalorder %s105, %s106
    %p115 = scmp.eq.s32.totalorder %s22, 0
    %p116 = por %p114, %p115
    %p117 = scmp.ne.s32.totalorder %s105, %s106
    %p118 = scmp.eq.s32.totalorder %s23, 1
    %p119 = por %p117, %p118
    %p121 = scmp.ne.s32.totalorder %s106, %s120
    %p122 = scmp.eq.s32.totalorder %s23, 0
    %p123 = por %p121, %p122
    %s125 = sadd.s32 %s124, 1
    %p128 = scmp.eq.s32.totalorder %s17, 1
    %p129 = scmp.ne.s32.totalorder %s124, %s126
    %p130 = scmp.eq.s32.totalorder %s17, 0
    %p131 = por %p129, %p130
    %p132 = scmp.ne.s32.totalorder %s124, %s126
    %p133 = scmp.eq.s32.totalorder %s22, 1
    %p134 = por %p132, %p133
    %p135 = scmp.ne.s32.totalorder %s126, %s127
    %p136 = scmp.eq.s32.totalorder %s22, 0
    %p137 = por %p135, %p136
    %p138 = scmp.ne.s32.totalorder %s126, %s127
    %p139 = scmp.eq.s32.totalorder %s23, 1
    %p140 = por %p138, %p139
    %p142 = scmp.ne.s32.totalorder %s127, %s141
    %p143 = scmp.eq.s32.totalorder %s23, 0
    %p144 = por %p142, %p143
    %s146 = sadd.s32 %s145, 1
    %p149 = scmp.eq.s32.totalorder %s17, 1
    %p150 = scmp.ne.s32.totalorder %s145, %s147
    %p151 = scmp.eq.s32.totalorder %s17, 0
    %p152 = por %p150, %p151
    %p153 = scmp.ne.s32.totalorder %s145, %s147
    %p154 = scmp.eq.s32.totalorder %s22, 1
    %p155 = por %p153, %p154
    %p156 = scmp.ne.s32.totalorder %s147, %s148
    %p157 = scmp.eq.s32.totalorder %s22, 0
    %p158 = por %p156, %p157
    %p159 = scmp.ne.s32.totalorder %s147, %s148
    %p160 = scmp.eq.s32.totalorder %s23, 1
    %p161 = por %p159, %p160
    %p163 = scmp.ne.s32.totalorder %s148, %s162
    %p164 = scmp.eq.s32.totalorder %s23, 0
    %p165 = por %p163, %p164
    %s167 = sadd.s32 %s166, 1
    %p170 = scmp.eq.s32.totalorder %s17, 1
    %p171 = scmp.ne.s32.totalorder %s166, %s168
    %p172 = scmp.eq.s32.totalorder %s17, 0
    %p173 = por %p171, %p172
    %p174 = scmp.ne.s32.totalorder %s166, %s168
    %p175 = scmp.eq.s32.totalorder %s22, 1
    %p176 = por %p174, %p175
    %p177 = scmp.ne.s32.totalorder %s168, %s169
    %p178 = scmp.eq.s32.totalorder %s22, 0
    %p179 = por %p177, %p178
    %p180 = scmp.ne.s32.totalorder %s168, %s169
    %p181 = scmp.eq.s32.totalorder %s23, 1
    %p182 = por %p180, %p181
    %p184 = scmp.ne.s32.totalorder %s169, %s183
    %p185 = scmp.eq.s32.totalorder %s23, 0
    %p186 = por %p184, %p185
    %s188 = sadd.s32 %s187, 1
    %p191 = scmp.eq.s32.totalorder %s17, 1
    %p192 = scmp.ne.s32.totalorder %s187, %s189
    %p193 = scmp.eq.s32.totalorder %s17, 0
    %p194 = por %p192, %p193
    %p195 = scmp.ne.s32.totalorder %s187, %s189
    %p196 = scmp.eq.s32.totalorder %s22, 1
    %p197 = por %p195, %p196
    %p198 = scmp.ne.s32.totalorder %s189, %s190
    %p199 = scmp.eq.s32.totalorder %s22, 0
    %p200 = por %p198, %p199
    %p201 = scmp.ne.s32.totalorder %s189, %s190
    %p202 = scmp.eq.s32.totalorder %s23, 1
    %p203 = por %p201, %p202
    %p205 = scmp.ne.s32.totalorder %s190, %s204
    %p206 = scmp.eq.s32.totalorder %s23, 0
    %p207 = por %p205, %p206
    %s209 = sadd.s32 %s208, 1
    %p212 = scmp.eq.s32.totalorder %s17, 1
    %p213 = scmp.ne.s32.totalorder %s208, %s210
    %p214 = scmp.eq.s32.totalorder %s17, 0
    %p215 = por %p213, %p214
    %p216 = scmp.ne.s32.totalorder %s208, %s210
    %p217 = scmp.eq.s32.totalorder %s22, 1
    %p218 = por %p216, %p217
    %p219 = scmp.ne.s32.totalorder %s210, %s211
    %p220 = scmp.eq.s32.totalorder %s22, 0
    %p221 = por %p219, %p220
    %p222 = scmp.ne.s32.totalorder %s210, %s211
    %p223 = scmp.eq.s32.totalorder %s23, 1
    %p224 = por %p222, %p223
    %p226 = scmp.ne.s32.totalorder %s211, %s225
    %p227 = scmp.eq.s32.totalorder %s23, 0
    %p228 = por %p226, %p227
    %s230 = sadd.s32 %s229, 1
    %p233 = scmp.eq.s32.totalorder %s17, 1
    %p234 = scmp.ne.s32.totalorder %s229, %s231
    %p235 = scmp.eq.s32.totalorder %s17, 0
    %p236 = por %p234, %p235
    %p237 = scmp.ne.s32.totalorder %s229, %s231
    %p238 = scmp.eq.s32.totalorder %s22, 1
    %p239 = por %p237, %p238
    %p240 = scmp.ne.s32.totalorder %s231, %s232
    %p241 = scmp.eq.s32.totalorder %s22, 0
    %p242 = por %p240, %p241
    %p243 = scmp.ne.s32.totalorder %s231, %s232
    %p244 = scmp.eq.s32.totalorder %s23, 1
    %p245 = por %p243, %p244
    %p247 = scmp.ne.s32.totalorder %s232, %s246
    %p248 = scmp.eq.s32.totalorder %s23, 0
    %p249 = por %p247, %p248
    %s251 = sadd.s32 %s250, 1
    %p254 = scmp.eq.s32.totalorder %s17, 1
    %p255 = scmp.ne.s32.totalorder %s250, %s252
    %p256 = scmp.eq.s32.totalorder %s17, 0
    %p257 = por %p255, %p256
    %p258 = scmp.ne.s32.totalorder %s250, %s252
    %p259 = scmp.eq.s32.totalorder %s22, 1
    %p260 = por %p258, %p259
    %p261 = scmp.ne.s32.totalorder %s252, %s253
    %p262 = scmp.eq.s32.totalorder %s22, 0
    %p263 = por %p261, %p262
    %p264 = scmp.ne.s32.totalorder %s252, %s253
    %p265 = scmp.eq.s32.totalorder %s23, 1
    %p266 = por %p264, %p265
    %p268 = scmp.ne.s32.totalorder %s253, %s267
    %p269 = scmp.eq.s32.totalorder %s23, 0
    %p270 = por %p268, %p269
    %s271 = ssub.s32 %s17, %s24
    %p272 = scmp.eq.s32.totalorder %s271, 0
    %s274 = sadd.s32 %s273, 1
    %s275 = scalar_select %p272, %s273, %s274
    %p278 = pneg %p272
    %p279 = scmp.eq.s32.totalorder %s17, 1
    %p280 = por %p278, %p279
    %p281 = scmp.ne.s32.totalorder %s273, %s276
    %p282 = scmp.eq.s32.totalorder %s17, 0
    %p283 = por %p281, %p282
    %p284 = scmp.ne.s32.totalorder %s273, %s276
    %p285 = scmp.eq.s32.totalorder %s22, 1
    %p286 = por %p284, %p285
    %p287 = scmp.ne.s32.totalorder %s276, %s277
    %p288 = scmp.eq.s32.totalorder %s22, 0
    %p289 = por %p287, %p288
    %p290 = scmp.ne.s32.totalorder %s276, %s277
    %p291 = scmp.eq.s32.totalorder %s23, 1
    %p292 = por %p290, %p291
    %p294 = scmp.ne.s32.totalorder %s277, %s293
    %p295 = scmp.eq.s32.totalorder %s23, 0
    %p296 = por %p294, %p295
    %p297 = scmp.le.s32.totalorder 1, %s17
    %p298 = scmp.lt.s32.totalorder %s17, 3
    %p299 = pnand %p297, %p298
    %p300 = pneg %p299
    // Predicated region
    $region9: #{_lambda_.18} parent=5 // pred_check
      _
    $region10: #{_lambda_.18} parent=5 // pred_check_branch
      %302 = sbr.rel (%p299) target = $region12
    $region11: #{_lambda_.18} parent=5 // pred_region
      %s303 = ssub.s32 %s17, 1
      // Predicated region
      $region13: #{_lambda_.18} parent=11 // pred_check
        %p304 = pneg %p116
      $region14: #{_lambda_.18} parent=11 // pred_check_branch
        %306 = sbr.rel (%p304) target = $region16
      $region15: #{_lambda_.18} parent=11 // pred_region
        _
      $region16: #{_lambda_.18} parent=11 // pred_fallthru
        _
      // Predicated region
      $region17: #{_lambda_.18} parent=11 // pred_check
        %p307 = pneg %p137
      $region18: #{_lambda_.18} parent=11 // pred_check_branch
        %309 = sbr.rel (%p307) target = $region20
      $region19: #{_lambda_.18} parent=11 // pred_region
        _
      $region20: #{_lambda_.18} parent=11 // pred_fallthru
        _
      // Predicated region
      $region21: #{_lambda_.18} parent=11 // pred_check
        %p310 = pneg %p158
      $region22: #{_lambda_.18} parent=11 // pred_check_branch
        %312 = sbr.rel (%p310) target = $region24
      $region23: #{_lambda_.18} parent=11 // pred_region
        _
      $region24: #{_lambda_.18} parent=11 // pred_fallthru
        _
      // Predicated region
      $region25: #{_lambda_.18} parent=11 // pred_check
        %p313 = pneg %p179
      $region26: #{_lambda_.18} parent=11 // pred_check_branch
        %315 = sbr.rel (%p313) target = $region28
      $region27: #{_lambda_.18} parent=11 // pred_region
        _
      $region28: #{_lambda_.18} parent=11 // pred_fallthru
        _
      // Predicated region
      $region29: #{_lambda_.18} parent=11 // pred_check
        %p316 = pneg %p200
      $region30: #{_lambda_.18} parent=11 // pred_check_branch
        %318 = sbr.rel (%p316) target = $region32
      $region31: #{_lambda_.18} parent=11 // pred_region
        _
      $region32: #{_lambda_.18} parent=11 // pred_fallthru
        _
      // Predicated region
      $region33: #{_lambda_.18} parent=11 // pred_check
        %p319 = pneg %p221
      $region34: #{_lambda_.18} parent=11 // pred_check_branch
        %321 = sbr.rel (%p319) target = $region36
      $region35: #{_lambda_.18} parent=11 // pred_region
        _
      $region36: #{_lambda_.18} parent=11 // pred_fallthru
        _
      // Predicated region
      $region37: #{_lambda_.18} parent=11 // pred_check
        %p322 = pneg %p242
      $region38: #{_lambda_.18} parent=11 // pred_check_branch
        %324 = sbr.rel (%p322) target = $region40
      $region39: #{_lambda_.18} parent=11 // pred_region
        _
      $region40: #{_lambda_.18} parent=11 // pred_fallthru
        _
      // Predicated region
      $region41: #{_lambda_.18} parent=11 // pred_check
        %p325 = pneg %p263
      $region42: #{_lambda_.18} parent=11 // pred_check_branch
        %327 = sbr.rel (%p325) target = $region44
      $region43: #{_lambda_.18} parent=11 // pred_region
        _
      $region44: #{_lambda_.18} parent=11 // pred_fallthru
        _
    $region12: #{_lambda_.18} parent=5 // pred_fallthru
      _
    %p328 = scmp.lt.s32.totalorder %s17, 2
    // Predicated region
    $region45: #{_lambda_.18} parent=5 // pred_check
      %p329 = pneg %p328
    $region46: #{_lambda_.18} parent=5 // pred_check_branch
      %331 = sbr.rel (%p329) target = $region48
    $region47: #{_lambda_.18} parent=5 // pred_region
      // Predicated region
      $region49: #{_lambda_.18} parent=47 // pred_check
        %p332 = pneg %p37
      $region50: #{_lambda_.18} parent=47 // pred_check_branch
        %334 = sbr.rel (%p332) target = $region52
      $region51: #{_lambda_.18} parent=47 // pred_region
        %p335 = scmp.lt.s32.totalorder %s17, 1
        %s336 = scalar_select %p335, %s17, 1
        %s337 = smul.addr %s336, 8
        %s338 = scalar_lea.vmem %s0, %s337
      $region52: #{_lambda_.18} parent=47 // pred_fallthru
        _
      // Predicated region
      $region53: #{_lambda_.18} parent=47 // pred_check
        %p339 = pneg %p63
      $region54: #{_lambda_.18} parent=47 // pred_check_branch
        %341 = sbr.rel (%p339) target = $region56
      $region55: #{_lambda_.18} parent=47 // pred_region
        %p342 = scmp.lt.s32.totalorder %s17, 1
        %s343 = scalar_select %p342, %s17, 1
        %s344 = smul.addr %s343, 8
        %s345 = scalar_lea.vmem %s1, %s344
      $region56: #{_lambda_.18} parent=47 // pred_fallthru
        _
      // Predicated region
      $region57: #{_lambda_.18} parent=47 // pred_check
        %p346 = pneg %p89
      $region58: #{_lambda_.18} parent=47 // pred_check_branch
        %348 = sbr.rel (%p346) target = $region60
      $region59: #{_lambda_.18} parent=47 // pred_region
        %p349 = scmp.lt.s32.totalorder %s17, 1
        %s350 = scalar_select %p349, %s17, 1
        %s351 = smul.addr %s350, 8
        %s352 = scalar_lea.vmem %s2, %s351
      $region60: #{_lambda_.18} parent=47 // pred_fallthru
        _
    $region48: #{_lambda_.18} parent=5 // pred_fallthru
      _
    %p353 = scmp.le.s32.totalorder 1, %s17
    %p354 = scmp.lt.s32.totalorder %s17, 3
    %p355 = pnand %p353, %p354
    %p356 = pneg %p355
    // Predicated region
    $region61: #{_lambda_.18} parent=5 // pred_check
      _
    $region62: #{_lambda_.18} parent=5 // pred_check_branch
      %358 = sbr.rel (%p355) target = $region64
    $region63: #{_lambda_.18} parent=5 // pred_region
      %s359 = ssub.s32 %s17, 1
      %p360 = scmp.lt.s32.totalorder %s22, 1
      %s361 = scalar_select %p360, %s22, 1
      %s362 = smul.addr %s361, 8
      %s363 = scalar_lea.vmem %s0, %s362
      %p364 = pneg %p43
      %p365 = pneg %p40
      %p366 = scmp.lt.s32.totalorder %s22, 1
      %s367 = scalar_select %p366, %s22, 1
      %s368 = smul.addr %s367, 8
      %s369 = scalar_lea.vmem %s1, %s368
      %p370 = pneg %p69
      %p371 = pneg %p66
      %p372 = scmp.lt.s32.totalorder %s22, 1
      %s373 = scalar_select %p372, %s22, 1
      %s374 = smul.addr %s373, 8
      %s375 = scalar_lea.vmem %s2, %s374
      %p376 = pneg %p95
      %p377 = pneg %p92
      %p378 = pneg %p116
      %p379 = pneg %p113
      %p380 = pneg %p137
      %p381 = pneg %p134
      %p382 = pneg %p158
      %p383 = pneg %p155
      %p384 = pneg %p179
      %p385 = pneg %p176
      %p386 = pneg %p200
      %p387 = pneg %p197
      %p388 = pneg %p221
      %p389 = pneg %p218
      %p390 = pneg %p242
      %p391 = pneg %p239
      %p392 = pneg %p263
      %p393 = pneg %p260
      %p394 = pneg %p289
      %p395 = pneg %p286
      %p396 = scmp.lt.s32.totalorder %s22, 1
      %s397 = scalar_select %p396, %s22, 1
      %s398 = smul.addr %s397, 8
      %s399 = scalar_lea.vmem %s11, %s398
      %p400 = scmp.lt.s32.totalorder %s22, 1
      %s401 = scalar_select %p400, %s22, 1
      %s402 = smul.addr %s401, 8
      %s403 = scalar_lea.vmem %s0, %s402
      %p404 = scmp.lt.s32.totalorder %s22, 1
      %s405 = scalar_select %p404, %s22, 1
      %s406 = smul.addr %s405, 8
      %s407 = scalar_lea.vmem %s1, %s406
      %p408 = scmp.lt.s32.totalorder %s22, 1
      %s409 = scalar_select %p408, %s22, 1
      %s410 = smul.addr %s409, 8
      %s411 = scalar_lea.vmem %s2, %s410
      %p412 = scmp.lt.s32.totalorder %s22, 1
      %s413 = scalar_select %p412, %s22, 1
      %s414 = smul.addr %s413, 8
      %s415 = scalar_lea.vmem %s11, %s414
      %v417 = vld [vmem:[%s411] sm:$0xff]
      %v418 = vld [vmem:[%s403] sm:$0xff]
      %v419 = vld [vmem:[%s407] sm:$0xff]
      %v420 = vadd.f32 %v418, %v419
      %vm421 = vcmask 261120
      %v422 = vsel %vm421, %v420, 0.0
      %423 = vadd.xlane.f32.xlu0 %v422
      %v424 = vpop.xlane.xlu0 %423
      %v425 = vrcp.pop 32.0
      %v426 = vmul.f32 32.0, %v425
      %v427 = vsub.f32 1.0, %v426
      %v428 = vmul.f32 %v425, %v427
      %v429 = vadd.f32 %v425, %v428
      %vm430 = vweird.f32 %v425
      %v431 = vsel %vm430, %v425, %v429
      %v432 = vmul.f32 %v424, %v431
      %v433 = vsub.f32 %v420, %v432
      %v434 = vmul.f32 %v433, %v433
      %v435 = vsel %vm421, %v434, 0.0
      %436 = vadd.xlane.f32.xlu0 %v435
      %v437 = vpop.xlane.xlu0 %436
      %v438 = vmul.f32 %v437, %v431
      %v439 = vadd.f32 %v438, 1e-05
      %v440 = vrsqrt.pop %v439
      %v441 = vmul.f32 %v440, %v439
      %v442 = vmul.f32 %v441, %v440
      %v443 = vmul.f32 0.5, %v442
      %v444 = vsub.f32 1.5, %v443
      %v445 = vmul.f32 %v440, %v444
      %vm446 = vweird.f32 %v439
      %vm447 = vweird.f32 %v440
      %vm448 = vmor %vm446, %vm447
      %v449 = vsel %vm448, %v440, %v445
      %v450 = vmul.f32 %v433, %v449
      %v451 = vld [vmem:[%s3] sm:$0x1]
      %v453 = vperm.slane %v451, 0
      %v455 = vmul.f32 %v450, %v453
      %v456 = vld [vmem:[%s4] sm:$0x1]
      %v458 = vperm.slane %v456, 0
      %v460 = vadd.f32 %v455, %v458
      %462 = vset.pattern.permute.xlu0 0
      %463 = vperm.xlu0 %462, %v417
      %v464 = vpop.permute.xlu0 %463
      %v466 = vmul.f32 %v460, %v464
      %vm467 = vcmask 257024
      %468 = vst.msk [vmem:[#allocation2] sm:$0xf] %vm467, 0
      %469 = vst.msk [vmem:[#allocation2 + $0x8] sm:$0xf] %vm467, 0
      %v470 = vpack.c.bf16 %v466, %v466
      %471 = vst.msk [vmem:[#allocation2 + $0x4] sm:$0xf] %vm467, %v470
      %v472 = vld [vmem:[#allocation2] sm:$0x8]
      %v473 = vld [vmem:[#allocation2 + $0x4] sm:$0xf]
      %v474 = vld [vmem:[%s5] sm:$0xf]
      %v475 = vld [vmem:[%s5 + $0x4] sm:$0xf]
      %v476 = vld [vmem:[%s5 + $0x8] sm:$0xf]
      %v477 = vld [vmem:[%s5 + $0xc] sm:$0xf]
      %s478 = scalar_lea.vmem %s5, 16
      %v479 = vld [vmem:[%s478] sm:$0xf]
      %v480 = vld [vmem:[%s478 + $0x4] sm:$0xf]
      %v481 = vld [vmem:[%s478 + $0x8] sm:$0xf]
      %v482 = vld [vmem:[%s478 + $0xc] sm:$0xf]
      %v487 = vunpack.c.l.b16 %v479
      %v488 = vunpack.c.l.b16 %v480
      %v489 = vunpack.c.l.b16 %v481
      %v490 = vunpack.c.l.b16 %v482
      %v491 = vpack.c.b16 %v488, %v487
      %v492 = vpack.c.b16 %v490, %v489
      %v496 = vsel %vm421, %v473, 0
      %498 = vmatpush.bf16.msra.mxu0 0
      %499 = vmatpush.bf16.msra.mxu0 0
      %500 = vmatpush.bf16.msra.mxu0 0
      %501 = vmatpush.bf16.msra.mxu0 0
      %502 = vmatpush.bf16.msra.mxu0 0
      %503 = vmatpush.bf16.msra.mxu0 0
      %504 = vmatpush.bf16.msra.mxu0 %v492
      %505 = vmatpush.bf16.msra.mxu0 %v491
      %506 = vmatmul.bf16.gmra.mxu0 %v496
      %v507 = vpop.f32.mrf.mxu0
      %v508 = vadd.f32 0.0, %v507
      %v509 = vpop.f32.mrf.mxu0
      %510 = vdwg.mxu0
      %v513 = vunpack.c.l.b16 %v472
      %v514 = vunpack.c.l.b16 %v473
      %v515 = vpack.c.b16 %v514, %v513
      %v517 = vshrl.u32 %v515, 16
      %v519 = vrot.slane %v517, 3
      %v520 = vshll.u32 %v515, 16
      %v522 = vrot.slane %v520, 4
      %v523 = vor.u32 %v519, %v522
      %v528 = vunpack.c.l.b16 %v474
      %v529 = vunpack.c.l.b16 %v475
      %v530 = vunpack.c.l.b16 %v476
      %v531 = vunpack.c.l.b16 %v477
      %v532 = vpack.c.b16 %v529, %v528
      %v533 = vpack.c.b16 %v531, %v530
      %v537 = vsel %vm421, %v523, 0
      %539 = vmatpush.bf16.msra.mxu0 0
      %540 = vmatpush.bf16.msra.mxu0 0
      %541 = vmatpush.bf16.msra.mxu0 0
      %542 = vmatpush.bf16.msra.mxu0 0
      %543 = vmatpush.bf16.msra.mxu0 0
      %544 = vmatpush.bf16.msra.mxu0 0
      %545 = vmatpush.bf16.msra.mxu0 %v533
      %546 = vmatpush.bf16.msra.mxu0 %v532
      %547 = vmatmul.bf16.gmra.mxu0 %v537
      %v548 = vpop.f32.mrf.mxu0
      %v549 = vadd.f32 %v508, %v548
      %v550 = vpop.f32.mrf.mxu0
      %551 = vdwg.mxu0
      %v552 = vld [vmem:[#allocation2 + $0x4] sm:$0xf]
      %v553 = vld [vmem:[#allocation2 + $0x8] sm:$0x1]
      %s554 = scalar_lea.vmem %s5, 32
      %v555 = vld [vmem:[%s554] sm:$0xf]
      %v556 = vld [vmem:[%s554 + $0x4] sm:$0xf]
      %v557 = vld [vmem:[%s554 + $0x8] sm:$0xf]
      %v558 = vld [vmem:[%s554 + $0xc] sm:$0xf]
      %v561 = vunpack.c.l.b16 %v552
      %v562 = vunpack.c.l.b16 %v553
      %v563 = vpack.c.b16 %v562, %v561
      %v565 = vshrl.u32 %v563, 16
      %v567 = vshll.u32 %v563, 16
      %v569 = vrot.slane %v567, 1
      %v570 = vor.u32 %v565, %v569
      %v575 = vunpack.c.l.b16 %v555
      %v576 = vunpack.c.l.b16 %v556
      %v577 = vunpack.c.l.b16 %v557
      %v578 = vunpack.c.l.b16 %v558
      %v579 = vpack.c.b16 %v576, %v575
      %v580 = vpack.c.b16 %v578, %v577
      %v584 = vsel %vm421, %v570, 0
      %586 = vmatpush.bf16.msra.mxu0 0
      %587 = vmatpush.bf16.msra.mxu0 0
      %588 = vmatpush.bf16.msra.mxu0 0
      %589 = vmatpush.bf16.msra.mxu0 0
      %590 = vmatpush.bf16.msra.mxu0 0
      %591 = vmatpush.bf16.msra.mxu0 0
      %592 = vmatpush.bf16.msra.mxu0 %v580
      %593 = vmatpush.bf16.msra.mxu0 %v579
      %594 = vmatmul.bf16.gmra.mxu0 %v584
      %v595 = vpop.f32.mrf.mxu0
      %v596 = vadd.f32 0.0, %v595
      %v597 = vpop.f32.mrf.mxu0
      %598 = vdwg.mxu0
      %v599 = vadd.f32 %v549, %v596
      %v600 = vld [vmem:[%s6] sm:$0x1]
      %v602 = vperm.slane %v600, 0
      %v604 = vadd.f32 %v599, %v602
      %v605 = vmax.f32 %v604, 0.0
      %vm606 = vcmask 519168
      %607 = vst.msk [vmem:[#allocation3] sm:$0xf] %vm606, 0
      %608 = vst.msk [vmem:[#allocation3 + $0x8] sm:$0xf] %vm606, 0
      %v609 = vpack.c.bf16 %v605, %v605
      %610 = vst.msk [vmem:[#allocation3 + $0x4] sm:$0xf] %vm606, %v609
      %v611 = vld [vmem:[#allocation3] sm:$0x8]
      %v612 = vld [vmem:[#allocation3 + $0x4] sm:$0xf]
      %v613 = vld [vmem:[%s7] sm:$0xf]
      %v614 = vld [vmem:[%s7 + $0x4] sm:$0xf]
      %v615 = vld [vmem:[%s7 + $0x8] sm:$0xf]
      %v616 = vld [vmem:[%s7 + $0xc] sm:$0xf]
      %v617 = vld [vmem:[%s7 + $0x10] sm:$0xf]
      %v618 = vld [vmem:[%s7 + $0x14] sm:$0xf]
      %v619 = vld [vmem:[%s7 + $0x18] sm:$0xf]
      %v620 = vld [vmem:[%s7 + $0x1c] sm:$0xf]
      %s621 = scalar_lea.vmem %s7, 32
      %v622 = vld [vmem:[%s621] sm:$0xf]
      %v623 = vld [vmem:[%s621 + $0x4] sm:$0xf]
      %v624 = vld [vmem:[%s621 + $0x8] sm:$0xf]
      %v625 = vld [vmem:[%s621 + $0xc] sm:$0xf]
      %v626 = vld [vmem:[%s621 + $0x10] sm:$0xf]
      %v627 = vld [vmem:[%s621 + $0x14] sm:$0xf]
      %v628 = vld [vmem:[%s621 + $0x18] sm:$0xf]
      %v629 = vld [vmem:[%s621 + $0x1c] sm:$0xf]
      %v638 = vunpack.c.l.b16 %v622
      %v639 = vunpack.c.l.b16 %v623
      %v640 = vunpack.c.l.b16 %v624
      %v641 = vunpack.c.l.b16 %v625
      %v642 = vunpack.c.l.b16 %v626
      %v643 = vunpack.c.l.b16 %v627
      %v644 = vunpack.c.l.b16 %v628
      %v645 = vunpack.c.l.b16 %v629
      %v646 = vpack.c.b16 %v639, %v638
      %v647 = vpack.c.b16 %v641, %v640
      %v648 = vpack.c.b16 %v643, %v642
      %v649 = vpack.c.b16 %v645, %v644
      %vm654 = vcmask 523264
      %v656 = vsel %vm654, %v612, 0
      %658 = vmatpush.bf16.msra.mxu0 0
      %659 = vmatpush.bf16.msra.mxu0 0
      %660 = vmatpush.bf16.msra.mxu0 0
      %661 = vmatpush.bf16.msra.mxu0 0
      %662 = vmatpush.bf16.msra.mxu0 %v649
      %663 = vmatpush.bf16.msra.mxu0 %v648
      %664 = vmatpush.bf16.msra.mxu0 %v647
      %665 = vmatpush.bf16.msra.mxu0 %v646
      %666 = vmatmul.bf16.gmra.mxu0 %v656
      %v667 = vpop.f32.mrf.mxu0
      %v668 = vadd.f32 0.0, %v667
      %v669 = vpop.f32.mrf.mxu0
      %670 = vdwg.mxu0
      %v673 = vunpack.c.l.b16 %v611
      %v674 = vunpack.c.l.b16 %v612
      %v675 = vpack.c.b16 %v674, %v673
      %v677 = vshrl.u32 %v675, 16
      %v679 = vrot.slane %v677, 3
      %v680 = vshll.u32 %v675, 16
      %v682 = vrot.slane %v680, 4
      %v683 = vor.u32 %v679, %v682
      %v692 = vunpack.c.l.b16 %v613
      %v693 = vunpack.c.l.b16 %v614
      %v694 = vunpack.c.l.b16 %v615
      %v695 = vunpack.c.l.b16 %v616
      %v696 = vunpack.c.l.b16 %v617
      %v697 = vunpack.c.l.b16 %v618
      %v698 = vunpack.c.l.b16 %v619
      %v699 = vunpack.c.l.b16 %v620
      %v700 = vpack.c.b16 %v693, %v692
      %v701 = vpack.c.b16 %v695, %v694
      %v702 = vpack.c.b16 %v697, %v696
      %v703 = vpack.c.b16 %v699, %v698
      %v709 = vsel %vm654, %v683, 0
      %711 = vmatpush.bf16.msra.mxu0 0
      %712 = vmatpush.bf16.msra.mxu0 0
      %713 = vmatpush.bf16.msra.mxu0 0
      %714 = vmatpush.bf16.msra.mxu0 0
      %715 = vmatpush.bf16.msra.mxu0 %v703
      %716 = vmatpush.bf16.msra.mxu0 %v702
      %717 = vmatpush.bf16.msra.mxu0 %v701
      %718 = vmatpush.bf16.msra.mxu0 %v700
      %719 = vmatmul.bf16.gmra.mxu0 %v709
      %v720 = vpop.f32.mrf.mxu0
      %v721 = vadd.f32 %v668, %v720
      %v722 = vpop.f32.mrf.mxu0
      %723 = vdwg.mxu0
      %v724 = vld [vmem:[#allocation3 + $0x4] sm:$0xf]
      %v725 = vld [vmem:[#allocation3 + $0x8] sm:$0x1]
      %s726 = scalar_lea.vmem %s7, 64
      %v727 = vld [vmem:[%s726] sm:$0xf]
      %v728 = vld [vmem:[%s726 + $0x4] sm:$0xf]
      %v729 = vld [vmem:[%s726 + $0x8] sm:$0xf]
      %v730 = vld [vmem:[%s726 + $0xc] sm:$0xf]
      %v731 = vld [vmem:[%s726 + $0x10] sm:$0xf]
      %v732 = vld [vmem:[%s726 + $0x14] sm:$0xf]
      %v733 = vld [vmem:[%s726 + $0x18] sm:$0xf]
      %v734 = vld [vmem:[%s726 + $0x1c] sm:$0xf]
      %v737 = vunpack.c.l.b16 %v724
      %v738 = vunpack.c.l.b16 %v725
      %v739 = vpack.c.b16 %v738, %v737
      %v741 = vshrl.u32 %v739, 16
      %v743 = vshll.u32 %v739, 16
      %v745 = vrot.slane %v743, 1
      %v746 = vor.u32 %v741, %v745
      %v755 = vunpack.c.l.b16 %v727
      %v756 = vunpack.c.l.b16 %v728
      %v757 = vunpack.c.l.b16 %v729
      %v758 = vunpack.c.l.b16 %v730
      %v759 = vunpack.c.l.b16 %v731
      %v760 = vunpack.c.l.b16 %v732
      %v761 = vunpack.c.l.b16 %v733
      %v762 = vunpack.c.l.b16 %v734
      %v763 = vpack.c.b16 %v756, %v755
      %v764 = vpack.c.b16 %v758, %v757
      %v765 = vpack.c.b16 %v760, %v759
      %v766 = vpack.c.b16 %v762, %v761
      %v772 = vsel %vm654, %v746, 0
      %774 = vmatpush.bf16.msra.mxu0 0
      %775 = vmatpush.bf16.msra.mxu0 0
      %776 = vmatpush.bf16.msra.mxu0 0
      %777 = vmatpush.bf16.msra.mxu0 0
      %778 = vmatpush.bf16.msra.mxu0 %v766
      %779 = vmatpush.bf16.msra.mxu0 %v765
      %780 = vmatpush.bf16.msra.mxu0 %v764
      %781 = vmatpush.bf16.msra.mxu0 %v763
      %782 = vmatmul.bf16.gmra.mxu0 %v772
      %v783 = vpop.f32.mrf.mxu0
      %v784 = vadd.f32 0.0, %v783
      %v785 = vpop.f32.mrf.mxu0
      %786 = vdwg.mxu0
      %v787 = vadd.f32 %v721, %v784
      %v788 = vld [vmem:[%s8] sm:$0x1]
      %v790 = vperm.slane %v788, 0
      %v792 = vadd.f32 %v787, %v790
      %v793 = vadd.f32 %v792, %v466
      %v794 = vsel %vm421, %v793, 0.0
      %795 = vadd.xlane.f32.xlu0 %v794
      %v796 = vpop.xlane.xlu0 %795
      %v797 = vmul.f32 %v796, %v431
      %v798 = vsub.f32 %v793, %v797
      %v799 = vmul.f32 %v798, %v798
      %v800 = vsel %vm421, %v799, 0.0
      %801 = vadd.xlane.f32.xlu0 %v800
      %v802 = vpop.xlane.xlu0 %801
      %v803 = vmul.f32 %v802, %v431
      %v804 = vadd.f32 %v803, 1e-05
      %v805 = vrsqrt.pop %v804
      %v806 = vmul.f32 %v805, %v804
      %v807 = vmul.f32 %v806, %v805
      %v808 = vmul.f32 0.5, %v807
      %v809 = vsub.f32 1.5, %v808
      %v810 = vmul.f32 %v805, %v809
      %vm811 = vweird.f32 %v804
      %vm812 = vweird.f32 %v805
      %vm813 = vmor %vm811, %vm812
      %v814 = vsel %vm813, %v805, %v810
      %v815 = vmul.f32 %v798, %v814
      %v816 = vld [vmem:[%s9] sm:$0x1]
      %v818 = vperm.slane %v816, 0
      %v820 = vmul.f32 %v815, %v818
      %v821 = vld [vmem:[%s10] sm:$0x1]
      %v823 = vperm.slane %v821, 0
      %v825 = vadd.f32 %v820, %v823
      %v826 = vmul.f32 %v825, %v464
      %827 = vst.msk [vmem:[%s415] sm:$0xff] %vm421, %v826
      %p828 = scmp.lt.s32.totalorder %s22, 1
      %s829 = scalar_select %p828, %s22, 1
      %s830 = smul.addr %s829, 8
      %s831 = scalar_lea.vmem %s11, %s830
      // Predicated region
      $region65: #{_lambda_.18} parent=63 // pred_check
        %p832 = pneg %p286
      $region66: #{_lambda_.18} parent=63 // pred_check_branch
        %834 = sbr.rel (%p832) target = $region68
      $region67: #{_lambda_.18} parent=63 // pred_region
        _
      $region68: #{_lambda_.18} parent=63 // pred_fallthru
        _
    $region64: #{_lambda_.18} parent=5 // pred_fallthru
      _
    %p835 = scmp.le.s32.totalorder 2, %s17
    // Predicated region
    $region69: #{_lambda_.18} parent=5 // pred_check
      %p836 = pneg %p835
    $region70: #{_lambda_.18} parent=5 // pred_check_branch
      %838 = sbr.rel (%p836) target = $region72
    $region71: #{_lambda_.18} parent=5 // pred_region
      %s839 = ssub.s32 %s17, 2
      // Predicated region
      $region73: #{_lambda_.18} parent=71 // pred_check
        %p840 = pneg %p292
      $region74: #{_lambda_.18} parent=71 // pred_check_branch
        %842 = sbr.rel (%p840) target = $region76
      $region75: #{_lambda_.18} parent=71 // pred_region
        %p843 = scmp.lt.s32.totalorder %s23, 1
        %s844 = scalar_select %p843, %s23, 1
        %s845 = smul.addr %s844, 8
        %s846 = scalar_lea.vmem %s11, %s845
      $region76: #{_lambda_.18} parent=71 // pred_fallthru
        _
    $region72: #{_lambda_.18} parent=5 // pred_fallthru
      _
  $region6: #{_lambda_.18} parent=0 // loop_footer
    %s21 = sadd.s32 1, %s17
  $region7: #{_lambda_.18} parent=0 // loop_footer_branch
    %16 = sbr.rel target = $region3
  $region8: #{_lambda_.18} parent=0 // loop_exit
    _

// kernel: _lambda_.22
$region0: #{_lambda_.22}
  #allocation0 [shape = 'u32[]', space=smem, size = 0x4, offset = 0x4, fixed_abs, tag = 'smem constant byte address 0x4 - core index']
  #allocation1 [shape = 'u32[72,128]{1,0:T(1,128)}', space=vmem, size = 0x9000, scoped, tag = 'internal scratch']
  #allocation2 [shape = 'bf16[24,32]{1,0:T(8,128)(2,1)}', space=vmem, size = 0x1800, scoped, tag = 'scratch operand']
  #allocation3 [shape = 'bf16[24,32]{1,0:T(8,128)(2,1)}', space=vmem, size = 0x1800, scoped, tag = 'scratch operand']
  #allocation4 [shape = 'f32[1,1]{1,0:T(1,128)S(1)}', space=vmem, size = 0x200, scoped, tag = 'scoped memory for _lambda_.22']
  %s0 = inlined_call_operand.vmem [shape: f32[2,8,32], index: 0, kind: input, shape index: {}]
  %s1 = inlined_call_operand.vmem [shape: bf16[3,32,32], index: 1, kind: input, shape index: {}]
  %s2 = inlined_call_operand.vmem [shape: f32[1,32], index: 2, kind: input, shape index: {}]
  %s3 = inlined_call_operand.vmem [shape: f32[1,32], index: 3, kind: input, shape index: {}]
  %s4 = inlined_call_operand.vmem [shape: f32[1,32], index: 4, kind: input, shape index: {}]
  %s5 = inlined_call_operand.vmem [shape: bf16[3,32,32], index: 5, kind: input, shape index: {}]
  %s6 = inlined_call_operand.vmem [shape: f32[1,32], index: 6, kind: input, shape index: {}]
  %s7 = inlined_call_operand.vmem [shape: f32[1,32], index: 7, kind: input, shape index: {}]
  %s8 = inlined_call_operand.vmem [shape: f32[1,32], index: 8, kind: input, shape index: {}]
  %s9 = inlined_call_operand.vmem [shape: f32[1,32], index: 9, kind: input, shape index: {}]
  %s10 = inlined_call_operand.<no memory space> [shape: f32[1,1], index: 10, kind: input, shape index: {}]
  %s11 = inlined_call_operand.vmem [shape: f32[2,8,1], index: 11, kind: output, shape index: {}]
  %s12 = sld [smem:[#allocation0]]
  $region77: #{_lambda_.22} parent=0
    _
  %s14 = ssub.s32 1, %s12
  %s15 = scalar_select 0, %s14, %s12
  %v16 = vstv %s10
  %17 = vst [vmem:[#allocation4] sm:$0x1] %v16
  loop: start=0, step=1, limit=4
  $region2: #{_lambda_.22} parent=0 // loop_pre_header
    _
  $region3: #{_lambda_.22} parent=0 // loop_header
    %s19 = sphi 0, %s23
    %p20 = scmp.ge.s32.totalorder %s19, 4
    %s29 = sphi 0, %s31
    %s32 = sphi 0, %s29
    %s33 = sphi 0, %s32
    %s49 = sphi 0, %s33
    %s53 = sphi 0, %s53
    %s55 = sphi 0, %s53
    %s56 = sphi 0, %s55
    %s70 = sphi 0, %s56
    %s74 = sphi 0, %s74
    %s76 = sphi 0, %s74
    %s77 = sphi 0, %s76
    %s91 = sphi 0, %s77
    %s95 = sphi 0, %s95
    %s97 = sphi 0, %s95
    %s98 = sphi 0, %s97
    %s112 = sphi 0, %s98
    %s116 = sphi 0, %s116
    %s118 = sphi 0, %s116
    %s119 = sphi 0, %s118
    %s133 = sphi 0, %s119
    %s137 = sphi 0, %s137
    %s139 = sphi 0, %s137
    %s140 = sphi 0, %s139
    %s154 = sphi 0, %s140
    %s158 = sphi 0, %s158
    %s160 = sphi 0, %s158
    %s161 = sphi 0, %s160
    %s175 = sphi 0, %s161
    %s179 = sphi 0, %s179
    %s181 = sphi 0, %s179
    %s182 = sphi 0, %s181
    %s196 = sphi 0, %s182
    %s200 = sphi 0, %s200
    %s202 = sphi 0, %s200
    %s203 = sphi 0, %s202
    %s217 = sphi 0, %s203
    %s221 = sphi 0, %s221
    %s223 = sphi 0, %s221
    %s224 = sphi 0, %s223
    %s238 = sphi 0, %s224
    %s242 = sphi 0, %s242
    %s244 = sphi 0, %s242
    %s245 = sphi 0, %s244
    %s259 = sphi 0, %s245
    %s265 = sphi 0, %s267
    %s268 = sphi 0, %s265
    %s269 = sphi 0, %s268
    %s285 = sphi 0, %s269
  $region4: #{_lambda_.22} parent=0 // loop_header_branch
    %22 = sbr.rel (%p20) target = $region8
  $region5: #{_lambda_.22} parent=0 // loop_body
    %s24 = ssub.s32 %s19, 1
    %s25 = ssub.s32 %s19, 2
    %s26 = sadd.s32 %s19, 1
    %s27 = ssub.s32 %s19, %s26
    %p28 = scmp.eq.s32.totalorder %s27, 0
    %s30 = sadd.s32 %s29, 1
    %s31 = scalar_select %p28, %s29, %s30
    %p34 = pneg %p28
    %p35 = scmp.eq.s32.totalorder %s19, 1
    %p36 = por %p34, %p35
    %p37 = scmp.ne.s32.totalorder %s29, %s32
    %p38 = scmp.eq.s32.totalorder %s19, 0
    %p39 = por %p37, %p38
    %p40 = scmp.ne.s32.totalorder %s29, %s32
    %p41 = scmp.eq.s32.totalorder %s24, 1
    %p42 = por %p40, %p41
    %p43 = scmp.ne.s32.totalorder %s32, %s33
    %p44 = scmp.eq.s32.totalorder %s24, 0
    %p45 = por %p43, %p44
    %p46 = scmp.ne.s32.totalorder %s32, %s33
    %p47 = scmp.eq.s32.totalorder %s25, 1
    %p48 = por %p46, %p47
    %p50 = scmp.ne.s32.totalorder %s33, %s49
    %p51 = scmp.eq.s32.totalorder %s25, 0
    %p52 = por %p50, %p51
    %s54 = sadd.s32 %s53, 1
    %p57 = scmp.eq.s32.totalorder %s19, 1
    %p58 = scmp.ne.s32.totalorder %s53, %s55
    %p59 = scmp.eq.s32.totalorder %s19, 0
    %p60 = por %p58, %p59
    %p61 = scmp.ne.s32.totalorder %s53, %s55
    %p62 = scmp.eq.s32.totalorder %s24, 1
    %p63 = por %p61, %p62
    %p64 = scmp.ne.s32.totalorder %s55, %s56
    %p65 = scmp.eq.s32.totalorder %s24, 0
    %p66 = por %p64, %p65
    %p67 = scmp.ne.s32.totalorder %s55, %s56
    %p68 = scmp.eq.s32.totalorder %s25, 1
    %p69 = por %p67, %p68
    %p71 = scmp.ne.s32.totalorder %s56, %s70
    %p72 = scmp.eq.s32.totalorder %s25, 0
    %p73 = por %p71, %p72
    %s75 = sadd.s32 %s74, 1
    %p78 = scmp.eq.s32.totalorder %s19, 1
    %p79 = scmp.ne.s32.totalorder %s74, %s76
    %p80 = scmp.eq.s32.totalorder %s19, 0
    %p81 = por %p79, %p80
    %p82 = scmp.ne.s32.totalorder %s74, %s76
    %p83 = scmp.eq.s32.totalorder %s24, 1
    %p84 = por %p82, %p83
    %p85 = scmp.ne.s32.totalorder %s76, %s77
    %p86 = scmp.eq.s32.totalorder %s24, 0
    %p87 = por %p85, %p86
    %p88 = scmp.ne.s32.totalorder %s76, %s77
    %p89 = scmp.eq.s32.totalorder %s25, 1
    %p90 = por %p88, %p89
    %p92 = scmp.ne.s32.totalorder %s77, %s91
    %p93 = scmp.eq.s32.totalorder %s25, 0
    %p94 = por %p92, %p93
    %s96 = sadd.s32 %s95, 1
    %p99 = scmp.eq.s32.totalorder %s19, 1
    %p100 = scmp.ne.s32.totalorder %s95, %s97
    %p101 = scmp.eq.s32.totalorder %s19, 0
    %p102 = por %p100, %p101
    %p103 = scmp.ne.s32.totalorder %s95, %s97
    %p104 = scmp.eq.s32.totalorder %s24, 1
    %p105 = por %p103, %p104
    %p106 = scmp.ne.s32.totalorder %s97, %s98
    %p107 = scmp.eq.s32.totalorder %s24, 0
    %p108 = por %p106, %p107
    %p109 = scmp.ne.s32.totalorder %s97, %s98
    %p110 = scmp.eq.s32.totalorder %s25, 1
    %p111 = por %p109, %p110
    %p113 = scmp.ne.s32.totalorder %s98, %s112
    %p114 = scmp.eq.s32.totalorder %s25, 0
    %p115 = por %p113, %p114
    %s117 = sadd.s32 %s116, 1
    %p120 = scmp.eq.s32.totalorder %s19, 1
    %p121 = scmp.ne.s32.totalorder %s116, %s118
    %p122 = scmp.eq.s32.totalorder %s19, 0
    %p123 = por %p121, %p122
    %p124 = scmp.ne.s32.totalorder %s116, %s118
    %p125 = scmp.eq.s32.totalorder %s24, 1
    %p126 = por %p124, %p125
    %p127 = scmp.ne.s32.totalorder %s118, %s119
    %p128 = scmp.eq.s32.totalorder %s24, 0
    %p129 = por %p127, %p128
    %p130 = scmp.ne.s32.totalorder %s118, %s119
    %p131 = scmp.eq.s32.totalorder %s25, 1
    %p132 = por %p130, %p131
    %p134 = scmp.ne.s32.totalorder %s119, %s133
    %p135 = scmp.eq.s32.totalorder %s25, 0
    %p136 = por %p134, %p135
    %s138 = sadd.s32 %s137, 1
    %p141 = scmp.eq.s32.totalorder %s19, 1
    %p142 = scmp.ne.s32.totalorder %s137, %s139
    %p143 = scmp.eq.s32.totalorder %s19, 0
    %p144 = por %p142, %p143
    %p145 = scmp.ne.s32.totalorder %s137, %s139
    %p146 = scmp.eq.s32.totalorder %s24, 1
    %p147 = por %p145, %p146
    %p148 = scmp.ne.s32.totalorder %s139, %s140
    %p149 = scmp.eq.s32.totalorder %s24, 0
    %p150 = por %p148, %p149
    %p151 = scmp.ne.s32.totalorder %s139, %s140
    %p152 = scmp.eq.s32.totalorder %s25, 1
    %p153 = por %p151, %p152
    %p155 = scmp.ne.s32.totalorder %s140, %s154
    %p156 = scmp.eq.s32.totalorder %s25, 0
    %p157 = por %p155, %p156
    %s159 = sadd.s32 %s158, 1
    %p162 = scmp.eq.s32.totalorder %s19, 1
    %p163 = scmp.ne.s32.totalorder %s158, %s160
    %p164 = scmp.eq.s32.totalorder %s19, 0
    %p165 = por %p163, %p164
    %p166 = scmp.ne.s32.totalorder %s158, %s160
    %p167 = scmp.eq.s32.totalorder %s24, 1
    %p168 = por %p166, %p167
    %p169 = scmp.ne.s32.totalorder %s160, %s161
    %p170 = scmp.eq.s32.totalorder %s24, 0
    %p171 = por %p169, %p170
    %p172 = scmp.ne.s32.totalorder %s160, %s161
    %p173 = scmp.eq.s32.totalorder %s25, 1
    %p174 = por %p172, %p173
    %p176 = scmp.ne.s32.totalorder %s161, %s175
    %p177 = scmp.eq.s32.totalorder %s25, 0
    %p178 = por %p176, %p177
    %s180 = sadd.s32 %s179, 1
    %p183 = scmp.eq.s32.totalorder %s19, 1
    %p184 = scmp.ne.s32.totalorder %s179, %s181
    %p185 = scmp.eq.s32.totalorder %s19, 0
    %p186 = por %p184, %p185
    %p187 = scmp.ne.s32.totalorder %s179, %s181
    %p188 = scmp.eq.s32.totalorder %s24, 1
    %p189 = por %p187, %p188
    %p190 = scmp.ne.s32.totalorder %s181, %s182
    %p191 = scmp.eq.s32.totalorder %s24, 0
    %p192 = por %p190, %p191
    %p193 = scmp.ne.s32.totalorder %s181, %s182
    %p194 = scmp.eq.s32.totalorder %s25, 1
    %p195 = por %p193, %p194
    %p197 = scmp.ne.s32.totalorder %s182, %s196
    %p198 = scmp.eq.s32.totalorder %s25, 0
    %p199 = por %p197, %p198
    %s201 = sadd.s32 %s200, 1
    %p204 = scmp.eq.s32.totalorder %s19, 1
    %p205 = scmp.ne.s32.totalorder %s200, %s202
    %p206 = scmp.eq.s32.totalorder %s19, 0
    %p207 = por %p205, %p206
    %p208 = scmp.ne.s32.totalorder %s200, %s202
    %p209 = scmp.eq.s32.totalorder %s24, 1
    %p210 = por %p208, %p209
    %p211 = scmp.ne.s32.totalorder %s202, %s203
    %p212 = scmp.eq.s32.totalorder %s24, 0
    %p213 = por %p211, %p212
    %p214 = scmp.ne.s32.totalorder %s202, %s203
    %p215 = scmp.eq.s32.totalorder %s25, 1
    %p216 = por %p214, %p215
    %p218 = scmp.ne.s32.totalorder %s203, %s217
    %p219 = scmp.eq.s32.totalorder %s25, 0
    %p220 = por %p218, %p219
    %s222 = sadd.s32 %s221, 1
    %p225 = scmp.eq.s32.totalorder %s19, 1
    %p226 = scmp.ne.s32.totalorder %s221, %s223
    %p227 = scmp.eq.s32.totalorder %s19, 0
    %p228 = por %p226, %p227
    %p229 = scmp.ne.s32.totalorder %s221, %s223
    %p230 = scmp.eq.s32.totalorder %s24, 1
    %p231 = por %p229, %p230
    %p232 = scmp.ne.s32.totalorder %s223, %s224
    %p233 = scmp.eq.s32.totalorder %s24, 0
    %p234 = por %p232, %p233
    %p235 = scmp.ne.s32.totalorder %s223, %s224
    %p236 = scmp.eq.s32.totalorder %s25, 1
    %p237 = por %p235, %p236
    %p239 = scmp.ne.s32.totalorder %s224, %s238
    %p240 = scmp.eq.s32.totalorder %s25, 0
    %p241 = por %p239, %p240
    %s243 = sadd.s32 %s242, 1
    %p246 = scmp.eq.s32.totalorder %s19, 1
    %p247 = scmp.ne.s32.totalorder %s242, %s244
    %p248 = scmp.eq.s32.totalorder %s19, 0
    %p249 = por %p247, %p248
    %p250 = scmp.ne.s32.totalorder %s242, %s244
    %p251 = scmp.eq.s32.totalorder %s24, 1
    %p252 = por %p250, %p251
    %p253 = scmp.ne.s32.totalorder %s244, %s245
    %p254 = scmp.eq.s32.totalorder %s24, 0
    %p255 = por %p253, %p254
    %p256 = scmp.ne.s32.totalorder %s244, %s245
    %p257 = scmp.eq.s32.totalorder %s25, 1
    %p258 = por %p256, %p257
    %p260 = scmp.ne.s32.totalorder %s245, %s259
    %p261 = scmp.eq.s32.totalorder %s25, 0
    %p262 = por %p260, %p261
    %s263 = ssub.s32 %s19, %s26
    %p264 = scmp.eq.s32.totalorder %s263, 0
    %s266 = sadd.s32 %s265, 1
    %s267 = scalar_select %p264, %s265, %s266
    %p270 = pneg %p264
    %p271 = scmp.eq.s32.totalorder %s19, 1
    %p272 = por %p270, %p271
    %p273 = scmp.ne.s32.totalorder %s265, %s268
    %p274 = scmp.eq.s32.totalorder %s19, 0
    %p275 = por %p273, %p274
    %p276 = scmp.ne.s32.totalorder %s265, %s268
    %p277 = scmp.eq.s32.totalorder %s24, 1
    %p278 = por %p276, %p277
    %p279 = scmp.ne.s32.totalorder %s268, %s269
    %p280 = scmp.eq.s32.totalorder %s24, 0
    %p281 = por %p279, %p280
    %p282 = scmp.ne.s32.totalorder %s268, %s269
    %p283 = scmp.eq.s32.totalorder %s25, 1
    %p284 = por %p282, %p283
    %p286 = scmp.ne.s32.totalorder %s269, %s285
    %p287 = scmp.eq.s32.totalorder %s25, 0
    %p288 = por %p286, %p287
    %p289 = scmp.le.s32.totalorder 1, %s19
    %p290 = scmp.lt.s32.totalorder %s19, 3
    %p291 = pnand %p289, %p290
    %p292 = pneg %p291
    // Predicated region
    $region9: #{_lambda_.22} parent=5 // pred_check
      _
    $region10: #{_lambda_.22} parent=5 // pred_check_branch
      %294 = sbr.rel (%p291) target = $region12
    $region11: #{_lambda_.22} parent=5 // pred_region
      %s295 = ssub.s32 %s19, 1
      // Predicated region
      $region13: #{_lambda_.22} parent=11 // pred_check
        %p296 = pneg %p66
      $region14: #{_lambda_.22} parent=11 // pred_check_branch
        %298 = sbr.rel (%p296) target = $region16
      $region15: #{_lambda_.22} parent=11 // pred_region
        _
      $region16: #{_lambda_.22} parent=11 // pred_fallthru
        _
      // Predicated region
      $region17: #{_lambda_.22} parent=11 // pred_check
        %p299 = pneg %p87
      $region18: #{_lambda_.22} parent=11 // pred_check_branch
        %301 = sbr.rel (%p299) target = $region20
      $region19: #{_lambda_.22} parent=11 // pred_region
        _
      $region20: #{_lambda_.22} parent=11 // pred_fallthru
        _
      // Predicated region
      $region21: #{_lambda_.22} parent=11 // pred_check
        %p302 = pneg %p108
      $region22: #{_lambda_.22} parent=11 // pred_check_branch
        %304 = sbr.rel (%p302) target = $region24
      $region23: #{_lambda_.22} parent=11 // pred_region
        _
      $region24: #{_lambda_.22} parent=11 // pred_fallthru
        _
      // Predicated region
      $region25: #{_lambda_.22} parent=11 // pred_check
        %p305 = pneg %p129
      $region26: #{_lambda_.22} parent=11 // pred_check_branch
        %307 = sbr.rel (%p305) target = $region28
      $region27: #{_lambda_.22} parent=11 // pred_region
        _
      $region28: #{_lambda_.22} parent=11 // pred_fallthru
        _
      // Predicated region
      $region29: #{_lambda_.22} parent=11 // pred_check
        %p308 = pneg %p150
      $region30: #{_lambda_.22} parent=11 // pred_check_branch
        %310 = sbr.rel (%p308) target = $region32
      $region31: #{_lambda_.22} parent=11 // pred_region
        _
      $region32: #{_lambda_.22} parent=11 // pred_fallthru
        _
      // Predicated region
      $region33: #{_lambda_.22} parent=11 // pred_check
        %p311 = pneg %p171
      $region34: #{_lambda_.22} parent=11 // pred_check_branch
        %313 = sbr.rel (%p311) target = $region36
      $region35: #{_lambda_.22} parent=11 // pred_region
        _
      $region36: #{_lambda_.22} parent=11 // pred_fallthru
        _
      // Predicated region
      $region37: #{_lambda_.22} parent=11 // pred_check
        %p314 = pneg %p192
      $region38: #{_lambda_.22} parent=11 // pred_check_branch
        %316 = sbr.rel (%p314) target = $region40
      $region39: #{_lambda_.22} parent=11 // pred_region
        _
      $region40: #{_lambda_.22} parent=11 // pred_fallthru
        _
      // Predicated region
      $region41: #{_lambda_.22} parent=11 // pred_check
        %p317 = pneg %p213
      $region42: #{_lambda_.22} parent=11 // pred_check_branch
        %319 = sbr.rel (%p317) target = $region44
      $region43: #{_lambda_.22} parent=11 // pred_region
        _
      $region44: #{_lambda_.22} parent=11 // pred_fallthru
        _
      // Predicated region
      $region45: #{_lambda_.22} parent=11 // pred_check
        %p320 = pneg %p234
      $region46: #{_lambda_.22} parent=11 // pred_check_branch
        %322 = sbr.rel (%p320) target = $region48
      $region47: #{_lambda_.22} parent=11 // pred_region
        _
      $region48: #{_lambda_.22} parent=11 // pred_fallthru
        _
      // Predicated region
      $region49: #{_lambda_.22} parent=11 // pred_check
        %p323 = pneg %p255
      $region50: #{_lambda_.22} parent=11 // pred_check_branch
        %325 = sbr.rel (%p323) target = $region52
      $region51: #{_lambda_.22} parent=11 // pred_region
        _
      $region52: #{_lambda_.22} parent=11 // pred_fallthru
        _
    $region12: #{_lambda_.22} parent=5 // pred_fallthru
      _
    %p326 = scmp.lt.s32.totalorder %s19, 2
    // Predicated region
    $region53: #{_lambda_.22} parent=5 // pred_check
      %p327 = pneg %p326
    $region54: #{_lambda_.22} parent=5 // pred_check_branch
      %329 = sbr.rel (%p327) target = $region56
    $region55: #{_lambda_.22} parent=5 // pred_region
      // Predicated region
      $region57: #{_lambda_.22} parent=55 // pred_check
        %p330 = pneg %p39
      $region58: #{_lambda_.22} parent=55 // pred_check_branch
        %332 = sbr.rel (%p330) target = $region60
      $region59: #{_lambda_.22} parent=55 // pred_region
        %p333 = scmp.lt.s32.totalorder %s19, 1
        %s334 = scalar_select %p333, %s19, 1
        %s335 = smul.addr %s334, 8
        %s336 = scalar_lea.vmem %s0, %s335
      $region60: #{_lambda_.22} parent=55 // pred_fallthru
        _
    $region56: #{_lambda_.22} parent=5 // pred_fallthru
      _
    %p337 = scmp.le.s32.totalorder 1, %s19
    %p338 = scmp.lt.s32.totalorder %s19, 3
    %p339 = pnand %p337, %p338
    %p340 = pneg %p339
    // Predicated region
    $region61: #{_lambda_.22} parent=5 // pred_check
      _
    $region62: #{_lambda_.22} parent=5 // pred_check_branch
      %342 = sbr.rel (%p339) target = $region64
    $region63: #{_lambda_.22} parent=5 // pred_region
      %s343 = ssub.s32 %s19, 1
      %p344 = scmp.lt.s32.totalorder %s24, 1
      %s345 = scalar_select %p344, %s24, 1
      %s346 = smul.addr %s345, 8
      %s347 = scalar_lea.vmem %s0, %s346
      %p348 = pneg %p45
      %p349 = pneg %p42
      %p350 = pneg %p66
      %p351 = pneg %p63
      %p352 = pneg %p87
      %p353 = pneg %p84
      %p354 = pneg %p108
      %p355 = pneg %p105
      %p356 = pneg %p129
      %p357 = pneg %p126
      %p358 = pneg %p150
      %p359 = pneg %p147
      %p360 = pneg %p171
      %p361 = pneg %p168
      %p362 = pneg %p192
      %p363 = pneg %p189
      %p364 = pneg %p213
      %p365 = pneg %p210
      %p366 = pneg %p234
      %p367 = pneg %p231
      %p368 = pneg %p255
      %p369 = pneg %p252
      %p370 = pneg %p281
      %p371 = pneg %p278
      %p372 = scmp.lt.s32.totalorder %s24, 1
      %s373 = scalar_select %p372, %s24, 1
      %s374 = smul.addr %s373, 8
      %s375 = scalar_lea.vmem %s11, %s374
      %p376 = scmp.lt.s32.totalorder %s24, 1
      %s377 = scalar_select %p376, %s24, 1
      %s378 = smul.addr %s377, 8
      %s379 = scalar_lea.vmem %s0, %s378
      %p380 = scmp.lt.s32.totalorder %s24, 1
      %s381 = scalar_select %p380, %s24, 1
      %s382 = smul.addr %s381, 8
      %s383 = scalar_lea.vmem %s11, %s382
      %vm385 = vcmask 257024
      %386 = vst.msk [vmem:[#allocation2] sm:$0xf] %vm385, 0
      %387 = vst.msk [vmem:[#allocation2 + $0x8] sm:$0xf] %vm385, 0
      %v388 = vld [vmem:[%s379] sm:$0xff]
      %v389 = vpack.c.bf16 %v388, %v388
      %390 = vst.msk [vmem:[#allocation2 + $0x4] sm:$0xf] %vm385, %v389
      %v391 = vld [vmem:[#allocation2] sm:$0x8]
      %v392 = vld [vmem:[#allocation2 + $0x4] sm:$0xf]
      %v393 = vld [vmem:[%s1] sm:$0xf]
      %v394 = vld [vmem:[%s1 + $0x4] sm:$0xf]
      %v395 = vld [vmem:[%s1 + $0x8] sm:$0xf]
      %v396 = vld [vmem:[%s1 + $0xc] sm:$0xf]
      %s397 = scalar_lea.vmem %s1, 16
      %v398 = vld [vmem:[%s397] sm:$0xf]
      %v399 = vld [vmem:[%s397 + $0x4] sm:$0xf]
      %v400 = vld [vmem:[%s397 + $0x8] sm:$0xf]
      %v401 = vld [vmem:[%s397 + $0xc] sm:$0xf]
      %v406 = vunpack.c.l.b16 %v398
      %v407 = vunpack.c.l.b16 %v399
      %v408 = vunpack.c.l.b16 %v400
      %v409 = vunpack.c.l.b16 %v401
      %v410 = vpack.c.b16 %v407, %v406
      %v411 = vpack.c.b16 %v409, %v408
      %vm414 = vcmask 261120
      %v416 = vsel %vm414, %v392, 0
      %418 = vmatpush.bf16.msra.mxu0 0
      %419 = vmatpush.bf16.msra.mxu0 0
      %420 = vmatpush.bf16.msra.mxu0 0
      %421 = vmatpush.bf16.msra.mxu0 0
      %422 = vmatpush.bf16.msra.mxu0 0
      %423 = vmatpush.bf16.msra.mxu0 0
      %424 = vmatpush.bf16.msra.mxu0 %v411
      %425 = vmatpush.bf16.msra.mxu0 %v410
      %426 = vmatmul.bf16.gmra.mxu0 %v416
      %v427 = vpop.f32.mrf.mxu0
      %v428 = vadd.f32 0.0, %v427
      %v429 = vpop.f32.mrf.mxu0
      %430 = vdwg.mxu0
      %v433 = vunpack.c.l.b16 %v391
      %v434 = vunpack.c.l.b16 %v392
      %v435 = vpack.c.b16 %v434, %v433
      %v437 = vshrl.u32 %v435, 16
      %v439 = vrot.slane %v437, 3
      %v440 = vshll.u32 %v435, 16
      %v442 = vrot.slane %v440, 4
      %v443 = vor.u32 %v439, %v442
      %v448 = vunpack.c.l.b16 %v393
      %v449 = vunpack.c.l.b16 %v394
      %v450 = vunpack.c.l.b16 %v395
      %v451 = vunpack.c.l.b16 %v396
      %v452 = vpack.c.b16 %v449, %v448
      %v453 = vpack.c.b16 %v451, %v450
      %v457 = vsel %vm414, %v443, 0
      %459 = vmatpush.bf16.msra.mxu0 0
      %460 = vmatpush.bf16.msra.mxu0 0
      %461 = vmatpush.bf16.msra.mxu0 0
      %462 = vmatpush.bf16.msra.mxu0 0
      %463 = vmatpush.bf16.msra.mxu0 0
      %464 = vmatpush.bf16.msra.mxu0 0
      %465 = vmatpush.bf16.msra.mxu0 %v453
      %466 = vmatpush.bf16.msra.mxu0 %v452
      %467 = vmatmul.bf16.gmra.mxu0 %v457
      %v468 = vpop.f32.mrf.mxu0
      %v469 = vadd.f32 %v428, %v468
      %v470 = vpop.f32.mrf.mxu0
      %471 = vdwg.mxu0
      %v472 = vld [vmem:[#allocation2 + $0x4] sm:$0xf]
      %v473 = vld [vmem:[#allocation2 + $0x8] sm:$0x1]
      %s474 = scalar_lea.vmem %s1, 32
      %v475 = vld [vmem:[%s474] sm:$0xf]
      %v476 = vld [vmem:[%s474 + $0x4] sm:$0xf]
      %v477 = vld [vmem:[%s474 + $0x8] sm:$0xf]
      %v478 = vld [vmem:[%s474 + $0xc] sm:$0xf]
      %v481 = vunpack.c.l.b16 %v472
      %v482 = vunpack.c.l.b16 %v473
      %v483 = vpack.c.b16 %v482, %v481
      %v485 = vshrl.u32 %v483, 16
      %v487 = vshll.u32 %v483, 16
      %v489 = vrot.slane %v487, 1
      %v490 = vor.u32 %v485, %v489
      %v495 = vunpack.c.l.b16 %v475
      %v496 = vunpack.c.l.b16 %v476
      %v497 = vunpack.c.l.b16 %v477
      %v498 = vunpack.c.l.b16 %v478
      %v499 = vpack.c.b16 %v496, %v495
      %v500 = vpack.c.b16 %v498, %v497
      %v504 = vsel %vm414, %v490, 0
      %506 = vmatpush.bf16.msra.mxu0 0
      %507 = vmatpush.bf16.msra.mxu0 0
      %508 = vmatpush.bf16.msra.mxu0 0
      %509 = vmatpush.bf16.msra.mxu0 0
      %510 = vmatpush.bf16.msra.mxu0 0
      %511 = vmatpush.bf16.msra.mxu0 0
      %512 = vmatpush.bf16.msra.mxu0 %v500
      %513 = vmatpush.bf16.msra.mxu0 %v499
      %514 = vmatmul.bf16.gmra.mxu0 %v504
      %v515 = vpop.f32.mrf.mxu0
      %v516 = vadd.f32 0.0, %v515
      %v517 = vpop.f32.mrf.mxu0
      %518 = vdwg.mxu0
      %v519 = vadd.f32 %v469, %v516
      %v520 = vld [vmem:[%s2] sm:$0x1]
      %v522 = vperm.slane %v520, 0
      %v524 = vadd.f32 %v519, %v522
      %v525 = vmax.f32 %v524, 0.0
      %v526 = vsel %vm414, %v525, 0.0
      %527 = vadd.xlane.f32.xlu0 %v526
      %v528 = vpop.xlane.xlu0 %527
      %v529 = vrcp.pop 32.0
      %v530 = vmul.f32 32.0, %v529
      %v531 = vsub.f32 1.0, %v530
      %v532 = vmul.f32 %v529, %v531
      %v533 = vadd.f32 %v529, %v532
      %vm534 = vweird.f32 %v529
      %v535 = vsel %vm534, %v529, %v533
      %v536 = vmul.f32 %v528, %v535
      %v537 = vsub.f32 %v525, %v536
      %v538 = vmul.f32 %v537, %v537
      %v539 = vsel %vm414, %v538, 0.0
      %540 = vadd.xlane.f32.xlu0 %v539
      %v541 = vpop.xlane.xlu0 %540
      %v542 = vmul.f32 %v541, %v535
      %v543 = vadd.f32 %v542, 1e-05
      %v544 = vrsqrt.pop %v543
      %v545 = vmul.f32 %v544, %v543
      %v546 = vmul.f32 %v545, %v544
      %v547 = vmul.f32 0.5, %v546
      %v548 = vsub.f32 1.5, %v547
      %v549 = vmul.f32 %v544, %v548
      %vm550 = vweird.f32 %v543
      %vm551 = vweird.f32 %v544
      %vm552 = vmor %vm550, %vm551
      %v553 = vsel %vm552, %v544, %v549
      %v554 = vmul.f32 %v537, %v553
      %v555 = vld [vmem:[%s3] sm:$0x1]
      %v557 = vperm.slane %v555, 0
      %v559 = vmul.f32 %v554, %v557
      %v560 = vld [vmem:[%s4] sm:$0x1]
      %v562 = vperm.slane %v560, 0
      %v564 = vadd.f32 %v559, %v562
      %565 = vst.msk [vmem:[#allocation3] sm:$0xf] %vm385, 0
      %566 = vst.msk [vmem:[#allocation3 + $0x8] sm:$0xf] %vm385, 0
      %v567 = vpack.c.bf16 %v564, %v564
      %568 = vst.msk [vmem:[#allocation3 + $0x4] sm:$0xf] %vm385, %v567
      %v569 = vld [vmem:[#allocation3] sm:$0x8]
      %v570 = vld [vmem:[#allocation3 + $0x4] sm:$0xf]
      %v571 = vld [vmem:[%s5] sm:$0xf]
      %v572 = vld [vmem:[%s5 + $0x4] sm:$0xf]
      %v573 = vld [vmem:[%s5 + $0x8] sm:$0xf]
      %v574 = vld [vmem:[%s5 + $0xc] sm:$0xf]
      %s575 = scalar_lea.vmem %s5, 16
      %v576 = vld [vmem:[%s575] sm:$0xf]
      %v577 = vld [vmem:[%s575 + $0x4] sm:$0xf]
      %v578 = vld [vmem:[%s575 + $0x8] sm:$0xf]
      %v579 = vld [vmem:[%s575 + $0xc] sm:$0xf]
      %v584 = vunpack.c.l.b16 %v576
      %v585 = vunpack.c.l.b16 %v577
      %v586 = vunpack.c.l.b16 %v578
      %v587 = vunpack.c.l.b16 %v579
      %v588 = vpack.c.b16 %v585, %v584
      %v589 = vpack.c.b16 %v587, %v586
      %v593 = vsel %vm414, %v570, 0
      %595 = vmatpush.bf16.msra.mxu0 0
      %596 = vmatpush.bf16.msra.mxu0 0
      %597 = vmatpush.bf16.msra.mxu0 0
      %598 = vmatpush.bf16.msra.mxu0 0
      %599 = vmatpush.bf16.msra.mxu0 0
      %600 = vmatpush.bf16.msra.mxu0 0
      %601 = vmatpush.bf16.msra.mxu0 %v589
      %602 = vmatpush.bf16.msra.mxu0 %v588
      %603 = vmatmul.bf16.gmra.mxu0 %v593
      %v604 = vpop.f32.mrf.mxu0
      %v605 = vadd.f32 0.0, %v604
      %v606 = vpop.f32.mrf.mxu0
      %607 = vdwg.mxu0
      %v610 = vunpack.c.l.b16 %v569
      %v611 = vunpack.c.l.b16 %v570
      %v612 = vpack.c.b16 %v611, %v610
      %v614 = vshrl.u32 %v612, 16
      %v616 = vrot.slane %v614, 3
      %v617 = vshll.u32 %v612, 16
      %v619 = vrot.slane %v617, 4
      %v620 = vor.u32 %v616, %v619
      %v625 = vunpack.c.l.b16 %v571
      %v626 = vunpack.c.l.b16 %v572
      %v627 = vunpack.c.l.b16 %v573
      %v628 = vunpack.c.l.b16 %v574
      %v629 = vpack.c.b16 %v626, %v625
      %v630 = vpack.c.b16 %v628, %v627
      %v634 = vsel %vm414, %v620, 0
      %636 = vmatpush.bf16.msra.mxu0 0
      %637 = vmatpush.bf16.msra.mxu0 0
      %638 = vmatpush.bf16.msra.mxu0 0
      %639 = vmatpush.bf16.msra.mxu0 0
      %640 = vmatpush.bf16.msra.mxu0 0
      %641 = vmatpush.bf16.msra.mxu0 0
      %642 = vmatpush.bf16.msra.mxu0 %v630
      %643 = vmatpush.bf16.msra.mxu0 %v629
      %644 = vmatmul.bf16.gmra.mxu0 %v634
      %v645 = vpop.f32.mrf.mxu0
      %v646 = vadd.f32 %v605, %v645
      %v647 = vpop.f32.mrf.mxu0
      %648 = vdwg.mxu0
      %v649 = vld [vmem:[#allocation3 + $0x4] sm:$0xf]
      %v650 = vld [vmem:[#allocation3 + $0x8] sm:$0x1]
      %s651 = scalar_lea.vmem %s5, 32
      %v652 = vld [vmem:[%s651] sm:$0xf]
      %v653 = vld [vmem:[%s651 + $0x4] sm:$0xf]
      %v654 = vld [vmem:[%s651 + $0x8] sm:$0xf]
      %v655 = vld [vmem:[%s651 + $0xc] sm:$0xf]
      %v658 = vunpack.c.l.b16 %v649
      %v659 = vunpack.c.l.b16 %v650
      %v660 = vpack.c.b16 %v659, %v658
      %v662 = vshrl.u32 %v660, 16
      %v664 = vshll.u32 %v660, 16
      %v666 = vrot.slane %v664, 1
      %v667 = vor.u32 %v662, %v666
      %v672 = vunpack.c.l.b16 %v652
      %v673 = vunpack.c.l.b16 %v653
      %v674 = vunpack.c.l.b16 %v654
      %v675 = vunpack.c.l.b16 %v655
      %v676 = vpack.c.b16 %v673, %v672
      %v677 = vpack.c.b16 %v675, %v674
      %v681 = vsel %vm414, %v667, 0
      %683 = vmatpush.bf16.msra.mxu0 0
      %684 = vmatpush.bf16.msra.mxu0 0
      %685 = vmatpush.bf16.msra.mxu0 0
      %686 = vmatpush.bf16.msra.mxu0 0
      %687 = vmatpush.bf16.msra.mxu0 0
      %688 = vmatpush.bf16.msra.mxu0 0
      %689 = vmatpush.bf16.msra.mxu0 %v677
      %690 = vmatpush.bf16.msra.mxu0 %v676
      %691 = vmatmul.bf16.gmra.mxu0 %v681
      %v692 = vpop.f32.mrf.mxu0
      %v693 = vadd.f32 0.0, %v692
      %v694 = vpop.f32.mrf.mxu0
      %695 = vdwg.mxu0
      %v696 = vadd.f32 %v646, %v693
      %v697 = vld [vmem:[%s6] sm:$0x1]
      %v699 = vperm.slane %v697, 0
      %v701 = vadd.f32 %v696, %v699
      %v702 = vmax.f32 %v701, 0.0
      %v703 = vsel %vm414, %v702, 0.0
      %704 = vadd.xlane.f32.xlu0 %v703
      %v705 = vpop.xlane.xlu0 %704
      %v706 = vmul.f32 %v705, %v535
      %v707 = vsub.f32 %v702, %v706
      %v708 = vmul.f32 %v707, %v707
      %v709 = vsel %vm414, %v708, 0.0
      %710 = vadd.xlane.f32.xlu0 %v709
      %v711 = vpop.xlane.xlu0 %710
      %v712 = vmul.f32 %v711, %v535
      %v713 = vadd.f32 %v712, 1e-05
      %v714 = vrsqrt.pop %v713
      %v715 = vmul.f32 %v714, %v713
      %v716 = vmul.f32 %v715, %v714
      %v717 = vmul.f32 0.5, %v716
      %v718 = vsub.f32 1.5, %v717
      %v719 = vmul.f32 %v714, %v718
      %vm720 = vweird.f32 %v713
      %vm721 = vweird.f32 %v714
      %vm722 = vmor %vm720, %vm721
      %v723 = vsel %vm722, %v714, %v719
      %v724 = vmul.f32 %v707, %v723
      %v725 = vld [vmem:[%s7] sm:$0x1]
      %v727 = vperm.slane %v725, 0
      %v729 = vmul.f32 %v724, %v727
      %v730 = vld [vmem:[%s8] sm:$0x1]
      %v732 = vperm.slane %v730, 0
      %v734 = vadd.f32 %v729, %v732
      %v735 = vld [vmem:[%s9] sm:$0x1]
      %v737 = vperm.slane %v735, 0
      %v739 = vmul.f32 %v734, %v737
      %v740 = vsel %vm414, %v739, 0.0
      %741 = vadd.xlane.f32.xlu0 %v740
      %v742 = vpop.xlane.xlu0 %741
      %v743 = vld [vmem:[#allocation4] sm:$0x1]
      %v745 = vperm.slane %v743, 0
      %v747 = vadd.f32 %v742, %v745
      %vm748 = vcmask 7168
      %749 = vst.msk [vmem:[%s383] sm:$0xff] %vm748, %v747
      %p750 = scmp.lt.s32.totalorder %s24, 1
      %s751 = scalar_select %p750, %s24, 1
      %s752 = smul.addr %s751, 8
      %s753 = scalar_lea.vmem %s11, %s752
      // Predicated region
      $region65: #{_lambda_.22} parent=63 // pred_check
        %p754 = pneg %p278
      $region66: #{_lambda_.22} parent=63 // pred_check_branch
        %756 = sbr.rel (%p754) target = $region68
      $region67: #{_lambda_.22} parent=63 // pred_region
        _
      $region68: #{_lambda_.22} parent=63 // pred_fallthru
        _
    $region64: #{_lambda_.22} parent=5 // pred_fallthru
      _
    %p757 = scmp.le.s32.totalorder 2, %s19
    // Predicated region
    $region69: #{_lambda_.22} parent=5 // pred_check
      %p758 = pneg %p757
    $region70: #{_lambda_.22} parent=5 // pred_check_branch
      %760 = sbr.rel (%p758) target = $region72
    $region71: #{_lambda_.22} parent=5 // pred_region
      %s761 = ssub.s32 %s19, 2
      // Predicated region
      $region73: #{_lambda_.22} parent=71 // pred_check
        %p762 = pneg %p284
      $region74: #{_lambda_.22} parent=71 // pred_check_branch
        %764 = sbr.rel (%p762) target = $region76
      $region75: #{_lambda_.22} parent=71 // pred_region
        %p765 = scmp.lt.s32.totalorder %s25, 1
        %s766 = scalar_select %p765, %s25, 1
        %s767 = smul.addr %s766, 8
        %s768 = scalar_lea.vmem %s11, %s767
      $region76: #{_lambda_.22} parent=71 // pred_fallthru
        _
    $region72: #{_lambda_.22} parent=5 // pred_fallthru
      _
  $region6: #{_lambda_.22} parent=0 // loop_footer
    %s23 = sadd.s32 1, %s19
  $region7: #{_lambda_.22} parent=0 // loop_footer_branch
    %18 = sbr.rel target = $region3
  $region8: #{_lambda_.22} parent=0 // loop_exit
    _

// kernel: ne.6
$region0: #{ne.6}
  #allocation0 [shape = 's32[1]{0}', space=sflag, size = 0x4, scoped, tag = 'scoped memory for ne.6']
  %s0 = inlined_call_operand.vmem [shape: f32[2,32], index: 0, kind: input, shape index: {}, may-alias: {0,1}]
  %s1 = inlined_call_operand.vmem [shape: f32[2,32], index: 1, kind: input, shape index: {}, may-alias: {0,1}]
  %s2 = inlined_call_operand.vmem [shape: pred[2,32], index: 2, kind: output, shape index: {}]
  %v3 = vld [vmem:[%s0] sm:$0x3]
  %v4 = vld [vmem:[%s1] sm:$0x3]
  %5 = xla_tuple %v3, %v4
  %6 = xla_tuple %5
  %vm7 = vcmp.ne.f32.partialorder %v3, %v4
  %v8 = vsel %vm7, 1, 0
  %9 = xla_tuple %v8
  %v10 = vpack.c.b16 0, %v8
  %v11 = vpack.c.b8 0, %v10
  %s13 = ssub.s32 2, 1
  %14 = vst [vmem:[%s2] sm:%s13] %v11

// kernel: custom-call.2
$region0: #{custom-call.2}
  %s0 = inlined_call_operand.vmem [shape: u32[2,32], index: 0, kind: output, shape index: {}]

// kernel: squeeze.16
$region0: #{squeeze.16}
  %s0 = inlined_call_operand.vmem [shape: f32[64], index: 0, kind: input, shape index: {}]
  %s1 = inlined_call_operand.vmem [shape: f32[2,32], index: 1, kind: output, shape index: {}]
  $region1: #{squeeze.16} parent=0
    #allocation0 [shape = 'u8[4096]{0}', space=vmem, size = 0x1000, scoped, tag = 'scoped mem for output reshape']
    #allocation1 [shape = 'u8[4096]{0}', space=vmem, size = 0x1000, scoped, tag = 'scoped mem for input reshape']
    %s3 = ssub.s32 2, 1
    %v4 = vld [vmem:[%s0] sm:%s3]
    %5 = vst [vmem:[#allocation1] sm:%s3] %v4
    %v6 = vld [vmem:[#allocation1] sm:$0x1]
    %vm7 = vcmask 261120
    %8 = vst.msk [vmem:[#allocation0] sm:$0x1] %vm7, %v6
    %v9 = vld [vmem:[#allocation1] sm:$0x1]
    %10 = vrot.lane.b32.xlu0 %v9, 96
    %v11 = vpop.permute.xlu0 %10
    %vm12 = vcmask 261120
    %s13 = scalar_lea.vmem [#allocation0], 1
    %14 = vst.msk [vmem:[%s13] sm:$0x1] %vm12, %v11
    %s16 = ssub.s32 4, 1
    %v17 = vld [vmem:[#allocation0] sm:%s16]
    %s19 = ssub.s32 4, 1
    %20 = vst [vmem:[%s1] sm:%s19] %v17

// kernel: _lambda_.25
$region0: #{_lambda_.25}
  #allocation0 [shape = 'u32[]', space=smem, size = 0x4, offset = 0x4, fixed_abs, tag = 'smem constant byte address 0x4 - core index']
  #allocation1 [shape = 'u32[72,128]{1,0:T(1,128)}', space=vmem, size = 0x9000, scoped, tag = 'internal scratch']
  %s0 = inlined_call_operand.vmem [shape: f32[64,32], index: 0, kind: input, shape index: {}]
  %s1 = inlined_call_operand.vmem [shape: bf16[32,96], index: 1, kind: input, shape index: {}]
  %s2 = inlined_call_operand.vmem [shape: f32[1,96], index: 2, kind: input, shape index: {}]
  %s3 = inlined_call_operand.vmem [shape: bf16[64,32], index: 3, kind: output, shape index: {0}]
  %s4 = inlined_call_operand.vmem [shape: bf16[64,32], index: 4, kind: output, shape index: {1}]
  %s5 = inlined_call_operand.vmem [shape: bf16[64,32], index: 5, kind: output, shape index: {2}]
  %6 = xla_tuple %s3, %s4, %s5
  %s7 = sld [smem:[#allocation0]]
  $region38: #{_lambda_.25} parent=0
    _
  %s9 = ssub.s32 1, %s7
  %s10 = scalar_select 0, %s9, %s7
  // Predicated region
  $region2: #{_lambda_.25} parent=0 // pred_check
    _
  $region3: #{_lambda_.25} parent=0 // pred_check_branch
    %12 = sbr.rel (0) target = $region5
  $region4: #{_lambda_.25} parent=0 // pred_region
    _
  $region5: #{_lambda_.25} parent=0 // pred_fallthru
    _
  // Predicated region
  $region6: #{_lambda_.25} parent=0 // pred_check
    _
  $region7: #{_lambda_.25} parent=0 // pred_check_branch
    %14 = sbr.rel (0) target = $region9
  $region8: #{_lambda_.25} parent=0 // pred_region
    _
  $region9: #{_lambda_.25} parent=0 // pred_fallthru
    _
  // Predicated region
  $region10: #{_lambda_.25} parent=0 // pred_check
    _
  $region11: #{_lambda_.25} parent=0 // pred_check_branch
    %16 = sbr.rel (0) target = $region13
  $region12: #{_lambda_.25} parent=0 // pred_region
    _
  $region13: #{_lambda_.25} parent=0 // pred_fallthru
    _
  %v18 = vld [vmem:[%s0] sm:$0xff]
  %v19 = vld [vmem:[%s0 + $0x8] sm:$0xff]
  %v20 = vld [vmem:[%s0 + $0x10] sm:$0xff]
  %v21 = vld [vmem:[%s0 + $0x18] sm:$0xff]
  %v22 = vld [vmem:[%s0 + $0x20] sm:$0xff]
  %v23 = vld [vmem:[%s0 + $0x28] sm:$0xff]
  %v24 = vld [vmem:[%s0 + $0x30] sm:$0xff]
  %v25 = vld [vmem:[%s0 + $0x38] sm:$0xff]
  %v26 = vpack.c.bf16 %v19, %v18
  %v27 = vpack.c.bf16 %v21, %v20
  %v28 = vpack.c.bf16 %v23, %v22
  %v29 = vpack.c.bf16 %v25, %v24
  %v30 = vld [vmem:[%s1] sm:$0xf]
  %v31 = vld [vmem:[%s1 + $0x4] sm:$0xf]
  %v32 = vld [vmem:[%s1 + $0x8] sm:$0xf]
  %v33 = vld [vmem:[%s1 + $0xc] sm:$0xf]
  %v34 = vld [vmem:[%s2] sm:$0x1]
  %v36 = vperm.slane %v34, 0
  %v42 = vunpack.c.l.b16 %v30
  %v43 = vunpack.c.l.b16 %v31
  %v44 = vunpack.c.l.b16 %v32
  %v45 = vunpack.c.l.b16 %v33
  %v46 = vpack.c.b16 %v43, %v42
  %v47 = vpack.c.b16 %v45, %v44
  %vm50 = vcmask 261120
  %v52 = vsel %vm50, %v26, 0
  %v55 = vsel %vm50, %v27, 0
  %v58 = vsel %vm50, %v28, 0
  %v61 = vsel %vm50, %v29, 0
  %63 = vmatpush.bf16.msra.mxu0 0
  %64 = vmatpush.bf16.msra.mxu0 0
  %65 = vmatpush.bf16.msra.mxu0 0
  %66 = vmatpush.bf16.msra.mxu0 0
  %67 = vmatpush.bf16.msra.mxu0 0
  %68 = vmatpush.bf16.msra.mxu0 0
  %69 = vmatpush.bf16.msra.mxu0 %v47
  %70 = vmatpush.bf16.msra.mxu0 %v46
  %71 = vmatmul.bf16.gmra.mxu0 %v52
  %v72 = vpop.f32.mrf.mxu0
  %v73 = vadd.f32 %v36, %v72
  %v74 = vpop.f32.mrf.mxu0
  %v75 = vadd.f32 %v36, %v74
  %76 = vmatmul.bf16.gmra.mxu0 %v55
  %v77 = vpop.f32.mrf.mxu0
  %v78 = vadd.f32 %v36, %v77
  %v79 = vpop.f32.mrf.mxu0
  %v80 = vadd.f32 %v36, %v79
  %81 = vmatmul.bf16.gmra.mxu0 %v58
  %v82 = vpop.f32.mrf.mxu0
  %v83 = vadd.f32 %v36, %v82
  %v84 = vpop.f32.mrf.mxu0
  %v85 = vadd.f32 %v36, %v84
  %86 = vmatmul.bf16.gmra.mxu0 %v61
  %v87 = vpop.f32.mrf.mxu0
  %v88 = vadd.f32 %v36, %v87
  %v89 = vpop.f32.mrf.mxu0
  %v90 = vadd.f32 %v36, %v89
  %91 = vdwg.mxu0
  %v92 = vpack.c.bf16 %v73, %v73
  %v93 = vpack.c.bf16 %v75, %v75
  %v94 = vpack.c.bf16 %v78, %v78
  %v95 = vpack.c.bf16 %v80, %v80
  %v96 = vpack.c.bf16 %v83, %v83
  %v97 = vpack.c.bf16 %v85, %v85
  %v98 = vpack.c.bf16 %v88, %v88
  %v99 = vpack.c.bf16 %v90, %v90
  %vm100 = vcmask 257024
  %101 = vst.msk [vmem:[%s3] sm:$0xf] %vm100, %v92
  %102 = vst.msk [vmem:[%s3 + $0x4] sm:$0xf] %vm100, %v93
  %103 = vst.msk [vmem:[%s3 + $0x8] sm:$0xf] %vm100, %v94
  %104 = vst.msk [vmem:[%s3 + $0xc] sm:$0xf] %vm100, %v95
  %105 = vst.msk [vmem:[%s3 + $0x10] sm:$0xf] %vm100, %v96
  %106 = vst.msk [vmem:[%s3 + $0x14] sm:$0xf] %vm100, %v97
  %107 = vst.msk [vmem:[%s3 + $0x18] sm:$0xf] %vm100, %v98
  %108 = vst.msk [vmem:[%s3 + $0x1c] sm:$0xf] %vm100, %v99
  %117 = vrot.lane.b32.xlu0 %v92, 96
  %v118 = vpop.permute.xlu0 %117
  %119 = vrot.lane.b32.xlu0 %v93, 96
  %v120 = vpop.permute.xlu0 %119
  %121 = vrot.lane.b32.xlu0 %v94, 96
  %v122 = vpop.permute.xlu0 %121
  %123 = vrot.lane.b32.xlu0 %v95, 96
  %v124 = vpop.permute.xlu0 %123
  %125 = vrot.lane.b32.xlu0 %v96, 96
  %v126 = vpop.permute.xlu0 %125
  %127 = vrot.lane.b32.xlu0 %v97, 96
  %v128 = vpop.permute.xlu0 %127
  %129 = vrot.lane.b32.xlu0 %v98, 96
  %v130 = vpop.permute.xlu0 %129
  %131 = vrot.lane.b32.xlu0 %v99, 96
  %v132 = vpop.permute.xlu0 %131
  %141 = vst.msk [vmem:[%s4] sm:$0xf] %vm100, %v118
  %142 = vst.msk [vmem:[%s4 + $0x4] sm:$0xf] %vm100, %v120
  %143 = vst.msk [vmem:[%s4 + $0x8] sm:$0xf] %vm100, %v122
  %144 = vst.msk [vmem:[%s4 + $0xc] sm:$0xf] %vm100, %v124
  %145 = vst.msk [vmem:[%s4 + $0x10] sm:$0xf] %vm100, %v126
  %146 = vst.msk [vmem:[%s4 + $0x14] sm:$0xf] %vm100, %v128
  %147 = vst.msk [vmem:[%s4 + $0x18] sm:$0xf] %vm100, %v130
  %148 = vst.msk [vmem:[%s4 + $0x1c] sm:$0xf] %vm100, %v132
  %149 = vrot.lane.b32.xlu0 %v92, 64
  %v150 = vpop.permute.xlu0 %149
  %151 = vrot.lane.b32.xlu0 %v93, 64
  %v152 = vpop.permute.xlu0 %151
  %153 = vrot.lane.b32.xlu0 %v94, 64
  %v154 = vpop.permute.xlu0 %153
  %155 = vrot.lane.b32.xlu0 %v95, 64
  %v156 = vpop.permute.xlu0 %155
  %157 = vrot.lane.b32.xlu0 %v96, 64
  %v158 = vpop.permute.xlu0 %157
  %159 = vrot.lane.b32.xlu0 %v97, 64
  %v160 = vpop.permute.xlu0 %159
  %161 = vrot.lane.b32.xlu0 %v98, 64
  %v162 = vpop.permute.xlu0 %161
  %163 = vrot.lane.b32.xlu0 %v99, 64
  %v164 = vpop.permute.xlu0 %163
  %173 = vst.msk [vmem:[%s5] sm:$0xf] %vm100, %v150
  %174 = vst.msk [vmem:[%s5 + $0x4] sm:$0xf] %vm100, %v152
  %175 = vst.msk [vmem:[%s5 + $0x8] sm:$0xf] %vm100, %v154
  %176 = vst.msk [vmem:[%s5 + $0xc] sm:$0xf] %vm100, %v156
  %177 = vst.msk [vmem:[%s5 + $0x10] sm:$0xf] %vm100, %v158
  %178 = vst.msk [vmem:[%s5 + $0x14] sm:$0xf] %vm100, %v160
  %179 = vst.msk [vmem:[%s5 + $0x18] sm:$0xf] %vm100, %v162
  %180 = vst.msk [vmem:[%s5 + $0x1c] sm:$0xf] %vm100, %v164
  // Predicated region
  $region14: #{_lambda_.25} parent=0 // pred_check
    _
  $region15: #{_lambda_.25} parent=0 // pred_check_branch
    %182 = sbr.rel (0) target = $region17
  $region16: #{_lambda_.25} parent=0 // pred_region
    _
  $region17: #{_lambda_.25} parent=0 // pred_fallthru
    _
  // Predicated region
  $region18: #{_lambda_.25} parent=0 // pred_check
    _
  $region19: #{_lambda_.25} parent=0 // pred_check_branch
    %184 = sbr.rel (0) target = $region21
  $region20: #{_lambda_.25} parent=0 // pred_region
    _
  $region21: #{_lambda_.25} parent=0 // pred_fallthru
    _
  // Predicated region
  $region22: #{_lambda_.25} parent=0 // pred_check
    _
  $region23: #{_lambda_.25} parent=0 // pred_check_branch
    %186 = sbr.rel (0) target = $region25
  $region24: #{_lambda_.25} parent=0 // pred_region
    _
  $region25: #{_lambda_.25} parent=0 // pred_fallthru
    _
  // Predicated region
  $region26: #{_lambda_.25} parent=0 // pred_check
    _
  $region27: #{_lambda_.25} parent=0 // pred_check_branch
    %188 = sbr.rel (0) target = $region29
  $region28: #{_lambda_.25} parent=0 // pred_region
    _
  $region29: #{_lambda_.25} parent=0 // pred_fallthru
    _
  // Predicated region
  $region30: #{_lambda_.25} parent=0 // pred_check
    _
  $region31: #{_lambda_.25} parent=0 // pred_check_branch
    %190 = sbr.rel (0) target = $region33
  $region32: #{_lambda_.25} parent=0 // pred_region
    _
  $region33: #{_lambda_.25} parent=0 // pred_fallthru
    _
  // Predicated region
  $region34: #{_lambda_.25} parent=0 // pred_check
    _
  $region35: #{_lambda_.25} parent=0 // pred_check_branch
    %192 = sbr.rel (0) target = $region37
  $region36: #{_lambda_.25} parent=0 // pred_region
    _
  $region37: #{_lambda_.25} parent=0 // pred_fallthru
    _

// kernel: _lambda_.23
$region0: #{_lambda_.23}
  #allocation0 [shape = 'u32[]', space=smem, size = 0x4, offset = 0x4, fixed_abs, tag = 'smem constant byte address 0x4 - core index']
  #allocation1 [shape = 'u32[72,128]{1,0:T(1,128)}', space=vmem, size = 0x9000, scoped, tag = 'internal scratch']
  #allocation2 [shape = 'bf16[48,32]{1,0:T(8,128)(2,1)}', space=vmem, size = 0x3000, scoped, tag = 'scratch operand']
  #allocation3 [shape = 'bf16[48,32]{1,0:T(8,128)(2,1)}', space=vmem, size = 0x3000, scoped, tag = 'scratch operand']
  #allocation4 [shape = 'f32[1,1]{1,0:T(1,128)S(1)}', space=vmem, size = 0x200, scoped, tag = 'scoped memory for _lambda_.23']
  %s0 = inlined_call_operand.vmem [shape: f32[2,32,32], index: 0, kind: input, shape index: {}]
  %s1 = inlined_call_operand.vmem [shape: bf16[3,32,32], index: 1, kind: input, shape index: {}]
  %s2 = inlined_call_operand.vmem [shape: f32[1,32], index: 2, kind: input, shape index: {}]
  %s3 = inlined_call_operand.vmem [shape: f32[1,32], index: 3, kind: input, shape index: {}]
  %s4 = inlined_call_operand.vmem [shape: f32[1,32], index: 4, kind: input, shape index: {}]
  %s5 = inlined_call_operand.vmem [shape: bf16[3,32,32], index: 5, kind: input, shape index: {}]
  %s6 = inlined_call_operand.vmem [shape: f32[1,32], index: 6, kind: input, shape index: {}]
  %s7 = inlined_call_operand.vmem [shape: f32[1,32], index: 7, kind: input, shape index: {}]
  %s8 = inlined_call_operand.vmem [shape: f32[1,32], index: 8, kind: input, shape index: {}]
  %s9 = inlined_call_operand.vmem [shape: f32[1,32], index: 9, kind: input, shape index: {}]
  %s10 = inlined_call_operand.<no memory space> [shape: f32[1,1], index: 10, kind: input, shape index: {}]
  %s11 = inlined_call_operand.vmem [shape: f32[2,32,1], index: 11, kind: output, shape index: {}]
  %s12 = sld [smem:[#allocation0]]
  $region77: #{_lambda_.23} parent=0
    _
  %s14 = ssub.s32 1, %s12
  %s15 = scalar_select 0, %s14, %s12
  %v16 = vstv %s10
  %17 = vst [vmem:[#allocation4] sm:$0x1] %v16
  loop: start=0, step=1, limit=4
  $region2: #{_lambda_.23} parent=0 // loop_pre_header
    _
  $region3: #{_lambda_.23} parent=0 // loop_header
    %s19 = sphi 0, %s23
    %p20 = scmp.ge.s32.totalorder %s19, 4
    %s29 = sphi 0, %s31
    %s32 = sphi 0, %s29
    %s33 = sphi 0, %s32
    %s49 = sphi 0, %s33
    %s53 = sphi 0, %s53
    %s55 = sphi 0, %s53
    %s56 = sphi 0, %s55
    %s70 = sphi 0, %s56
    %s74 = sphi 0, %s74
    %s76 = sphi 0, %s74
    %s77 = sphi 0, %s76
    %s91 = sphi 0, %s77
    %s95 = sphi 0, %s95
    %s97 = sphi 0, %s95
    %s98 = sphi 0, %s97
    %s112 = sphi 0, %s98
    %s116 = sphi 0, %s116
    %s118 = sphi 0, %s116
    %s119 = sphi 0, %s118
    %s133 = sphi 0, %s119
    %s137 = sphi 0, %s137
    %s139 = sphi 0, %s137
    %s140 = sphi 0, %s139
    %s154 = sphi 0, %s140
    %s158 = sphi 0, %s158
    %s160 = sphi 0, %s158
    %s161 = sphi 0, %s160
    %s175 = sphi 0, %s161
    %s179 = sphi 0, %s179
    %s181 = sphi 0, %s179
    %s182 = sphi 0, %s181
    %s196 = sphi 0, %s182
    %s200 = sphi 0, %s200
    %s202 = sphi 0, %s200
    %s203 = sphi 0, %s202
    %s217 = sphi 0, %s203
    %s221 = sphi 0, %s221
    %s223 = sphi 0, %s221
    %s224 = sphi 0, %s223
    %s238 = sphi 0, %s224
    %s242 = sphi 0, %s242
    %s244 = sphi 0, %s242
    %s245 = sphi 0, %s244
    %s259 = sphi 0, %s245
    %s265 = sphi 0, %s267
    %s268 = sphi 0, %s265
    %s269 = sphi 0, %s268
    %s285 = sphi 0, %s269
  $region4: #{_lambda_.23} parent=0 // loop_header_branch
    %22 = sbr.rel (%p20) target = $region8
  $region5: #{_lambda_.23} parent=0 // loop_body
    %s24 = ssub.s32 %s19, 1
    %s25 = ssub.s32 %s19, 2
    %s26 = sadd.s32 %s19, 1
    %s27 = ssub.s32 %s19, %s26
    %p28 = scmp.eq.s32.totalorder %s27, 0
    %s30 = sadd.s32 %s29, 1
    %s31 = scalar_select %p28, %s29, %s30
    %p34 = pneg %p28
    %p35 = scmp.eq.s32.totalorder %s19, 1
    %p36 = por %p34, %p35
    %p37 = scmp.ne.s32.totalorder %s29, %s32
    %p38 = scmp.eq.s32.totalorder %s19, 0
    %p39 = por %p37, %p38
    %p40 = scmp.ne.s32.totalorder %s29, %s32
    %p41 = scmp.eq.s32.totalorder %s24, 1
    %p42 = por %p40, %p41
    %p43 = scmp.ne.s32.totalorder %s32, %s33
    %p44 = scmp.eq.s32.totalorder %s24, 0
    %p45 = por %p43, %p44
    %p46 = scmp.ne.s32.totalorder %s32, %s33
    %p47 = scmp.eq.s32.totalorder %s25, 1
    %p48 = por %p46, %p47
    %p50 = scmp.ne.s32.totalorder %s33, %s49
    %p51 = scmp.eq.s32.totalorder %s25, 0
    %p52 = por %p50, %p51
    %s54 = sadd.s32 %s53, 1
    %p57 = scmp.eq.s32.totalorder %s19, 1
    %p58 = scmp.ne.s32.totalorder %s53, %s55
    %p59 = scmp.eq.s32.totalorder %s19, 0
    %p60 = por %p58, %p59
    %p61 = scmp.ne.s32.totalorder %s53, %s55
    %p62 = scmp.eq.s32.totalorder %s24, 1
    %p63 = por %p61, %p62
    %p64 = scmp.ne.s32.totalorder %s55, %s56
    %p65 = scmp.eq.s32.totalorder %s24, 0
    %p66 = por %p64, %p65
    %p67 = scmp.ne.s32.totalorder %s55, %s56
    %p68 = scmp.eq.s32.totalorder %s25, 1
    %p69 = por %p67, %p68
    %p71 = scmp.ne.s32.totalorder %s56, %s70
    %p72 = scmp.eq.s32.totalorder %s25, 0
    %p73 = por %p71, %p72
    %s75 = sadd.s32 %s74, 1
    %p78 = scmp.eq.s32.totalorder %s19, 1
    %p79 = scmp.ne.s32.totalorder %s74, %s76
    %p80 = scmp.eq.s32.totalorder %s19, 0
    %p81 = por %p79, %p80
    %p82 = scmp.ne.s32.totalorder %s74, %s76
    %p83 = scmp.eq.s32.totalorder %s24, 1
    %p84 = por %p82, %p83
    %p85 = scmp.ne.s32.totalorder %s76, %s77
    %p86 = scmp.eq.s32.totalorder %s24, 0
    %p87 = por %p85, %p86
    %p88 = scmp.ne.s32.totalorder %s76, %s77
    %p89 = scmp.eq.s32.totalorder %s25, 1
    %p90 = por %p88, %p89
    %p92 = scmp.ne.s32.totalorder %s77, %s91
    %p93 = scmp.eq.s32.totalorder %s25, 0
    %p94 = por %p92, %p93
    %s96 = sadd.s32 %s95, 1
    %p99 = scmp.eq.s32.totalorder %s19, 1
    %p100 = scmp.ne.s32.totalorder %s95, %s97
    %p101 = scmp.eq.s32.totalorder %s19, 0
    %p102 = por %p100, %p101
    %p103 = scmp.ne.s32.totalorder %s95, %s97
    %p104 = scmp.eq.s32.totalorder %s24, 1
    %p105 = por %p103, %p104
    %p106 = scmp.ne.s32.totalorder %s97, %s98
    %p107 = scmp.eq.s32.totalorder %s24, 0
    %p108 = por %p106, %p107
    %p109 = scmp.ne.s32.totalorder %s97, %s98
    %p110 = scmp.eq.s32.totalorder %s25, 1
    %p111 = por %p109, %p110
    %p113 = scmp.ne.s32.totalorder %s98, %s112
    %p114 = scmp.eq.s32.totalorder %s25, 0
    %p115 = por %p113, %p114
    %s117 = sadd.s32 %s116, 1
    %p120 = scmp.eq.s32.totalorder %s19, 1
    %p121 = scmp.ne.s32.totalorder %s116, %s118
    %p122 = scmp.eq.s32.totalorder %s19, 0
    %p123 = por %p121, %p122
    %p124 = scmp.ne.s32.totalorder %s116, %s118
    %p125 = scmp.eq.s32.totalorder %s24, 1
    %p126 = por %p124, %p125
    %p127 = scmp.ne.s32.totalorder %s118, %s119
    %p128 = scmp.eq.s32.totalorder %s24, 0
    %p129 = por %p127, %p128
    %p130 = scmp.ne.s32.totalorder %s118, %s119
    %p131 = scmp.eq.s32.totalorder %s25, 1
    %p132 = por %p130, %p131
    %p134 = scmp.ne.s32.totalorder %s119, %s133
    %p135 = scmp.eq.s32.totalorder %s25, 0
    %p136 = por %p134, %p135
    %s138 = sadd.s32 %s137, 1
    %p141 = scmp.eq.s32.totalorder %s19, 1
    %p142 = scmp.ne.s32.totalorder %s137, %s139
    %p143 = scmp.eq.s32.totalorder %s19, 0
    %p144 = por %p142, %p143
    %p145 = scmp.ne.s32.totalorder %s137, %s139
    %p146 = scmp.eq.s32.totalorder %s24, 1
    %p147 = por %p145, %p146
    %p148 = scmp.ne.s32.totalorder %s139, %s140
    %p149 = scmp.eq.s32.totalorder %s24, 0
    %p150 = por %p148, %p149
    %p151 = scmp.ne.s32.totalorder %s139, %s140
    %p152 = scmp.eq.s32.totalorder %s25, 1
    %p153 = por %p151, %p152
    %p155 = scmp.ne.s32.totalorder %s140, %s154
    %p156 = scmp.eq.s32.totalorder %s25, 0
    %p157 = por %p155, %p156
    %s159 = sadd.s32 %s158, 1
    %p162 = scmp.eq.s32.totalorder %s19, 1
    %p163 = scmp.ne.s32.totalorder %s158, %s160
    %p164 = scmp.eq.s32.totalorder %s19, 0
    %p165 = por %p163, %p164
    %p166 = scmp.ne.s32.totalorder %s158, %s160
    %p167 = scmp.eq.s32.totalorder %s24, 1
    %p168 = por %p166, %p167
    %p169 = scmp.ne.s32.totalorder %s160, %s161
    %p170 = scmp.eq.s32.totalorder %s24, 0
    %p171 = por %p169, %p170
    %p172 = scmp.ne.s32.totalorder %s160, %s161
    %p173 = scmp.eq.s32.totalorder %s25, 1
    %p174 = por %p172, %p173
    %p176 = scmp.ne.s32.totalorder %s161, %s175
    %p177 = scmp.eq.s32.totalorder %s25, 0
    %p178 = por %p176, %p177
    %s180 = sadd.s32 %s179, 1
    %p183 = scmp.eq.s32.totalorder %s19, 1
    %p184 = scmp.ne.s32.totalorder %s179, %s181
    %p185 = scmp.eq.s32.totalorder %s19, 0
    %p186 = por %p184, %p185
    %p187 = scmp.ne.s32.totalorder %s179, %s181
    %p188 = scmp.eq.s32.totalorder %s24, 1
    %p189 = por %p187, %p188
    %p190 = scmp.ne.s32.totalorder %s181, %s182
    %p191 = scmp.eq.s32.totalorder %s24, 0
    %p192 = por %p190, %p191
    %p193 = scmp.ne.s32.totalorder %s181, %s182
    %p194 = scmp.eq.s32.totalorder %s25, 1
    %p195 = por %p193, %p194
    %p197 = scmp.ne.s32.totalorder %s182, %s196
    %p198 = scmp.eq.s32.totalorder %s25, 0
    %p199 = por %p197, %p198
    %s201 = sadd.s32 %s200, 1
    %p204 = scmp.eq.s32.totalorder %s19, 1
    %p205 = scmp.ne.s32.totalorder %s200, %s202
    %p206 = scmp.eq.s32.totalorder %s19, 0
    %p207 = por %p205, %p206
    %p208 = scmp.ne.s32.totalorder %s200, %s202
    %p209 = scmp.eq.s32.totalorder %s24, 1
    %p210 = por %p208, %p209
    %p211 = scmp.ne.s32.totalorder %s202, %s203
    %p212 = scmp.eq.s32.totalorder %s24, 0
    %p213 = por %p211, %p212
    %p214 = scmp.ne.s32.totalorder %s202, %s203
    %p215 = scmp.eq.s32.totalorder %s25, 1
    %p216 = por %p214, %p215
    %p218 = scmp.ne.s32.totalorder %s203, %s217
    %p219 = scmp.eq.s32.totalorder %s25, 0
    %p220 = por %p218, %p219
    %s222 = sadd.s32 %s221, 1
    %p225 = scmp.eq.s32.totalorder %s19, 1
    %p226 = scmp.ne.s32.totalorder %s221, %s223
    %p227 = scmp.eq.s32.totalorder %s19, 0
    %p228 = por %p226, %p227
    %p229 = scmp.ne.s32.totalorder %s221, %s223
    %p230 = scmp.eq.s32.totalorder %s24, 1
    %p231 = por %p229, %p230
    %p232 = scmp.ne.s32.totalorder %s223, %s224
    %p233 = scmp.eq.s32.totalorder %s24, 0
    %p234 = por %p232, %p233
    %p235 = scmp.ne.s32.totalorder %s223, %s224
    %p236 = scmp.eq.s32.totalorder %s25, 1
    %p237 = por %p235, %p236
    %p239 = scmp.ne.s32.totalorder %s224, %s238
    %p240 = scmp.eq.s32.totalorder %s25, 0
    %p241 = por %p239, %p240
    %s243 = sadd.s32 %s242, 1
    %p246 = scmp.eq.s32.totalorder %s19, 1
    %p247 = scmp.ne.s32.totalorder %s242, %s244
    %p248 = scmp.eq.s32.totalorder %s19, 0
    %p249 = por %p247, %p248
    %p250 = scmp.ne.s32.totalorder %s242, %s244
    %p251 = scmp.eq.s32.totalorder %s24, 1
    %p252 = por %p250, %p251
    %p253 = scmp.ne.s32.totalorder %s244, %s245
    %p254 = scmp.eq.s32.totalorder %s24, 0
    %p255 = por %p253, %p254
    %p256 = scmp.ne.s32.totalorder %s244, %s245
    %p257 = scmp.eq.s32.totalorder %s25, 1
    %p258 = por %p256, %p257
    %p260 = scmp.ne.s32.totalorder %s245, %s259
    %p261 = scmp.eq.s32.totalorder %s25, 0
    %p262 = por %p260, %p261
    %s263 = ssub.s32 %s19, %s26
    %p264 = scmp.eq.s32.totalorder %s263, 0
    %s266 = sadd.s32 %s265, 1
    %s267 = scalar_select %p264, %s265, %s266
    %p270 = pneg %p264
    %p271 = scmp.eq.s32.totalorder %s19, 1
    %p272 = por %p270, %p271
    %p273 = scmp.ne.s32.totalorder %s265, %s268
    %p274 = scmp.eq.s32.totalorder %s19, 0
    %p275 = por %p273, %p274
    %p276 = scmp.ne.s32.totalorder %s265, %s268
    %p277 = scmp.eq.s32.totalorder %s24, 1
    %p278 = por %p276, %p277
    %p279 = scmp.ne.s32.totalorder %s268, %s269
    %p280 = scmp.eq.s32.totalorder %s24, 0
    %p281 = por %p279, %p280
    %p282 = scmp.ne.s32.totalorder %s268, %s269
    %p283 = scmp.eq.s32.totalorder %s25, 1
    %p284 = por %p282, %p283
    %p286 = scmp.ne.s32.totalorder %s269, %s285
    %p287 = scmp.eq.s32.totalorder %s25, 0
    %p288 = por %p286, %p287
    %p289 = scmp.le.s32.totalorder 1, %s19
    %p290 = scmp.lt.s32.totalorder %s19, 3
    %p291 = pnand %p289, %p290
    %p292 = pneg %p291
    // Predicated region
    $region9: #{_lambda_.23} parent=5 // pred_check
      _
    $region10: #{_lambda_.23} parent=5 // pred_check_branch
      %294 = sbr.rel (%p291) target = $region12
    $region11: #{_lambda_.23} parent=5 // pred_region
      %s295 = ssub.s32 %s19, 1
      // Predicated region
      $region13: #{_lambda_.23} parent=11 // pred_check
        %p296 = pneg %p66
      $region14: #{_lambda_.23} parent=11 // pred_check_branch
        %298 = sbr.rel (%p296) target = $region16
      $region15: #{_lambda_.23} parent=11 // pred_region
        _
      $region16: #{_lambda_.23} parent=11 // pred_fallthru
        _
      // Predicated region
      $region17: #{_lambda_.23} parent=11 // pred_check
        %p299 = pneg %p87
      $region18: #{_lambda_.23} parent=11 // pred_check_branch
        %301 = sbr.rel (%p299) target = $region20
      $region19: #{_lambda_.23} parent=11 // pred_region
        _
      $region20: #{_lambda_.23} parent=11 // pred_fallthru
        _
      // Predicated region
      $region21: #{_lambda_.23} parent=11 // pred_check
        %p302 = pneg %p108
      $region22: #{_lambda_.23} parent=11 // pred_check_branch
        %304 = sbr.rel (%p302) target = $region24
      $region23: #{_lambda_.23} parent=11 // pred_region
        _
      $region24: #{_lambda_.23} parent=11 // pred_fallthru
        _
      // Predicated region
      $region25: #{_lambda_.23} parent=11 // pred_check
        %p305 = pneg %p129
      $region26: #{_lambda_.23} parent=11 // pred_check_branch
        %307 = sbr.rel (%p305) target = $region28
      $region27: #{_lambda_.23} parent=11 // pred_region
        _
      $region28: #{_lambda_.23} parent=11 // pred_fallthru
        _
      // Predicated region
      $region29: #{_lambda_.23} parent=11 // pred_check
        %p308 = pneg %p150
      $region30: #{_lambda_.23} parent=11 // pred_check_branch
        %310 = sbr.rel (%p308) target = $region32
      $region31: #{_lambda_.23} parent=11 // pred_region
        _
      $region32: #{_lambda_.23} parent=11 // pred_fallthru
        _
      // Predicated region
      $region33: #{_lambda_.23} parent=11 // pred_check
        %p311 = pneg %p171
      $region34: #{_lambda_.23} parent=11 // pred_check_branch
        %313 = sbr.rel (%p311) target = $region36
      $region35: #{_lambda_.23} parent=11 // pred_region
        _
      $region36: #{_lambda_.23} parent=11 // pred_fallthru
        _
      // Predicated region
      $region37: #{_lambda_.23} parent=11 // pred_check
        %p314 = pneg %p192
      $region38: #{_lambda_.23} parent=11 // pred_check_branch
        %316 = sbr.rel (%p314) target = $region40
      $region39: #{_lambda_.23} parent=11 // pred_region
        _
      $region40: #{_lambda_.23} parent=11 // pred_fallthru
        _
      // Predicated region
      $region41: #{_lambda_.23} parent=11 // pred_check
        %p317 = pneg %p213
      $region42: #{_lambda_.23} parent=11 // pred_check_branch
        %319 = sbr.rel (%p317) target = $region44
      $region43: #{_lambda_.23} parent=11 // pred_region
        _
      $region44: #{_lambda_.23} parent=11 // pred_fallthru
        _
      // Predicated region
      $region45: #{_lambda_.23} parent=11 // pred_check
        %p320 = pneg %p234
      $region46: #{_lambda_.23} parent=11 // pred_check_branch
        %322 = sbr.rel (%p320) target = $region48
      $region47: #{_lambda_.23} parent=11 // pred_region
        _
      $region48: #{_lambda_.23} parent=11 // pred_fallthru
        _
      // Predicated region
      $region49: #{_lambda_.23} parent=11 // pred_check
        %p323 = pneg %p255
      $region50: #{_lambda_.23} parent=11 // pred_check_branch
        %325 = sbr.rel (%p323) target = $region52
      $region51: #{_lambda_.23} parent=11 // pred_region
        _
      $region52: #{_lambda_.23} parent=11 // pred_fallthru
        _
    $region12: #{_lambda_.23} parent=5 // pred_fallthru
      _
    %p326 = scmp.lt.s32.totalorder %s19, 2
    // Predicated region
    $region53: #{_lambda_.23} parent=5 // pred_check
      %p327 = pneg %p326
    $region54: #{_lambda_.23} parent=5 // pred_check_branch
      %329 = sbr.rel (%p327) target = $region56
    $region55: #{_lambda_.23} parent=5 // pred_region
      // Predicated region
      $region57: #{_lambda_.23} parent=55 // pred_check
        %p330 = pneg %p39
      $region58: #{_lambda_.23} parent=55 // pred_check_branch
        %332 = sbr.rel (%p330) target = $region60
      $region59: #{_lambda_.23} parent=55 // pred_region
        %p333 = scmp.lt.s32.totalorder %s19, 1
        %s334 = scalar_select %p333, %s19, 1
        %s335 = smul.addr %s334, 4
        %s336 = smul.addr %s335, 8
        %s337 = scalar_lea.vmem %s0, %s336
      $region60: #{_lambda_.23} parent=55 // pred_fallthru
        _
    $region56: #{_lambda_.23} parent=5 // pred_fallthru
      _
    %p338 = scmp.le.s32.totalorder 1, %s19
    %p339 = scmp.lt.s32.totalorder %s19, 3
    %p340 = pnand %p338, %p339
    %p341 = pneg %p340
    // Predicated region
    $region61: #{_lambda_.23} parent=5 // pred_check
      _
    $region62: #{_lambda_.23} parent=5 // pred_check_branch
      %343 = sbr.rel (%p340) target = $region64
    $region63: #{_lambda_.23} parent=5 // pred_region
      %s344 = ssub.s32 %s19, 1
      %p345 = scmp.lt.s32.totalorder %s24, 1
      %s346 = scalar_select %p345, %s24, 1
      %s347 = smul.addr %s346, 4
      %s348 = smul.addr %s347, 8
      %s349 = scalar_lea.vmem %s0, %s348
      %p350 = pneg %p45
      %p351 = pneg %p42
      %p352 = pneg %p66
      %p353 = pneg %p63
      %p354 = pneg %p87
      %p355 = pneg %p84
      %p356 = pneg %p108
      %p357 = pneg %p105
      %p358 = pneg %p129
      %p359 = pneg %p126
      %p360 = pneg %p150
      %p361 = pneg %p147
      %p362 = pneg %p171
      %p363 = pneg %p168
      %p364 = pneg %p192
      %p365 = pneg %p189
      %p366 = pneg %p213
      %p367 = pneg %p210
      %p368 = pneg %p234
      %p369 = pneg %p231
      %p370 = pneg %p255
      %p371 = pneg %p252
      %p372 = pneg %p281
      %p373 = pneg %p278
      %p374 = scmp.lt.s32.totalorder %s24, 1
      %s375 = scalar_select %p374, %s24, 1
      %s376 = smul.addr %s375, 4
      %s377 = smul.addr %s376, 8
      %s378 = scalar_lea.vmem %s11, %s377
      %p379 = scmp.lt.s32.totalorder %s24, 1
      %s380 = scalar_select %p379, %s24, 1
      %s381 = smul.addr %s380, 4
      %s382 = smul.addr %s381, 8
      %s383 = scalar_lea.vmem %s0, %s382
      %p384 = scmp.lt.s32.totalorder %s24, 1
      %s385 = scalar_select %p384, %s24, 1
      %s386 = smul.addr %s385, 4
      %s387 = smul.addr %s386, 8
      %s388 = scalar_lea.vmem %s11, %s387
      %vm390 = vcmask 257024
      %391 = vst.msk [vmem:[#allocation2] sm:$0xf] %vm390, 0
      %392 = vst.msk [vmem:[#allocation2 + $0x14] sm:$0xf] %vm390, 0
      %v393 = vld [vmem:[%s383] sm:$0xff]
      %v394 = vld [vmem:[%s383 + $0x8] sm:$0xff]
      %v395 = vld [vmem:[%s383 + $0x10] sm:$0xff]
      %v396 = vld [vmem:[%s383 + $0x18] sm:$0xff]
      %v397 = vpack.c.bf16 %v393, %v393
      %v398 = vpack.c.bf16 %v394, %v394
      %v399 = vpack.c.bf16 %v395, %v395
      %v400 = vpack.c.bf16 %v396, %v396
      %401 = vst.msk [vmem:[#allocation2 + $0x4] sm:$0xf] %vm390, %v397
      %402 = vst.msk [vmem:[#allocation2 + $0x8] sm:$0xf] %vm390, %v398
      %403 = vst.msk [vmem:[#allocation2 + $0xc] sm:$0xf] %vm390, %v399
      %404 = vst.msk [vmem:[#allocation2 + $0x10] sm:$0xf] %vm390, %v400
      %v405 = vld [vmem:[#allocation2] sm:$0x8]
      %v406 = vld [vmem:[#allocation2 + $0x4] sm:$0xf]
      %v407 = vld [vmem:[#allocation2 + $0x8] sm:$0xf]
      %v408 = vld [vmem:[#allocation2 + $0xc] sm:$0xf]
      %v409 = vld [vmem:[#allocation2 + $0x10] sm:$0xf]
      %v410 = vld [vmem:[%s1] sm:$0xf]
      %v411 = vld [vmem:[%s1 + $0x4] sm:$0xf]
      %v412 = vld [vmem:[%s1 + $0x8] sm:$0xf]
      %v413 = vld [vmem:[%s1 + $0xc] sm:$0xf]
      %s414 = scalar_lea.vmem %s1, 16
      %v415 = vld [vmem:[%s414] sm:$0xf]
      %v416 = vld [vmem:[%s414 + $0x4] sm:$0xf]
      %v417 = vld [vmem:[%s414 + $0x8] sm:$0xf]
      %v418 = vld [vmem:[%s414 + $0xc] sm:$0xf]
      %v423 = vunpack.c.l.b16 %v406
      %v424 = vunpack.c.l.b16 %v407
      %v425 = vunpack.c.l.b16 %v408
      %v426 = vunpack.c.l.b16 %v409
      %v427 = vpack.c.b16 %v424, %v423
      %v428 = vpack.c.b16 %v426, %v425
      %v433 = vunpack.c.l.b16 %v415
      %v434 = vunpack.c.l.b16 %v416
      %v435 = vunpack.c.l.b16 %v417
      %v436 = vunpack.c.l.b16 %v418
      %v437 = vpack.c.b16 %v434, %v433
      %v438 = vpack.c.b16 %v436, %v435
      %vm441 = vcmask 261120
      %v443 = vsel %vm441, %v427, 0
      %v446 = vsel %vm441, %v428, 0
      %448 = vmatpush.bf16.msra.mxu0 0
      %449 = vmatpush.bf16.msra.mxu0 0
      %450 = vmatpush.bf16.msra.mxu0 0
      %451 = vmatpush.bf16.msra.mxu0 0
      %452 = vmatpush.bf16.msra.mxu0 0
      %453 = vmatpush.bf16.msra.mxu0 0
      %454 = vmatpush.bf16.msra.mxu0 %v438
      %455 = vmatpush.bf16.msra.mxu0 %v437
      %456 = vmatmul.bf16.gmra.mxu0 %v443
      %v457 = vpop.f32.mrf.mxu0
      %v458 = vadd.f32 0.0, %v457
      %v459 = vpop.f32.mrf.mxu0
      %v460 = vadd.f32 0.0, %v459
      %461 = vmatmul.bf16.gmra.mxu0 %v446
      %v462 = vpop.f32.mrf.mxu0
      %v463 = vadd.f32 0.0, %v462
      %v464 = vpop.f32.mrf.mxu0
      %v465 = vadd.f32 0.0, %v464
      %466 = vdwg.mxu0
      %v468 = vunpack.c.l.b16 %v405
      %v469 = vpack.c.b16 %v423, %v468
      %v470 = vpack.c.b16 %v425, %v424
      %v471 = vpack.c.b16 %v426, %v426
      %vm472 = vsmask.f32 4352
      %v474 = vshrl.u32 %v469, 16
      %v476 = vrot.slane %v474, 3
      %v477 = vshll.u32 %v469, 16
      %v479 = vrot.slane %v477, 4
      %v480 = vor.u32 %v476, %v479
      %v482 = vshrl.u32 %v470, 16
      %v484 = vrot.slane %v482, 3
      %v485 = vshll.u32 %v470, 16
      %v487 = vrot.slane %v485, 4
      %v488 = vor.u32 %v484, %v487
      %v489 = vsel %vm472, %v480, %v488
      %v491 = vshrl.u32 %v471, 16
      %v493 = vrot.slane %v491, 3
      %v494 = vshll.u32 %v471, 16
      %v496 = vrot.slane %v494, 4
      %v497 = vor.u32 %v493, %v496
      %v498 = vsel %vm472, %v488, %v497
      %v503 = vunpack.c.l.b16 %v410
      %v504 = vunpack.c.l.b16 %v411
      %v505 = vunpack.c.l.b16 %v412
      %v506 = vunpack.c.l.b16 %v413
      %v507 = vpack.c.b16 %v504, %v503
      %v508 = vpack.c.b16 %v506, %v505
      %v512 = vsel %vm441, %v489, 0
      %v515 = vsel %vm441, %v498, 0
      %517 = vmatpush.bf16.msra.mxu0 0
      %518 = vmatpush.bf16.msra.mxu0 0
      %519 = vmatpush.bf16.msra.mxu0 0
      %520 = vmatpush.bf16.msra.mxu0 0
      %521 = vmatpush.bf16.msra.mxu0 0
      %522 = vmatpush.bf16.msra.mxu0 0
      %523 = vmatpush.bf16.msra.mxu0 %v508
      %524 = vmatpush.bf16.msra.mxu0 %v507
      %525 = vmatmul.bf16.gmra.mxu0 %v512
      %v526 = vpop.f32.mrf.mxu0
      %v527 = vadd.f32 %v458, %v526
      %v528 = vpop.f32.mrf.mxu0
      %v529 = vadd.f32 %v460, %v528
      %530 = vmatmul.bf16.gmra.mxu0 %v515
      %v531 = vpop.f32.mrf.mxu0
      %v532 = vadd.f32 %v463, %v531
      %v533 = vpop.f32.mrf.mxu0
      %v534 = vadd.f32 %v465, %v533
      %535 = vdwg.mxu0
      %v536 = vld [vmem:[#allocation2 + $0x4] sm:$0xf]
      %v537 = vld [vmem:[#allocation2 + $0x8] sm:$0xf]
      %v538 = vld [vmem:[#allocation2 + $0xc] sm:$0xf]
      %v539 = vld [vmem:[#allocation2 + $0x10] sm:$0xf]
      %v540 = vld [vmem:[#allocation2 + $0x14] sm:$0x1]
      %s541 = scalar_lea.vmem %s1, 32
      %v542 = vld [vmem:[%s541] sm:$0xf]
      %v543 = vld [vmem:[%s541 + $0x4] sm:$0xf]
      %v544 = vld [vmem:[%s541 + $0x8] sm:$0xf]
      %v545 = vld [vmem:[%s541 + $0xc] sm:$0xf]
      %v551 = vunpack.c.l.b16 %v536
      %v552 = vunpack.c.l.b16 %v537
      %v553 = vunpack.c.l.b16 %v538
      %v554 = vunpack.c.l.b16 %v539
      %v555 = vunpack.c.l.b16 %v540
      %v556 = vpack.c.b16 %v552, %v551
      %v557 = vpack.c.b16 %v554, %v553
      %v558 = vpack.c.b16 %v555, %v555
      %vm559 = vsmask.f32 7424
      %v561 = vshrl.u32 %v556, 16
      %v563 = vshll.u32 %v556, 16
      %v565 = vrot.slane %v563, 1
      %v566 = vor.u32 %v561, %v565
      %v568 = vshll.u32 %v557, 16
      %v570 = vrot.slane %v568, 1
      %v571 = vsel %vm559, %v566, %v570
      %v572 = vshrl.u32 %v557, 16
      %v574 = vor.u32 %v572, %v570
      %v576 = vshll.u32 %v558, 16
      %v578 = vrot.slane %v576, 1
      %v579 = vsel %vm559, %v574, %v578
      %v584 = vunpack.c.l.b16 %v542
      %v585 = vunpack.c.l.b16 %v543
      %v586 = vunpack.c.l.b16 %v544
      %v587 = vunpack.c.l.b16 %v545
      %v588 = vpack.c.b16 %v585, %v584
      %v589 = vpack.c.b16 %v587, %v586
      %v593 = vsel %vm441, %v571, 0
      %v596 = vsel %vm441, %v579, 0
      %598 = vmatpush.bf16.msra.mxu0 0
      %599 = vmatpush.bf16.msra.mxu0 0
      %600 = vmatpush.bf16.msra.mxu0 0
      %601 = vmatpush.bf16.msra.mxu0 0
      %602 = vmatpush.bf16.msra.mxu0 0
      %603 = vmatpush.bf16.msra.mxu0 0
      %604 = vmatpush.bf16.msra.mxu0 %v589
      %605 = vmatpush.bf16.msra.mxu0 %v588
      %606 = vmatmul.bf16.gmra.mxu0 %v593
      %v607 = vpop.f32.mrf.mxu0
      %v608 = vadd.f32 0.0, %v607
      %v609 = vpop.f32.mrf.mxu0
      %v610 = vadd.f32 0.0, %v609
      %611 = vmatmul.bf16.gmra.mxu0 %v596
      %v612 = vpop.f32.mrf.mxu0
      %v613 = vadd.f32 0.0, %v612
      %v614 = vpop.f32.mrf.mxu0
      %v615 = vadd.f32 0.0, %v614
      %616 = vdwg.mxu0
      %v617 = vadd.f32 %v527, %v608
      %v618 = vadd.f32 %v529, %v610
      %v619 = vadd.f32 %v532, %v613
      %v620 = vadd.f32 %v534, %v615
      %v621 = vld [vmem:[%s2] sm:$0x1]
      %v623 = vperm.slane %v621, 0
      %v625 = vadd.f32 %v617, %v623
      %v626 = vadd.f32 %v618, %v623
      %v627 = vadd.f32 %v619, %v623
      %v628 = vadd.f32 %v620, %v623
      %v629 = vmax.f32 %v625, 0.0
      %v630 = vmax.f32 %v626, 0.0
      %v631 = vmax.f32 %v627, 0.0
      %v632 = vmax.f32 %v628, 0.0
      %v633 = vsel %vm441, %v629, 0.0
      %634 = vadd.xlane.f32.xlu0 %v633
      %v635 = vpop.xlane.xlu0 %634
      %v636 = vsel %vm441, %v630, 0.0
      %637 = vadd.xlane.f32.xlu0 %v636
      %v638 = vpop.xlane.xlu0 %637
      %v639 = vsel %vm441, %v631, 0.0
      %640 = vadd.xlane.f32.xlu0 %v639
      %v641 = vpop.xlane.xlu0 %640
      %v642 = vsel %vm441, %v632, 0.0
      %643 = vadd.xlane.f32.xlu0 %v642
      %v644 = vpop.xlane.xlu0 %643
      %v645 = vrcp.pop 32.0
      %v646 = vmul.f32 32.0, %v645
      %v647 = vsub.f32 1.0, %v646
      %v648 = vmul.f32 %v645, %v647
      %v649 = vadd.f32 %v645, %v648
      %vm650 = vweird.f32 %v645
      %v651 = vsel %vm650, %v645, %v649
      %v652 = vmul.f32 %v635, %v651
      %v653 = vmul.f32 %v638, %v651
      %v654 = vmul.f32 %v641, %v651
      %v655 = vmul.f32 %v644, %v651
      %v656 = vsub.f32 %v629, %v652
      %v657 = vsub.f32 %v630, %v653
      %v658 = vsub.f32 %v631, %v654
      %v659 = vsub.f32 %v632, %v655
      %v660 = vmul.f32 %v656, %v656
      %v661 = vmul.f32 %v657, %v657
      %v662 = vmul.f32 %v658, %v658
      %v663 = vmul.f32 %v659, %v659
      %v664 = vsel %vm441, %v660, 0.0
      %665 = vadd.xlane.f32.xlu0 %v664
      %v666 = vpop.xlane.xlu0 %665
      %v667 = vsel %vm441, %v661, 0.0
      %668 = vadd.xlane.f32.xlu0 %v667
      %v669 = vpop.xlane.xlu0 %668
      %v670 = vsel %vm441, %v662, 0.0
      %671 = vadd.xlane.f32.xlu0 %v670
      %v672 = vpop.xlane.xlu0 %671
      %v673 = vsel %vm441, %v663, 0.0
      %674 = vadd.xlane.f32.xlu0 %v673
      %v675 = vpop.xlane.xlu0 %674
      %v676 = vmul.f32 %v666, %v651
      %v677 = vmul.f32 %v669, %v651
      %v678 = vmul.f32 %v672, %v651
      %v679 = vmul.f32 %v675, %v651
      %v680 = vadd.f32 %v676, 1e-05
      %v681 = vadd.f32 %v677, 1e-05
      %v682 = vadd.f32 %v678, 1e-05
      %v683 = vadd.f32 %v679, 1e-05
      %v684 = vrsqrt.pop %v680
      %v685 = vmul.f32 %v684, %v680
      %v686 = vmul.f32 %v685, %v684
      %v687 = vmul.f32 0.5, %v686
      %v688 = vsub.f32 1.5, %v687
      %v689 = vmul.f32 %v684, %v688
      %vm690 = vweird.f32 %v680
      %vm691 = vweird.f32 %v684
      %vm692 = vmor %vm690, %vm691
      %v693 = vsel %vm692, %v684, %v689
      %v694 = vrsqrt.pop %v681
      %v695 = vmul.f32 %v694, %v681
      %v696 = vmul.f32 %v695, %v694
      %v697 = vmul.f32 0.5, %v696
      %v698 = vsub.f32 1.5, %v697
      %v699 = vmul.f32 %v694, %v698
      %vm700 = vweird.f32 %v681
      %vm701 = vweird.f32 %v694
      %vm702 = vmor %vm700, %vm701
      %v703 = vsel %vm702, %v694, %v699
      %v704 = vrsqrt.pop %v682
      %v705 = vmul.f32 %v704, %v682
      %v706 = vmul.f32 %v705, %v704
      %v707 = vmul.f32 0.5, %v706
      %v708 = vsub.f32 1.5, %v707
      %v709 = vmul.f32 %v704, %v708
      %vm710 = vweird.f32 %v682
      %vm711 = vweird.f32 %v704
      %vm712 = vmor %vm710, %vm711
      %v713 = vsel %vm712, %v704, %v709
      %v714 = vrsqrt.pop %v683
      %v715 = vmul.f32 %v714, %v683
      %v716 = vmul.f32 %v715, %v714
      %v717 = vmul.f32 0.5, %v716
      %v718 = vsub.f32 1.5, %v717
      %v719 = vmul.f32 %v714, %v718
      %vm720 = vweird.f32 %v683
      %vm721 = vweird.f32 %v714
      %vm722 = vmor %vm720, %vm721
      %v723 = vsel %vm722, %v714, %v719
      %v724 = vmul.f32 %v656, %v693
      %v725 = vmul.f32 %v657, %v703
      %v726 = vmul.f32 %v658, %v713
      %v727 = vmul.f32 %v659, %v723
      %v728 = vld [vmem:[%s3] sm:$0x1]
      %v730 = vperm.slane %v728, 0
      %v732 = vmul.f32 %v724, %v730
      %v733 = vmul.f32 %v725, %v730
      %v734 = vmul.f32 %v726, %v730
      %v735 = vmul.f32 %v727, %v730
      %v736 = vld [vmem:[%s4] sm:$0x1]
      %v738 = vperm.slane %v736, 0
      %v740 = vadd.f32 %v732, %v738
      %v741 = vadd.f32 %v733, %v738
      %v742 = vadd.f32 %v734, %v738
      %v743 = vadd.f32 %v735, %v738
      %744 = vst.msk [vmem:[#allocation3] sm:$0xf] %vm390, 0
      %745 = vst.msk [vmem:[#allocation3 + $0x14] sm:$0xf] %vm390, 0
      %v746 = vpack.c.bf16 %v740, %v740
      %v747 = vpack.c.bf16 %v741, %v741
      %v748 = vpack.c.bf16 %v742, %v742
      %v749 = vpack.c.bf16 %v743, %v743
      %750 = vst.msk [vmem:[#allocation3 + $0x4] sm:$0xf] %vm390, %v746
      %751 = vst.msk [vmem:[#allocation3 + $0x8] sm:$0xf] %vm390, %v747
      %752 = vst.msk [vmem:[#allocation3 + $0xc] sm:$0xf] %vm390, %v748
      %753 = vst.msk [vmem:[#allocation3 + $0x10] sm:$0xf] %vm390, %v749
      %v754 = vld [vmem:[#allocation3] sm:$0x8]
      %v755 = vld [vmem:[#allocation3 + $0x4] sm:$0xf]
      %v756 = vld [vmem:[#allocation3 + $0x8] sm:$0xf]
      %v757 = vld [vmem:[#allocation3 + $0xc] sm:$0xf]
      %v758 = vld [vmem:[#allocation3 + $0x10] sm:$0xf]
      %v759 = vld [vmem:[%s5] sm:$0xf]
      %v760 = vld [vmem:[%s5 + $0x4] sm:$0xf]
      %v761 = vld [vmem:[%s5 + $0x8] sm:$0xf]
      %v762 = vld [vmem:[%s5 + $0xc] sm:$0xf]
      %s763 = scalar_lea.vmem %s5, 16
      %v764 = vld [vmem:[%s763] sm:$0xf]
      %v765 = vld [vmem:[%s763 + $0x4] sm:$0xf]
      %v766 = vld [vmem:[%s763 + $0x8] sm:$0xf]
      %v767 = vld [vmem:[%s763 + $0xc] sm:$0xf]
      %v772 = vunpack.c.l.b16 %v755
      %v773 = vunpack.c.l.b16 %v756
      %v774 = vunpack.c.l.b16 %v757
      %v775 = vunpack.c.l.b16 %v758
      %v776 = vpack.c.b16 %v773, %v772
      %v777 = vpack.c.b16 %v775, %v774
      %v782 = vunpack.c.l.b16 %v764
      %v783 = vunpack.c.l.b16 %v765
      %v784 = vunpack.c.l.b16 %v766
      %v785 = vunpack.c.l.b16 %v767
      %v786 = vpack.c.b16 %v783, %v782
      %v787 = vpack.c.b16 %v785, %v784
      %v791 = vsel %vm441, %v776, 0
      %v794 = vsel %vm441, %v777, 0
      %796 = vmatpush.bf16.msra.mxu0 0
      %797 = vmatpush.bf16.msra.mxu0 0
      %798 = vmatpush.bf16.msra.mxu0 0
      %799 = vmatpush.bf16.msra.mxu0 0
      %800 = vmatpush.bf16.msra.mxu0 0
      %801 = vmatpush.bf16.msra.mxu0 0
      %802 = vmatpush.bf16.msra.mxu0 %v787
      %803 = vmatpush.bf16.msra.mxu0 %v786
      %804 = vmatmul.bf16.gmra.mxu0 %v791
      %v805 = vpop.f32.mrf.mxu0
      %v806 = vadd.f32 0.0, %v805
      %v807 = vpop.f32.mrf.mxu0
      %v808 = vadd.f32 0.0, %v807
      %809 = vmatmul.bf16.gmra.mxu0 %v794
      %v810 = vpop.f32.mrf.mxu0
      %v811 = vadd.f32 0.0, %v810
      %v812 = vpop.f32.mrf.mxu0
      %v813 = vadd.f32 0.0, %v812
      %814 = vdwg.mxu0
      %v816 = vunpack.c.l.b16 %v754
      %v817 = vpack.c.b16 %v772, %v816
      %v818 = vpack.c.b16 %v774, %v773
      %v819 = vpack.c.b16 %v775, %v775
      %v821 = vshrl.u32 %v817, 16
      %v823 = vrot.slane %v821, 3
      %v824 = vshll.u32 %v817, 16
      %v826 = vrot.slane %v824, 4
      %v827 = vor.u32 %v823, %v826
      %v829 = vshrl.u32 %v818, 16
      %v831 = vrot.slane %v829, 3
      %v832 = vshll.u32 %v818, 16
      %v834 = vrot.slane %v832, 4
      %v835 = vor.u32 %v831, %v834
      %v836 = vsel %vm472, %v827, %v835
      %v838 = vshrl.u32 %v819, 16
      %v840 = vrot.slane %v838, 3
      %v841 = vshll.u32 %v819, 16
      %v843 = vrot.slane %v841, 4
      %v844 = vor.u32 %v840, %v843
      %v845 = vsel %vm472, %v835, %v844
      %v850 = vunpack.c.l.b16 %v759
      %v851 = vunpack.c.l.b16 %v760
      %v852 = vunpack.c.l.b16 %v761
      %v853 = vunpack.c.l.b16 %v762
      %v854 = vpack.c.b16 %v851, %v850
      %v855 = vpack.c.b16 %v853, %v852
      %v859 = vsel %vm441, %v836, 0
      %v862 = vsel %vm441, %v845, 0
      %864 = vmatpush.bf16.msra.mxu0 0
      %865 = vmatpush.bf16.msra.mxu0 0
      %866 = vmatpush.bf16.msra.mxu0 0
      %867 = vmatpush.bf16.msra.mxu0 0
      %868 = vmatpush.bf16.msra.mxu0 0
      %869 = vmatpush.bf16.msra.mxu0 0
      %870 = vmatpush.bf16.msra.mxu0 %v855
      %871 = vmatpush.bf16.msra.mxu0 %v854
      %872 = vmatmul.bf16.gmra.mxu0 %v859
      %v873 = vpop.f32.mrf.mxu0
      %v874 = vadd.f32 %v806, %v873
      %v875 = vpop.f32.mrf.mxu0
      %v876 = vadd.f32 %v808, %v875
      %877 = vmatmul.bf16.gmra.mxu0 %v862
      %v878 = vpop.f32.mrf.mxu0
      %v879 = vadd.f32 %v811, %v878
      %v880 = vpop.f32.mrf.mxu0
      %v881 = vadd.f32 %v813, %v880
      %882 = vdwg.mxu0
      %v883 = vld [vmem:[#allocation3 + $0x4] sm:$0xf]
      %v884 = vld [vmem:[#allocation3 + $0x8] sm:$0xf]
      %v885 = vld [vmem:[#allocation3 + $0xc] sm:$0xf]
      %v886 = vld [vmem:[#allocation3 + $0x10] sm:$0xf]
      %v887 = vld [vmem:[#allocation3 + $0x14] sm:$0x1]
      %s888 = scalar_lea.vmem %s5, 32
      %v889 = vld [vmem:[%s888] sm:$0xf]
      %v890 = vld [vmem:[%s888 + $0x4] sm:$0xf]
      %v891 = vld [vmem:[%s888 + $0x8] sm:$0xf]
      %v892 = vld [vmem:[%s888 + $0xc] sm:$0xf]
      %v898 = vunpack.c.l.b16 %v883
      %v899 = vunpack.c.l.b16 %v884
      %v900 = vunpack.c.l.b16 %v885
      %v901 = vunpack.c.l.b16 %v886
      %v902 = vunpack.c.l.b16 %v887
      %v903 = vpack.c.b16 %v899, %v898
      %v904 = vpack.c.b16 %v901, %v900
      %v905 = vpack.c.b16 %v902, %v902
      %v907 = vshrl.u32 %v903, 16
      %v909 = vshll.u32 %v903, 16
      %v911 = vrot.slane %v909, 1
      %v912 = vor.u32 %v907, %v911
      %v914 = vshll.u32 %v904, 16
      %v916 = vrot.slane %v914, 1
      %v917 = vsel %vm559, %v912, %v916
      %v918 = vshrl.u32 %v904, 16
      %v920 = vor.u32 %v918, %v916
      %v922 = vshll.u32 %v905, 16
      %v924 = vrot.slane %v922, 1
      %v925 = vsel %vm559, %v920, %v924
      %v930 = vunpack.c.l.b16 %v889
      %v931 = vunpack.c.l.b16 %v890
      %v932 = vunpack.c.l.b16 %v891
      %v933 = vunpack.c.l.b16 %v892
      %v934 = vpack.c.b16 %v931, %v930
      %v935 = vpack.c.b16 %v933, %v932
      %v939 = vsel %vm441, %v917, 0
      %v942 = vsel %vm441, %v925, 0
      %944 = vmatpush.bf16.msra.mxu0 0
      %945 = vmatpush.bf16.msra.mxu0 0
      %946 = vmatpush.bf16.msra.mxu0 0
      %947 = vmatpush.bf16.msra.mxu0 0
      %948 = vmatpush.bf16.msra.mxu0 0
      %949 = vmatpush.bf16.msra.mxu0 0
      %950 = vmatpush.bf16.msra.mxu0 %v935
      %951 = vmatpush.bf16.msra.mxu0 %v934
      %952 = vmatmul.bf16.gmra.mxu0 %v939
      %v953 = vpop.f32.mrf.mxu0
      %v954 = vadd.f32 0.0, %v953
      %v955 = vpop.f32.mrf.mxu0
      %v956 = vadd.f32 0.0, %v955
      %957 = vmatmul.bf16.gmra.mxu0 %v942
      %v958 = vpop.f32.mrf.mxu0
      %v959 = vadd.f32 0.0, %v958
      %v960 = vpop.f32.mrf.mxu0
      %v961 = vadd.f32 0.0, %v960
      %962 = vdwg.mxu0
      %v963 = vadd.f32 %v874, %v954
      %v964 = vadd.f32 %v876, %v956
      %v965 = vadd.f32 %v879, %v959
      %v966 = vadd.f32 %v881, %v961
      %v967 = vld [vmem:[%s6] sm:$0x1]
      %v969 = vperm.slane %v967, 0
      %v971 = vadd.f32 %v963, %v969
      %v972 = vadd.f32 %v964, %v969
      %v973 = vadd.f32 %v965, %v969
      %v974 = vadd.f32 %v966, %v969
      %v975 = vmax.f32 %v971, 0.0
      %v976 = vmax.f32 %v972, 0.0
      %v977 = vmax.f32 %v973, 0.0
      %v978 = vmax.f32 %v974, 0.0
      %v979 = vsel %vm441, %v975, 0.0
      %980 = vadd.xlane.f32.xlu0 %v979
      %v981 = vpop.xlane.xlu0 %980
      %v982 = vsel %vm441, %v976, 0.0
      %983 = vadd.xlane.f32.xlu0 %v982
      %v984 = vpop.xlane.xlu0 %983
      %v985 = vsel %vm441, %v977, 0.0
      %986 = vadd.xlane.f32.xlu0 %v985
      %v987 = vpop.xlane.xlu0 %986
      %v988 = vsel %vm441, %v978, 0.0
      %989 = vadd.xlane.f32.xlu0 %v988
      %v990 = vpop.xlane.xlu0 %989
      %v991 = vmul.f32 %v981, %v651
      %v992 = vmul.f32 %v984, %v651
      %v993 = vmul.f32 %v987, %v651
      %v994 = vmul.f32 %v990, %v651
      %v995 = vsub.f32 %v975, %v991
      %v996 = vsub.f32 %v976, %v992
      %v997 = vsub.f32 %v977, %v993
      %v998 = vsub.f32 %v978, %v994
      %v999 = vmul.f32 %v995, %v995
      %v1000 = vmul.f32 %v996, %v996
      %v1001 = vmul.f32 %v997, %v997
      %v1002 = vmul.f32 %v998, %v998
      %v1003 = vsel %vm441, %v999, 0.0
      %1004 = vadd.xlane.f32.xlu0 %v1003
      %v1005 = vpop.xlane.xlu0 %1004
      %v1006 = vsel %vm441, %v1000, 0.0
      %1007 = vadd.xlane.f32.xlu0 %v1006
      %v1008 = vpop.xlane.xlu0 %1007
      %v1009 = vsel %vm441, %v1001, 0.0
      %1010 = vadd.xlane.f32.xlu0 %v1009
      %v1011 = vpop.xlane.xlu0 %1010
      %v1012 = vsel %vm441, %v1002, 0.0
      %1013 = vadd.xlane.f32.xlu0 %v1012
      %v1014 = vpop.xlane.xlu0 %1013
      %v1015 = vmul.f32 %v1005, %v651
      %v1016 = vmul.f32 %v1008, %v651
      %v1017 = vmul.f32 %v1011, %v651
      %v1018 = vmul.f32 %v1014, %v651
      %v1019 = vadd.f32 %v1015, 1e-05
      %v1020 = vadd.f32 %v1016, 1e-05
      %v1021 = vadd.f32 %v1017, 1e-05
      %v1022 = vadd.f32 %v1018, 1e-05
      %v1023 = vrsqrt.pop %v1019
      %v1024 = vmul.f32 %v1023, %v1019
      %v1025 = vmul.f32 %v1024, %v1023
      %v1026 = vmul.f32 0.5, %v1025
      %v1027 = vsub.f32 1.5, %v1026
      %v1028 = vmul.f32 %v1023, %v1027
      %vm1029 = vweird.f32 %v1019
      %vm1030 = vweird.f32 %v1023
      %vm1031 = vmor %vm1029, %vm1030
      %v1032 = vsel %vm1031, %v1023, %v1028
      %v1033 = vrsqrt.pop %v1020
      %v1034 = vmul.f32 %v1033, %v1020
      %v1035 = vmul.f32 %v1034, %v1033
      %v1036 = vmul.f32 0.5, %v1035
      %v1037 = vsub.f32 1.5, %v1036
      %v1038 = vmul.f32 %v1033, %v1037
      %vm1039 = vweird.f32 %v1020
      %vm1040 = vweird.f32 %v1033
      %vm1041 = vmor %vm1039, %vm1040
      %v1042 = vsel %vm1041, %v1033, %v1038
      %v1043 = vrsqrt.pop %v1021
      %v1044 = vmul.f32 %v1043, %v1021
      %v1045 = vmul.f32 %v1044, %v1043
      %v1046 = vmul.f32 0.5, %v1045
      %v1047 = vsub.f32 1.5, %v1046
      %v1048 = vmul.f32 %v1043, %v1047
      %vm1049 = vweird.f32 %v1021
      %vm1050 = vweird.f32 %v1043
      %vm1051 = vmor %vm1049, %vm1050
      %v1052 = vsel %vm1051, %v1043, %v1048
      %v1053 = vrsqrt.pop %v1022
      %v1054 = vmul.f32 %v1053, %v1022
      %v1055 = vmul.f32 %v1054, %v1053
      %v1056 = vmul.f32 0.5, %v1055
      %v1057 = vsub.f32 1.5, %v1056
      %v1058 = vmul.f32 %v1053, %v1057
      %vm1059 = vweird.f32 %v1022
      %vm1060 = vweird.f32 %v1053
      %vm1061 = vmor %vm1059, %vm1060
      %v1062 = vsel %vm1061, %v1053, %v1058
      %v1063 = vmul.f32 %v995, %v1032
      %v1064 = vmul.f32 %v996, %v1042
      %v1065 = vmul.f32 %v997, %v1052
      %v1066 = vmul.f32 %v998, %v1062
      %v1067 = vld [vmem:[%s7] sm:$0x1]
      %v1069 = vperm.slane %v1067, 0
      %v1071 = vmul.f32 %v1063, %v1069
      %v1072 = vmul.f32 %v1064, %v1069
      %v1073 = vmul.f32 %v1065, %v1069
      %v1074 = vmul.f32 %v1066, %v1069
      %v1075 = vld [vmem:[%s8] sm:$0x1]
      %v1077 = vperm.slane %v1075, 0
      %v1079 = vadd.f32 %v1071, %v1077
      %v1080 = vadd.f32 %v1072, %v1077
      %v1081 = vadd.f32 %v1073, %v1077
      %v1082 = vadd.f32 %v1074, %v1077
      %v1083 = vld [vmem:[%s9] sm:$0x1]
      %v1085 = vperm.slane %v1083, 0
      %v1087 = vmul.f32 %v1079, %v1085
      %v1088 = vmul.f32 %v1080, %v1085
      %v1089 = vmul.f32 %v1081, %v1085
      %v1090 = vmul.f32 %v1082, %v1085
      %v1091 = vsel %vm441, %v1087, 0.0
      %1092 = vadd.xlane.f32.xlu0 %v1091
      %v1093 = vpop.xlane.xlu0 %1092
      %v1094 = vsel %vm441, %v1088, 0.0
      %1095 = vadd.xlane.f32.xlu0 %v1094
      %v1096 = vpop.xlane.xlu0 %1095
      %v1097 = vsel %vm441, %v1089, 0.0
      %1098 = vadd.xlane.f32.xlu0 %v1097
      %v1099 = vpop.xlane.xlu0 %1098
      %v1100 = vsel %vm441, %v1090, 0.0
      %1101 = vadd.xlane.f32.xlu0 %v1100
      %v1102 = vpop.xlane.xlu0 %1101
      %v1103 = vld [vmem:[#allocation4] sm:$0x1]
      %v1105 = vperm.slane %v1103, 0
      %v1107 = vadd.f32 %v1093, %v1105
      %v1108 = vadd.f32 %v1096, %v1105
      %v1109 = vadd.f32 %v1099, %v1105
      %v1110 = vadd.f32 %v1102, %v1105
      %vm1111 = vcmask 7168
      %1112 = vst.msk [vmem:[%s388] sm:$0xff] %vm1111, %v1107
      %1113 = vst.msk [vmem:[%s388 + $0x8] sm:$0xff] %vm1111, %v1108
      %1114 = vst.msk [vmem:[%s388 + $0x10] sm:$0xff] %vm1111, %v1109
      %1115 = vst.msk [vmem:[%s388 + $0x18] sm:$0xff] %vm1111, %v1110
      %p1116 = scmp.lt.s32.totalorder %s24, 1
      %s1117 = scalar_select %p1116, %s24, 1
      %s1118 = smul.addr %s1117, 4
      %s1119 = smul.addr %s1118, 8
      %s1120 = scalar_lea.vmem %s11, %s1119
      // Predicated region
      $region65: #{_lambda_.23} parent=63 // pred_check
        %p1121 = pneg %p278
      $region66: #{_lambda_.23} parent=63 // pred_check_branch
        %1123 = sbr.rel (%p1121) target = $region68
      $region67: #{_lambda_.23} parent=63 // pred_region
        _
      $region68: #{_lambda_.23} parent=63 // pred_fallthru
        _
    $region64: #{_lambda_.23} parent=5 // pred_fallthru
      _
    %p1124 = scmp.le.s32.totalorder 2, %s19
    // Predicated region
    $region69: #{_lambda_.23} parent=5 // pred_check
      %p1125 = pneg %p1124
    $region70: #{_lambda_.23} parent=5 // pred_check_branch
      %1127 = sbr.rel (%p1125) target = $region72
    $region71: #{_lambda_.23} parent=5 // pred_region
      %s1128 = ssub.s32 %s19, 2
      // Predicated region
      $region73: #{_lambda_.23} parent=71 // pred_check
        %p1129 = pneg %p284
      $region74: #{_lambda_.23} parent=71 // pred_check_branch
        %1131 = sbr.rel (%p1129) target = $region76
      $region75: #{_lambda_.23} parent=71 // pred_region
        %p1132 = scmp.lt.s32.totalorder %s25, 1
        %s1133 = scalar_select %p1132, %s25, 1
        %s1134 = smul.addr %s1133, 4
        %s1135 = smul.addr %s1134, 8
        %s1136 = scalar_lea.vmem %s11, %s1135
      $region76: #{_lambda_.23} parent=71 // pred_fallthru
        _
    $region72: #{_lambda_.23} parent=5 // pred_fallthru
      _
  $region6: #{_lambda_.23} parent=0 // loop_footer
    %s23 = sadd.s32 1, %s19
  $region7: #{_lambda_.23} parent=0 // loop_footer_branch
    %18 = sbr.rel target = $region3
  $region8: #{_lambda_.23} parent=0 // loop_exit
    _

// kernel: _lambda_.26
$region0: #{_lambda_.26}
  #allocation0 [shape = 'u32[]', space=smem, size = 0x4, offset = 0x4, fixed_abs, tag = 'smem constant byte address 0x4 - core index']
  #allocation1 [shape = 'u32[72,128]{1,0:T(1,128)}', space=vmem, size = 0x9000, scoped, tag = 'internal scratch']
  %s0 = inlined_call_operand.vmem [shape: bf16[2,32,32], index: 0, kind: input, shape index: {}]
  %s1 = inlined_call_operand.vmem [shape: bf16[2,32,32], index: 1, kind: input, shape index: {}]
  %s2 = inlined_call_operand.vmem [shape: bf16[2,32,32], index: 2, kind: input, shape index: {}]
  %s3 = inlined_call_operand.vmem [shape: f32[2,1,32], index: 3, kind: input, shape index: {}]
  %s4 = inlined_call_operand.vmem [shape: bf16[32,32], index: 4, kind: input, shape index: {}]
  %s5 = inlined_call_operand.vmem [shape: f32[1,32], index: 5, kind: input, shape index: {}]
  %s6 = inlined_call_operand.vmem [shape: f32[2,32,32], index: 6, kind: output, shape index: {}]
  %s7 = sld [smem:[#allocation0]]
  $region57: #{_lambda_.26} parent=0
    _
  %s9 = ssub.s32 1, %s7
  %s10 = scalar_select 0, %s9, %s7
  loop: start=0, step=1, limit=4
  $region2: #{_lambda_.26} parent=0 // loop_pre_header
    _
  $region3: #{_lambda_.26} parent=0 // loop_header
    %s12 = sphi 0, %s16
    %p13 = scmp.ge.s32.totalorder %s12, 4
    %s19 = sphi 0, %s31
    %s20 = sphi 0, %s27
    %s21 = sphi 0, %s19
    %s22 = sphi 0, %s20
    %s23 = sphi 0, %s21
    %s24 = sphi 0, %s22
    %s36 = sphi 0, %s38
    %s39 = sphi 0, %s36
    %s40 = sphi 0, %s39
    %s56 = sphi 0, %s40
    %s62 = sphi 0, %s64
    %s65 = sphi 0, %s62
    %s66 = sphi 0, %s65
    %s82 = sphi 0, %s66
    %s88 = sphi 0, %s90
    %s91 = sphi 0, %s88
    %s92 = sphi 0, %s91
    %s108 = sphi 0, %s92
    %s114 = sphi 0, %s116
    %s117 = sphi 0, %s114
    %s118 = sphi 0, %s117
    %s134 = sphi 0, %s118
    %s138 = sphi 0, %s138
    %s140 = sphi 0, %s138
    %s141 = sphi 0, %s140
    %s155 = sphi 0, %s141
    %s159 = sphi 0, %s159
    %s161 = sphi 0, %s159
    %s162 = sphi 0, %s161
    %s176 = sphi 0, %s162
    %s184 = sphi 0, %s186
    %s187 = sphi 0, %s184
    %s188 = sphi 0, %s187
    %s204 = sphi 0, %s188
  $region4: #{_lambda_.26} parent=0 // loop_header_branch
    %15 = sbr.rel (%p13) target = $region8
  $region5: #{_lambda_.26} parent=0 // loop_body
    %s17 = ssub.s32 %s12, 1
    %s18 = ssub.s32 %s12, 2
    %s25 = sadd.s32 1, %s20
    %p26 = scmp.ge.s32.totalorder %s25, 1
    %s27 = scalar_select %p26, 0, %s25
    %s28 = sadd.s32 1, %s19
    %s29 = scalar_select %p26, %s28, %s19
    %p30 = scmp.ge.s32.totalorder %s29, 2
    %s31 = scalar_select %p30, 0, %s29
    %s32 = ssub.s32 %s19, %s31
    %s33 = ssub.s32 %s20, %s27
    %s34 = sor.u32 %s32, %s33
    %p35 = scmp.eq.s32.totalorder %s34, 0
    %s37 = sadd.s32 %s36, 1
    %s38 = scalar_select %p35, %s36, %s37
    %p41 = pneg %p35
    %p42 = scmp.eq.s32.totalorder %s12, 1
    %p43 = por %p41, %p42
    %p44 = scmp.ne.s32.totalorder %s36, %s39
    %p45 = scmp.eq.s32.totalorder %s12, 0
    %p46 = por %p44, %p45
    %p47 = scmp.ne.s32.totalorder %s36, %s39
    %p48 = scmp.eq.s32.totalorder %s17, 1
    %p49 = por %p47, %p48
    %p50 = scmp.ne.s32.totalorder %s39, %s40
    %p51 = scmp.eq.s32.totalorder %s17, 0
    %p52 = por %p50, %p51
    %p53 = scmp.ne.s32.totalorder %s39, %s40
    %p54 = scmp.eq.s32.totalorder %s18, 1
    %p55 = por %p53, %p54
    %p57 = scmp.ne.s32.totalorder %s40, %s56
    %p58 = scmp.eq.s32.totalorder %s18, 0
    %p59 = por %p57, %p58
    %s60 = ssub.s32 %s19, %s31
    %p61 = scmp.eq.s32.totalorder %s60, 0
    %s63 = sadd.s32 %s62, 1
    %s64 = scalar_select %p61, %s62, %s63
    %p67 = pneg %p61
    %p68 = scmp.eq.s32.totalorder %s12, 1
    %p69 = por %p67, %p68
    %p70 = scmp.ne.s32.totalorder %s62, %s65
    %p71 = scmp.eq.s32.totalorder %s12, 0
    %p72 = por %p70, %p71
    %p73 = scmp.ne.s32.totalorder %s62, %s65
    %p74 = scmp.eq.s32.totalorder %s17, 1
    %p75 = por %p73, %p74
    %p76 = scmp.ne.s32.totalorder %s65, %s66
    %p77 = scmp.eq.s32.totalorder %s17, 0
    %p78 = por %p76, %p77
    %p79 = scmp.ne.s32.totalorder %s65, %s66
    %p80 = scmp.eq.s32.totalorder %s18, 1
    %p81 = por %p79, %p80
    %p83 = scmp.ne.s32.totalorder %s66, %s82
    %p84 = scmp.eq.s32.totalorder %s18, 0
    %p85 = por %p83, %p84
    %s86 = ssub.s32 %s19, %s31
    %p87 = scmp.eq.s32.totalorder %s86, 0
    %s89 = sadd.s32 %s88, 1
    %s90 = scalar_select %p87, %s88, %s89
    %p93 = pneg %p87
    %p94 = scmp.eq.s32.totalorder %s12, 1
    %p95 = por %p93, %p94
    %p96 = scmp.ne.s32.totalorder %s88, %s91
    %p97 = scmp.eq.s32.totalorder %s12, 0
    %p98 = por %p96, %p97
    %p99 = scmp.ne.s32.totalorder %s88, %s91
    %p100 = scmp.eq.s32.totalorder %s17, 1
    %p101 = por %p99, %p100
    %p102 = scmp.ne.s32.totalorder %s91, %s92
    %p103 = scmp.eq.s32.totalorder %s17, 0
    %p104 = por %p102, %p103
    %p105 = scmp.ne.s32.totalorder %s91, %s92
    %p106 = scmp.eq.s32.totalorder %s18, 1
    %p107 = por %p105, %p106
    %p109 = scmp.ne.s32.totalorder %s92, %s108
    %p110 = scmp.eq.s32.totalorder %s18, 0
    %p111 = por %p109, %p110
    %s112 = ssub.s32 %s19, %s31
    %p113 = scmp.eq.s32.totalorder %s112, 0
    %s115 = sadd.s32 %s114, 1
    %s116 = scalar_select %p113, %s114, %s115
    %p119 = pneg %p113
    %p120 = scmp.eq.s32.totalorder %s12, 1
    %p121 = por %p119, %p120
    %p122 = scmp.ne.s32.totalorder %s114, %s117
    %p123 = scmp.eq.s32.totalorder %s12, 0
    %p124 = por %p122, %p123
    %p125 = scmp.ne.s32.totalorder %s114, %s117
    %p126 = scmp.eq.s32.totalorder %s17, 1
    %p127 = por %p125, %p126
    %p128 = scmp.ne.s32.totalorder %s117, %s118
    %p129 = scmp.eq.s32.totalorder %s17, 0
    %p130 = por %p128, %p129
    %p131 = scmp.ne.s32.totalorder %s117, %s118
    %p132 = scmp.eq.s32.totalorder %s18, 1
    %p133 = por %p131, %p132
    %p135 = scmp.ne.s32.totalorder %s118, %s134
    %p136 = scmp.eq.s32.totalorder %s18, 0
    %p137 = por %p135, %p136
    %s139 = sadd.s32 %s138, 1
    %p142 = scmp.eq.s32.totalorder %s12, 1
    %p143 = scmp.ne.s32.totalorder %s138, %s140
    %p144 = scmp.eq.s32.totalorder %s12, 0
    %p145 = por %p143, %p144
    %p146 = scmp.ne.s32.totalorder %s138, %s140
    %p147 = scmp.eq.s32.totalorder %s17, 1
    %p148 = por %p146, %p147
    %p149 = scmp.ne.s32.totalorder %s140, %s141
    %p150 = scmp.eq.s32.totalorder %s17, 0
    %p151 = por %p149, %p150
    %p152 = scmp.ne.s32.totalorder %s140, %s141
    %p153 = scmp.eq.s32.totalorder %s18, 1
    %p154 = por %p152, %p153
    %p156 = scmp.ne.s32.totalorder %s141, %s155
    %p157 = scmp.eq.s32.totalorder %s18, 0
    %p158 = por %p156, %p157
    %s160 = sadd.s32 %s159, 1
    %p163 = scmp.eq.s32.totalorder %s12, 1
    %p164 = scmp.ne.s32.totalorder %s159, %s161
    %p165 = scmp.eq.s32.totalorder %s12, 0
    %p166 = por %p164, %p165
    %p167 = scmp.ne.s32.totalorder %s159, %s161
    %p168 = scmp.eq.s32.totalorder %s17, 1
    %p169 = por %p167, %p168
    %p170 = scmp.ne.s32.totalorder %s161, %s162
    %p171 = scmp.eq.s32.totalorder %s17, 0
    %p172 = por %p170, %p171
    %p173 = scmp.ne.s32.totalorder %s161, %s162
    %p174 = scmp.eq.s32.totalorder %s18, 1
    %p175 = por %p173, %p174
    %p177 = scmp.ne.s32.totalorder %s162, %s176
    %p178 = scmp.eq.s32.totalorder %s18, 0
    %p179 = por %p177, %p178
    %s180 = ssub.s32 %s19, %s31
    %s181 = ssub.s32 %s20, %s27
    %s182 = sor.u32 %s180, %s181
    %p183 = scmp.eq.s32.totalorder %s182, 0
    %s185 = sadd.s32 %s184, 1
    %s186 = scalar_select %p183, %s184, %s185
    %p189 = pneg %p183
    %p190 = scmp.eq.s32.totalorder %s12, 1
    %p191 = por %p189, %p190
    %p192 = scmp.ne.s32.totalorder %s184, %s187
    %p193 = scmp.eq.s32.totalorder %s12, 0
    %p194 = por %p192, %p193
    %p195 = scmp.ne.s32.totalorder %s184, %s187
    %p196 = scmp.eq.s32.totalorder %s17, 1
    %p197 = por %p195, %p196
    %p198 = scmp.ne.s32.totalorder %s187, %s188
    %p199 = scmp.eq.s32.totalorder %s17, 0
    %p200 = por %p198, %p199
    %p201 = scmp.ne.s32.totalorder %s187, %s188
    %p202 = scmp.eq.s32.totalorder %s18, 1
    %p203 = por %p201, %p202
    %p205 = scmp.ne.s32.totalorder %s188, %s204
    %p206 = scmp.eq.s32.totalorder %s18, 0
    %p207 = por %p205, %p206
    %p208 = scmp.le.s32.totalorder 1, %s12
    %p209 = scmp.lt.s32.totalorder %s12, 3
    %p210 = pnand %p208, %p209
    %p211 = pneg %p210
    // Predicated region
    $region9: #{_lambda_.26} parent=5 // pred_check
      _
    $region10: #{_lambda_.26} parent=5 // pred_check_branch
      %213 = sbr.rel (%p210) target = $region12
    $region11: #{_lambda_.26} parent=5 // pred_region
      %s214 = ssub.s32 %s12, 1
      // Predicated region
      $region13: #{_lambda_.26} parent=11 // pred_check
        %p215 = pneg %p151
      $region14: #{_lambda_.26} parent=11 // pred_check_branch
        %217 = sbr.rel (%p215) target = $region16
      $region15: #{_lambda_.26} parent=11 // pred_region
        _
      $region16: #{_lambda_.26} parent=11 // pred_fallthru
        _
      // Predicated region
      $region17: #{_lambda_.26} parent=11 // pred_check
        %p218 = pneg %p172
      $region18: #{_lambda_.26} parent=11 // pred_check_branch
        %220 = sbr.rel (%p218) target = $region20
      $region19: #{_lambda_.26} parent=11 // pred_region
        _
      $region20: #{_lambda_.26} parent=11 // pred_fallthru
        _
    $region12: #{_lambda_.26} parent=5 // pred_fallthru
      _
    %p221 = scmp.lt.s32.totalorder %s12, 2
    // Predicated region
    $region21: #{_lambda_.26} parent=5 // pred_check
      %p222 = pneg %p221
    $region22: #{_lambda_.26} parent=5 // pred_check_branch
      %224 = sbr.rel (%p222) target = $region24
    $region23: #{_lambda_.26} parent=5 // pred_region
      // Predicated region
      $region25: #{_lambda_.26} parent=23 // pred_check
        %p225 = pneg %p46
      $region26: #{_lambda_.26} parent=23 // pred_check_branch
        %227 = sbr.rel (%p225) target = $region28
      $region27: #{_lambda_.26} parent=23 // pred_region
        %s228 = smul.u32 4, %s20
        %p229 = scmp.lt.s32.totalorder %s19, 1
        %s230 = scalar_select %p229, %s19, 1
        %p231 = scmp.lt.s32.totalorder %s228, 3
        %s232 = scalar_select %p231, %s228, 3
        %s233 = smul.addr %s230, 4
        %s234 = sadd.s32 %s232, %s233
        %s235 = smul.addr %s234, 4
        %s236 = scalar_lea.vmem %s0, %s235
        %s237 = smul.u32 4, %s20
      $region28: #{_lambda_.26} parent=23 // pred_fallthru
        _
      // Predicated region
      $region29: #{_lambda_.26} parent=23 // pred_check
        %p238 = pneg %p72
      $region30: #{_lambda_.26} parent=23 // pred_check_branch
        %240 = sbr.rel (%p238) target = $region32
      $region31: #{_lambda_.26} parent=23 // pred_region
        %p241 = scmp.lt.s32.totalorder %s19, 1
        %s242 = scalar_select %p241, %s19, 1
        %s243 = smul.addr %s242, 4
        %s244 = smul.addr %s243, 4
        %s245 = scalar_lea.vmem %s1, %s244
      $region32: #{_lambda_.26} parent=23 // pred_fallthru
        _
      // Predicated region
      $region33: #{_lambda_.26} parent=23 // pred_check
        %p246 = pneg %p98
      $region34: #{_lambda_.26} parent=23 // pred_check_branch
        %248 = sbr.rel (%p246) target = $region36
      $region35: #{_lambda_.26} parent=23 // pred_region
        %p249 = scmp.lt.s32.totalorder %s19, 1
        %s250 = scalar_select %p249, %s19, 1
        %s251 = smul.addr %s250, 4
        %s252 = smul.addr %s251, 4
        %s253 = scalar_lea.vmem %s2, %s252
      $region36: #{_lambda_.26} parent=23 // pred_fallthru
        _
      // Predicated region
      $region37: #{_lambda_.26} parent=23 // pred_check
        %p254 = pneg %p124
      $region38: #{_lambda_.26} parent=23 // pred_check_branch
        %256 = sbr.rel (%p254) target = $region40
      $region39: #{_lambda_.26} parent=23 // pred_region
        %p257 = scmp.lt.s32.totalorder %s19, 1
        %s258 = scalar_select %p257, %s19, 1
        %s259 = scalar_lea.vmem %s3, %s258
      $region40: #{_lambda_.26} parent=23 // pred_fallthru
        _
    $region24: #{_lambda_.26} parent=5 // pred_fallthru
      _
    %p260 = scmp.le.s32.totalorder 1, %s12
    %p261 = scmp.lt.s32.totalorder %s12, 3
    %p262 = pnand %p260, %p261
    %p263 = pneg %p262
    // Predicated region
    $region41: #{_lambda_.26} parent=5 // pred_check
      _
    $region42: #{_lambda_.26} parent=5 // pred_check_branch
      %265 = sbr.rel (%p262) target = $region44
    $region43: #{_lambda_.26} parent=5 // pred_region
      %s266 = ssub.s32 %s12, 1
      %s267 = smul.u32 4, %s22
      %p268 = scmp.lt.s32.totalorder %s21, 1
      %s269 = scalar_select %p268, %s21, 1
      %p270 = scmp.lt.s32.totalorder %s267, 3
      %s271 = scalar_select %p270, %s267, 3
      %s272 = smul.addr %s269, 4
      %s273 = sadd.s32 %s271, %s272
      %s274 = smul.addr %s273, 4
      %s275 = scalar_lea.vmem %s0, %s274
      %p276 = pneg %p52
      %p277 = pneg %p49
      %p278 = scmp.lt.s32.totalorder %s21, 1
      %s279 = scalar_select %p278, %s21, 1
      %s280 = smul.addr %s279, 4
      %s281 = smul.addr %s280, 4
      %s282 = scalar_lea.vmem %s1, %s281
      %p283 = pneg %p78
      %p284 = pneg %p75
      %p285 = scmp.lt.s32.totalorder %s21, 1
      %s286 = scalar_select %p285, %s21, 1
      %s287 = smul.addr %s286, 4
      %s288 = smul.addr %s287, 4
      %s289 = scalar_lea.vmem %s2, %s288
      %p290 = pneg %p104
      %p291 = pneg %p101
      %p292 = scmp.lt.s32.totalorder %s21, 1
      %s293 = scalar_select %p292, %s21, 1
      %s294 = scalar_lea.vmem %s3, %s293
      %p295 = pneg %p130
      %p296 = pneg %p127
      %p297 = pneg %p151
      %p298 = pneg %p148
      %p299 = pneg %p172
      %p300 = pneg %p169
      %p301 = pneg %p200
      %p302 = pneg %p197
      %s303 = smul.u32 4, %s22
      %p304 = scmp.lt.s32.totalorder %s21, 1
      %s305 = scalar_select %p304, %s21, 1
      %p306 = scmp.lt.s32.totalorder %s303, 3
      %s307 = scalar_select %p306, %s303, 3
      %s308 = smul.addr %s305, 4
      %s309 = sadd.s32 %s307, %s308
      %s310 = smul.addr %s309, 8
      %s311 = scalar_lea.vmem %s6, %s310
      %s312 = smul.u32 4, %s22
      %p313 = scmp.lt.s32.totalorder %s21, 1
      %s314 = scalar_select %p313, %s21, 1
      %p315 = scmp.lt.s32.totalorder %s312, 3
      %s316 = scalar_select %p315, %s312, 3
      %s317 = smul.addr %s314, 4
      %s318 = sadd.s32 %s316, %s317
      %s319 = smul.addr %s318, 4
      %s320 = scalar_lea.vmem %s0, %s319
      %s321 = smul.u32 4, %s22
      %p322 = scmp.lt.s32.totalorder %s21, 1
      %s323 = scalar_select %p322, %s21, 1
      %s324 = smul.addr %s323, 4
      %s325 = smul.addr %s324, 4
      %s326 = scalar_lea.vmem %s1, %s325
      %p327 = scmp.lt.s32.totalorder %s21, 1
      %s328 = scalar_select %p327, %s21, 1
      %s329 = smul.addr %s328, 4
      %s330 = smul.addr %s329, 4
      %s331 = scalar_lea.vmem %s2, %s330
      %p332 = scmp.lt.s32.totalorder %s21, 1
      %s333 = scalar_select %p332, %s21, 1
      %s334 = scalar_lea.vmem %s3, %s333
      %s335 = smul.u32 4, %s22
      %p336 = scmp.lt.s32.totalorder %s21, 1
      %s337 = scalar_select %p336, %s21, 1
      %p338 = scmp.lt.s32.totalorder %s335, 3
      %s339 = scalar_select %p338, %s335, 3
      %s340 = smul.addr %s337, 4
      %s341 = sadd.s32 %s339, %s340
      %s342 = smul.addr %s341, 8
      %s343 = scalar_lea.vmem %s6, %s342
      %s344 = smul.u32 4, %s22
      %v346 = vld [vmem:[%s334] sm:$0x1]
      %v347 = vld [vmem:[%s320] sm:$0xf]
      %v348 = vld [vmem:[%s320 + $0x4] sm:$0xf]
      %v349 = vld [vmem:[%s320 + $0x8] sm:$0xf]
      %v350 = vld [vmem:[%s320 + $0xc] sm:$0xf]
      %v351 = vld [vmem:[%s326] sm:$0xf]
      %v352 = vld [vmem:[%s326 + $0x4] sm:$0xf]
      %v353 = vld [vmem:[%s326 + $0x8] sm:$0xf]
      %v354 = vld [vmem:[%s326 + $0xc] sm:$0xf]
      %v355 = vld [vmem:[%s331] sm:$0xf]
      %v356 = vld [vmem:[%s331 + $0x4] sm:$0xf]
      %v357 = vld [vmem:[%s331 + $0x8] sm:$0xf]
      %v358 = vld [vmem:[%s331 + $0xc] sm:$0xf]
      %v363 = vunpack.c.l.b16 %v347
      %v364 = vunpack.c.l.b16 %v348
      %v365 = vunpack.c.l.b16 %v349
      %v366 = vunpack.c.l.b16 %v350
      %v367 = vpack.c.b16 %v364, %v363
      %v368 = vpack.c.b16 %v366, %v365
      %v373 = vunpack.c.l.b16 %v351
      %v374 = vunpack.c.l.b16 %v352
      %v375 = vunpack.c.l.b16 %v353
      %v376 = vunpack.c.l.b16 %v354
      %v377 = vpack.c.b16 %v374, %v373
      %v378 = vpack.c.b16 %v376, %v375
      %vm379 = vcmask 130048
      %v381 = vsel %vm379, %v367, 0
      %v384 = vsel %vm379, %v368, 0
      %v387 = vsel %vm379, %v377, 0
      %v390 = vsel %vm379, %v378, 0
      %392 = vmatpush.bf16.xpose.msra.mxu0 0
      %393 = vmatpush.bf16.xpose.msra.mxu0 0
      %394 = vmatpush.bf16.xpose.msra.mxu0 0
      %395 = vmatpush.bf16.xpose.msra.mxu0 0
      %396 = vmatpush.bf16.xpose.msra.mxu0 0
      %397 = vmatpush.bf16.xpose.msra.mxu0 0
      %398 = vmatpush.bf16.xpose.msra.mxu0 %v390
      %399 = vmatpush.bf16.xpose.msra.mxu0 %v387
      %400 = vmatmul.bf16.gmra.mxu0 %v381
      %v401 = vpop.f32.mrf.mxu0
      %v402 = vadd.f32 0.0, %v401
      %v403 = vpop.f32.mrf.mxu0
      %v404 = vadd.f32 0.0, %v403
      %405 = vmatmul.bf16.gmra.mxu0 %v384
      %v406 = vpop.f32.mrf.mxu0
      %v407 = vadd.f32 0.0, %v406
      %v408 = vpop.f32.mrf.mxu0
      %v409 = vadd.f32 0.0, %v408
      %410 = vdwg.mxu0
      %v411 = vmul.f32 %v402, 0.25
      %v412 = vmul.f32 %v404, 0.25
      %v413 = vmul.f32 %v407, 0.25
      %v414 = vmul.f32 %v409, 0.25
      %v416 = vperm.slane %v346, 0
      %v418 = vadd.f32 %v411, %v416
      %v419 = vadd.f32 %v412, %v416
      %v420 = vadd.f32 %v413, %v416
      %v421 = vadd.f32 %v414, %v416
      %vm422 = vcmask 261120
      %v423 = vsel %vm422, %v418, -inf
      %424 = vmax.xlane.f32.xlu0 %v423
      %v425 = vpop.xlane.xlu0 %424
      %v426 = vsel %vm422, %v419, -inf
      %427 = vmax.xlane.f32.xlu0 %v426
      %v428 = vpop.xlane.xlu0 %427
      %v429 = vsel %vm422, %v420, -inf
      %430 = vmax.xlane.f32.xlu0 %v429
      %v431 = vpop.xlane.xlu0 %430
      %v432 = vsel %vm422, %v421, -inf
      %433 = vmax.xlane.f32.xlu0 %v432
      %v434 = vpop.xlane.xlu0 %433
      %v435 = vsub.f32 %v418, %v425
      %v436 = vsub.f32 %v419, %v428
      %v437 = vsub.f32 %v420, %v431
      %v438 = vsub.f32 %v421, %v434
      %v439 = vmul.f32 %v435, 1.442695
      %v440 = vpow.pop %v439
      %v441 = vmul.f32 %v436, 1.442695
      %v442 = vpow.pop %v441
      %v443 = vmul.f32 %v437, 1.442695
      %v444 = vpow.pop %v443
      %v445 = vmul.f32 %v438, 1.442695
      %v446 = vpow.pop %v445
      %v447 = vsel %vm422, %v440, 0.0
      %448 = vadd.xlane.f32.xlu0 %v447
      %v449 = vpop.xlane.xlu0 %448
      %v450 = vsel %vm422, %v442, 0.0
      %451 = vadd.xlane.f32.xlu0 %v450
      %v452 = vpop.xlane.xlu0 %451
      %v453 = vsel %vm422, %v444, 0.0
      %454 = vadd.xlane.f32.xlu0 %v453
      %v455 = vpop.xlane.xlu0 %454
      %v456 = vsel %vm422, %v446, 0.0
      %457 = vadd.xlane.f32.xlu0 %v456
      %v458 = vpop.xlane.xlu0 %457
      %v459 = vrcp.pop %v449
      %v460 = vrcp.pop %v452
      %v461 = vrcp.pop %v455
      %v462 = vrcp.pop %v458
      %v463 = vmul.f32 %v440, %v459
      %v464 = vmul.f32 %v442, %v460
      %v465 = vmul.f32 %v444, %v461
      %v466 = vmul.f32 %v446, %v462
      %v467 = vpack.c.bf16 %v464, %v463
      %v468 = vpack.c.bf16 %v466, %v465
      %v473 = vunpack.c.l.b16 %v355
      %v474 = vunpack.c.l.b16 %v356
      %v475 = vunpack.c.l.b16 %v357
      %v476 = vunpack.c.l.b16 %v358
      %v477 = vpack.c.b16 %v474, %v473
      %v478 = vpack.c.b16 %v476, %v475
      %v482 = vsel %vm422, %v467, 0
      %v485 = vsel %vm422, %v468, 0
      %487 = vmatpush.bf16.msra.mxu0 0
      %488 = vmatpush.bf16.msra.mxu0 0
      %489 = vmatpush.bf16.msra.mxu0 0
      %490 = vmatpush.bf16.msra.mxu0 0
      %491 = vmatpush.bf16.msra.mxu0 0
      %492 = vmatpush.bf16.msra.mxu0 0
      %493 = vmatpush.bf16.msra.mxu0 %v478
      %494 = vmatpush.bf16.msra.mxu0 %v477
      %495 = vmatmul.bf16.gmra.mxu0 %v482
      %v496 = vpop.f32.mrf.mxu0
      %v497 = vadd.f32 0.0, %v496
      %v498 = vpop.f32.mrf.mxu0
      %v499 = vadd.f32 0.0, %v498
      %500 = vmatmul.bf16.gmra.mxu0 %v485
      %v501 = vpop.f32.mrf.mxu0
      %v502 = vadd.f32 0.0, %v501
      %v503 = vpop.f32.mrf.mxu0
      %v504 = vadd.f32 0.0, %v503
      %505 = vdwg.mxu0
      %v506 = vpack.c.bf16 %v499, %v497
      %v507 = vpack.c.bf16 %v504, %v502
      %v508 = vld [vmem:[%s4] sm:$0xf]
      %v509 = vld [vmem:[%s4 + $0x4] sm:$0xf]
      %510 = vrot.lane.b32.xlu0 %v367, 112
      %v511 = vpop.permute.xlu0 %510
      %512 = vrot.lane.b32.xlu0 %v368, 112
      %v513 = vpop.permute.xlu0 %512
      %514 = vrot.lane.b32.xlu0 %v377, 112
      %v515 = vpop.permute.xlu0 %514
      %516 = vrot.lane.b32.xlu0 %v378, 112
      %v517 = vpop.permute.xlu0 %516
      %v519 = vsel %vm379, %v511, 0
      %v522 = vsel %vm379, %v513, 0
      %v525 = vsel %vm379, %v515, 0
      %v528 = vsel %vm379, %v517, 0
      %530 = vmatpush.bf16.xpose.msra.mxu0 0
      %531 = vmatpush.bf16.xpose.msra.mxu0 0
      %532 = vmatpush.bf16.xpose.msra.mxu0 0
      %533 = vmatpush.bf16.xpose.msra.mxu0 0
      %534 = vmatpush.bf16.xpose.msra.mxu0 0
      %535 = vmatpush.bf16.xpose.msra.mxu0 0
      %536 = vmatpush.bf16.xpose.msra.mxu0 %v528
      %537 = vmatpush.bf16.xpose.msra.mxu0 %v525
      %538 = vmatmul.bf16.gmra.mxu0 %v519
      %v539 = vpop.f32.mrf.mxu0
      %v540 = vadd.f32 0.0, %v539
      %v541 = vpop.f32.mrf.mxu0
      %v542 = vadd.f32 0.0, %v541
      %543 = vmatmul.bf16.gmra.mxu0 %v522
      %v544 = vpop.f32.mrf.mxu0
      %v545 = vadd.f32 0.0, %v544
      %v546 = vpop.f32.mrf.mxu0
      %v547 = vadd.f32 0.0, %v546
      %548 = vdwg.mxu0
      %v549 = vmul.f32 %v540, 0.25
      %v550 = vmul.f32 %v542, 0.25
      %v551 = vmul.f32 %v545, 0.25
      %v552 = vmul.f32 %v547, 0.25
      %v553 = vadd.f32 %v549, %v416
      %v554 = vadd.f32 %v550, %v416
      %v555 = vadd.f32 %v551, %v416
      %v556 = vadd.f32 %v552, %v416
      %v557 = vsel %vm422, %v553, -inf
      %558 = vmax.xlane.f32.xlu0 %v557
      %v559 = vpop.xlane.xlu0 %558
      %v560 = vsel %vm422, %v554, -inf
      %561 = vmax.xlane.f32.xlu0 %v560
      %v562 = vpop.xlane.xlu0 %561
      %v563 = vsel %vm422, %v555, -inf
      %564 = vmax.xlane.f32.xlu0 %v563
      %v565 = vpop.xlane.xlu0 %564
      %v566 = vsel %vm422, %v556, -inf
      %567 = vmax.xlane.f32.xlu0 %v566
      %v568 = vpop.xlane.xlu0 %567
      %v569 = vsub.f32 %v553, %v559
      %v570 = vsub.f32 %v554, %v562
      %v571 = vsub.f32 %v555, %v565
      %v572 = vsub.f32 %v556, %v568
      %v573 = vmul.f32 %v569, 1.442695
      %v574 = vpow.pop %v573
      %v575 = vmul.f32 %v570, 1.442695
      %v576 = vpow.pop %v575
      %v577 = vmul.f32 %v571, 1.442695
      %v578 = vpow.pop %v577
      %v579 = vmul.f32 %v572, 1.442695
      %v580 = vpow.pop %v579
      %v581 = vsel %vm422, %v574, 0.0
      %582 = vadd.xlane.f32.xlu0 %v581
      %v583 = vpop.xlane.xlu0 %582
      %v584 = vsel %vm422, %v576, 0.0
      %585 = vadd.xlane.f32.xlu0 %v584
      %v586 = vpop.xlane.xlu0 %585
      %v587 = vsel %vm422, %v578, 0.0
      %588 = vadd.xlane.f32.xlu0 %v587
      %v589 = vpop.xlane.xlu0 %588
      %v590 = vsel %vm422, %v580, 0.0
      %591 = vadd.xlane.f32.xlu0 %v590
      %v592 = vpop.xlane.xlu0 %591
      %v593 = vrcp.pop %v583
      %v594 = vrcp.pop %v586
      %v595 = vrcp.pop %v589
      %v596 = vrcp.pop %v592
      %v597 = vmul.f32 %v574, %v593
      %v598 = vmul.f32 %v576, %v594
      %v599 = vmul.f32 %v578, %v595
      %v600 = vmul.f32 %v580, %v596
      %v601 = vpack.c.bf16 %v598, %v597
      %v602 = vpack.c.bf16 %v600, %v599
      %603 = vrot.lane.b32.xlu0 %v477, 112
      %v604 = vpop.permute.xlu0 %603
      %605 = vrot.lane.b32.xlu0 %v478, 112
      %v606 = vpop.permute.xlu0 %605
      %v610 = vsel %vm422, %v601, 0
      %v613 = vsel %vm422, %v602, 0
      %615 = vmatpush.bf16.msra.mxu0 0
      %616 = vmatpush.bf16.msra.mxu0 0
      %617 = vmatpush.bf16.msra.mxu0 0
      %618 = vmatpush.bf16.msra.mxu0 0
      %619 = vmatpush.bf16.msra.mxu0 0
      %620 = vmatpush.bf16.msra.mxu0 0
      %621 = vmatpush.bf16.msra.mxu0 %v606
      %622 = vmatpush.bf16.msra.mxu0 %v604
      %623 = vmatmul.bf16.gmra.mxu0 %v610
      %v624 = vpop.f32.mrf.mxu0
      %v625 = vadd.f32 0.0, %v624
      %v626 = vpop.f32.mrf.mxu0
      %v627 = vadd.f32 0.0, %v626
      %628 = vmatmul.bf16.gmra.mxu0 %v613
      %v629 = vpop.f32.mrf.mxu0
      %v630 = vadd.f32 0.0, %v629
      %v631 = vpop.f32.mrf.mxu0
      %v632 = vadd.f32 0.0, %v631
      %633 = vdwg.mxu0
      %v634 = vpack.c.bf16 %v627, %v625
      %v635 = vpack.c.bf16 %v632, %v630
      %v636 = vld [vmem:[%s4 + $0x8] sm:$0xf]
      %v637 = vld [vmem:[%s4 + $0xc] sm:$0xf]
      %v640 = vunpack.c.l.b16 %v636
      %v641 = vunpack.c.l.b16 %v637
      %v642 = vpack.c.b16 %v641, %v640
      %v645 = vsel %vm379, %v634, 0
      %v648 = vsel %vm379, %v635, 0
      %650 = vmatpush.bf16.msra.mxu0 0
      %651 = vmatpush.bf16.msra.mxu0 0
      %652 = vmatpush.bf16.msra.mxu0 0
      %653 = vmatpush.bf16.msra.mxu0 0
      %654 = vmatpush.bf16.msra.mxu0 0
      %655 = vmatpush.bf16.msra.mxu0 0
      %656 = vmatpush.bf16.msra.mxu0 0
      %657 = vmatpush.bf16.msra.mxu0 %v642
      %658 = vmatmul.bf16.gmra.mxu0 %v645
      %v659 = vpop.f32.mrf.mxu0
      %v660 = vadd.f32 0.0, %v659
      %v661 = vpop.f32.mrf.mxu0
      %v662 = vadd.f32 0.0, %v661
      %663 = vmatmul.bf16.gmra.mxu0 %v648
      %v664 = vpop.f32.mrf.mxu0
      %v665 = vadd.f32 0.0, %v664
      %v666 = vpop.f32.mrf.mxu0
      %v667 = vadd.f32 0.0, %v666
      %668 = vdwg.mxu0
      %v671 = vunpack.c.l.b16 %v508
      %v672 = vunpack.c.l.b16 %v509
      %v673 = vpack.c.b16 %v672, %v671
      %v676 = vsel %vm379, %v506, 0
      %v679 = vsel %vm379, %v507, 0
      %681 = vmatpush.bf16.msra.mxu0 0
      %682 = vmatpush.bf16.msra.mxu0 0
      %683 = vmatpush.bf16.msra.mxu0 0
      %684 = vmatpush.bf16.msra.mxu0 0
      %685 = vmatpush.bf16.msra.mxu0 0
      %686 = vmatpush.bf16.msra.mxu0 0
      %687 = vmatpush.bf16.msra.mxu0 0
      %688 = vmatpush.bf16.msra.mxu0 %v673
      %689 = vmatmul.bf16.gmra.mxu0 %v676
      %v690 = vpop.f32.mrf.mxu0
      %v691 = vadd.f32 %v660, %v690
      %v692 = vpop.f32.mrf.mxu0
      %v693 = vadd.f32 %v662, %v692
      %694 = vmatmul.bf16.gmra.mxu0 %v679
      %v695 = vpop.f32.mrf.mxu0
      %v696 = vadd.f32 %v665, %v695
      %v697 = vpop.f32.mrf.mxu0
      %v698 = vadd.f32 %v667, %v697
      %699 = vdwg.mxu0
      %v700 = vld [vmem:[%s5] sm:$0x1]
      %v702 = vperm.slane %v700, 0
      %v704 = vadd.f32 %v691, %v702
      %v705 = vadd.f32 %v693, %v702
      %v706 = vadd.f32 %v696, %v702
      %v707 = vadd.f32 %v698, %v702
      %708 = vst.msk [vmem:[%s343] sm:$0xff] %vm422, %v704
      %709 = vst.msk [vmem:[%s343 + $0x8] sm:$0xff] %vm422, %v705
      %710 = vst.msk [vmem:[%s343 + $0x10] sm:$0xff] %vm422, %v706
      %711 = vst.msk [vmem:[%s343 + $0x18] sm:$0xff] %vm422, %v707
      %s712 = smul.u32 4, %s22
      %p713 = scmp.lt.s32.totalorder %s21, 1
      %s714 = scalar_select %p713, %s21, 1
      %p715 = scmp.lt.s32.totalorder %s712, 3
      %s716 = scalar_select %p715, %s712, 3
      %s717 = smul.addr %s714, 4
      %s718 = sadd.s32 %s716, %s717
      %s719 = smul.addr %s718, 8
      %s720 = scalar_lea.vmem %s6, %s719
      // Predicated region
      $region45: #{_lambda_.26} parent=43 // pred_check
        %p721 = pneg %p197
      $region46: #{_lambda_.26} parent=43 // pred_check_branch
        %723 = sbr.rel (%p721) target = $region48
      $region47: #{_lambda_.26} parent=43 // pred_region
        %s724 = smul.u32 4, %s22
      $region48: #{_lambda_.26} parent=43 // pred_fallthru
        _
    $region44: #{_lambda_.26} parent=5 // pred_fallthru
      _
    %p725 = scmp.le.s32.totalorder 2, %s12
    // Predicated region
    $region49: #{_lambda_.26} parent=5 // pred_check
      %p726 = pneg %p725
    $region50: #{_lambda_.26} parent=5 // pred_check_branch
      %728 = sbr.rel (%p726) target = $region52
    $region51: #{_lambda_.26} parent=5 // pred_region
      %s729 = ssub.s32 %s12, 2
      // Predicated region
      $region53: #{_lambda_.26} parent=51 // pred_check
        %p730 = pneg %p203
      $region54: #{_lambda_.26} parent=51 // pred_check_branch
        %732 = sbr.rel (%p730) target = $region56
      $region55: #{_lambda_.26} parent=51 // pred_region
        %s733 = smul.u32 4, %s24
        %p734 = scmp.lt.s32.totalorder %s23, 1
        %s735 = scalar_select %p734, %s23, 1
        %p736 = scmp.lt.s32.totalorder %s733, 3
        %s737 = scalar_select %p736, %s733, 3
        %s738 = smul.addr %s735, 4
        %s739 = sadd.s32 %s737, %s738
        %s740 = smul.addr %s739, 8
        %s741 = scalar_lea.vmem %s6, %s740
      $region56: #{_lambda_.26} parent=51 // pred_fallthru
        _
    $region52: #{_lambda_.26} parent=5 // pred_fallthru
      _
  $region6: #{_lambda_.26} parent=0 // loop_footer
    %s16 = sadd.s32 1, %s12
  $region7: #{_lambda_.26} parent=0 // loop_footer_branch
    %11 = sbr.rel target = $region3
  $region8: #{_lambda_.26} parent=0 // loop_exit
    _

// kernel: _lambda_.27
$region0: #{_lambda_.27}
  #allocation0 [shape = 'u32[]', space=smem, size = 0x4, offset = 0x4, fixed_abs, tag = 'smem constant byte address 0x4 - core index']
  #allocation1 [shape = 'u32[72,128]{1,0:T(1,128)}', space=vmem, size = 0x9000, scoped, tag = 'internal scratch']
  #allocation2 [shape = 'bf16[48,32]{1,0:T(8,128)(2,1)}', space=vmem, size = 0x3000, scoped, tag = 'scratch operand']
  #allocation3 [shape = 'bf16[48,64]{1,0:T(8,128)(2,1)}', space=vmem, size = 0x3000, scoped, tag = 'scratch operand']
  %s0 = inlined_call_operand.vmem [shape: f32[2,32,32], index: 0, kind: input, shape index: {}]
  %s1 = inlined_call_operand.vmem [shape: f32[2,32,32], index: 1, kind: input, shape index: {}]
  %s2 = inlined_call_operand.vmem [shape: f32[2,32,1], index: 2, kind: input, shape index: {}]
  %s3 = inlined_call_operand.vmem [shape: f32[1,32], index: 3, kind: input, shape index: {}]
  %s4 = inlined_call_operand.vmem [shape: f32[1,32], index: 4, kind: input, shape index: {}]
  %s5 = inlined_call_operand.vmem [shape: bf16[3,32,64], index: 5, kind: input, shape index: {}]
  %s6 = inlined_call_operand.vmem [shape: f32[1,64], index: 6, kind: input, shape index: {}]
  %s7 = inlined_call_operand.vmem [shape: bf16[3,64,32], index: 7, kind: input, shape index: {}]
  %s8 = inlined_call_operand.vmem [shape: f32[1,32], index: 8, kind: input, shape index: {}]
  %s9 = inlined_call_operand.vmem [shape: f32[1,32], index: 9, kind: input, shape index: {}]
  %s10 = inlined_call_operand.vmem [shape: f32[1,32], index: 10, kind: input, shape index: {}]
  %s11 = inlined_call_operand.vmem [shape: f32[2,32,32], index: 11, kind: output, shape index: {}]
  %s12 = sld [smem:[#allocation0]]
  $region77: #{_lambda_.27} parent=0
    _
  %s14 = ssub.s32 1, %s12
  %s15 = scalar_select 0, %s14, %s12
  loop: start=0, step=1, limit=4
  $region2: #{_lambda_.27} parent=0 // loop_pre_header
    _
  $region3: #{_lambda_.27} parent=0 // loop_header
    %s17 = sphi 0, %s21
    %p18 = scmp.ge.s32.totalorder %s17, 4
    %s27 = sphi 0, %s29
    %s30 = sphi 0, %s27
    %s31 = sphi 0, %s30
    %s47 = sphi 0, %s31
    %s53 = sphi 0, %s55
    %s56 = sphi 0, %s53
    %s57 = sphi 0, %s56
    %s73 = sphi 0, %s57
    %s79 = sphi 0, %s81
    %s82 = sphi 0, %s79
    %s83 = sphi 0, %s82
    %s99 = sphi 0, %s83
    %s103 = sphi 0, %s103
    %s105 = sphi 0, %s103
    %s106 = sphi 0, %s105
    %s120 = sphi 0, %s106
    %s124 = sphi 0, %s124
    %s126 = sphi 0, %s124
    %s127 = sphi 0, %s126
    %s141 = sphi 0, %s127
    %s145 = sphi 0, %s145
    %s147 = sphi 0, %s145
    %s148 = sphi 0, %s147
    %s162 = sphi 0, %s148
    %s166 = sphi 0, %s166
    %s168 = sphi 0, %s166
    %s169 = sphi 0, %s168
    %s183 = sphi 0, %s169
    %s187 = sphi 0, %s187
    %s189 = sphi 0, %s187
    %s190 = sphi 0, %s189
    %s204 = sphi 0, %s190
    %s208 = sphi 0, %s208
    %s210 = sphi 0, %s208
    %s211 = sphi 0, %s210
    %s225 = sphi 0, %s211
    %s229 = sphi 0, %s229
    %s231 = sphi 0, %s229
    %s232 = sphi 0, %s231
    %s246 = sphi 0, %s232
    %s250 = sphi 0, %s250
    %s252 = sphi 0, %s250
    %s253 = sphi 0, %s252
    %s267 = sphi 0, %s253
    %s273 = sphi 0, %s275
    %s276 = sphi 0, %s273
    %s277 = sphi 0, %s276
    %s293 = sphi 0, %s277
  $region4: #{_lambda_.27} parent=0 // loop_header_branch
    %20 = sbr.rel (%p18) target = $region8
  $region5: #{_lambda_.27} parent=0 // loop_body
    %s22 = ssub.s32 %s17, 1
    %s23 = ssub.s32 %s17, 2
    %s24 = sadd.s32 %s17, 1
    %s25 = ssub.s32 %s17, %s24
    %p26 = scmp.eq.s32.totalorder %s25, 0
    %s28 = sadd.s32 %s27, 1
    %s29 = scalar_select %p26, %s27, %s28
    %p32 = pneg %p26
    %p33 = scmp.eq.s32.totalorder %s17, 1
    %p34 = por %p32, %p33
    %p35 = scmp.ne.s32.totalorder %s27, %s30
    %p36 = scmp.eq.s32.totalorder %s17, 0
    %p37 = por %p35, %p36
    %p38 = scmp.ne.s32.totalorder %s27, %s30
    %p39 = scmp.eq.s32.totalorder %s22, 1
    %p40 = por %p38, %p39
    %p41 = scmp.ne.s32.totalorder %s30, %s31
    %p42 = scmp.eq.s32.totalorder %s22, 0
    %p43 = por %p41, %p42
    %p44 = scmp.ne.s32.totalorder %s30, %s31
    %p45 = scmp.eq.s32.totalorder %s23, 1
    %p46 = por %p44, %p45
    %p48 = scmp.ne.s32.totalorder %s31, %s47
    %p49 = scmp.eq.s32.totalorder %s23, 0
    %p50 = por %p48, %p49
    %s51 = ssub.s32 %s17, %s24
    %p52 = scmp.eq.s32.totalorder %s51, 0
    %s54 = sadd.s32 %s53, 1
    %s55 = scalar_select %p52, %s53, %s54
    %p58 = pneg %p52
    %p59 = scmp.eq.s32.totalorder %s17, 1
    %p60 = por %p58, %p59
    %p61 = scmp.ne.s32.totalorder %s53, %s56
    %p62 = scmp.eq.s32.totalorder %s17, 0
    %p63 = por %p61, %p62
    %p64 = scmp.ne.s32.totalorder %s53, %s56
    %p65 = scmp.eq.s32.totalorder %s22, 1
    %p66 = por %p64, %p65
    %p67 = scmp.ne.s32.totalorder %s56, %s57
    %p68 = scmp.eq.s32.totalorder %s22, 0
    %p69 = por %p67, %p68
    %p70 = scmp.ne.s32.totalorder %s56, %s57
    %p71 = scmp.eq.s32.totalorder %s23, 1
    %p72 = por %p70, %p71
    %p74 = scmp.ne.s32.totalorder %s57, %s73
    %p75 = scmp.eq.s32.totalorder %s23, 0
    %p76 = por %p74, %p75
    %s77 = ssub.s32 %s17, %s24
    %p78 = scmp.eq.s32.totalorder %s77, 0
    %s80 = sadd.s32 %s79, 1
    %s81 = scalar_select %p78, %s79, %s80
    %p84 = pneg %p78
    %p85 = scmp.eq.s32.totalorder %s17, 1
    %p86 = por %p84, %p85
    %p87 = scmp.ne.s32.totalorder %s79, %s82
    %p88 = scmp.eq.s32.totalorder %s17, 0
    %p89 = por %p87, %p88
    %p90 = scmp.ne.s32.totalorder %s79, %s82
    %p91 = scmp.eq.s32.totalorder %s22, 1
    %p92 = por %p90, %p91
    %p93 = scmp.ne.s32.totalorder %s82, %s83
    %p94 = scmp.eq.s32.totalorder %s22, 0
    %p95 = por %p93, %p94
    %p96 = scmp.ne.s32.totalorder %s82, %s83
    %p97 = scmp.eq.s32.totalorder %s23, 1
    %p98 = por %p96, %p97
    %p100 = scmp.ne.s32.totalorder %s83, %s99
    %p101 = scmp.eq.s32.totalorder %s23, 0
    %p102 = por %p100, %p101
    %s104 = sadd.s32 %s103, 1
    %p107 = scmp.eq.s32.totalorder %s17, 1
    %p108 = scmp.ne.s32.totalorder %s103, %s105
    %p109 = scmp.eq.s32.totalorder %s17, 0
    %p110 = por %p108, %p109
    %p111 = scmp.ne.s32.totalorder %s103, %s105
    %p112 = scmp.eq.s32.totalorder %s22, 1
    %p113 = por %p111, %p112
    %p114 = scmp.ne.s32.totalorder %s105, %s106
    %p115 = scmp.eq.s32.totalorder %s22, 0
    %p116 = por %p114, %p115
    %p117 = scmp.ne.s32.totalorder %s105, %s106
    %p118 = scmp.eq.s32.totalorder %s23, 1
    %p119 = por %p117, %p118
    %p121 = scmp.ne.s32.totalorder %s106, %s120
    %p122 = scmp.eq.s32.totalorder %s23, 0
    %p123 = por %p121, %p122
    %s125 = sadd.s32 %s124, 1
    %p128 = scmp.eq.s32.totalorder %s17, 1
    %p129 = scmp.ne.s32.totalorder %s124, %s126
    %p130 = scmp.eq.s32.totalorder %s17, 0
    %p131 = por %p129, %p130
    %p132 = scmp.ne.s32.totalorder %s124, %s126
    %p133 = scmp.eq.s32.totalorder %s22, 1
    %p134 = por %p132, %p133
    %p135 = scmp.ne.s32.totalorder %s126, %s127
    %p136 = scmp.eq.s32.totalorder %s22, 0
    %p137 = por %p135, %p136
    %p138 = scmp.ne.s32.totalorder %s126, %s127
    %p139 = scmp.eq.s32.totalorder %s23, 1
    %p140 = por %p138, %p139
    %p142 = scmp.ne.s32.totalorder %s127, %s141
    %p143 = scmp.eq.s32.totalorder %s23, 0
    %p144 = por %p142, %p143
    %s146 = sadd.s32 %s145, 1
    %p149 = scmp.eq.s32.totalorder %s17, 1
    %p150 = scmp.ne.s32.totalorder %s145, %s147
    %p151 = scmp.eq.s32.totalorder %s17, 0
    %p152 = por %p150, %p151
    %p153 = scmp.ne.s32.totalorder %s145, %s147
    %p154 = scmp.eq.s32.totalorder %s22, 1
    %p155 = por %p153, %p154
    %p156 = scmp.ne.s32.totalorder %s147, %s148
    %p157 = scmp.eq.s32.totalorder %s22, 0
    %p158 = por %p156, %p157
    %p159 = scmp.ne.s32.totalorder %s147, %s148
    %p160 = scmp.eq.s32.totalorder %s23, 1
    %p161 = por %p159, %p160
    %p163 = scmp.ne.s32.totalorder %s148, %s162
    %p164 = scmp.eq.s32.totalorder %s23, 0
    %p165 = por %p163, %p164
    %s167 = sadd.s32 %s166, 1
    %p170 = scmp.eq.s32.totalorder %s17, 1
    %p171 = scmp.ne.s32.totalorder %s166, %s168
    %p172 = scmp.eq.s32.totalorder %s17, 0
    %p173 = por %p171, %p172
    %p174 = scmp.ne.s32.totalorder %s166, %s168
    %p175 = scmp.eq.s32.totalorder %s22, 1
    %p176 = por %p174, %p175
    %p177 = scmp.ne.s32.totalorder %s168, %s169
    %p178 = scmp.eq.s32.totalorder %s22, 0
    %p179 = por %p177, %p178
    %p180 = scmp.ne.s32.totalorder %s168, %s169
    %p181 = scmp.eq.s32.totalorder %s23, 1
    %p182 = por %p180, %p181
    %p184 = scmp.ne.s32.totalorder %s169, %s183
    %p185 = scmp.eq.s32.totalorder %s23, 0
    %p186 = por %p184, %p185
    %s188 = sadd.s32 %s187, 1
    %p191 = scmp.eq.s32.totalorder %s17, 1
    %p192 = scmp.ne.s32.totalorder %s187, %s189
    %p193 = scmp.eq.s32.totalorder %s17, 0
    %p194 = por %p192, %p193
    %p195 = scmp.ne.s32.totalorder %s187, %s189
    %p196 = scmp.eq.s32.totalorder %s22, 1
    %p197 = por %p195, %p196
    %p198 = scmp.ne.s32.totalorder %s189, %s190
    %p199 = scmp.eq.s32.totalorder %s22, 0
    %p200 = por %p198, %p199
    %p201 = scmp.ne.s32.totalorder %s189, %s190
    %p202 = scmp.eq.s32.totalorder %s23, 1
    %p203 = por %p201, %p202
    %p205 = scmp.ne.s32.totalorder %s190, %s204
    %p206 = scmp.eq.s32.totalorder %s23, 0
    %p207 = por %p205, %p206
    %s209 = sadd.s32 %s208, 1
    %p212 = scmp.eq.s32.totalorder %s17, 1
    %p213 = scmp.ne.s32.totalorder %s208, %s210
    %p214 = scmp.eq.s32.totalorder %s17, 0
    %p215 = por %p213, %p214
    %p216 = scmp.ne.s32.totalorder %s208, %s210
    %p217 = scmp.eq.s32.totalorder %s22, 1
    %p218 = por %p216, %p217
    %p219 = scmp.ne.s32.totalorder %s210, %s211
    %p220 = scmp.eq.s32.totalorder %s22, 0
    %p221 = por %p219, %p220
    %p222 = scmp.ne.s32.totalorder %s210, %s211
    %p223 = scmp.eq.s32.totalorder %s23, 1
    %p224 = por %p222, %p223
    %p226 = scmp.ne.s32.totalorder %s211, %s225
    %p227 = scmp.eq.s32.totalorder %s23, 0
    %p228 = por %p226, %p227
    %s230 = sadd.s32 %s229, 1
    %p233 = scmp.eq.s32.totalorder %s17, 1
    %p234 = scmp.ne.s32.totalorder %s229, %s231
    %p235 = scmp.eq.s32.totalorder %s17, 0
    %p236 = por %p234, %p235
    %p237 = scmp.ne.s32.totalorder %s229, %s231
    %p238 = scmp.eq.s32.totalorder %s22, 1
    %p239 = por %p237, %p238
    %p240 = scmp.ne.s32.totalorder %s231, %s232
    %p241 = scmp.eq.s32.totalorder %s22, 0
    %p242 = por %p240, %p241
    %p243 = scmp.ne.s32.totalorder %s231, %s232
    %p244 = scmp.eq.s32.totalorder %s23, 1
    %p245 = por %p243, %p244
    %p247 = scmp.ne.s32.totalorder %s232, %s246
    %p248 = scmp.eq.s32.totalorder %s23, 0
    %p249 = por %p247, %p248
    %s251 = sadd.s32 %s250, 1
    %p254 = scmp.eq.s32.totalorder %s17, 1
    %p255 = scmp.ne.s32.totalorder %s250, %s252
    %p256 = scmp.eq.s32.totalorder %s17, 0
    %p257 = por %p255, %p256
    %p258 = scmp.ne.s32.totalorder %s250, %s252
    %p259 = scmp.eq.s32.totalorder %s22, 1
    %p260 = por %p258, %p259
    %p261 = scmp.ne.s32.totalorder %s252, %s253
    %p262 = scmp.eq.s32.totalorder %s22, 0
    %p263 = por %p261, %p262
    %p264 = scmp.ne.s32.totalorder %s252, %s253
    %p265 = scmp.eq.s32.totalorder %s23, 1
    %p266 = por %p264, %p265
    %p268 = scmp.ne.s32.totalorder %s253, %s267
    %p269 = scmp.eq.s32.totalorder %s23, 0
    %p270 = por %p268, %p269
    %s271 = ssub.s32 %s17, %s24
    %p272 = scmp.eq.s32.totalorder %s271, 0
    %s274 = sadd.s32 %s273, 1
    %s275 = scalar_select %p272, %s273, %s274
    %p278 = pneg %p272
    %p279 = scmp.eq.s32.totalorder %s17, 1
    %p280 = por %p278, %p279
    %p281 = scmp.ne.s32.totalorder %s273, %s276
    %p282 = scmp.eq.s32.totalorder %s17, 0
    %p283 = por %p281, %p282
    %p284 = scmp.ne.s32.totalorder %s273, %s276
    %p285 = scmp.eq.s32.totalorder %s22, 1
    %p286 = por %p284, %p285
    %p287 = scmp.ne.s32.totalorder %s276, %s277
    %p288 = scmp.eq.s32.totalorder %s22, 0
    %p289 = por %p287, %p288
    %p290 = scmp.ne.s32.totalorder %s276, %s277
    %p291 = scmp.eq.s32.totalorder %s23, 1
    %p292 = por %p290, %p291
    %p294 = scmp.ne.s32.totalorder %s277, %s293
    %p295 = scmp.eq.s32.totalorder %s23, 0
    %p296 = por %p294, %p295
    %p297 = scmp.le.s32.totalorder 1, %s17
    %p298 = scmp.lt.s32.totalorder %s17, 3
    %p299 = pnand %p297, %p298
    %p300 = pneg %p299
    // Predicated region
    $region9: #{_lambda_.27} parent=5 // pred_check
      _
    $region10: #{_lambda_.27} parent=5 // pred_check_branch
      %302 = sbr.rel (%p299) target = $region12
    $region11: #{_lambda_.27} parent=5 // pred_region
      %s303 = ssub.s32 %s17, 1
      // Predicated region
      $region13: #{_lambda_.27} parent=11 // pred_check
        %p304 = pneg %p116
      $region14: #{_lambda_.27} parent=11 // pred_check_branch
        %306 = sbr.rel (%p304) target = $region16
      $region15: #{_lambda_.27} parent=11 // pred_region
        _
      $region16: #{_lambda_.27} parent=11 // pred_fallthru
        _
      // Predicated region
      $region17: #{_lambda_.27} parent=11 // pred_check
        %p307 = pneg %p137
      $region18: #{_lambda_.27} parent=11 // pred_check_branch
        %309 = sbr.rel (%p307) target = $region20
      $region19: #{_lambda_.27} parent=11 // pred_region
        _
      $region20: #{_lambda_.27} parent=11 // pred_fallthru
        _
      // Predicated region
      $region21: #{_lambda_.27} parent=11 // pred_check
        %p310 = pneg %p158
      $region22: #{_lambda_.27} parent=11 // pred_check_branch
        %312 = sbr.rel (%p310) target = $region24
      $region23: #{_lambda_.27} parent=11 // pred_region
        _
      $region24: #{_lambda_.27} parent=11 // pred_fallthru
        _
      // Predicated region
      $region25: #{_lambda_.27} parent=11 // pred_check
        %p313 = pneg %p179
      $region26: #{_lambda_.27} parent=11 // pred_check_branch
        %315 = sbr.rel (%p313) target = $region28
      $region27: #{_lambda_.27} parent=11 // pred_region
        _
      $region28: #{_lambda_.27} parent=11 // pred_fallthru
        _
      // Predicated region
      $region29: #{_lambda_.27} parent=11 // pred_check
        %p316 = pneg %p200
      $region30: #{_lambda_.27} parent=11 // pred_check_branch
        %318 = sbr.rel (%p316) target = $region32
      $region31: #{_lambda_.27} parent=11 // pred_region
        _
      $region32: #{_lambda_.27} parent=11 // pred_fallthru
        _
      // Predicated region
      $region33: #{_lambda_.27} parent=11 // pred_check
        %p319 = pneg %p221
      $region34: #{_lambda_.27} parent=11 // pred_check_branch
        %321 = sbr.rel (%p319) target = $region36
      $region35: #{_lambda_.27} parent=11 // pred_region
        _
      $region36: #{_lambda_.27} parent=11 // pred_fallthru
        _
      // Predicated region
      $region37: #{_lambda_.27} parent=11 // pred_check
        %p322 = pneg %p242
      $region38: #{_lambda_.27} parent=11 // pred_check_branch
        %324 = sbr.rel (%p322) target = $region40
      $region39: #{_lambda_.27} parent=11 // pred_region
        _
      $region40: #{_lambda_.27} parent=11 // pred_fallthru
        _
      // Predicated region
      $region41: #{_lambda_.27} parent=11 // pred_check
        %p325 = pneg %p263
      $region42: #{_lambda_.27} parent=11 // pred_check_branch
        %327 = sbr.rel (%p325) target = $region44
      $region43: #{_lambda_.27} parent=11 // pred_region
        _
      $region44: #{_lambda_.27} parent=11 // pred_fallthru
        _
    $region12: #{_lambda_.27} parent=5 // pred_fallthru
      _
    %p328 = scmp.lt.s32.totalorder %s17, 2
    // Predicated region
    $region45: #{_lambda_.27} parent=5 // pred_check
      %p329 = pneg %p328
    $region46: #{_lambda_.27} parent=5 // pred_check_branch
      %331 = sbr.rel (%p329) target = $region48
    $region47: #{_lambda_.27} parent=5 // pred_region
      // Predicated region
      $region49: #{_lambda_.27} parent=47 // pred_check
        %p332 = pneg %p37
      $region50: #{_lambda_.27} parent=47 // pred_check_branch
        %334 = sbr.rel (%p332) target = $region52
      $region51: #{_lambda_.27} parent=47 // pred_region
        %p335 = scmp.lt.s32.totalorder %s17, 1
        %s336 = scalar_select %p335, %s17, 1
        %s337 = smul.addr %s336, 4
        %s338 = smul.addr %s337, 8
        %s339 = scalar_lea.vmem %s0, %s338
      $region52: #{_lambda_.27} parent=47 // pred_fallthru
        _
      // Predicated region
      $region53: #{_lambda_.27} parent=47 // pred_check
        %p340 = pneg %p63
      $region54: #{_lambda_.27} parent=47 // pred_check_branch
        %342 = sbr.rel (%p340) target = $region56
      $region55: #{_lambda_.27} parent=47 // pred_region
        %p343 = scmp.lt.s32.totalorder %s17, 1
        %s344 = scalar_select %p343, %s17, 1
        %s345 = smul.addr %s344, 4
        %s346 = smul.addr %s345, 8
        %s347 = scalar_lea.vmem %s1, %s346
      $region56: #{_lambda_.27} parent=47 // pred_fallthru
        _
      // Predicated region
      $region57: #{_lambda_.27} parent=47 // pred_check
        %p348 = pneg %p89
      $region58: #{_lambda_.27} parent=47 // pred_check_branch
        %350 = sbr.rel (%p348) target = $region60
      $region59: #{_lambda_.27} parent=47 // pred_region
        %p351 = scmp.lt.s32.totalorder %s17, 1
        %s352 = scalar_select %p351, %s17, 1
        %s353 = smul.addr %s352, 4
        %s354 = smul.addr %s353, 8
        %s355 = scalar_lea.vmem %s2, %s354
      $region60: #{_lambda_.27} parent=47 // pred_fallthru
        _
    $region48: #{_lambda_.27} parent=5 // pred_fallthru
      _
    %p356 = scmp.le.s32.totalorder 1, %s17
    %p357 = scmp.lt.s32.totalorder %s17, 3
    %p358 = pnand %p356, %p357
    %p359 = pneg %p358
    // Predicated region
    $region61: #{_lambda_.27} parent=5 // pred_check
      _
    $region62: #{_lambda_.27} parent=5 // pred_check_branch
      %361 = sbr.rel (%p358) target = $region64
    $region63: #{_lambda_.27} parent=5 // pred_region
      %s362 = ssub.s32 %s17, 1
      %p363 = scmp.lt.s32.totalorder %s22, 1
      %s364 = scalar_select %p363, %s22, 1
      %s365 = smul.addr %s364, 4
      %s366 = smul.addr %s365, 8
      %s367 = scalar_lea.vmem %s0, %s366
      %p368 = pneg %p43
      %p369 = pneg %p40
      %p370 = scmp.lt.s32.totalorder %s22, 1
      %s371 = scalar_select %p370, %s22, 1
      %s372 = smul.addr %s371, 4
      %s373 = smul.addr %s372, 8
      %s374 = scalar_lea.vmem %s1, %s373
      %p375 = pneg %p69
      %p376 = pneg %p66
      %p377 = scmp.lt.s32.totalorder %s22, 1
      %s378 = scalar_select %p377, %s22, 1
      %s379 = smul.addr %s378, 4
      %s380 = smul.addr %s379, 8
      %s381 = scalar_lea.vmem %s2, %s380
      %p382 = pneg %p95
      %p383 = pneg %p92
      %p384 = pneg %p116
      %p385 = pneg %p113
      %p386 = pneg %p137
      %p387 = pneg %p134
      %p388 = pneg %p158
      %p389 = pneg %p155
      %p390 = pneg %p179
      %p391 = pneg %p176
      %p392 = pneg %p200
      %p393 = pneg %p197
      %p394 = pneg %p221
      %p395 = pneg %p218
      %p396 = pneg %p242
      %p397 = pneg %p239
      %p398 = pneg %p263
      %p399 = pneg %p260
      %p400 = pneg %p289
      %p401 = pneg %p286
      %p402 = scmp.lt.s32.totalorder %s22, 1
      %s403 = scalar_select %p402, %s22, 1
      %s404 = smul.addr %s403, 4
      %s405 = smul.addr %s404, 8
      %s406 = scalar_lea.vmem %s11, %s405
      %p407 = scmp.lt.s32.totalorder %s22, 1
      %s408 = scalar_select %p407, %s22, 1
      %s409 = smul.addr %s408, 4
      %s410 = smul.addr %s409, 8
      %s411 = scalar_lea.vmem %s0, %s410
      %p412 = scmp.lt.s32.totalorder %s22, 1
      %s413 = scalar_select %p412, %s22, 1
      %s414 = smul.addr %s413, 4
      %s415 = smul.addr %s414, 8
      %s416 = scalar_lea.vmem %s1, %s415
      %p417 = scmp.lt.s32.totalorder %s22, 1
      %s418 = scalar_select %p417, %s22, 1
      %s419 = smul.addr %s418, 4
      %s420 = smul.addr %s419, 8
      %s421 = scalar_lea.vmem %s2, %s420
      %p422 = scmp.lt.s32.totalorder %s22, 1
      %s423 = scalar_select %p422, %s22, 1
      %s424 = smul.addr %s423, 4
      %s425 = smul.addr %s424, 8
      %s426 = scalar_lea.vmem %s11, %s425
      %v428 = vld [vmem:[%s421] sm:$0xff]
      %v429 = vld [vmem:[%s421 + $0x8] sm:$0xff]
      %v430 = vld [vmem:[%s421 + $0x10] sm:$0xff]
      %v431 = vld [vmem:[%s421 + $0x18] sm:$0xff]
      %v432 = vld [vmem:[%s411] sm:$0xff]
      %v433 = vld [vmem:[%s411 + $0x8] sm:$0xff]
      %v434 = vld [vmem:[%s411 + $0x10] sm:$0xff]
      %v435 = vld [vmem:[%s411 + $0x18] sm:$0xff]
      %v436 = vld [vmem:[%s416] sm:$0xff]
      %v437 = vld [vmem:[%s416 + $0x8] sm:$0xff]
      %v438 = vld [vmem:[%s416 + $0x10] sm:$0xff]
      %v439 = vld [vmem:[%s416 + $0x18] sm:$0xff]
      %v440 = vadd.f32 %v432, %v436
      %v441 = vadd.f32 %v433, %v437
      %v442 = vadd.f32 %v434, %v438
      %v443 = vadd.f32 %v435, %v439
      %vm444 = vcmask 261120
      %v445 = vsel %vm444, %v440, 0.0
      %446 = vadd.xlane.f32.xlu0 %v445
      %v447 = vpop.xlane.xlu0 %446
      %v448 = vsel %vm444, %v441, 0.0
      %449 = vadd.xlane.f32.xlu0 %v448
      %v450 = vpop.xlane.xlu0 %449
      %v451 = vsel %vm444, %v442, 0.0
      %452 = vadd.xlane.f32.xlu0 %v451
      %v453 = vpop.xlane.xlu0 %452
      %v454 = vsel %vm444, %v443, 0.0
      %455 = vadd.xlane.f32.xlu0 %v454
      %v456 = vpop.xlane.xlu0 %455
      %v457 = vrcp.pop 32.0
      %v458 = vmul.f32 32.0, %v457
      %v459 = vsub.f32 1.0, %v458
      %v460 = vmul.f32 %v457, %v459
      %v461 = vadd.f32 %v457, %v460
      %vm462 = vweird.f32 %v457
      %v463 = vsel %vm462, %v457, %v461
      %v464 = vmul.f32 %v447, %v463
      %v465 = vmul.f32 %v450, %v463
      %v466 = vmul.f32 %v453, %v463
      %v467 = vmul.f32 %v456, %v463
      %v468 = vsub.f32 %v440, %v464
      %v469 = vsub.f32 %v441, %v465
      %v470 = vsub.f32 %v442, %v466
      %v471 = vsub.f32 %v443, %v467
      %v472 = vmul.f32 %v468, %v468
      %v473 = vmul.f32 %v469, %v469
      %v474 = vmul.f32 %v470, %v470
      %v475 = vmul.f32 %v471, %v471
      %v476 = vsel %vm444, %v472, 0.0
      %477 = vadd.xlane.f32.xlu0 %v476
      %v478 = vpop.xlane.xlu0 %477
      %v479 = vsel %vm444, %v473, 0.0
      %480 = vadd.xlane.f32.xlu0 %v479
      %v481 = vpop.xlane.xlu0 %480
      %v482 = vsel %vm444, %v474, 0.0
      %483 = vadd.xlane.f32.xlu0 %v482
      %v484 = vpop.xlane.xlu0 %483
      %v485 = vsel %vm444, %v475, 0.0
      %486 = vadd.xlane.f32.xlu0 %v485
      %v487 = vpop.xlane.xlu0 %486
      %v488 = vmul.f32 %v478, %v463
      %v489 = vmul.f32 %v481, %v463
      %v490 = vmul.f32 %v484, %v463
      %v491 = vmul.f32 %v487, %v463
      %v492 = vadd.f32 %v488, 1e-05
      %v493 = vadd.f32 %v489, 1e-05
      %v494 = vadd.f32 %v490, 1e-05
      %v495 = vadd.f32 %v491, 1e-05
      %v496 = vrsqrt.pop %v492
      %v497 = vmul.f32 %v496, %v492
      %v498 = vmul.f32 %v497, %v496
      %v499 = vmul.f32 0.5, %v498
      %v500 = vsub.f32 1.5, %v499
      %v501 = vmul.f32 %v496, %v500
      %vm502 = vweird.f32 %v492
      %vm503 = vweird.f32 %v496
      %vm504 = vmor %vm502, %vm503
      %v505 = vsel %vm504, %v496, %v501
      %v506 = vrsqrt.pop %v493
      %v507 = vmul.f32 %v506, %v493
      %v508 = vmul.f32 %v507, %v506
      %v509 = vmul.f32 0.5, %v508
      %v510 = vsub.f32 1.5, %v509
      %v511 = vmul.f32 %v506, %v510
      %vm512 = vweird.f32 %v493
      %vm513 = vweird.f32 %v506
      %vm514 = vmor %vm512, %vm513
      %v515 = vsel %vm514, %v506, %v511
      %v516 = vrsqrt.pop %v494
      %v517 = vmul.f32 %v516, %v494
      %v518 = vmul.f32 %v517, %v516
      %v519 = vmul.f32 0.5, %v518
      %v520 = vsub.f32 1.5, %v519
      %v521 = vmul.f32 %v516, %v520
      %vm522 = vweird.f32 %v494
      %vm523 = vweird.f32 %v516
      %vm524 = vmor %vm522, %vm523
      %v525 = vsel %vm524, %v516, %v521
      %v526 = vrsqrt.pop %v495
      %v527 = vmul.f32 %v526, %v495
      %v528 = vmul.f32 %v527, %v526
      %v529 = vmul.f32 0.5, %v528
      %v530 = vsub.f32 1.5, %v529
      %v531 = vmul.f32 %v526, %v530
      %vm532 = vweird.f32 %v495
      %vm533 = vweird.f32 %v526
      %vm534 = vmor %vm532, %vm533
      %v535 = vsel %vm534, %v526, %v531
      %v536 = vmul.f32 %v468, %v505
      %v537 = vmul.f32 %v469, %v515
      %v538 = vmul.f32 %v470, %v525
      %v539 = vmul.f32 %v471, %v535
      %v540 = vld [vmem:[%s3] sm:$0x1]
      %v542 = vperm.slane %v540, 0
      %v544 = vmul.f32 %v536, %v542
      %v545 = vmul.f32 %v537, %v542
      %v546 = vmul.f32 %v538, %v542
      %v547 = vmul.f32 %v539, %v542
      %v548 = vld [vmem:[%s4] sm:$0x1]
      %v550 = vperm.slane %v548, 0
      %v552 = vadd.f32 %v544, %v550
      %v553 = vadd.f32 %v545, %v550
      %v554 = vadd.f32 %v546, %v550
      %v555 = vadd.f32 %v547, %v550
      %557 = vset.pattern.permute.xlu0 0
      %558 = vperm.xlu0 %557, %v428
      %v559 = vpop.permute.xlu0 %558
      %562 = vset.pattern.permute.xlu0 0
      %563 = vperm.xlu0 %562, %v429
      %v564 = vpop.permute.xlu0 %563
      %567 = vset.pattern.permute.xlu0 0
      %568 = vperm.xlu0 %567, %v430
      %v569 = vpop.permute.xlu0 %568
      %572 = vset.pattern.permute.xlu0 0
      %573 = vperm.xlu0 %572, %v431
      %v574 = vpop.permute.xlu0 %573
      %v576 = vmul.f32 %v552, %v559
      %v577 = vmul.f32 %v553, %v564
      %v578 = vmul.f32 %v554, %v569
      %v579 = vmul.f32 %v555, %v574
      %vm580 = vcmask 257024
      %581 = vst.msk [vmem:[#allocation2] sm:$0xf] %vm580, 0
      %582 = vst.msk [vmem:[#allocation2 + $0x14] sm:$0xf] %vm580, 0
      %v583 = vpack.c.bf16 %v576, %v576
      %v584 = vpack.c.bf16 %v577, %v577
      %v585 = vpack.c.bf16 %v578, %v578
      %v586 = vpack.c.bf16 %v579, %v579
      %587 = vst.msk [vmem:[#allocation2 + $0x4] sm:$0xf] %vm580, %v583
      %588 = vst.msk [vmem:[#allocation2 + $0x8] sm:$0xf] %vm580, %v584
      %589 = vst.msk [vmem:[#allocation2 + $0xc] sm:$0xf] %vm580, %v585
      %590 = vst.msk [vmem:[#allocation2 + $0x10] sm:$0xf] %vm580, %v586
      %v591 = vld [vmem:[#allocation2] sm:$0x8]
      %v592 = vld [vmem:[#allocation2 + $0x4] sm:$0xf]
      %v593 = vld [vmem:[#allocation2 + $0x8] sm:$0xf]
      %v594 = vld [vmem:[#allocation2 + $0xc] sm:$0xf]
      %v595 = vld [vmem:[#allocation2 + $0x10] sm:$0xf]
      %v596 = vld [vmem:[%s5] sm:$0xf]
      %v597 = vld [vmem:[%s5 + $0x4] sm:$0xf]
      %v598 = vld [vmem:[%s5 + $0x8] sm:$0xf]
      %v599 = vld [vmem:[%s5 + $0xc] sm:$0xf]
      %s600 = scalar_lea.vmem %s5, 16
      %v601 = vld [vmem:[%s600] sm:$0xf]
      %v602 = vld [vmem:[%s600 + $0x4] sm:$0xf]
      %v603 = vld [vmem:[%s600 + $0x8] sm:$0xf]
      %v604 = vld [vmem:[%s600 + $0xc] sm:$0xf]
      %v609 = vunpack.c.l.b16 %v592
      %v610 = vunpack.c.l.b16 %v593
      %v611 = vunpack.c.l.b16 %v594
      %v612 = vunpack.c.l.b16 %v595
      %v613 = vpack.c.b16 %v610, %v609
      %v614 = vpack.c.b16 %v612, %v611
      %v619 = vunpack.c.l.b16 %v601
      %v620 = vunpack.c.l.b16 %v602
      %v621 = vunpack.c.l.b16 %v603
      %v622 = vunpack.c.l.b16 %v604
      %v623 = vpack.c.b16 %v620, %v619
      %v624 = vpack.c.b16 %v622, %v621
      %v628 = vsel %vm444, %v613, 0
      %v631 = vsel %vm444, %v614, 0
      %633 = vmatpush.bf16.msra.mxu0 0
      %634 = vmatpush.bf16.msra.mxu0 0
      %635 = vmatpush.bf16.msra.mxu0 0
      %636 = vmatpush.bf16.msra.mxu0 0
      %637 = vmatpush.bf16.msra.mxu0 0
      %638 = vmatpush.bf16.msra.mxu0 0
      %639 = vmatpush.bf16.msra.mxu0 %v624
      %640 = vmatpush.bf16.msra.mxu0 %v623
      %641 = vmatmul.bf16.gmra.mxu0 %v628
      %v642 = vpop.f32.mrf.mxu0
      %v643 = vadd.f32 0.0, %v642
      %v644 = vpop.f32.mrf.mxu0
      %v645 = vadd.f32 0.0, %v644
      %646 = vmatmul.bf16.gmra.mxu0 %v631
      %v647 = vpop.f32.mrf.mxu0
      %v648 = vadd.f32 0.0, %v647
      %v649 = vpop.f32.mrf.mxu0
      %v650 = vadd.f32 0.0, %v649
      %651 = vdwg.mxu0
      %v653 = vunpack.c.l.b16 %v591
      %v654 = vpack.c.b16 %v609, %v653
      %v655 = vpack.c.b16 %v611, %v610
      %v656 = vpack.c.b16 %v612, %v612
      %vm657 = vsmask.f32 4352
      %v659 = vshrl.u32 %v654, 16
      %v661 = vrot.slane %v659, 3
      %v662 = vshll.u32 %v654, 16
      %v664 = vrot.slane %v662, 4
      %v665 = vor.u32 %v661, %v664
      %v667 = vshrl.u32 %v655, 16
      %v669 = vrot.slane %v667, 3
      %v670 = vshll.u32 %v655, 16
      %v672 = vrot.slane %v670, 4
      %v673 = vor.u32 %v669, %v672
      %v674 = vsel %vm657, %v665, %v673
      %v676 = vshrl.u32 %v656, 16
      %v678 = vrot.slane %v676, 3
      %v679 = vshll.u32 %v656, 16
      %v681 = vrot.slane %v679, 4
      %v682 = vor.u32 %v678, %v681
      %v683 = vsel %vm657, %v673, %v682
      %v688 = vunpack.c.l.b16 %v596
      %v689 = vunpack.c.l.b16 %v597
      %v690 = vunpack.c.l.b16 %v598
      %v691 = vunpack.c.l.b16 %v599
      %v692 = vpack.c.b16 %v689, %v688
      %v693 = vpack.c.b16 %v691, %v690
      %v697 = vsel %vm444, %v674, 0
      %v700 = vsel %vm444, %v683, 0
      %702 = vmatpush.bf16.msra.mxu0 0
      %703 = vmatpush.bf16.msra.mxu0 0
      %704 = vmatpush.bf16.msra.mxu0 0
      %705 = vmatpush.bf16.msra.mxu0 0
      %706 = vmatpush.bf16.msra.mxu0 0
      %707 = vmatpush.bf16.msra.mxu0 0
      %708 = vmatpush.bf16.msra.mxu0 %v693
      %709 = vmatpush.bf16.msra.mxu0 %v692
      %710 = vmatmul.bf16.gmra.mxu0 %v697
      %v711 = vpop.f32.mrf.mxu0
      %v712 = vadd.f32 %v643, %v711
      %v713 = vpop.f32.mrf.mxu0
      %v714 = vadd.f32 %v645, %v713
      %715 = vmatmul.bf16.gmra.mxu0 %v700
      %v716 = vpop.f32.mrf.mxu0
      %v717 = vadd.f32 %v648, %v716
      %v718 = vpop.f32.mrf.mxu0
      %v719 = vadd.f32 %v650, %v718
      %720 = vdwg.mxu0
      %v721 = vld [vmem:[#allocation2 + $0x4] sm:$0xf]
      %v722 = vld [vmem:[#allocation2 + $0x8] sm:$0xf]
      %v723 = vld [vmem:[#allocation2 + $0xc] sm:$0xf]
      %v724 = vld [vmem:[#allocation2 + $0x10] sm:$0xf]
      %v725 = vld [vmem:[#allocation2 + $0x14] sm:$0x1]
      %s726 = scalar_lea.vmem %s5, 32
      %v727 = vld [vmem:[%s726] sm:$0xf]
      %v728 = vld [vmem:[%s726 + $0x4] sm:$0xf]
      %v729 = vld [vmem:[%s726 + $0x8] sm:$0xf]
      %v730 = vld [vmem:[%s726 + $0xc] sm:$0xf]
      %v736 = vunpack.c.l.b16 %v721
      %v737 = vunpack.c.l.b16 %v722
      %v738 = vunpack.c.l.b16 %v723
      %v739 = vunpack.c.l.b16 %v724
      %v740 = vunpack.c.l.b16 %v725
      %v741 = vpack.c.b16 %v737, %v736
      %v742 = vpack.c.b16 %v739, %v738
      %v743 = vpack.c.b16 %v740, %v740
      %vm744 = vsmask.f32 7424
      %v746 = vshrl.u32 %v741, 16
      %v748 = vshll.u32 %v741, 16
      %v750 = vrot.slane %v748, 1
      %v751 = vor.u32 %v746, %v750
      %v753 = vshll.u32 %v742, 16
      %v755 = vrot.slane %v753, 1
      %v756 = vsel %vm744, %v751, %v755
      %v757 = vshrl.u32 %v742, 16
      %v759 = vor.u32 %v757, %v755
      %v761 = vshll.u32 %v743, 16
      %v763 = vrot.slane %v761, 1
      %v764 = vsel %vm744, %v759, %v763
      %v769 = vunpack.c.l.b16 %v727
      %v770 = vunpack.c.l.b16 %v728
      %v771 = vunpack.c.l.b16 %v729
      %v772 = vunpack.c.l.b16 %v730
      %v773 = vpack.c.b16 %v770, %v769
      %v774 = vpack.c.b16 %v772, %v771
      %v778 = vsel %vm444, %v756, 0
      %v781 = vsel %vm444, %v764, 0
      %783 = vmatpush.bf16.msra.mxu0 0
      %784 = vmatpush.bf16.msra.mxu0 0
      %785 = vmatpush.bf16.msra.mxu0 0
      %786 = vmatpush.bf16.msra.mxu0 0
      %787 = vmatpush.bf16.msra.mxu0 0
      %788 = vmatpush.bf16.msra.mxu0 0
      %789 = vmatpush.bf16.msra.mxu0 %v774
      %790 = vmatpush.bf16.msra.mxu0 %v773
      %791 = vmatmul.bf16.gmra.mxu0 %v778
      %v792 = vpop.f32.mrf.mxu0
      %v793 = vadd.f32 0.0, %v792
      %v794 = vpop.f32.mrf.mxu0
      %v795 = vadd.f32 0.0, %v794
      %796 = vmatmul.bf16.gmra.mxu0 %v781
      %v797 = vpop.f32.mrf.mxu0
      %v798 = vadd.f32 0.0, %v797
      %v799 = vpop.f32.mrf.mxu0
      %v800 = vadd.f32 0.0, %v799
      %801 = vdwg.mxu0
      %v802 = vadd.f32 %v712, %v793
      %v803 = vadd.f32 %v714, %v795
      %v804 = vadd.f32 %v717, %v798
      %v805 = vadd.f32 %v719, %v800
      %v806 = vld [vmem:[%s6] sm:$0x1]
      %v808 = vperm.slane %v806, 0
      %v810 = vadd.f32 %v802, %v808
      %v811 = vadd.f32 %v803, %v808
      %v812 = vadd.f32 %v804, %v808
      %v813 = vadd.f32 %v805, %v808
      %v814 = vmax.f32 %v810, 0.0
      %v815 = vmax.f32 %v811, 0.0
      %v816 = vmax.f32 %v812, 0.0
      %v817 = vmax.f32 %v813, 0.0
      %vm818 = vcmask 519168
      %819 = vst.msk [vmem:[#allocation3] sm:$0xf] %vm818, 0
      %820 = vst.msk [vmem:[#allocation3 + $0x14] sm:$0xf] %vm818, 0
      %v821 = vpack.c.bf16 %v814, %v814
      %v822 = vpack.c.bf16 %v815, %v815
      %v823 = vpack.c.bf16 %v816, %v816
      %v824 = vpack.c.bf16 %v817, %v817
      %825 = vst.msk [vmem:[#allocation3 + $0x4] sm:$0xf] %vm818, %v821
      %826 = vst.msk [vmem:[#allocation3 + $0x8] sm:$0xf] %vm818, %v822
      %827 = vst.msk [vmem:[#allocation3 + $0xc] sm:$0xf] %vm818, %v823
      %828 = vst.msk [vmem:[#allocation3 + $0x10] sm:$0xf] %vm818, %v824
      %v829 = vld [vmem:[#allocation3] sm:$0x8]
      %v830 = vld [vmem:[#allocation3 + $0x4] sm:$0xf]
      %v831 = vld [vmem:[#allocation3 + $0x8] sm:$0xf]
      %v832 = vld [vmem:[#allocation3 + $0xc] sm:$0xf]
      %v833 = vld [vmem:[#allocation3 + $0x10] sm:$0xf]
      %v834 = vld [vmem:[%s7] sm:$0xf]
      %v835 = vld [vmem:[%s7 + $0x4] sm:$0xf]
      %v836 = vld [vmem:[%s7 + $0x8] sm:$0xf]
      %v837 = vld [vmem:[%s7 + $0xc] sm:$0xf]
      %v838 = vld [vmem:[%s7 + $0x10] sm:$0xf]
      %v839 = vld [vmem:[%s7 + $0x14] sm:$0xf]
      %v840 = vld [vmem:[%s7 + $0x18] sm:$0xf]
      %v841 = vld [vmem:[%s7 + $0x1c] sm:$0xf]
      %s842 = scalar_lea.vmem %s7, 32
      %v843 = vld [vmem:[%s842] sm:$0xf]
      %v844 = vld [vmem:[%s842 + $0x4] sm:$0xf]
      %v845 = vld [vmem:[%s842 + $0x8] sm:$0xf]
      %v846 = vld [vmem:[%s842 + $0xc] sm:$0xf]
      %v847 = vld [vmem:[%s842 + $0x10] sm:$0xf]
      %v848 = vld [vmem:[%s842 + $0x14] sm:$0xf]
      %v849 = vld [vmem:[%s842 + $0x18] sm:$0xf]
      %v850 = vld [vmem:[%s842 + $0x1c] sm:$0xf]
      %v855 = vunpack.c.l.b16 %v830
      %v856 = vunpack.c.l.b16 %v831
      %v857 = vunpack.c.l.b16 %v832
      %v858 = vunpack.c.l.b16 %v833
      %v859 = vpack.c.b16 %v856, %v855
      %v860 = vpack.c.b16 %v858, %v857
      %v869 = vunpack.c.l.b16 %v843
      %v870 = vunpack.c.l.b16 %v844
      %v871 = vunpack.c.l.b16 %v845
      %v872 = vunpack.c.l.b16 %v846
      %v873 = vunpack.c.l.b16 %v847
      %v874 = vunpack.c.l.b16 %v848
      %v875 = vunpack.c.l.b16 %v849
      %v876 = vunpack.c.l.b16 %v850
      %v877 = vpack.c.b16 %v870, %v869
      %v878 = vpack.c.b16 %v872, %v871
      %v879 = vpack.c.b16 %v874, %v873
      %v880 = vpack.c.b16 %v876, %v875
      %vm885 = vcmask 523264
      %v887 = vsel %vm885, %v859, 0
      %v890 = vsel %vm885, %v860, 0
      %892 = vmatpush.bf16.msra.mxu0 0
      %893 = vmatpush.bf16.msra.mxu0 0
      %894 = vmatpush.bf16.msra.mxu0 0
      %895 = vmatpush.bf16.msra.mxu0 0
      %896 = vmatpush.bf16.msra.mxu0 %v880
      %897 = vmatpush.bf16.msra.mxu0 %v879
      %898 = vmatpush.bf16.msra.mxu0 %v878
      %899 = vmatpush.bf16.msra.mxu0 %v877
      %900 = vmatmul.bf16.gmra.mxu0 %v887
      %v901 = vpop.f32.mrf.mxu0
      %v902 = vadd.f32 0.0, %v901
      %v903 = vpop.f32.mrf.mxu0
      %v904 = vadd.f32 0.0, %v903
      %905 = vmatmul.bf16.gmra.mxu0 %v890
      %v906 = vpop.f32.mrf.mxu0
      %v907 = vadd.f32 0.0, %v906
      %v908 = vpop.f32.mrf.mxu0
      %v909 = vadd.f32 0.0, %v908
      %910 = vdwg.mxu0
      %v912 = vunpack.c.l.b16 %v829
      %v913 = vpack.c.b16 %v855, %v912
      %v914 = vpack.c.b16 %v857, %v856
      %v915 = vpack.c.b16 %v858, %v858
      %v917 = vshrl.u32 %v913, 16
      %v919 = vrot.slane %v917, 3
      %v920 = vshll.u32 %v913, 16
      %v922 = vrot.slane %v920, 4
      %v923 = vor.u32 %v919, %v922
      %v925 = vshrl.u32 %v914, 16
      %v927 = vrot.slane %v925, 3
      %v928 = vshll.u32 %v914, 16
      %v930 = vrot.slane %v928, 4
      %v931 = vor.u32 %v927, %v930
      %v932 = vsel %vm657, %v923, %v931
      %v934 = vshrl.u32 %v915, 16
      %v936 = vrot.slane %v934, 3
      %v937 = vshll.u32 %v915, 16
      %v939 = vrot.slane %v937, 4
      %v940 = vor.u32 %v936, %v939
      %v941 = vsel %vm657, %v931, %v940
      %v950 = vunpack.c.l.b16 %v834
      %v951 = vunpack.c.l.b16 %v835
      %v952 = vunpack.c.l.b16 %v836
      %v953 = vunpack.c.l.b16 %v837
      %v954 = vunpack.c.l.b16 %v838
      %v955 = vunpack.c.l.b16 %v839
      %v956 = vunpack.c.l.b16 %v840
      %v957 = vunpack.c.l.b16 %v841
      %v958 = vpack.c.b16 %v951, %v950
      %v959 = vpack.c.b16 %v953, %v952
      %v960 = vpack.c.b16 %v955, %v954
      %v961 = vpack.c.b16 %v957, %v956
      %v967 = vsel %vm885, %v932, 0
      %v970 = vsel %vm885, %v941, 0
      %972 = vmatpush.bf16.msra.mxu0 0
      %973 = vmatpush.bf16.msra.mxu0 0
      %974 = vmatpush.bf16.msra.mxu0 0
      %975 = vmatpush.bf16.msra.mxu0 0
      %976 = vmatpush.bf16.msra.mxu0 %v961
      %977 = vmatpush.bf16.msra.mxu0 %v960
      %978 = vmatpush.bf16.msra.mxu0 %v959
      %979 = vmatpush.bf16.msra.mxu0 %v958
      %980 = vmatmul.bf16.gmra.mxu0 %v967
      %v981 = vpop.f32.mrf.mxu0
      %v982 = vadd.f32 %v902, %v981
      %v983 = vpop.f32.mrf.mxu0
      %v984 = vadd.f32 %v904, %v983
      %985 = vmatmul.bf16.gmra.mxu0 %v970
      %v986 = vpop.f32.mrf.mxu0
      %v987 = vadd.f32 %v907, %v986
      %v988 = vpop.f32.mrf.mxu0
      %v989 = vadd.f32 %v909, %v988
      %990 = vdwg.mxu0
      %v991 = vld [vmem:[#allocation3 + $0x4] sm:$0xf]
      %v992 = vld [vmem:[#allocation3 + $0x8] sm:$0xf]
      %v993 = vld [vmem:[#allocation3 + $0xc] sm:$0xf]
      %v994 = vld [vmem:[#allocation3 + $0x10] sm:$0xf]
      %v995 = vld [vmem:[#allocation3 + $0x14] sm:$0x1]
      %s996 = scalar_lea.vmem %s7, 64
      %v997 = vld [vmem:[%s996] sm:$0xf]
      %v998 = vld [vmem:[%s996 + $0x4] sm:$0xf]
      %v999 = vld [vmem:[%s996 + $0x8] sm:$0xf]
      %v1000 = vld [vmem:[%s996 + $0xc] sm:$0xf]
      %v1001 = vld [vmem:[%s996 + $0x10] sm:$0xf]
      %v1002 = vld [vmem:[%s996 + $0x14] sm:$0xf]
      %v1003 = vld [vmem:[%s996 + $0x18] sm:$0xf]
      %v1004 = vld [vmem:[%s996 + $0x1c] sm:$0xf]
      %v1010 = vunpack.c.l.b16 %v991
      %v1011 = vunpack.c.l.b16 %v992
      %v1012 = vunpack.c.l.b16 %v993
      %v1013 = vunpack.c.l.b16 %v994
      %v1014 = vunpack.c.l.b16 %v995
      %v1015 = vpack.c.b16 %v1011, %v1010
      %v1016 = vpack.c.b16 %v1013, %v1012
      %v1017 = vpack.c.b16 %v1014, %v1014
      %v1019 = vshrl.u32 %v1015, 16
      %v1021 = vshll.u32 %v1015, 16
      %v1023 = vrot.slane %v1021, 1
      %v1024 = vor.u32 %v1019, %v1023
      %v1026 = vshll.u32 %v1016, 16
      %v1028 = vrot.slane %v1026, 1
      %v1029 = vsel %vm744, %v1024, %v1028
      %v1030 = vshrl.u32 %v1016, 16
      %v1032 = vor.u32 %v1030, %v1028
      %v1034 = vshll.u32 %v1017, 16
      %v1036 = vrot.slane %v1034, 1
      %v1037 = vsel %vm744, %v1032, %v1036
      %v1046 = vunpack.c.l.b16 %v997
      %v1047 = vunpack.c.l.b16 %v998
      %v1048 = vunpack.c.l.b16 %v999
      %v1049 = vunpack.c.l.b16 %v1000
      %v1050 = vunpack.c.l.b16 %v1001
      %v1051 = vunpack.c.l.b16 %v1002
      %v1052 = vunpack.c.l.b16 %v1003
      %v1053 = vunpack.c.l.b16 %v1004
      %v1054 = vpack.c.b16 %v1047, %v1046
      %v1055 = vpack.c.b16 %v1049, %v1048
      %v1056 = vpack.c.b16 %v1051, %v1050
      %v1057 = vpack.c.b16 %v1053, %v1052
      %v1063 = vsel %vm885, %v1029, 0
      %v1066 = vsel %vm885, %v1037, 0
      %1068 = vmatpush.bf16.msra.mxu0 0
      %1069 = vmatpush.bf16.msra.mxu0 0
      %1070 = vmatpush.bf16.msra.mxu0 0
      %1071 = vmatpush.bf16.msra.mxu0 0
      %1072 = vmatpush.bf16.msra.mxu0 %v1057
      %1073 = vmatpush.bf16.msra.mxu0 %v1056
      %1074 = vmatpush.bf16.msra.mxu0 %v1055
      %1075 = vmatpush.bf16.msra.mxu0 %v1054
      %1076 = vmatmul.bf16.gmra.mxu0 %v1063
      %v1077 = vpop.f32.mrf.mxu0
      %v1078 = vadd.f32 0.0, %v1077
      %v1079 = vpop.f32.mrf.mxu0
      %v1080 = vadd.f32 0.0, %v1079
      %1081 = vmatmul.bf16.gmra.mxu0 %v1066
      %v1082 = vpop.f32.mrf.mxu0
      %v1083 = vadd.f32 0.0, %v1082
      %v1084 = vpop.f32.mrf.mxu0
      %v1085 = vadd.f32 0.0, %v1084
      %1086 = vdwg.mxu0
      %v1087 = vadd.f32 %v982, %v1078
      %v1088 = vadd.f32 %v984, %v1080
      %v1089 = vadd.f32 %v987, %v1083
      %v1090 = vadd.f32 %v989, %v1085
      %v1091 = vld [vmem:[%s8] sm:$0x1]
      %v1093 = vperm.slane %v1091, 0
      %v1095 = vadd.f32 %v1087, %v1093
      %v1096 = vadd.f32 %v1088, %v1093
      %v1097 = vadd.f32 %v1089, %v1093
      %v1098 = vadd.f32 %v1090, %v1093
      %v1099 = vadd.f32 %v1095, %v576
      %v1100 = vadd.f32 %v1096, %v577
      %v1101 = vadd.f32 %v1097, %v578
      %v1102 = vadd.f32 %v1098, %v579
      %v1103 = vsel %vm444, %v1099, 0.0
      %1104 = vadd.xlane.f32.xlu0 %v1103
      %v1105 = vpop.xlane.xlu0 %1104
      %v1106 = vsel %vm444, %v1100, 0.0
      %1107 = vadd.xlane.f32.xlu0 %v1106
      %v1108 = vpop.xlane.xlu0 %1107
      %v1109 = vsel %vm444, %v1101, 0.0
      %1110 = vadd.xlane.f32.xlu0 %v1109
      %v1111 = vpop.xlane.xlu0 %1110
      %v1112 = vsel %vm444, %v1102, 0.0
      %1113 = vadd.xlane.f32.xlu0 %v1112
      %v1114 = vpop.xlane.xlu0 %1113
      %v1115 = vmul.f32 %v1105, %v463
      %v1116 = vmul.f32 %v1108, %v463
      %v1117 = vmul.f32 %v1111, %v463
      %v1118 = vmul.f32 %v1114, %v463
      %v1119 = vsub.f32 %v1099, %v1115
      %v1120 = vsub.f32 %v1100, %v1116
      %v1121 = vsub.f32 %v1101, %v1117
      %v1122 = vsub.f32 %v1102, %v1118
      %v1123 = vmul.f32 %v1119, %v1119
      %v1124 = vmul.f32 %v1120, %v1120
      %v1125 = vmul.f32 %v1121, %v1121
      %v1126 = vmul.f32 %v1122, %v1122
      %v1127 = vsel %vm444, %v1123, 0.0
      %1128 = vadd.xlane.f32.xlu0 %v1127
      %v1129 = vpop.xlane.xlu0 %1128
      %v1130 = vsel %vm444, %v1124, 0.0
      %1131 = vadd.xlane.f32.xlu0 %v1130
      %v1132 = vpop.xlane.xlu0 %1131
      %v1133 = vsel %vm444, %v1125, 0.0
      %1134 = vadd.xlane.f32.xlu0 %v1133
      %v1135 = vpop.xlane.xlu0 %1134
      %v1136 = vsel %vm444, %v1126, 0.0
      %1137 = vadd.xlane.f32.xlu0 %v1136
      %v1138 = vpop.xlane.xlu0 %1137
      %v1139 = vmul.f32 %v1129, %v463
      %v1140 = vmul.f32 %v1132, %v463
      %v1141 = vmul.f32 %v1135, %v463
      %v1142 = vmul.f32 %v1138, %v463
      %v1143 = vadd.f32 %v1139, 1e-05
      %v1144 = vadd.f32 %v1140, 1e-05
      %v1145 = vadd.f32 %v1141, 1e-05
      %v1146 = vadd.f32 %v1142, 1e-05
      %v1147 = vrsqrt.pop %v1143
      %v1148 = vmul.f32 %v1147, %v1143
      %v1149 = vmul.f32 %v1148, %v1147
      %v1150 = vmul.f32 0.5, %v1149
      %v1151 = vsub.f32 1.5, %v1150
      %v1152 = vmul.f32 %v1147, %v1151
      %vm1153 = vweird.f32 %v1143
      %vm1154 = vweird.f32 %v1147
      %vm1155 = vmor %vm1153, %vm1154
      %v1156 = vsel %vm1155, %v1147, %v1152
      %v1157 = vrsqrt.pop %v1144
      %v1158 = vmul.f32 %v1157, %v1144
      %v1159 = vmul.f32 %v1158, %v1157
      %v1160 = vmul.f32 0.5, %v1159
      %v1161 = vsub.f32 1.5, %v1160
      %v1162 = vmul.f32 %v1157, %v1161
      %vm1163 = vweird.f32 %v1144
      %vm1164 = vweird.f32 %v1157
      %vm1165 = vmor %vm1163, %vm1164
      %v1166 = vsel %vm1165, %v1157, %v1162
      %v1167 = vrsqrt.pop %v1145
      %v1168 = vmul.f32 %v1167, %v1145
      %v1169 = vmul.f32 %v1168, %v1167
      %v1170 = vmul.f32 0.5, %v1169
      %v1171 = vsub.f32 1.5, %v1170
      %v1172 = vmul.f32 %v1167, %v1171
      %vm1173 = vweird.f32 %v1145
      %vm1174 = vweird.f32 %v1167
      %vm1175 = vmor %vm1173, %vm1174
      %v1176 = vsel %vm1175, %v1167, %v1172
      %v1177 = vrsqrt.pop %v1146
      %v1178 = vmul.f32 %v1177, %v1146
      %v1179 = vmul.f32 %v1178, %v1177
      %v1180 = vmul.f32 0.5, %v1179
      %v1181 = vsub.f32 1.5, %v1180
      %v1182 = vmul.f32 %v1177, %v1181
      %vm1183 = vweird.f32 %v1146
      %vm1184 = vweird.f32 %v1177
      %vm1185 = vmor %vm1183, %vm1184
      %v1186 = vsel %vm1185, %v1177, %v1182
      %v1187 = vmul.f32 %v1119, %v1156
      %v1188 = vmul.f32 %v1120, %v1166
      %v1189 = vmul.f32 %v1121, %v1176
      %v1190 = vmul.f32 %v1122, %v1186
      %v1191 = vld [vmem:[%s9] sm:$0x1]
      %v1193 = vperm.slane %v1191, 0
      %v1195 = vmul.f32 %v1187, %v1193
      %v1196 = vmul.f32 %v1188, %v1193
      %v1197 = vmul.f32 %v1189, %v1193
      %v1198 = vmul.f32 %v1190, %v1193
      %v1199 = vld [vmem:[%s10] sm:$0x1]
      %v1201 = vperm.slane %v1199, 0
      %v1203 = vadd.f32 %v1195, %v1201
      %v1204 = vadd.f32 %v1196, %v1201
      %v1205 = vadd.f32 %v1197, %v1201
      %v1206 = vadd.f32 %v1198, %v1201
      %v1207 = vmul.f32 %v1203, %v559
      %v1208 = vmul.f32 %v1204, %v564
      %v1209 = vmul.f32 %v1205, %v569
      %v1210 = vmul.f32 %v1206, %v574
      %1211 = vst.msk [vmem:[%s426] sm:$0xff] %vm444, %v1207
      %1212 = vst.msk [vmem:[%s426 + $0x8] sm:$0xff] %vm444, %v1208
      %1213 = vst.msk [vmem:[%s426 + $0x10] sm:$0xff] %vm444, %v1209
      %1214 = vst.msk [vmem:[%s426 + $0x18] sm:$0xff] %vm444, %v1210
      %p1215 = scmp.lt.s32.totalorder %s22, 1
      %s1216 = scalar_select %p1215, %s22, 1
      %s1217 = smul.addr %s1216, 4
      %s1218 = smul.addr %s1217, 8
      %s1219 = scalar_lea.vmem %s11, %s1218
      // Predicated region
      $region65: #{_lambda_.27} parent=63 // pred_check
        %p1220 = pneg %p286
      $region66: #{_lambda_.27} parent=63 // pred_check_branch
        %1222 = sbr.rel (%p1220) target = $region68
      $region67: #{_lambda_.27} parent=63 // pred_region
        _
      $region68: #{_lambda_.27} parent=63 // pred_fallthru
        _
    $region64: #{_lambda_.27} parent=5 // pred_fallthru
      _
    %p1223 = scmp.le.s32.totalorder 2, %s17
    // Predicated region
    $region69: #{_lambda_.27} parent=5 // pred_check
      %p1224 = pneg %p1223
    $region70: #{_lambda_.27} parent=5 // pred_check_branch
      %1226 = sbr.rel (%p1224) target = $region72
    $region71: #{_lambda_.27} parent=5 // pred_region
      %s1227 = ssub.s32 %s17, 2
      // Predicated region
      $region73: #{_lambda_.27} parent=71 // pred_check
        %p1228 = pneg %p292
      $region74: #{_lambda_.27} parent=71 // pred_check_branch
        %1230 = sbr.rel (%p1228) target = $region76
      $region75: #{_lambda_.27} parent=71 // pred_region
        %p1231 = scmp.lt.s32.totalorder %s23, 1
        %s1232 = scalar_select %p1231, %s23, 1
        %s1233 = smul.addr %s1232, 4
        %s1234 = smul.addr %s1233, 8
        %s1235 = scalar_lea.vmem %s11, %s1234
      $region76: #{_lambda_.27} parent=71 // pred_fallthru
        _
    $region72: #{_lambda_.27} parent=5 // pred_fallthru
      _
  $region6: #{_lambda_.27} parent=0 // loop_footer
    %s21 = sadd.s32 1, %s17
  $region7: #{_lambda_.27} parent=0 // loop_footer_branch
    %16 = sbr.rel target = $region3
  $region8: #{_lambda_.27} parent=0 // loop_exit
    _

// kernel: _lambda_.31
$region0: #{_lambda_.31}
  #allocation0 [shape = 'u32[]', space=smem, size = 0x4, offset = 0x4, fixed_abs, tag = 'smem constant byte address 0x4 - core index']
  #allocation1 [shape = 'u32[72,128]{1,0:T(1,128)}', space=vmem, size = 0x9000, scoped, tag = 'internal scratch']
  %s0 = inlined_call_operand.vmem [shape: f32[64,32], index: 0, kind: input, shape index: {}]
  %s1 = inlined_call_operand.vmem [shape: bf16[32,128], index: 1, kind: input, shape index: {}]
  %s2 = inlined_call_operand.vmem [shape: f32[1,128], index: 2, kind: input, shape index: {}]
  %s3 = inlined_call_operand.vmem [shape: f32[64,128], index: 3, kind: output, shape index: {}]
  %s4 = sld [smem:[#allocation0]]
  $region22: #{_lambda_.31} parent=0
    _
  %s6 = ssub.s32 1, %s4
  %s7 = scalar_select 0, %s6, %s4
  // Predicated region
  $region2: #{_lambda_.31} parent=0 // pred_check
    _
  $region3: #{_lambda_.31} parent=0 // pred_check_branch
    %9 = sbr.rel (0) target = $region5
  $region4: #{_lambda_.31} parent=0 // pred_region
    _
  $region5: #{_lambda_.31} parent=0 // pred_fallthru
    _
  // Predicated region
  $region6: #{_lambda_.31} parent=0 // pred_check
    _
  $region7: #{_lambda_.31} parent=0 // pred_check_branch
    %11 = sbr.rel (0) target = $region9
  $region8: #{_lambda_.31} parent=0 // pred_region
    _
  $region9: #{_lambda_.31} parent=0 // pred_fallthru
    _
  // Predicated region
  $region10: #{_lambda_.31} parent=0 // pred_check
    _
  $region11: #{_lambda_.31} parent=0 // pred_check_branch
    %13 = sbr.rel (0) target = $region13
  $region12: #{_lambda_.31} parent=0 // pred_region
    _
  $region13: #{_lambda_.31} parent=0 // pred_fallthru
    _
  %v15 = vld [vmem:[%s0] sm:$0xff]
  %v16 = vld [vmem:[%s0 + $0x8] sm:$0xff]
  %v17 = vld [vmem:[%s0 + $0x10] sm:$0xff]
  %v18 = vld [vmem:[%s0 + $0x18] sm:$0xff]
  %v19 = vld [vmem:[%s0 + $0x20] sm:$0xff]
  %v20 = vld [vmem:[%s0 + $0x28] sm:$0xff]
  %v21 = vld [vmem:[%s0 + $0x30] sm:$0xff]
  %v22 = vld [vmem:[%s0 + $0x38] sm:$0xff]
  %v23 = vpack.c.bf16 %v16, %v15
  %v24 = vpack.c.bf16 %v18, %v17
  %v25 = vpack.c.bf16 %v20, %v19
  %v26 = vpack.c.bf16 %v22, %v21
  %v27 = vld [vmem:[%s1] sm:$0xf]
  %v28 = vld [vmem:[%s1 + $0x4] sm:$0xf]
  %v29 = vld [vmem:[%s1 + $0x8] sm:$0xf]
  %v30 = vld [vmem:[%s1 + $0xc] sm:$0xf]
  %v31 = vld [vmem:[%s2] sm:$0x1]
  %v33 = vperm.slane %v31, 0
  %v39 = vunpack.c.l.b16 %v27
  %v40 = vunpack.c.l.b16 %v28
  %v41 = vunpack.c.l.b16 %v29
  %v42 = vunpack.c.l.b16 %v30
  %v43 = vpack.c.b16 %v40, %v39
  %v44 = vpack.c.b16 %v42, %v41
  %vm47 = vcmask 261120
  %v49 = vsel %vm47, %v23, 0
  %v52 = vsel %vm47, %v24, 0
  %v55 = vsel %vm47, %v25, 0
  %v58 = vsel %vm47, %v26, 0
  %60 = vmatpush.bf16.msra.mxu0 0
  %61 = vmatpush.bf16.msra.mxu0 0
  %62 = vmatpush.bf16.msra.mxu0 0
  %63 = vmatpush.bf16.msra.mxu0 0
  %64 = vmatpush.bf16.msra.mxu0 0
  %65 = vmatpush.bf16.msra.mxu0 0
  %66 = vmatpush.bf16.msra.mxu0 %v44
  %67 = vmatpush.bf16.msra.mxu0 %v43
  %68 = vmatmul.bf16.gmra.mxu0 %v49
  %v69 = vpop.f32.mrf.mxu0
  %v70 = vadd.f32 %v33, %v69
  %v71 = vpop.f32.mrf.mxu0
  %v72 = vadd.f32 %v33, %v71
  %73 = vmatmul.bf16.gmra.mxu0 %v52
  %v74 = vpop.f32.mrf.mxu0
  %v75 = vadd.f32 %v33, %v74
  %v76 = vpop.f32.mrf.mxu0
  %v77 = vadd.f32 %v33, %v76
  %78 = vmatmul.bf16.gmra.mxu0 %v55
  %v79 = vpop.f32.mrf.mxu0
  %v80 = vadd.f32 %v33, %v79
  %v81 = vpop.f32.mrf.mxu0
  %v82 = vadd.f32 %v33, %v81
  %83 = vmatmul.bf16.gmra.mxu0 %v58
  %v84 = vpop.f32.mrf.mxu0
  %v85 = vadd.f32 %v33, %v84
  %v86 = vpop.f32.mrf.mxu0
  %v87 = vadd.f32 %v33, %v86
  %88 = vdwg.mxu0
  %89 = vst [vmem:[%s3] sm:$0xff] %v70
  %90 = vst [vmem:[%s3 + $0x8] sm:$0xff] %v72
  %91 = vst [vmem:[%s3 + $0x10] sm:$0xff] %v75
  %92 = vst [vmem:[%s3 + $0x18] sm:$0xff] %v77
  %93 = vst [vmem:[%s3 + $0x20] sm:$0xff] %v80
  %94 = vst [vmem:[%s3 + $0x28] sm:$0xff] %v82
  %95 = vst [vmem:[%s3 + $0x30] sm:$0xff] %v85
  %96 = vst [vmem:[%s3 + $0x38] sm:$0xff] %v87
  // Predicated region
  $region14: #{_lambda_.31} parent=0 // pred_check
    _
  $region15: #{_lambda_.31} parent=0 // pred_check_branch
    %98 = sbr.rel (0) target = $region17
  $region16: #{_lambda_.31} parent=0 // pred_region
    _
  $region17: #{_lambda_.31} parent=0 // pred_fallthru
    _
  // Predicated region
  $region18: #{_lambda_.31} parent=0 // pred_check
    _
  $region19: #{_lambda_.31} parent=0 // pred_check_branch
    %100 = sbr.rel (0) target = $region21
  $region20: #{_lambda_.31} parent=0 // pred_region
    _
  $region21: #{_lambda_.31} parent=0 // pred_fallthru
    _

</llo_original>
